<compile_context>
chip_gen: v6e
topology: v6e:2x2x1
jax: 0.10.0
libtpu: 0.0.40
codegen_flags: <defaults>
</compile_context>

<pallas_src>
import jax
import jax.numpy as jnp
from jax.experimental import pallas as pl
from jax.experimental.pallas import tpu as pltpu


# --------------------- fused conv 5x5 ('same') + maxpool 2x2 ---------------------
def _conv_pool_kernel(p_ref, w_ref, b_ref, o_ref):
    """p_ref: (1, 4, K, P) bf16   pool-grouped im2col patches (K = Cin*25, P = Ho*Wo)
       w_ref: (Cout, K)   bf16   flattened conv weight (PyTorch OIHW -> (O, I*5*5))
       b_ref: (Cout, 1)   f32    bias
       o_ref: (1, Cout, P) bf16  pooled output, channels-major (NCHW-flat)
    """
    w = w_ref[...]
    # One fat-K matmul per 2x2 pooling phase; results live in registers.
    y00 = jnp.dot(w, p_ref[0, 0], preferred_element_type=jnp.float32)
    y01 = jnp.dot(w, p_ref[0, 1], preferred_element_type=jnp.float32)
    y10 = jnp.dot(w, p_ref[0, 2], preferred_element_type=jnp.float32)
    y11 = jnp.dot(w, p_ref[0, 3], preferred_element_type=jnp.float32)
    pooled = jnp.maximum(jnp.maximum(y00, y01), jnp.maximum(y10, y11))   # f32
    o_ref[0] = (pooled + b_ref[...]).astype(o_ref.dtype)


def _pool_grouped_patches(x, k=5, pad=2):
    """x: (N, C, H, W) -> (N, 4, C*k*k, (H//2)*(W//2)) im2col patches grouped by the
    2x2 pool phase g = di*2 + dj, so that a max over axis 1 == MaxPool2d(2)."""
    n, c, h, w = x.shape
    ho, wo = h // 2, w // 2
    xp = jnp.pad(x, ((0, 0), (0, 0), (pad, pad), (pad, pad)))
    taps = [xp[:, :, kh:kh + h, kw:kw + w] for kh in range(k) for kw in range(k)]
    t = jnp.stack(taps, axis=2)                       # (N, C, 25, H, W)
    t = t.reshape(n, c, k * k, ho, 2, wo, 2)          # H -> (Ho, di), W -> (Wo, dj)
    t = t.transpose(0, 4, 6, 1, 2, 3, 5)              # (N, di, dj, C, 25, Ho, Wo)
    return t.reshape(n, 4, c * k * k, ho * wo)


def conv5x5_pool2(x, w_flat, b):
    """x: (N, C, H, W) bf16 -> (N, Cout, (H//2)*(W//2)) bf16."""
    n, c, h, w = x.shape
    ho, wo = h // 2, w // 2
    cout, kdim = w_flat.shape
    p = ho * wo
    patches = _pool_grouped_patches(x)                # (N, 4, K, P), K = C*25
    return pl.pallas_call(
        _conv_pool_kernel,
        out_shape=jax.ShapeDtypeStruct((n, cout, p), x.dtype),
        grid=(n,),
        in_specs=[
            pl.BlockSpec((1, 4, kdim, p), lambda i: (i, 0, 0, 0)),
            pl.BlockSpec((cout, kdim), lambda i: (0, 0)),
            pl.BlockSpec((cout, 1), lambda i: (0, 0)),
        ],
        out_specs=pl.BlockSpec((1, cout, p), lambda i: (i, 0, 0)),
        compiler_params=pltpu.CompilerParams(dimension_semantics=("parallel",)),
    )(patches, w_flat, b)


# ----------------------------- fused 2-layer MLP ---------------------------------
def _mlp_kernel(x_ref, w1_ref, b1_ref, w2_ref, b2_ref, o_ref):
    h = jnp.dot(x_ref[...], w1_ref[...],
                preferred_element_type=jnp.float32) + b1_ref[...]
    y = jnp.dot(h.astype(w2_ref.dtype), w2_ref[...],
                preferred_element_type=jnp.float32) + b2_ref[...]
    o_ref[...] = y.astype(o_ref.dtype)


def mlp(x, w1t, b1, w2t, b2):
    n = x.shape[0]
    return pl.pallas_call(
        _mlp_kernel,
        out_shape=jax.ShapeDtypeStruct((n, w2t.shape[1]), jnp.float32),
    )(x, w1t, b1, w2t, b2)


# ----------------------------- params + forward ----------------------------------
def init_params(key):
    """PyTorch-convention parameters (Conv: OIHW, Linear: (out, in))."""
    ks = jax.random.split(key, 10)
    cw = lambda k, o, i: 0.05 * jax.random.normal(k, (o, i, 5, 5), jnp.float32)
    lw = lambda k, o, i: 0.05 * jax.random.normal(k, (o, i), jnp.float32)
    bb = lambda k, o: 0.01 * jax.random.normal(k, (o,), jnp.float32)
    return dict(
        w1=cw(ks[0], 32, 3),   b1=bb(ks[1], 32),
        w2=cw(ks[2], 32, 32),  b2=bb(ks[3], 32),
        w3=cw(ks[4], 64, 32),  b3=bb(ks[5], 64),
        wl1=lw(ks[6], 64, 1024), bl1=bb(ks[7], 64),
        wl2=lw(ks[8], 10, 64),   bl2=bb(ks[9], 10),
    )


def prepare_params(tp):
    """PyTorch layout -> kernel layout: conv OIHW -> (Cout, Cin*25) bf16,
    linear (out, in) -> (in, out) bf16, biases stay f32."""
    bf = jnp.bfloat16
    return dict(
        w1=tp["w1"].reshape(32, -1).astype(bf), b1=tp["b1"].reshape(-1, 1),
        w2=tp["w2"].reshape(32, -1).astype(bf), b2=tp["b2"].reshape(-1, 1),
        w3=tp["w3"].reshape(64, -1).astype(bf), b3=tp["b3"].reshape(-1, 1),
        wl1=tp["wl1"].T.astype(bf), bl1=tp["bl1"].reshape(1, -1),
        wl2=tp["wl2"].T.astype(bf), bl2=tp["bl2"].reshape(1, -1),
    )


def forward(x_nchw, p):
    n = x_nchw.shape[0]
    x = x_nchw.astype(jnp.bfloat16)                                    # (N, 3, 32, 32)
    x = conv5x5_pool2(x, p["w1"], p["b1"])                             # (N, 32, 256)
    x = conv5x5_pool2(x.reshape(n, 32, 16, 16), p["w2"], p["b2"])      # (N, 32, 64)
    x = conv5x5_pool2(x.reshape(n, 32, 8, 8), p["w3"], p["b3"])        # (N, 64, 16)
    x = x.reshape(n, 1024)        # channels-major == PyTorch Flatten on NCHW
    return mlp(x, p["wl1"], p["bl1"], p["wl2"], p["bl2"])              # (N, 10) f32


# ----------------------------- pure-XLA reference --------------------------------
def reference_forward(x, tp):
    """XLA reference with the same bf16 rounding points as the Pallas pipeline."""
    hi = jax.lax.Precision.HIGHEST
    rnd = lambda v: v.astype(jnp.bfloat16).astype(jnp.float32)

    def conv(a, w, b):
        y = jax.lax.conv_general_dilated(
            rnd(a), rnd(w), (1, 1), ((2, 2), (2, 2)),
            dimension_numbers=("NCHW", "OIHW", "NCHW"), precision=hi)
        return y + b.reshape(1, -1, 1, 1)

    def pool(y):
        n, c, h, w = y.shape
        return y.reshape(n, c, h // 2, 2, w // 2, 2).max(axis=(3, 5))

    a = rnd(pool(conv(x, tp["w1"], tp["b1"])))
    a = rnd(pool(conv(a, tp["w2"], tp["b2"])))
    a = rnd(pool(conv(a, tp["w3"], tp["b3"])))
    flat = a.reshape(a.shape[0], -1)
    h = rnd(jnp.dot(flat, rnd(tp["wl1"]).T, precision=hi) + tp["bl1"])
    return jnp.dot(h, rnd(tp["wl2"]).T, precision=hi) + tp["bl2"]


if __name__ == "__main__":
    key = jax.random.PRNGKey(0)
    pkey, xkey = jax.random.split(key)
    torch_params = init_params(pkey)
    params = prepare_params(torch_params)
    # PyTorch-convention NCHW input; 3x32x32 spatial is what Linear(1024, 64) implies.
    x = jax.random.normal(xkey, (2, 3, 32, 32), jnp.float32)

    out = jax.jit(forward)(x, params)
    out = jax.block_until_ready(out)
    assert out.shape == (2, 10) and out.dtype == jnp.float32

    ref = jax.block_until_ready(jax.jit(reference_forward)(x, torch_params))
    assert jnp.allclose(out, ref, rtol=1e-2, atol=1e-2), (out, ref)
    print("KERNEL_OK")
</pallas_src>

<mosaic_0001>
module attributes {stable_mosaic.version = 11 : i64} {
  func.func @_conv_pool_kernel(%arg0: i32, %arg1: memref<1x4x75x256xbf16, #tpu.memory_space<vmem>>, %arg2: memref<32x75xbf16, #tpu.memory_space<vmem>>, %arg3: memref<32x1xf32, #tpu.memory_space<vmem>>, %arg4: memref<1x32x256xbf16, #tpu.memory_space<vmem>>) attributes {dimension_semantics = [#tpu.dimension_semantics<parallel>], iteration_bounds = array<i64: 2>, scalar_prefetch = 0 : i64, scratch_operands = 0 : i64, tpu.core_type = #tpu.core_type<tc>, window_params = [{transform_indices = @transform_0, window_bounds = array<i64: 1, 4, 75, 256>}, {pipeline_mode = #tpu.pipeline_mode<synchronous>, transform_indices = @transform_1, window_bounds = array<i64: 32, 75>}, {pipeline_mode = #tpu.pipeline_mode<synchronous>, transform_indices = @transform_2, window_bounds = array<i64: 32, 1>}, {transform_indices = @transform_3, window_bounds = array<i64: 1, 32, 256>}]} {
    %c0 = arith.constant 0 : index
    %c0_0 = arith.constant 0 : index
    %0 = vector.load %arg2[%c0, %c0_0] : memref<32x75xbf16, #tpu.memory_space<vmem>>, vector<32x75xbf16>
    %c0_1 = arith.constant 0 : index
    %c0_2 = arith.constant 0 : index
    %c0_3 = arith.constant 0 : index
    %c0_4 = arith.constant 0 : index
    %1 = vector.load %arg1[%c0_1, %c0_2, %c0_3, %c0_4] : memref<1x4x75x256xbf16, #tpu.memory_space<vmem>>, vector<1x1x75x256xbf16>
    %2 = vector.shape_cast %1 : vector<1x1x75x256xbf16> to vector<75x256xbf16>
    %cst = arith.constant dense<0.000000e+00> : vector<32x256xf32>
    %3 = tpu.matmul %0, %2, %cst {dimension_numbers = #tpu.dot_dimension_numbers<[1], [0], [0], [1], [0, 0, 1, 1], [], []>} : vector<32x75xbf16>, vector<75x256xbf16>, vector<32x256xf32> -> vector<32x256xf32>
    %c0_5 = arith.constant 0 : index
    %c1 = arith.constant 1 : index
    %c0_6 = arith.constant 0 : index
    %c0_7 = arith.constant 0 : index
    %4 = vector.load %arg1[%c0_5, %c1, %c0_6, %c0_7] : memref<1x4x75x256xbf16, #tpu.memory_space<vmem>>, vector<1x1x75x256xbf16>
    %5 = vector.shape_cast %4 : vector<1x1x75x256xbf16> to vector<75x256xbf16>
    %cst_8 = arith.constant dense<0.000000e+00> : vector<32x256xf32>
    %6 = tpu.matmul %0, %5, %cst_8 {dimension_numbers = #tpu.dot_dimension_numbers<[1], [0], [0], [1], [0, 0, 1, 1], [], []>} : vector<32x75xbf16>, vector<75x256xbf16>, vector<32x256xf32> -> vector<32x256xf32>
    %c0_9 = arith.constant 0 : index
    %c2 = arith.constant 2 : index
    %c0_10 = arith.constant 0 : index
    %c0_11 = arith.constant 0 : index
    %7 = vector.load %arg1[%c0_9, %c2, %c0_10, %c0_11] : memref<1x4x75x256xbf16, #tpu.memory_space<vmem>>, vector<1x1x75x256xbf16>
    %8 = vector.shape_cast %7 : vector<1x1x75x256xbf16> to vector<75x256xbf16>
    %cst_12 = arith.constant dense<0.000000e+00> : vector<32x256xf32>
    %9 = tpu.matmul %0, %8, %cst_12 {dimension_numbers = #tpu.dot_dimension_numbers<[1], [0], [0], [1], [0, 0, 1, 1], [], []>} : vector<32x75xbf16>, vector<75x256xbf16>, vector<32x256xf32> -> vector<32x256xf32>
    %c0_13 = arith.constant 0 : index
    %c3 = arith.constant 3 : index
    %c0_14 = arith.constant 0 : index
    %c0_15 = arith.constant 0 : index
    %10 = vector.load %arg1[%c0_13, %c3, %c0_14, %c0_15] : memref<1x4x75x256xbf16, #tpu.memory_space<vmem>>, vector<1x1x75x256xbf16>
    %11 = vector.shape_cast %10 : vector<1x1x75x256xbf16> to vector<75x256xbf16>
    %cst_16 = arith.constant dense<0.000000e+00> : vector<32x256xf32>
    %12 = tpu.matmul %0, %11, %cst_16 {dimension_numbers = #tpu.dot_dimension_numbers<[1], [0], [0], [1], [0, 0, 1, 1], [], []>} : vector<32x75xbf16>, vector<75x256xbf16>, vector<32x256xf32> -> vector<32x256xf32>
    %13 = arith.maximumf %3, %6 : vector<32x256xf32>
    %14 = arith.maximumf %9, %12 : vector<32x256xf32>
    %15 = arith.maximumf %13, %14 : vector<32x256xf32>
    %c0_17 = arith.constant 0 : index
    %c0_18 = arith.constant 0 : index
    %16 = vector.load %arg3[%c0_17, %c0_18] : memref<32x1xf32, #tpu.memory_space<vmem>>, vector<32x1xf32>
    %17 = vector.broadcast %16 : vector<32x1xf32> to vector<32x256xf32>
    %18 = arith.addf %15, %17 : vector<32x256xf32>
    %19 = arith.truncf %18 : vector<32x256xf32> to vector<32x256xbf16>
    %c0_19 = arith.constant 0 : index
    %c0_20 = arith.constant 0 : index
    %c0_21 = arith.constant 0 : index
    %20 = vector.load %arg4[%c0_19, %c0_20, %c0_21] : memref<1x32x256xbf16, #tpu.memory_space<vmem>>, vector<1x32x256xbf16>
    %21 = vector.shape_cast %20 : vector<1x32x256xbf16> to vector<32x256xbf16>
    %22 = vector.shape_cast %19 : vector<32x256xbf16> to vector<1x32x256xbf16>
    tpu.vector_store %arg4[%c0_19, %c0_20, %c0_21], %22 {strides = array<i32>} : memref<1x32x256xbf16, #tpu.memory_space<vmem>>, vector<1x32x256xbf16>,
    return
  }
  func.func @transform_0(%arg0: i32) -> (i32, i32, i32, i32) {
    %c0_i32 = arith.constant 0 : i32
    %c0_i32_0 = arith.constant 0 : i32
    %c0_i32_1 = arith.constant 0 : i32
    %c0_i32_2 = arith.constant 0 : i32
    return %arg0, %c0_i32, %c0_i32_0, %c0_i32_1 : i32, i32, i32, i32
  }
  func.func @transform_1(%arg0: i32) -> (i32, i32) {
    %c0_i32 = arith.constant 0 : i32
    %c0_i32_0 = arith.constant 0 : i32
    %c0_i32_1 = arith.constant 0 : i32
    return %c0_i32, %c0_i32_0 : i32, i32
  }
  func.func @transform_2(%arg0: i32) -> (i32, i32) {
    %c0_i32 = arith.constant 0 : i32
    %c0_i32_0 = arith.constant 0 : i32
    %c0_i32_1 = arith.constant 0 : i32
    return %c0_i32, %c0_i32_0 : i32, i32
  }
  func.func @transform_3(%arg0: i32) -> (i32, i32, i32) {
    %c0_i32 = arith.constant 0 : i32
    %c0_i32_0 = arith.constant 0 : i32
    %c0_i32_1 = arith.constant 0 : i32
    return %arg0, %c0_i32, %c0_i32_0 : i32, i32, i32
  }
}

module attributes {stable_mosaic.version = 11 : i64} {
  func.func @_conv_pool_kernel(%arg0: i32, %arg1: memref<1x4x800x64xbf16, #tpu.memory_space<vmem>>, %arg2: memref<32x800xbf16, #tpu.memory_space<vmem>>, %arg3: memref<32x1xf32, #tpu.memory_space<vmem>>, %arg4: memref<1x32x64xbf16, #tpu.memory_space<vmem>>) attributes {dimension_semantics = [#tpu.dimension_semantics<parallel>], iteration_bounds = array<i64: 2>, scalar_prefetch = 0 : i64, scratch_operands = 0 : i64, tpu.core_type = #tpu.core_type<tc>, window_params = [{transform_indices = @transform_0, window_bounds = array<i64: 1, 4, 800, 64>}, {pipeline_mode = #tpu.pipeline_mode<synchronous>, transform_indices = @transform_1, window_bounds = array<i64: 32, 800>}, {pipeline_mode = #tpu.pipeline_mode<synchronous>, transform_indices = @transform_2, window_bounds = array<i64: 32, 1>}, {transform_indices = @transform_3, window_bounds = array<i64: 1, 32, 64>}]} {
    %c0 = arith.constant 0 : index
    %c0_0 = arith.constant 0 : index
    %0 = vector.load %arg2[%c0, %c0_0] : memref<32x800xbf16, #tpu.memory_space<vmem>>, vector<32x800xbf16>
    %c0_1 = arith.constant 0 : index
    %c0_2 = arith.constant 0 : index
    %c0_3 = arith.constant 0 : index
    %c0_4 = arith.constant 0 : index
    %1 = vector.load %arg1[%c0_1, %c0_2, %c0_3, %c0_4] : memref<1x4x800x64xbf16, #tpu.memory_space<vmem>>, vector<1x1x800x64xbf16>
    %2 = vector.shape_cast %1 : vector<1x1x800x64xbf16> to vector<800x64xbf16>
    %cst = arith.constant dense<0.000000e+00> : vector<32x64xf32>
    %3 = tpu.matmul %0, %2, %cst {dimension_numbers = #tpu.dot_dimension_numbers<[1], [0], [0], [1], [0, 0, 1, 1], [], []>} : vector<32x800xbf16>, vector<800x64xbf16>, vector<32x64xf32> -> vector<32x64xf32>
    %c0_5 = arith.constant 0 : index
    %c1 = arith.constant 1 : index
    %c0_6 = arith.constant 0 : index
    %c0_7 = arith.constant 0 : index
    %4 = vector.load %arg1[%c0_5, %c1, %c0_6, %c0_7] : memref<1x4x800x64xbf16, #tpu.memory_space<vmem>>, vector<1x1x800x64xbf16>
    %5 = vector.shape_cast %4 : vector<1x1x800x64xbf16> to vector<800x64xbf16>
    %cst_8 = arith.constant dense<0.000000e+00> : vector<32x64xf32>
    %6 = tpu.matmul %0, %5, %cst_8 {dimension_numbers = #tpu.dot_dimension_numbers<[1], [0], [0], [1], [0, 0, 1, 1], [], []>} : vector<32x800xbf16>, vector<800x64xbf16>, vector<32x64xf32> -> vector<32x64xf32>
    %c0_9 = arith.constant 0 : index
    %c2 = arith.constant 2 : index
    %c0_10 = arith.constant 0 : index
    %c0_11 = arith.constant 0 : index
    %7 = vector.load %arg1[%c0_9, %c2, %c0_10, %c0_11] : memref<1x4x800x64xbf16, #tpu.memory_space<vmem>>, vector<1x1x800x64xbf16>
    %8 = vector.shape_cast %7 : vector<1x1x800x64xbf16> to vector<800x64xbf16>
    %cst_12 = arith.constant dense<0.000000e+00> : vector<32x64xf32>
    %9 = tpu.matmul %0, %8, %cst_12 {dimension_numbers = #tpu.dot_dimension_numbers<[1], [0], [0], [1], [0, 0, 1, 1], [], []>} : vector<32x800xbf16>, vector<800x64xbf16>, vector<32x64xf32> -> vector<32x64xf32>
    %c0_13 = arith.constant 0 : index
    %c3 = arith.constant 3 : index
    %c0_14 = arith.constant 0 : index
    %c0_15 = arith.constant 0 : index
    %10 = vector.load %arg1[%c0_13, %c3, %c0_14, %c0_15] : memref<1x4x800x64xbf16, #tpu.memory_space<vmem>>, vector<1x1x800x64xbf16>
    %11 = vector.shape_cast %10 : vector<1x1x800x64xbf16> to vector<800x64xbf16>
    %cst_16 = arith.constant dense<0.000000e+00> : vector<32x64xf32>
    %12 = tpu.matmul %0, %11, %cst_16 {dimension_numbers = #tpu.dot_dimension_numbers<[1], [0], [0], [1], [0, 0, 1, 1], [], []>} : vector<32x800xbf16>, vector<800x64xbf16>, vector<32x64xf32> -> vector<32x64xf32>
    %13 = arith.maximumf %3, %6 : vector<32x64xf32>
    %14 = arith.maximumf %9, %12 : vector<32x64xf32>
    %15 = arith.maximumf %13, %14 : vector<32x64xf32>
    %c0_17 = arith.constant 0 : index
    %c0_18 = arith.constant 0 : index
    %16 = vector.load %arg3[%c0_17, %c0_18] : memref<32x1xf32, #tpu.memory_space<vmem>>, vector<32x1xf32>
    %17 = vector.broadcast %16 : vector<32x1xf32> to vector<32x64xf32>
    %18 = arith.addf %15, %17 : vector<32x64xf32>
    %19 = arith.truncf %18 : vector<32x64xf32> to vector<32x64xbf16>
    %c0_19 = arith.constant 0 : index
    %c0_20 = arith.constant 0 : index
    %c0_21 = arith.constant 0 : index
    %20 = vector.load %arg4[%c0_19, %c0_20, %c0_21] : memref<1x32x64xbf16, #tpu.memory_space<vmem>>, vector<1x32x64xbf16>
    %21 = vector.shape_cast %20 : vector<1x32x64xbf16> to vector<32x64xbf16>
    %22 = vector.shape_cast %19 : vector<32x64xbf16> to vector<1x32x64xbf16>
    tpu.vector_store %arg4[%c0_19, %c0_20, %c0_21], %22 {strides = array<i32>} : memref<1x32x64xbf16, #tpu.memory_space<vmem>>, vector<1x32x64xbf16>,
    return
  }
  func.func @transform_0(%arg0: i32) -> (i32, i32, i32, i32) {
    %c0_i32 = arith.constant 0 : i32
    %c0_i32_0 = arith.constant 0 : i32
    %c0_i32_1 = arith.constant 0 : i32
    %c0_i32_2 = arith.constant 0 : i32
    return %arg0, %c0_i32, %c0_i32_0, %c0_i32_1 : i32, i32, i32, i32
  }
  func.func @transform_1(%arg0: i32) -> (i32, i32) {
    %c0_i32 = arith.constant 0 : i32
    %c0_i32_0 = arith.constant 0 : i32
    %c0_i32_1 = arith.constant 0 : i32
    return %c0_i32, %c0_i32_0 : i32, i32
  }
  func.func @transform_2(%arg0: i32) -> (i32, i32) {
    %c0_i32 = arith.constant 0 : i32
    %c0_i32_0 = arith.constant 0 : i32
    %c0_i32_1 = arith.constant 0 : i32
    return %c0_i32, %c0_i32_0 : i32, i32
  }
  func.func @transform_3(%arg0: i32) -> (i32, i32, i32) {
    %c0_i32 = arith.constant 0 : i32
    %c0_i32_0 = arith.constant 0 : i32
    %c0_i32_1 = arith.constant 0 : i32
    return %arg0, %c0_i32, %c0_i32_0 : i32, i32, i32
  }
}

module attributes {stable_mosaic.version = 11 : i64} {
  func.func @_conv_pool_kernel(%arg0: i32, %arg1: memref<1x4x800x16xbf16, #tpu.memory_space<vmem>>, %arg2: memref<64x800xbf16, #tpu.memory_space<vmem>>, %arg3: memref<64x1xf32, #tpu.memory_space<vmem>>, %arg4: memref<1x64x16xbf16, #tpu.memory_space<vmem>>) attributes {dimension_semantics = [#tpu.dimension_semantics<parallel>], iteration_bounds = array<i64: 2>, scalar_prefetch = 0 : i64, scratch_operands = 0 : i64, tpu.core_type = #tpu.core_type<tc>, window_params = [{transform_indices = @transform_0, window_bounds = array<i64: 1, 4, 800, 16>}, {pipeline_mode = #tpu.pipeline_mode<synchronous>, transform_indices = @transform_1, window_bounds = array<i64: 64, 800>}, {pipeline_mode = #tpu.pipeline_mode<synchronous>, transform_indices = @transform_2, window_bounds = array<i64: 64, 1>}, {transform_indices = @transform_3, window_bounds = array<i64: 1, 64, 16>}]} {
    %c0 = arith.constant 0 : index
    %c0_0 = arith.constant 0 : index
    %0 = vector.load %arg2[%c0, %c0_0] : memref<64x800xbf16, #tpu.memory_space<vmem>>, vector<64x800xbf16>
    %c0_1 = arith.constant 0 : index
    %c0_2 = arith.constant 0 : index
    %c0_3 = arith.constant 0 : index
    %c0_4 = arith.constant 0 : index
    %1 = vector.load %arg1[%c0_1, %c0_2, %c0_3, %c0_4] : memref<1x4x800x16xbf16, #tpu.memory_space<vmem>>, vector<1x1x800x16xbf16>
    %2 = vector.shape_cast %1 : vector<1x1x800x16xbf16> to vector<800x16xbf16>
    %cst = arith.constant dense<0.000000e+00> : vector<64x16xf32>
    %3 = tpu.matmul %0, %2, %cst {dimension_numbers = #tpu.dot_dimension_numbers<[1], [0], [0], [1], [0, 0, 1, 1], [], []>} : vector<64x800xbf16>, vector<800x16xbf16>, vector<64x16xf32> -> vector<64x16xf32>
    %c0_5 = arith.constant 0 : index
    %c1 = arith.constant 1 : index
    %c0_6 = arith.constant 0 : index
    %c0_7 = arith.constant 0 : index
    %4 = vector.load %arg1[%c0_5, %c1, %c0_6, %c0_7] : memref<1x4x800x16xbf16, #tpu.memory_space<vmem>>, vector<1x1x800x16xbf16>
    %5 = vector.shape_cast %4 : vector<1x1x800x16xbf16> to vector<800x16xbf16>
    %cst_8 = arith.constant dense<0.000000e+00> : vector<64x16xf32>
    %6 = tpu.matmul %0, %5, %cst_8 {dimension_numbers = #tpu.dot_dimension_numbers<[1], [0], [0], [1], [0, 0, 1, 1], [], []>} : vector<64x800xbf16>, vector<800x16xbf16>, vector<64x16xf32> -> vector<64x16xf32>
    %c0_9 = arith.constant 0 : index
    %c2 = arith.constant 2 : index
    %c0_10 = arith.constant 0 : index
    %c0_11 = arith.constant 0 : index
    %7 = vector.load %arg1[%c0_9, %c2, %c0_10, %c0_11] : memref<1x4x800x16xbf16, #tpu.memory_space<vmem>>, vector<1x1x800x16xbf16>
    %8 = vector.shape_cast %7 : vector<1x1x800x16xbf16> to vector<800x16xbf16>
    %cst_12 = arith.constant dense<0.000000e+00> : vector<64x16xf32>
    %9 = tpu.matmul %0, %8, %cst_12 {dimension_numbers = #tpu.dot_dimension_numbers<[1], [0], [0], [1], [0, 0, 1, 1], [], []>} : vector<64x800xbf16>, vector<800x16xbf16>, vector<64x16xf32> -> vector<64x16xf32>
    %c0_13 = arith.constant 0 : index
    %c3 = arith.constant 3 : index
    %c0_14 = arith.constant 0 : index
    %c0_15 = arith.constant 0 : index
    %10 = vector.load %arg1[%c0_13, %c3, %c0_14, %c0_15] : memref<1x4x800x16xbf16, #tpu.memory_space<vmem>>, vector<1x1x800x16xbf16>
    %11 = vector.shape_cast %10 : vector<1x1x800x16xbf16> to vector<800x16xbf16>
    %cst_16 = arith.constant dense<0.000000e+00> : vector<64x16xf32>
    %12 = tpu.matmul %0, %11, %cst_16 {dimension_numbers = #tpu.dot_dimension_numbers<[1], [0], [0], [1], [0, 0, 1, 1], [], []>} : vector<64x800xbf16>, vector<800x16xbf16>, vector<64x16xf32> -> vector<64x16xf32>
    %13 = arith.maximumf %3, %6 : vector<64x16xf32>
    %14 = arith.maximumf %9, %12 : vector<64x16xf32>
    %15 = arith.maximumf %13, %14 : vector<64x16xf32>
    %c0_17 = arith.constant 0 : index
    %c0_18 = arith.constant 0 : index
    %16 = vector.load %arg3[%c0_17, %c0_18] : memref<64x1xf32, #tpu.memory_space<vmem>>, vector<64x1xf32>
    %17 = vector.broadcast %16 : vector<64x1xf32> to vector<64x16xf32>
    %18 = arith.addf %15, %17 : vector<64x16xf32>
    %19 = arith.truncf %18 : vector<64x16xf32> to vector<64x16xbf16>
    %c0_19 = arith.constant 0 : index
    %c0_20 = arith.constant 0 : index
    %c0_21 = arith.constant 0 : index
    %20 = vector.load %arg4[%c0_19, %c0_20, %c0_21] : memref<1x64x16xbf16, #tpu.memory_space<vmem>>, vector<1x64x16xbf16>
    %21 = vector.shape_cast %20 : vector<1x64x16xbf16> to vector<64x16xbf16>
    %22 = vector.shape_cast %19 : vector<64x16xbf16> to vector<1x64x16xbf16>
    tpu.vector_store %arg4[%c0_19, %c0_20, %c0_21], %22 {strides = array<i32>} : memref<1x64x16xbf16, #tpu.memory_space<vmem>>, vector<1x64x16xbf16>,
    return
  }
  func.func @transform_0(%arg0: i32) -> (i32, i32, i32, i32) {
    %c0_i32 = arith.constant 0 : i32
    %c0_i32_0 = arith.constant 0 : i32
    %c0_i32_1 = arith.constant 0 : i32
    %c0_i32_2 = arith.constant 0 : i32
    return %arg0, %c0_i32, %c0_i32_0, %c0_i32_1 : i32, i32, i32, i32
  }
  func.func @transform_1(%arg0: i32) -> (i32, i32) {
    %c0_i32 = arith.constant 0 : i32
    %c0_i32_0 = arith.constant 0 : i32
    %c0_i32_1 = arith.constant 0 : i32
    return %c0_i32, %c0_i32_0 : i32, i32
  }
  func.func @transform_2(%arg0: i32) -> (i32, i32) {
    %c0_i32 = arith.constant 0 : i32
    %c0_i32_0 = arith.constant 0 : i32
    %c0_i32_1 = arith.constant 0 : i32
    return %c0_i32, %c0_i32_0 : i32, i32
  }
  func.func @transform_3(%arg0: i32) -> (i32, i32, i32) {
    %c0_i32 = arith.constant 0 : i32
    %c0_i32_0 = arith.constant 0 : i32
    %c0_i32_1 = arith.constant 0 : i32
    return %arg0, %c0_i32, %c0_i32_0 : i32, i32, i32
  }
}

module attributes {stable_mosaic.version = 11 : i64} {
  func.func @_mlp_kernel(%arg0: memref<2x1024xbf16, #tpu.memory_space<vmem>>, %arg1: memref<1024x64xbf16, #tpu.memory_space<vmem>>, %arg2: memref<1x64xf32, #tpu.memory_space<vmem>>, %arg3: memref<64x10xbf16, #tpu.memory_space<vmem>>, %arg4: memref<1x10xf32, #tpu.memory_space<vmem>>, %arg5: memref<2x10xf32, #tpu.memory_space<vmem>>) attributes {dimension_semantics = [], scalar_prefetch = 0 : i64, scratch_operands = 0 : i64, tpu.core_type = #tpu.core_type<tc>} {
    %c0 = arith.constant 0 : index
    %c0_0 = arith.constant 0 : index
    %0 = vector.load %arg0[%c0, %c0_0] : memref<2x1024xbf16, #tpu.memory_space<vmem>>, vector<2x1024xbf16>
    %c0_1 = arith.constant 0 : index
    %c0_2 = arith.constant 0 : index
    %1 = vector.load %arg1[%c0_1, %c0_2] : memref<1024x64xbf16, #tpu.memory_space<vmem>>, vector<1024x64xbf16>
    %cst = arith.constant dense<0.000000e+00> : vector<2x64xf32>
    %2 = tpu.matmul %0, %1, %cst {dimension_numbers = #tpu.dot_dimension_numbers<[1], [0], [0], [1], [0, 0, 1, 1], [], []>} : vector<2x1024xbf16>, vector<1024x64xbf16>, vector<2x64xf32> -> vector<2x64xf32>
    %c0_3 = arith.constant 0 : index
    %c0_4 = arith.constant 0 : index
    %3 = vector.load %arg2[%c0_3, %c0_4] : memref<1x64xf32, #tpu.memory_space<vmem>>, vector<1x64xf32>
    %4 = vector.broadcast %3 : vector<1x64xf32> to vector<2x64xf32>
    %5 = arith.addf %2, %4 : vector<2x64xf32>
    %6 = arith.truncf %5 : vector<2x64xf32> to vector<2x64xbf16>
    %c0_5 = arith.constant 0 : index
    %c0_6 = arith.constant 0 : index
    %7 = vector.load %arg3[%c0_5, %c0_6] : memref<64x10xbf16, #tpu.memory_space<vmem>>, vector<64x10xbf16>
    %cst_7 = arith.constant dense<0.000000e+00> : vector<2x10xf32>
    %8 = tpu.matmul %6, %7, %cst_7 {dimension_numbers = #tpu.dot_dimension_numbers<[1], [0], [0], [1], [0, 0, 1, 1], [], []>} : vector<2x64xbf16>, vector<64x10xbf16>, vector<2x10xf32> -> vector<2x10xf32>
    %c0_8 = arith.constant 0 : index
    %c0_9 = arith.constant 0 : index
    %9 = vector.load %arg4[%c0_8, %c0_9] : memref<1x10xf32, #tpu.memory_space<vmem>>, vector<1x10xf32>
    %10 = vector.broadcast %9 : vector<1x10xf32> to vector<2x10xf32>
    %11 = arith.addf %8, %10 : vector<2x10xf32>
    %c0_10 = arith.constant 0 : index
    %c0_11 = arith.constant 0 : index
    %12 = vector.load %arg5[%c0_10, %c0_11] : memref<2x10xf32, #tpu.memory_space<vmem>>, vector<2x10xf32>
    tpu.vector_store %arg5[%c0_10, %c0_11], %11 {strides = array<i32>} : memref<2x10xf32, #tpu.memory_space<vmem>>, vector<2x10xf32>,
    return
  }
}

</mosaic_0001>

<llo_original>
// kernel: forward.4
$region0: #{forward.4}
  #allocation0 [shape = 'u32[]', space=smem, size = 0x4, offset = 0x4, fixed_abs, tag = 'smem constant byte address 0x4 - core index']
  #allocation1 [shape = 'u32[144,128]{1,0:T(1,128)}', space=vmem, size = 0x12000, scoped, tag = 'internal scratch']
  %s0 = inlined_call_operand.vmem [shape: bf16[2,4,75,256], index: 0, kind: input, shape index: {}]
  %s1 = inlined_call_operand.vmem [shape: bf16[32,75], index: 1, kind: input, shape index: {}]
  %s2 = inlined_call_operand.vmem [shape: f32[32,1], index: 2, kind: input, shape index: {}]
  %s3 = inlined_call_operand.vmem [shape: bf16[2,32,256], index: 3, kind: output, shape index: {}]
  %s4 = sld [smem:[#allocation0]]
  $region45: #{forward.4} parent=0
    _
  %s6 = ssub.s32 1, %s4
  %s7 = scalar_select 0, %s6, %s4
  loop: start=0, step=1, limit=4
  $region2: #{forward.4} parent=0 // loop_pre_header
    _
  $region3: #{forward.4} parent=0 // loop_header
    %s9 = sphi 0, %s13
    %p10 = scmp.ge.s32.totalorder %s9, 4
    %s19 = sphi 0, %s21
    %s22 = sphi 0, %s19
    %s23 = sphi 0, %s22
    %s39 = sphi 0, %s23
    %s43 = sphi 0, %s43
    %s45 = sphi 0, %s43
    %s46 = sphi 0, %s45
    %s60 = sphi 0, %s46
    %s64 = sphi 0, %s64
    %s66 = sphi 0, %s64
    %s67 = sphi 0, %s66
    %s81 = sphi 0, %s67
    %s87 = sphi 0, %s89
    %s90 = sphi 0, %s87
    %s91 = sphi 0, %s90
    %s107 = sphi 0, %s91
  $region4: #{forward.4} parent=0 // loop_header_branch
    %12 = sbr.rel (%p10) target = $region8
  $region5: #{forward.4} parent=0 // loop_body
    %s14 = ssub.s32 %s9, 1
    %s15 = ssub.s32 %s9, 2
    %s16 = sadd.s32 %s9, 1
    %s17 = ssub.s32 %s9, %s16
    %p18 = scmp.eq.s32.totalorder %s17, 0
    %s20 = sadd.s32 %s19, 1
    %s21 = scalar_select %p18, %s19, %s20
    %p24 = pneg %p18
    %p25 = scmp.eq.s32.totalorder %s9, 1
    %p26 = por %p24, %p25
    %p27 = scmp.ne.s32.totalorder %s19, %s22
    %p28 = scmp.eq.s32.totalorder %s9, 0
    %p29 = por %p27, %p28
    %p30 = scmp.ne.s32.totalorder %s19, %s22
    %p31 = scmp.eq.s32.totalorder %s14, 1
    %p32 = por %p30, %p31
    %p33 = scmp.ne.s32.totalorder %s22, %s23
    %p34 = scmp.eq.s32.totalorder %s14, 0
    %p35 = por %p33, %p34
    %p36 = scmp.ne.s32.totalorder %s22, %s23
    %p37 = scmp.eq.s32.totalorder %s15, 1
    %p38 = por %p36, %p37
    %p40 = scmp.ne.s32.totalorder %s23, %s39
    %p41 = scmp.eq.s32.totalorder %s15, 0
    %p42 = por %p40, %p41
    %s44 = sadd.s32 %s43, 1
    %p47 = scmp.eq.s32.totalorder %s9, 1
    %p48 = scmp.ne.s32.totalorder %s43, %s45
    %p49 = scmp.eq.s32.totalorder %s9, 0
    %p50 = por %p48, %p49
    %p51 = scmp.ne.s32.totalorder %s43, %s45
    %p52 = scmp.eq.s32.totalorder %s14, 1
    %p53 = por %p51, %p52
    %p54 = scmp.ne.s32.totalorder %s45, %s46
    %p55 = scmp.eq.s32.totalorder %s14, 0
    %p56 = por %p54, %p55
    %p57 = scmp.ne.s32.totalorder %s45, %s46
    %p58 = scmp.eq.s32.totalorder %s15, 1
    %p59 = por %p57, %p58
    %p61 = scmp.ne.s32.totalorder %s46, %s60
    %p62 = scmp.eq.s32.totalorder %s15, 0
    %p63 = por %p61, %p62
    %s65 = sadd.s32 %s64, 1
    %p68 = scmp.eq.s32.totalorder %s9, 1
    %p69 = scmp.ne.s32.totalorder %s64, %s66
    %p70 = scmp.eq.s32.totalorder %s9, 0
    %p71 = por %p69, %p70
    %p72 = scmp.ne.s32.totalorder %s64, %s66
    %p73 = scmp.eq.s32.totalorder %s14, 1
    %p74 = por %p72, %p73
    %p75 = scmp.ne.s32.totalorder %s66, %s67
    %p76 = scmp.eq.s32.totalorder %s14, 0
    %p77 = por %p75, %p76
    %p78 = scmp.ne.s32.totalorder %s66, %s67
    %p79 = scmp.eq.s32.totalorder %s15, 1
    %p80 = por %p78, %p79
    %p82 = scmp.ne.s32.totalorder %s67, %s81
    %p83 = scmp.eq.s32.totalorder %s15, 0
    %p84 = por %p82, %p83
    %s85 = ssub.s32 %s9, %s16
    %p86 = scmp.eq.s32.totalorder %s85, 0
    %s88 = sadd.s32 %s87, 1
    %s89 = scalar_select %p86, %s87, %s88
    %p92 = pneg %p86
    %p93 = scmp.eq.s32.totalorder %s9, 1
    %p94 = por %p92, %p93
    %p95 = scmp.ne.s32.totalorder %s87, %s90
    %p96 = scmp.eq.s32.totalorder %s9, 0
    %p97 = por %p95, %p96
    %p98 = scmp.ne.s32.totalorder %s87, %s90
    %p99 = scmp.eq.s32.totalorder %s14, 1
    %p100 = por %p98, %p99
    %p101 = scmp.ne.s32.totalorder %s90, %s91
    %p102 = scmp.eq.s32.totalorder %s14, 0
    %p103 = por %p101, %p102
    %p104 = scmp.ne.s32.totalorder %s90, %s91
    %p105 = scmp.eq.s32.totalorder %s15, 1
    %p106 = por %p104, %p105
    %p108 = scmp.ne.s32.totalorder %s91, %s107
    %p109 = scmp.eq.s32.totalorder %s15, 0
    %p110 = por %p108, %p109
    %p111 = scmp.le.s32.totalorder 1, %s9
    %p112 = scmp.lt.s32.totalorder %s9, 3
    %p113 = pnand %p111, %p112
    %p114 = pneg %p113
    // Predicated region
    $region9: #{forward.4} parent=5 // pred_check
      _
    $region10: #{forward.4} parent=5 // pred_check_branch
      %116 = sbr.rel (%p113) target = $region12
    $region11: #{forward.4} parent=5 // pred_region
      %s117 = ssub.s32 %s9, 1
      // Predicated region
      $region13: #{forward.4} parent=11 // pred_check
        %p118 = pneg %p56
      $region14: #{forward.4} parent=11 // pred_check_branch
        %120 = sbr.rel (%p118) target = $region16
      $region15: #{forward.4} parent=11 // pred_region
        _
      $region16: #{forward.4} parent=11 // pred_fallthru
        _
      // Predicated region
      $region17: #{forward.4} parent=11 // pred_check
        %p121 = pneg %p77
      $region18: #{forward.4} parent=11 // pred_check_branch
        %123 = sbr.rel (%p121) target = $region20
      $region19: #{forward.4} parent=11 // pred_region
        _
      $region20: #{forward.4} parent=11 // pred_fallthru
        _
    $region12: #{forward.4} parent=5 // pred_fallthru
      _
    %p124 = scmp.lt.s32.totalorder %s9, 2
    // Predicated region
    $region21: #{forward.4} parent=5 // pred_check
      %p125 = pneg %p124
    $region22: #{forward.4} parent=5 // pred_check_branch
      %127 = sbr.rel (%p125) target = $region24
    $region23: #{forward.4} parent=5 // pred_region
      // Predicated region
      $region25: #{forward.4} parent=23 // pred_check
        %p128 = pneg %p29
      $region26: #{forward.4} parent=23 // pred_check_branch
        %130 = sbr.rel (%p128) target = $region28
      $region27: #{forward.4} parent=23 // pred_region
        %p131 = scmp.lt.s32.totalorder %s9, 1
        %s132 = scalar_select %p131, %s9, 1
        %s133 = smul.addr %s132, 80
        %s134 = smul.addr %s133, 4
        %s135 = scalar_lea.vmem %s0, %s134
      $region28: #{forward.4} parent=23 // pred_fallthru
        _
    $region24: #{forward.4} parent=5 // pred_fallthru
      _
    %p136 = scmp.le.s32.totalorder 1, %s9
    %p137 = scmp.lt.s32.totalorder %s9, 3
    %p138 = pnand %p136, %p137
    %p139 = pneg %p138
    // Predicated region
    $region29: #{forward.4} parent=5 // pred_check
      _
    $region30: #{forward.4} parent=5 // pred_check_branch
      %141 = sbr.rel (%p138) target = $region32
    $region31: #{forward.4} parent=5 // pred_region
      %s142 = ssub.s32 %s9, 1
      %p143 = scmp.lt.s32.totalorder %s14, 1
      %s144 = scalar_select %p143, %s14, 1
      %s145 = smul.addr %s144, 80
      %s146 = smul.addr %s145, 4
      %s147 = scalar_lea.vmem %s0, %s146
      %p148 = pneg %p35
      %p149 = pneg %p32
      %p150 = pneg %p56
      %p151 = pneg %p53
      %p152 = pneg %p77
      %p153 = pneg %p74
      %p154 = pneg %p103
      %p155 = pneg %p100
      %p156 = scmp.lt.s32.totalorder %s14, 1
      %s157 = scalar_select %p156, %s14, 1
      %s158 = smul.addr %s157, 8
      %s159 = smul.addr %s158, 4
      %s160 = scalar_lea.vmem %s3, %s159
      %p161 = scmp.lt.s32.totalorder %s14, 1
      %s162 = scalar_select %p161, %s14, 1
      %s163 = smul.addr %s162, 80
      %s164 = smul.addr %s163, 4
      %s165 = scalar_lea.vmem %s0, %s164
      %p166 = scmp.lt.s32.totalorder %s14, 1
      %s167 = scalar_select %p166, %s14, 1
      %s168 = smul.addr %s167, 8
      %s169 = smul.addr %s168, 4
      %s170 = scalar_lea.vmem %s3, %s169
      %v172 = vld [vmem:[%s1] sm:$0xf]
      %v173 = vld [vmem:[%s1 + $0x4] sm:$0xf]
      %v174 = vld [vmem:[%s1 + $0x8] sm:$0xf]
      %v175 = vld [vmem:[%s1 + $0xc] sm:$0xf]
      %v176 = vld [vmem:[%s165] sm:$0xff]
      %v177 = vld [vmem:[%s165 + $0x8] sm:$0xff]
      %v178 = vld [vmem:[%s165 + $0x10] sm:$0xff]
      %v179 = vld [vmem:[%s165 + $0x18] sm:$0xff]
      %v180 = vld [vmem:[%s165 + $0x20] sm:$0xff]
      %v181 = vld [vmem:[%s165 + $0x28] sm:$0xff]
      %v182 = vld [vmem:[%s165 + $0x30] sm:$0xff]
      %v183 = vld [vmem:[%s165 + $0x38] sm:$0xff]
      %v184 = vld [vmem:[%s165 + $0x40] sm:$0xff]
      %v185 = vld [vmem:[%s165 + $0x48] sm:$0x33]
      %v190 = vunpack.c.l.b16 %v172
      %v191 = vunpack.c.l.b16 %v173
      %v192 = vunpack.c.l.b16 %v174
      %v193 = vunpack.c.l.b16 %v175
      %v194 = vpack.c.b16 %v191, %v190
      %v195 = vpack.c.b16 %v193, %v192
      %v206 = vunpack.c.l.b16 %v176
      %v207 = vunpack.c.h.b16 %v176
      %v208 = vunpack.c.l.b16 %v177
      %v209 = vunpack.c.h.b16 %v177
      %v210 = vunpack.c.l.b16 %v178
      %v211 = vunpack.c.h.b16 %v178
      %v212 = vunpack.c.l.b16 %v179
      %v213 = vunpack.c.h.b16 %v179
      %v214 = vunpack.c.l.b16 %v180
      %v215 = vunpack.c.h.b16 %v180
      %v216 = vunpack.c.l.b16 %v181
      %v217 = vunpack.c.h.b16 %v181
      %v218 = vunpack.c.l.b16 %v182
      %v219 = vunpack.c.h.b16 %v182
      %v220 = vunpack.c.l.b16 %v183
      %v221 = vunpack.c.h.b16 %v183
      %v222 = vunpack.c.l.b16 %v184
      %v223 = vunpack.c.h.b16 %v184
      %v224 = vunpack.c.l.b16 %v185
      %v225 = vunpack.c.h.b16 %v185
      %v226 = vpack.c.b16 %v208, %v206
      %v227 = vpack.c.b16 %v209, %v207
      %v228 = vpack.c.b16 %v212, %v210
      %v229 = vpack.c.b16 %v213, %v211
      %v230 = vpack.c.b16 %v216, %v214
      %v231 = vpack.c.b16 %v217, %v215
      %v232 = vpack.c.b16 %v220, %v218
      %v233 = vpack.c.b16 %v221, %v219
      %v234 = vpack.c.b16 %v224, %v222
      %v235 = vpack.c.b16 %v225, %v223
      %vm244 = vcmask 613376
      %v246 = vsel %vm244, %v194, 0
      %v249 = vsel %vm244, %v195, 0
      %vm251 = vcmask 1044480
      %vm252 = vcmask 1045504
      %v253 = vsel %vm251, 4294967295, 65535
      %v254 = vsel %vm252, %v253, 0
      %v256 = vand.u32 %v234, %v254
      %v259 = vand.u32 %v235, %v254
      %261 = vmatprep.subr.bf16.mxu0 0
      %262 = vmatpush1.bf16.msra.mxu0 0
      %263 = vmatprep.subr.bf16.mxu0 0
      %264 = vmatpush1.bf16.msra.mxu0 0
      %265 = vmatprep.subr.bf16.mxu0 0
      %266 = vmatpush1.bf16.msra.mxu0 0
      %267 = vmatprep.subr.bf16.mxu0 %v259
      %268 = vmatpush1.bf16.msra.mxu0 %v256
      %269 = vmatprep.subr.bf16.mxu0 %v233
      %270 = vmatpush1.bf16.msra.mxu0 %v232
      %271 = vmatprep.subr.bf16.mxu0 %v231
      %272 = vmatpush1.bf16.msra.mxu0 %v230
      %273 = vmatprep.subr.bf16.mxu0 %v229
      %274 = vmatpush1.bf16.msra.mxu0 %v228
      %275 = vmatprep.subr.bf16.mxu0 %v227
      %276 = vmatpush1.bf16.msra.mxu0 %v226
      %277 = vmatprep.subr.bf16.mxu0 0
      %278 = vmatpush2.bf16.msra.mxu0 0
      %279 = vmatprep.subr.bf16.mxu0 0
      %280 = vmatpush2.bf16.msra.mxu0 0
      %281 = vmatprep.subr.bf16.mxu0 0
      %282 = vmatpush2.bf16.msra.mxu0 0
      %283 = vmatprep.subr.bf16.mxu0 0
      %284 = vmatpush2.bf16.msra.mxu0 0
      %285 = vmatprep.subr.bf16.mxu0 0
      %286 = vmatpush2.bf16.msra.mxu0 0
      %287 = vmatprep.subr.bf16.mxu0 0
      %288 = vmatpush2.bf16.msra.mxu0 0
      %289 = vmatprep.subr.bf16.mxu0 0
      %290 = vmatpush2.bf16.msra.mxu0 0
      %291 = vmatprep.subr.bf16.mxu0 0
      %292 = vmatpush2.bf16.msra.mxu0 0
      %293 = vmatprep.mubr.bf16.mxu0 0
      %294 = vmatmul.mubr.bf16.gmra.mxu0 %v246
      %v295 = vpop.f32.mrf.mxu0
      %v296 = vadd.f32 0.0, %v295
      %v297 = vpop.f32.mrf.mxu0
      %v298 = vadd.f32 0.0, %v297
      %v299 = vpop.f32.mrf.mxu0
      %v300 = vadd.f32 0.0, %v299
      %v301 = vpop.f32.mrf.mxu0
      %v302 = vadd.f32 0.0, %v301
      %303 = vmatprep.mubr.bf16.mxu0 0
      %304 = vmatmul.mubr.bf16.gmra.mxu0 %v249
      %v305 = vpop.f32.mrf.mxu0
      %v306 = vadd.f32 0.0, %v305
      %v307 = vpop.f32.mrf.mxu0
      %v308 = vadd.f32 0.0, %v307
      %v309 = vpop.f32.mrf.mxu0
      %v310 = vadd.f32 0.0, %v309
      %v311 = vpop.f32.mrf.mxu0
      %v312 = vadd.f32 0.0, %v311
      %313 = vdwg.mxu0
      %s314 = scalar_lea.vmem %s165, 80
      %v315 = vld [vmem:[%s314] sm:$0xff]
      %v316 = vld [vmem:[%s314 + $0x8] sm:$0xff]
      %v317 = vld [vmem:[%s314 + $0x10] sm:$0xff]
      %v318 = vld [vmem:[%s314 + $0x18] sm:$0xff]
      %v319 = vld [vmem:[%s314 + $0x20] sm:$0xff]
      %v320 = vld [vmem:[%s314 + $0x28] sm:$0xff]
      %v321 = vld [vmem:[%s314 + $0x30] sm:$0xff]
      %v322 = vld [vmem:[%s314 + $0x38] sm:$0xff]
      %v323 = vld [vmem:[%s314 + $0x40] sm:$0xff]
      %v324 = vld [vmem:[%s314 + $0x48] sm:$0x33]
      %v335 = vunpack.c.l.b16 %v315
      %v336 = vunpack.c.h.b16 %v315
      %v337 = vunpack.c.l.b16 %v316
      %v338 = vunpack.c.h.b16 %v316
      %v339 = vunpack.c.l.b16 %v317
      %v340 = vunpack.c.h.b16 %v317
      %v341 = vunpack.c.l.b16 %v318
      %v342 = vunpack.c.h.b16 %v318
      %v343 = vunpack.c.l.b16 %v319
      %v344 = vunpack.c.h.b16 %v319
      %v345 = vunpack.c.l.b16 %v320
      %v346 = vunpack.c.h.b16 %v320
      %v347 = vunpack.c.l.b16 %v321
      %v348 = vunpack.c.h.b16 %v321
      %v349 = vunpack.c.l.b16 %v322
      %v350 = vunpack.c.h.b16 %v322
      %v351 = vunpack.c.l.b16 %v323
      %v352 = vunpack.c.h.b16 %v323
      %v353 = vunpack.c.l.b16 %v324
      %v354 = vunpack.c.h.b16 %v324
      %v355 = vpack.c.b16 %v337, %v335
      %v356 = vpack.c.b16 %v338, %v336
      %v357 = vpack.c.b16 %v341, %v339
      %v358 = vpack.c.b16 %v342, %v340
      %v359 = vpack.c.b16 %v345, %v343
      %v360 = vpack.c.b16 %v346, %v344
      %v361 = vpack.c.b16 %v349, %v347
      %v362 = vpack.c.b16 %v350, %v348
      %v363 = vpack.c.b16 %v353, %v351
      %v364 = vpack.c.b16 %v354, %v352
      %v374 = vand.u32 %v363, %v254
      %v377 = vand.u32 %v364, %v254
      %379 = vmatprep.subr.bf16.mxu0 0
      %380 = vmatpush1.bf16.msra.mxu0 0
      %381 = vmatprep.subr.bf16.mxu0 0
      %382 = vmatpush1.bf16.msra.mxu0 0
      %383 = vmatprep.subr.bf16.mxu0 0
      %384 = vmatpush1.bf16.msra.mxu0 0
      %385 = vmatprep.subr.bf16.mxu0 %v377
      %386 = vmatpush1.bf16.msra.mxu0 %v374
      %387 = vmatprep.subr.bf16.mxu0 %v362
      %388 = vmatpush1.bf16.msra.mxu0 %v361
      %389 = vmatprep.subr.bf16.mxu0 %v360
      %390 = vmatpush1.bf16.msra.mxu0 %v359
      %391 = vmatprep.subr.bf16.mxu0 %v358
      %392 = vmatpush1.bf16.msra.mxu0 %v357
      %393 = vmatprep.subr.bf16.mxu0 %v356
      %394 = vmatpush1.bf16.msra.mxu0 %v355
      %395 = vmatprep.subr.bf16.mxu0 0
      %396 = vmatpush2.bf16.msra.mxu0 0
      %397 = vmatprep.subr.bf16.mxu0 0
      %398 = vmatpush2.bf16.msra.mxu0 0
      %399 = vmatprep.subr.bf16.mxu0 0
      %400 = vmatpush2.bf16.msra.mxu0 0
      %401 = vmatprep.subr.bf16.mxu0 0
      %402 = vmatpush2.bf16.msra.mxu0 0
      %403 = vmatprep.subr.bf16.mxu0 0
      %404 = vmatpush2.bf16.msra.mxu0 0
      %405 = vmatprep.subr.bf16.mxu0 0
      %406 = vmatpush2.bf16.msra.mxu0 0
      %407 = vmatprep.subr.bf16.mxu0 0
      %408 = vmatpush2.bf16.msra.mxu0 0
      %409 = vmatprep.subr.bf16.mxu0 0
      %410 = vmatpush2.bf16.msra.mxu0 0
      %411 = vmatprep.mubr.bf16.mxu0 0
      %412 = vmatmul.mubr.bf16.gmra.mxu0 %v246
      %v413 = vpop.f32.mrf.mxu0
      %v414 = vadd.f32 0.0, %v413
      %v415 = vpop.f32.mrf.mxu0
      %v416 = vadd.f32 0.0, %v415
      %v417 = vpop.f32.mrf.mxu0
      %v418 = vadd.f32 0.0, %v417
      %v419 = vpop.f32.mrf.mxu0
      %v420 = vadd.f32 0.0, %v419
      %421 = vmatprep.mubr.bf16.mxu0 0
      %422 = vmatmul.mubr.bf16.gmra.mxu0 %v249
      %v423 = vpop.f32.mrf.mxu0
      %v424 = vadd.f32 0.0, %v423
      %v425 = vpop.f32.mrf.mxu0
      %v426 = vadd.f32 0.0, %v425
      %v427 = vpop.f32.mrf.mxu0
      %v428 = vadd.f32 0.0, %v427
      %v429 = vpop.f32.mrf.mxu0
      %v430 = vadd.f32 0.0, %v429
      %431 = vdwg.mxu0
      %s432 = scalar_lea.vmem %s165, 160
      %v433 = vld [vmem:[%s432] sm:$0xff]
      %v434 = vld [vmem:[%s432 + $0x8] sm:$0xff]
      %v435 = vld [vmem:[%s432 + $0x10] sm:$0xff]
      %v436 = vld [vmem:[%s432 + $0x18] sm:$0xff]
      %v437 = vld [vmem:[%s432 + $0x20] sm:$0xff]
      %v438 = vld [vmem:[%s432 + $0x28] sm:$0xff]
      %v439 = vld [vmem:[%s432 + $0x30] sm:$0xff]
      %v440 = vld [vmem:[%s432 + $0x38] sm:$0xff]
      %v441 = vld [vmem:[%s432 + $0x40] sm:$0xff]
      %v442 = vld [vmem:[%s432 + $0x48] sm:$0x33]
      %v453 = vunpack.c.l.b16 %v433
      %v454 = vunpack.c.h.b16 %v433
      %v455 = vunpack.c.l.b16 %v434
      %v456 = vunpack.c.h.b16 %v434
      %v457 = vunpack.c.l.b16 %v435
      %v458 = vunpack.c.h.b16 %v435
      %v459 = vunpack.c.l.b16 %v436
      %v460 = vunpack.c.h.b16 %v436
      %v461 = vunpack.c.l.b16 %v437
      %v462 = vunpack.c.h.b16 %v437
      %v463 = vunpack.c.l.b16 %v438
      %v464 = vunpack.c.h.b16 %v438
      %v465 = vunpack.c.l.b16 %v439
      %v466 = vunpack.c.h.b16 %v439
      %v467 = vunpack.c.l.b16 %v440
      %v468 = vunpack.c.h.b16 %v440
      %v469 = vunpack.c.l.b16 %v441
      %v470 = vunpack.c.h.b16 %v441
      %v471 = vunpack.c.l.b16 %v442
      %v472 = vunpack.c.h.b16 %v442
      %v473 = vpack.c.b16 %v455, %v453
      %v474 = vpack.c.b16 %v456, %v454
      %v475 = vpack.c.b16 %v459, %v457
      %v476 = vpack.c.b16 %v460, %v458
      %v477 = vpack.c.b16 %v463, %v461
      %v478 = vpack.c.b16 %v464, %v462
      %v479 = vpack.c.b16 %v467, %v465
      %v480 = vpack.c.b16 %v468, %v466
      %v481 = vpack.c.b16 %v471, %v469
      %v482 = vpack.c.b16 %v472, %v470
      %v492 = vand.u32 %v481, %v254
      %v495 = vand.u32 %v482, %v254
      %497 = vmatprep.subr.bf16.mxu0 0
      %498 = vmatpush1.bf16.msra.mxu0 0
      %499 = vmatprep.subr.bf16.mxu0 0
      %500 = vmatpush1.bf16.msra.mxu0 0
      %501 = vmatprep.subr.bf16.mxu0 0
      %502 = vmatpush1.bf16.msra.mxu0 0
      %503 = vmatprep.subr.bf16.mxu0 %v495
      %504 = vmatpush1.bf16.msra.mxu0 %v492
      %505 = vmatprep.subr.bf16.mxu0 %v480
      %506 = vmatpush1.bf16.msra.mxu0 %v479
      %507 = vmatprep.subr.bf16.mxu0 %v478
      %508 = vmatpush1.bf16.msra.mxu0 %v477
      %509 = vmatprep.subr.bf16.mxu0 %v476
      %510 = vmatpush1.bf16.msra.mxu0 %v475
      %511 = vmatprep.subr.bf16.mxu0 %v474
      %512 = vmatpush1.bf16.msra.mxu0 %v473
      %513 = vmatprep.subr.bf16.mxu0 0
      %514 = vmatpush2.bf16.msra.mxu0 0
      %515 = vmatprep.subr.bf16.mxu0 0
      %516 = vmatpush2.bf16.msra.mxu0 0
      %517 = vmatprep.subr.bf16.mxu0 0
      %518 = vmatpush2.bf16.msra.mxu0 0
      %519 = vmatprep.subr.bf16.mxu0 0
      %520 = vmatpush2.bf16.msra.mxu0 0
      %521 = vmatprep.subr.bf16.mxu0 0
      %522 = vmatpush2.bf16.msra.mxu0 0
      %523 = vmatprep.subr.bf16.mxu0 0
      %524 = vmatpush2.bf16.msra.mxu0 0
      %525 = vmatprep.subr.bf16.mxu0 0
      %526 = vmatpush2.bf16.msra.mxu0 0
      %527 = vmatprep.subr.bf16.mxu0 0
      %528 = vmatpush2.bf16.msra.mxu0 0
      %529 = vmatprep.mubr.bf16.mxu0 0
      %530 = vmatmul.mubr.bf16.gmra.mxu0 %v246
      %v531 = vpop.f32.mrf.mxu0
      %v532 = vadd.f32 0.0, %v531
      %v533 = vpop.f32.mrf.mxu0
      %v534 = vadd.f32 0.0, %v533
      %v535 = vpop.f32.mrf.mxu0
      %v536 = vadd.f32 0.0, %v535
      %v537 = vpop.f32.mrf.mxu0
      %v538 = vadd.f32 0.0, %v537
      %539 = vmatprep.mubr.bf16.mxu0 0
      %540 = vmatmul.mubr.bf16.gmra.mxu0 %v249
      %v541 = vpop.f32.mrf.mxu0
      %v542 = vadd.f32 0.0, %v541
      %v543 = vpop.f32.mrf.mxu0
      %v544 = vadd.f32 0.0, %v543
      %v545 = vpop.f32.mrf.mxu0
      %v546 = vadd.f32 0.0, %v545
      %v547 = vpop.f32.mrf.mxu0
      %v548 = vadd.f32 0.0, %v547
      %549 = vdwg.mxu0
      %s550 = scalar_lea.vmem %s165, 240
      %v551 = vld [vmem:[%s550] sm:$0xff]
      %v552 = vld [vmem:[%s550 + $0x8] sm:$0xff]
      %v553 = vld [vmem:[%s550 + $0x10] sm:$0xff]
      %v554 = vld [vmem:[%s550 + $0x18] sm:$0xff]
      %v555 = vld [vmem:[%s550 + $0x20] sm:$0xff]
      %v556 = vld [vmem:[%s550 + $0x28] sm:$0xff]
      %v557 = vld [vmem:[%s550 + $0x30] sm:$0xff]
      %v558 = vld [vmem:[%s550 + $0x38] sm:$0xff]
      %v559 = vld [vmem:[%s550 + $0x40] sm:$0xff]
      %v560 = vld [vmem:[%s550 + $0x48] sm:$0x33]
      %v571 = vunpack.c.l.b16 %v551
      %v572 = vunpack.c.h.b16 %v551
      %v573 = vunpack.c.l.b16 %v552
      %v574 = vunpack.c.h.b16 %v552
      %v575 = vunpack.c.l.b16 %v553
      %v576 = vunpack.c.h.b16 %v553
      %v577 = vunpack.c.l.b16 %v554
      %v578 = vunpack.c.h.b16 %v554
      %v579 = vunpack.c.l.b16 %v555
      %v580 = vunpack.c.h.b16 %v555
      %v581 = vunpack.c.l.b16 %v556
      %v582 = vunpack.c.h.b16 %v556
      %v583 = vunpack.c.l.b16 %v557
      %v584 = vunpack.c.h.b16 %v557
      %v585 = vunpack.c.l.b16 %v558
      %v586 = vunpack.c.h.b16 %v558
      %v587 = vunpack.c.l.b16 %v559
      %v588 = vunpack.c.h.b16 %v559
      %v589 = vunpack.c.l.b16 %v560
      %v590 = vunpack.c.h.b16 %v560
      %v591 = vpack.c.b16 %v573, %v571
      %v592 = vpack.c.b16 %v574, %v572
      %v593 = vpack.c.b16 %v577, %v575
      %v594 = vpack.c.b16 %v578, %v576
      %v595 = vpack.c.b16 %v581, %v579
      %v596 = vpack.c.b16 %v582, %v580
      %v597 = vpack.c.b16 %v585, %v583
      %v598 = vpack.c.b16 %v586, %v584
      %v599 = vpack.c.b16 %v589, %v587
      %v600 = vpack.c.b16 %v590, %v588
      %v610 = vand.u32 %v599, %v254
      %v613 = vand.u32 %v600, %v254
      %615 = vmatprep.subr.bf16.mxu0 0
      %616 = vmatpush1.bf16.msra.mxu0 0
      %617 = vmatprep.subr.bf16.mxu0 0
      %618 = vmatpush1.bf16.msra.mxu0 0
      %619 = vmatprep.subr.bf16.mxu0 0
      %620 = vmatpush1.bf16.msra.mxu0 0
      %621 = vmatprep.subr.bf16.mxu0 %v613
      %622 = vmatpush1.bf16.msra.mxu0 %v610
      %623 = vmatprep.subr.bf16.mxu0 %v598
      %624 = vmatpush1.bf16.msra.mxu0 %v597
      %625 = vmatprep.subr.bf16.mxu0 %v596
      %626 = vmatpush1.bf16.msra.mxu0 %v595
      %627 = vmatprep.subr.bf16.mxu0 %v594
      %628 = vmatpush1.bf16.msra.mxu0 %v593
      %629 = vmatprep.subr.bf16.mxu0 %v592
      %630 = vmatpush1.bf16.msra.mxu0 %v591
      %631 = vmatprep.subr.bf16.mxu0 0
      %632 = vmatpush2.bf16.msra.mxu0 0
      %633 = vmatprep.subr.bf16.mxu0 0
      %634 = vmatpush2.bf16.msra.mxu0 0
      %635 = vmatprep.subr.bf16.mxu0 0
      %636 = vmatpush2.bf16.msra.mxu0 0
      %637 = vmatprep.subr.bf16.mxu0 0
      %638 = vmatpush2.bf16.msra.mxu0 0
      %639 = vmatprep.subr.bf16.mxu0 0
      %640 = vmatpush2.bf16.msra.mxu0 0
      %641 = vmatprep.subr.bf16.mxu0 0
      %642 = vmatpush2.bf16.msra.mxu0 0
      %643 = vmatprep.subr.bf16.mxu0 0
      %644 = vmatpush2.bf16.msra.mxu0 0
      %645 = vmatprep.subr.bf16.mxu0 0
      %646 = vmatpush2.bf16.msra.mxu0 0
      %647 = vmatprep.mubr.bf16.mxu0 0
      %648 = vmatmul.mubr.bf16.gmra.mxu0 %v246
      %v649 = vpop.f32.mrf.mxu0
      %v650 = vadd.f32 0.0, %v649
      %v651 = vpop.f32.mrf.mxu0
      %v652 = vadd.f32 0.0, %v651
      %v653 = vpop.f32.mrf.mxu0
      %v654 = vadd.f32 0.0, %v653
      %v655 = vpop.f32.mrf.mxu0
      %v656 = vadd.f32 0.0, %v655
      %657 = vmatprep.mubr.bf16.mxu0 0
      %658 = vmatmul.mubr.bf16.gmra.mxu0 %v249
      %v659 = vpop.f32.mrf.mxu0
      %v660 = vadd.f32 0.0, %v659
      %v661 = vpop.f32.mrf.mxu0
      %v662 = vadd.f32 0.0, %v661
      %v663 = vpop.f32.mrf.mxu0
      %v664 = vadd.f32 0.0, %v663
      %v665 = vpop.f32.mrf.mxu0
      %v666 = vadd.f32 0.0, %v665
      %667 = vdwg.mxu0
      %v668 = vmax.f32 %v296, %v414
      %v669 = vmax.f32 %v298, %v416
      %v670 = vmax.f32 %v300, %v418
      %v671 = vmax.f32 %v302, %v420
      %v672 = vmax.f32 %v306, %v424
      %v673 = vmax.f32 %v308, %v426
      %v674 = vmax.f32 %v310, %v428
      %v675 = vmax.f32 %v312, %v430
      %v676 = vmax.f32 %v532, %v650
      %v677 = vmax.f32 %v534, %v652
      %v678 = vmax.f32 %v536, %v654
      %v679 = vmax.f32 %v538, %v656
      %v680 = vmax.f32 %v542, %v660
      %v681 = vmax.f32 %v544, %v662
      %v682 = vmax.f32 %v546, %v664
      %v683 = vmax.f32 %v548, %v666
      %v684 = vmax.f32 %v668, %v676
      %v685 = vmax.f32 %v669, %v677
      %v686 = vmax.f32 %v670, %v678
      %v687 = vmax.f32 %v671, %v679
      %v688 = vmax.f32 %v672, %v680
      %v689 = vmax.f32 %v673, %v681
      %v690 = vmax.f32 %v674, %v682
      %v691 = vmax.f32 %v675, %v683
      %v692 = vld [vmem:[%s2] sm:$0xff]
      %v693 = vld [vmem:[%s2 + $0x8] sm:$0xff]
      %v694 = vld [vmem:[%s2 + $0x10] sm:$0xff]
      %v695 = vld [vmem:[%s2 + $0x18] sm:$0xff]
      %697 = vset.pattern.permute.xlu0 0
      %698 = vperm.xlu0 %697, %v692
      %v699 = vpop.permute.xlu0 %698
      %702 = vset.pattern.permute.xlu0 0
      %703 = vperm.xlu0 %702, %v693
      %v704 = vpop.permute.xlu0 %703
      %707 = vset.pattern.permute.xlu0 0
      %708 = vperm.xlu0 %707, %v694
      %v709 = vpop.permute.xlu0 %708
      %712 = vset.pattern.permute.xlu0 0
      %713 = vperm.xlu0 %712, %v695
      %v714 = vpop.permute.xlu0 %713
      %v716 = vadd.f32 %v684, %v699
      %v717 = vadd.f32 %v685, %v699
      %v718 = vadd.f32 %v686, %v704
      %v719 = vadd.f32 %v687, %v704
      %v720 = vadd.f32 %v688, %v709
      %v721 = vadd.f32 %v689, %v709
      %v722 = vadd.f32 %v690, %v714
      %v723 = vadd.f32 %v691, %v714
      %v724 = vpack.c.bf16 %v718, %v716
      %v725 = vpack.c.bf16 %v719, %v717
      %v726 = vpack.c.bf16 %v722, %v720
      %v727 = vpack.c.bf16 %v723, %v721
      %v732 = vunpack.c.l.b16 %v724
      %v733 = vunpack.c.l.b16 %v725
      %v734 = vunpack.c.h.b16 %v724
      %v735 = vunpack.c.h.b16 %v725
      %v736 = vunpack.c.l.b16 %v726
      %v737 = vunpack.c.l.b16 %v727
      %v738 = vunpack.c.h.b16 %v726
      %v739 = vunpack.c.h.b16 %v727
      %v740 = vpack.c.b16 %v733, %v732
      %v741 = vpack.c.b16 %v735, %v734
      %v742 = vpack.c.b16 %v737, %v736
      %v743 = vpack.c.b16 %v739, %v738
      %748 = vst [vmem:[%s170] sm:$0xff] %v740
      %749 = vst [vmem:[%s170 + $0x8] sm:$0xff] %v741
      %750 = vst [vmem:[%s170 + $0x10] sm:$0xff] %v742
      %751 = vst [vmem:[%s170 + $0x18] sm:$0xff] %v743
      %p752 = scmp.lt.s32.totalorder %s14, 1
      %s753 = scalar_select %p752, %s14, 1
      %s754 = smul.addr %s753, 8
      %s755 = smul.addr %s754, 4
      %s756 = scalar_lea.vmem %s3, %s755
      // Predicated region
      $region33: #{forward.4} parent=31 // pred_check
        %p757 = pneg %p100
      $region34: #{forward.4} parent=31 // pred_check_branch
        %759 = sbr.rel (%p757) target = $region36
      $region35: #{forward.4} parent=31 // pred_region
        _
      $region36: #{forward.4} parent=31 // pred_fallthru
        _
    $region32: #{forward.4} parent=5 // pred_fallthru
      _
    %p760 = scmp.le.s32.totalorder 2, %s9
    // Predicated region
    $region37: #{forward.4} parent=5 // pred_check
      %p761 = pneg %p760
    $region38: #{forward.4} parent=5 // pred_check_branch
      %763 = sbr.rel (%p761) target = $region40
    $region39: #{forward.4} parent=5 // pred_region
      %s764 = ssub.s32 %s9, 2
      // Predicated region
      $region41: #{forward.4} parent=39 // pred_check
        %p765 = pneg %p106
      $region42: #{forward.4} parent=39 // pred_check_branch
        %767 = sbr.rel (%p765) target = $region44
      $region43: #{forward.4} parent=39 // pred_region
        %p768 = scmp.lt.s32.totalorder %s15, 1
        %s769 = scalar_select %p768, %s15, 1
        %s770 = smul.addr %s769, 8
        %s771 = smul.addr %s770, 4
        %s772 = scalar_lea.vmem %s3, %s771
      $region44: #{forward.4} parent=39 // pred_fallthru
        _
    $region40: #{forward.4} parent=5 // pred_fallthru
      _
  $region6: #{forward.4} parent=0 // loop_footer
    %s13 = sadd.s32 1, %s9
  $region7: #{forward.4} parent=0 // loop_footer_branch
    %8 = sbr.rel target = $region3
  $region8: #{forward.4} parent=0 // loop_exit
    _

// kernel: forward.5
$region0: #{forward.5}
  #allocation0 [shape = 'u32[]', space=smem, size = 0x4, offset = 0x4, fixed_abs, tag = 'smem constant byte address 0x4 - core index']
  #allocation1 [shape = 'u32[144,128]{1,0:T(1,128)}', space=vmem, size = 0x12000, scoped, tag = 'internal scratch']
  %s0 = inlined_call_operand.vmem [shape: bf16[2,4,800,64], index: 0, kind: input, shape index: {}]
  %s1 = inlined_call_operand.vmem [shape: bf16[32,800], index: 1, kind: input, shape index: {}]
  %s2 = inlined_call_operand.vmem [shape: f32[32,1], index: 2, kind: input, shape index: {}]
  %s3 = inlined_call_operand.vmem [shape: bf16[2,32,64], index: 3, kind: output, shape index: {}]
  %s4 = sld [smem:[#allocation0]]
  $region45: #{forward.5} parent=0
    _
  %s6 = ssub.s32 1, %s4
  %s7 = scalar_select 0, %s6, %s4
  loop: start=0, step=1, limit=4
  $region2: #{forward.5} parent=0 // loop_pre_header
    _
  $region3: #{forward.5} parent=0 // loop_header
    %s9 = sphi 0, %s13
    %p10 = scmp.ge.s32.totalorder %s9, 4
    %s19 = sphi 0, %s21
    %s22 = sphi 0, %s19
    %s23 = sphi 0, %s22
    %s39 = sphi 0, %s23
    %s43 = sphi 0, %s43
    %s45 = sphi 0, %s43
    %s46 = sphi 0, %s45
    %s60 = sphi 0, %s46
    %s64 = sphi 0, %s64
    %s66 = sphi 0, %s64
    %s67 = sphi 0, %s66
    %s81 = sphi 0, %s67
    %s87 = sphi 0, %s89
    %s90 = sphi 0, %s87
    %s91 = sphi 0, %s90
    %s107 = sphi 0, %s91
  $region4: #{forward.5} parent=0 // loop_header_branch
    %12 = sbr.rel (%p10) target = $region8
  $region5: #{forward.5} parent=0 // loop_body
    %s14 = ssub.s32 %s9, 1
    %s15 = ssub.s32 %s9, 2
    %s16 = sadd.s32 %s9, 1
    %s17 = ssub.s32 %s9, %s16
    %p18 = scmp.eq.s32.totalorder %s17, 0
    %s20 = sadd.s32 %s19, 1
    %s21 = scalar_select %p18, %s19, %s20
    %p24 = pneg %p18
    %p25 = scmp.eq.s32.totalorder %s9, 1
    %p26 = por %p24, %p25
    %p27 = scmp.ne.s32.totalorder %s19, %s22
    %p28 = scmp.eq.s32.totalorder %s9, 0
    %p29 = por %p27, %p28
    %p30 = scmp.ne.s32.totalorder %s19, %s22
    %p31 = scmp.eq.s32.totalorder %s14, 1
    %p32 = por %p30, %p31
    %p33 = scmp.ne.s32.totalorder %s22, %s23
    %p34 = scmp.eq.s32.totalorder %s14, 0
    %p35 = por %p33, %p34
    %p36 = scmp.ne.s32.totalorder %s22, %s23
    %p37 = scmp.eq.s32.totalorder %s15, 1
    %p38 = por %p36, %p37
    %p40 = scmp.ne.s32.totalorder %s23, %s39
    %p41 = scmp.eq.s32.totalorder %s15, 0
    %p42 = por %p40, %p41
    %s44 = sadd.s32 %s43, 1
    %p47 = scmp.eq.s32.totalorder %s9, 1
    %p48 = scmp.ne.s32.totalorder %s43, %s45
    %p49 = scmp.eq.s32.totalorder %s9, 0
    %p50 = por %p48, %p49
    %p51 = scmp.ne.s32.totalorder %s43, %s45
    %p52 = scmp.eq.s32.totalorder %s14, 1
    %p53 = por %p51, %p52
    %p54 = scmp.ne.s32.totalorder %s45, %s46
    %p55 = scmp.eq.s32.totalorder %s14, 0
    %p56 = por %p54, %p55
    %p57 = scmp.ne.s32.totalorder %s45, %s46
    %p58 = scmp.eq.s32.totalorder %s15, 1
    %p59 = por %p57, %p58
    %p61 = scmp.ne.s32.totalorder %s46, %s60
    %p62 = scmp.eq.s32.totalorder %s15, 0
    %p63 = por %p61, %p62
    %s65 = sadd.s32 %s64, 1
    %p68 = scmp.eq.s32.totalorder %s9, 1
    %p69 = scmp.ne.s32.totalorder %s64, %s66
    %p70 = scmp.eq.s32.totalorder %s9, 0
    %p71 = por %p69, %p70
    %p72 = scmp.ne.s32.totalorder %s64, %s66
    %p73 = scmp.eq.s32.totalorder %s14, 1
    %p74 = por %p72, %p73
    %p75 = scmp.ne.s32.totalorder %s66, %s67
    %p76 = scmp.eq.s32.totalorder %s14, 0
    %p77 = por %p75, %p76
    %p78 = scmp.ne.s32.totalorder %s66, %s67
    %p79 = scmp.eq.s32.totalorder %s15, 1
    %p80 = por %p78, %p79
    %p82 = scmp.ne.s32.totalorder %s67, %s81
    %p83 = scmp.eq.s32.totalorder %s15, 0
    %p84 = por %p82, %p83
    %s85 = ssub.s32 %s9, %s16
    %p86 = scmp.eq.s32.totalorder %s85, 0
    %s88 = sadd.s32 %s87, 1
    %s89 = scalar_select %p86, %s87, %s88
    %p92 = pneg %p86
    %p93 = scmp.eq.s32.totalorder %s9, 1
    %p94 = por %p92, %p93
    %p95 = scmp.ne.s32.totalorder %s87, %s90
    %p96 = scmp.eq.s32.totalorder %s9, 0
    %p97 = por %p95, %p96
    %p98 = scmp.ne.s32.totalorder %s87, %s90
    %p99 = scmp.eq.s32.totalorder %s14, 1
    %p100 = por %p98, %p99
    %p101 = scmp.ne.s32.totalorder %s90, %s91
    %p102 = scmp.eq.s32.totalorder %s14, 0
    %p103 = por %p101, %p102
    %p104 = scmp.ne.s32.totalorder %s90, %s91
    %p105 = scmp.eq.s32.totalorder %s15, 1
    %p106 = por %p104, %p105
    %p108 = scmp.ne.s32.totalorder %s91, %s107
    %p109 = scmp.eq.s32.totalorder %s15, 0
    %p110 = por %p108, %p109
    %p111 = scmp.le.s32.totalorder 1, %s9
    %p112 = scmp.lt.s32.totalorder %s9, 3
    %p113 = pnand %p111, %p112
    %p114 = pneg %p113
    // Predicated region
    $region9: #{forward.5} parent=5 // pred_check
      _
    $region10: #{forward.5} parent=5 // pred_check_branch
      %116 = sbr.rel (%p113) target = $region12
    $region11: #{forward.5} parent=5 // pred_region
      %s117 = ssub.s32 %s9, 1
      // Predicated region
      $region13: #{forward.5} parent=11 // pred_check
        %p118 = pneg %p56
      $region14: #{forward.5} parent=11 // pred_check_branch
        %120 = sbr.rel (%p118) target = $region16
      $region15: #{forward.5} parent=11 // pred_region
        _
      $region16: #{forward.5} parent=11 // pred_fallthru
        _
      // Predicated region
      $region17: #{forward.5} parent=11 // pred_check
        %p121 = pneg %p77
      $region18: #{forward.5} parent=11 // pred_check_branch
        %123 = sbr.rel (%p121) target = $region20
      $region19: #{forward.5} parent=11 // pred_region
        _
      $region20: #{forward.5} parent=11 // pred_fallthru
        _
    $region12: #{forward.5} parent=5 // pred_fallthru
      _
    %p124 = scmp.lt.s32.totalorder %s9, 2
    // Predicated region
    $region21: #{forward.5} parent=5 // pred_check
      %p125 = pneg %p124
    $region22: #{forward.5} parent=5 // pred_check_branch
      %127 = sbr.rel (%p125) target = $region24
    $region23: #{forward.5} parent=5 // pred_region
      // Predicated region
      $region25: #{forward.5} parent=23 // pred_check
        %p128 = pneg %p29
      $region26: #{forward.5} parent=23 // pred_check_branch
        %130 = sbr.rel (%p128) target = $region28
      $region27: #{forward.5} parent=23 // pred_region
        %p131 = scmp.lt.s32.totalorder %s9, 1
        %s132 = scalar_select %p131, %s9, 1
        %s133 = smul.addr %s132, 400
        %s134 = smul.addr %s133, 4
        %s135 = scalar_lea.vmem %s0, %s134
      $region28: #{forward.5} parent=23 // pred_fallthru
        _
    $region24: #{forward.5} parent=5 // pred_fallthru
      _
    %p136 = scmp.le.s32.totalorder 1, %s9
    %p137 = scmp.lt.s32.totalorder %s9, 3
    %p138 = pnand %p136, %p137
    %p139 = pneg %p138
    // Predicated region
    $region29: #{forward.5} parent=5 // pred_check
      _
    $region30: #{forward.5} parent=5 // pred_check_branch
      %141 = sbr.rel (%p138) target = $region32
    $region31: #{forward.5} parent=5 // pred_region
      %s142 = ssub.s32 %s9, 1
      %p143 = scmp.lt.s32.totalorder %s14, 1
      %s144 = scalar_select %p143, %s14, 1
      %s145 = smul.addr %s144, 400
      %s146 = smul.addr %s145, 4
      %s147 = scalar_lea.vmem %s0, %s146
      %p148 = pneg %p35
      %p149 = pneg %p32
      %p150 = pneg %p56
      %p151 = pneg %p53
      %p152 = pneg %p77
      %p153 = pneg %p74
      %p154 = pneg %p103
      %p155 = pneg %p100
      %p156 = scmp.lt.s32.totalorder %s14, 1
      %s157 = scalar_select %p156, %s14, 1
      %s158 = smul.addr %s157, 4
      %s159 = smul.addr %s158, 4
      %s160 = scalar_lea.vmem %s3, %s159
      %p161 = scmp.lt.s32.totalorder %s14, 1
      %s162 = scalar_select %p161, %s14, 1
      %s163 = smul.addr %s162, 400
      %s164 = smul.addr %s163, 4
      %s165 = scalar_lea.vmem %s0, %s164
      %p166 = scmp.lt.s32.totalorder %s14, 1
      %s167 = scalar_select %p166, %s14, 1
      %s168 = smul.addr %s167, 4
      %s169 = smul.addr %s168, 4
      %s170 = scalar_lea.vmem %s3, %s169
      %v172 = vld [vmem:[%s1] sm:$0xff]
      %v173 = vld [vmem:[%s1 + $0x8] sm:$0xff]
      %v174 = vld [vmem:[%s1 + $0x10] sm:$0xff]
      %v175 = vld [vmem:[%s1 + $0x18] sm:$0xf]
      %v176 = vld [vmem:[%s1 + $0x1c] sm:$0xff]
      %v177 = vld [vmem:[%s1 + $0x24] sm:$0xff]
      %v178 = vld [vmem:[%s1 + $0x2c] sm:$0xff]
      %v179 = vld [vmem:[%s1 + $0x34] sm:$0xf]
      %v180 = vld [vmem:[%s1 + $0x38] sm:$0xff]
      %v181 = vld [vmem:[%s1 + $0x40] sm:$0xff]
      %v182 = vld [vmem:[%s1 + $0x48] sm:$0xff]
      %v183 = vld [vmem:[%s1 + $0x50] sm:$0xf]
      %v184 = vld [vmem:[%s1 + $0x54] sm:$0xff]
      %v185 = vld [vmem:[%s1 + $0x5c] sm:$0xff]
      %v186 = vld [vmem:[%s1 + $0x64] sm:$0xff]
      %v187 = vld [vmem:[%s1 + $0x6c] sm:$0xf]
      %v188 = vld [vmem:[%s165] sm:$0xf]
      %v189 = vld [vmem:[%s165 + $0x4] sm:$0xf]
      %v190 = vld [vmem:[%s165 + $0x8] sm:$0xf]
      %v191 = vld [vmem:[%s165 + $0xc] sm:$0xf]
      %v192 = vld [vmem:[%s165 + $0x10] sm:$0xf]
      %v193 = vld [vmem:[%s165 + $0x14] sm:$0xf]
      %v194 = vld [vmem:[%s165 + $0x18] sm:$0xf]
      %v195 = vld [vmem:[%s165 + $0x1c] sm:$0xf]
      %v196 = vld [vmem:[%s165 + $0x20] sm:$0xf]
      %v197 = vld [vmem:[%s165 + $0x24] sm:$0xf]
      %v198 = vld [vmem:[%s165 + $0x28] sm:$0xf]
      %v199 = vld [vmem:[%s165 + $0x2c] sm:$0xf]
      %v200 = vld [vmem:[%s165 + $0x30] sm:$0xf]
      %v201 = vld [vmem:[%s165 + $0x34] sm:$0xf]
      %v202 = vld [vmem:[%s165 + $0x38] sm:$0xf]
      %v203 = vld [vmem:[%s165 + $0x3c] sm:$0xf]
      %v204 = vld [vmem:[%s165 + $0x40] sm:$0xf]
      %v205 = vld [vmem:[%s165 + $0x44] sm:$0xf]
      %v206 = vld [vmem:[%s165 + $0x48] sm:$0xf]
      %v207 = vld [vmem:[%s165 + $0x4c] sm:$0xf]
      %v208 = vld [vmem:[%s165 + $0x50] sm:$0xf]
      %v209 = vld [vmem:[%s165 + $0x54] sm:$0xf]
      %v210 = vld [vmem:[%s165 + $0x58] sm:$0xf]
      %v211 = vld [vmem:[%s165 + $0x5c] sm:$0xf]
      %v212 = vld [vmem:[%s165 + $0x60] sm:$0xf]
      %v213 = vld [vmem:[%s165 + $0x64] sm:$0xf]
      %v214 = vld [vmem:[%s165 + $0x68] sm:$0xf]
      %v215 = vld [vmem:[%s165 + $0x6c] sm:$0xf]
      %v216 = vld [vmem:[%s165 + $0x70] sm:$0xf]
      %v217 = vld [vmem:[%s165 + $0x74] sm:$0xf]
      %v218 = vld [vmem:[%s165 + $0x78] sm:$0xf]
      %v219 = vld [vmem:[%s165 + $0x7c] sm:$0xf]
      %v220 = vld [vmem:[%s165 + $0x80] sm:$0xf]
      %v221 = vld [vmem:[%s165 + $0x84] sm:$0xf]
      %v222 = vld [vmem:[%s165 + $0x88] sm:$0xf]
      %v223 = vld [vmem:[%s165 + $0x8c] sm:$0xf]
      %v224 = vld [vmem:[%s165 + $0x90] sm:$0xf]
      %v225 = vld [vmem:[%s165 + $0x94] sm:$0xf]
      %v226 = vld [vmem:[%s165 + $0x98] sm:$0xf]
      %v227 = vld [vmem:[%s165 + $0x9c] sm:$0xf]
      %v228 = vld [vmem:[%s165 + $0xa0] sm:$0xf]
      %v229 = vld [vmem:[%s165 + $0xa4] sm:$0xf]
      %v230 = vld [vmem:[%s165 + $0xa8] sm:$0xf]
      %v231 = vld [vmem:[%s165 + $0xac] sm:$0xf]
      %v232 = vld [vmem:[%s165 + $0xb0] sm:$0xf]
      %v233 = vld [vmem:[%s165 + $0xb4] sm:$0xf]
      %v234 = vld [vmem:[%s165 + $0xb8] sm:$0xf]
      %v235 = vld [vmem:[%s165 + $0xbc] sm:$0xf]
      %v236 = vld [vmem:[%s165 + $0xc0] sm:$0xf]
      %v237 = vld [vmem:[%s165 + $0xc4] sm:$0xf]
      %v238 = vld [vmem:[%s165 + $0xc8] sm:$0xf]
      %v239 = vld [vmem:[%s165 + $0xcc] sm:$0xf]
      %v240 = vld [vmem:[%s165 + $0xd0] sm:$0xf]
      %v241 = vld [vmem:[%s165 + $0xd4] sm:$0xf]
      %v242 = vld [vmem:[%s165 + $0xd8] sm:$0xf]
      %v243 = vld [vmem:[%s165 + $0xdc] sm:$0xf]
      %v244 = vld [vmem:[%s165 + $0xe0] sm:$0xf]
      %v245 = vld [vmem:[%s165 + $0xe4] sm:$0xf]
      %v246 = vld [vmem:[%s165 + $0xe8] sm:$0xf]
      %v247 = vld [vmem:[%s165 + $0xec] sm:$0xf]
      %v248 = vld [vmem:[%s165 + $0xf0] sm:$0xf]
      %v249 = vld [vmem:[%s165 + $0xf4] sm:$0xf]
      %v250 = vld [vmem:[%s165 + $0xf8] sm:$0xf]
      %v251 = vld [vmem:[%s165 + $0xfc] sm:$0xf]
      %v252 = vld [vmem:[%s165 + $0x100] sm:$0xf]
      %v253 = vld [vmem:[%s165 + $0x104] sm:$0xf]
      %v254 = vld [vmem:[%s165 + $0x108] sm:$0xf]
      %v255 = vld [vmem:[%s165 + $0x10c] sm:$0xf]
      %v256 = vld [vmem:[%s165 + $0x110] sm:$0xf]
      %v257 = vld [vmem:[%s165 + $0x114] sm:$0xf]
      %v258 = vld [vmem:[%s165 + $0x118] sm:$0xf]
      %v259 = vld [vmem:[%s165 + $0x11c] sm:$0xf]
      %v260 = vld [vmem:[%s165 + $0x120] sm:$0xf]
      %v261 = vld [vmem:[%s165 + $0x124] sm:$0xf]
      %v262 = vld [vmem:[%s165 + $0x128] sm:$0xf]
      %v263 = vld [vmem:[%s165 + $0x12c] sm:$0xf]
      %v264 = vld [vmem:[%s165 + $0x130] sm:$0xf]
      %v265 = vld [vmem:[%s165 + $0x134] sm:$0xf]
      %v266 = vld [vmem:[%s165 + $0x138] sm:$0xf]
      %v267 = vld [vmem:[%s165 + $0x13c] sm:$0xf]
      %v268 = vld [vmem:[%s165 + $0x140] sm:$0xf]
      %v269 = vld [vmem:[%s165 + $0x144] sm:$0xf]
      %v270 = vld [vmem:[%s165 + $0x148] sm:$0xf]
      %v271 = vld [vmem:[%s165 + $0x14c] sm:$0xf]
      %v272 = vld [vmem:[%s165 + $0x150] sm:$0xf]
      %v273 = vld [vmem:[%s165 + $0x154] sm:$0xf]
      %v274 = vld [vmem:[%s165 + $0x158] sm:$0xf]
      %v275 = vld [vmem:[%s165 + $0x15c] sm:$0xf]
      %v276 = vld [vmem:[%s165 + $0x160] sm:$0xf]
      %v277 = vld [vmem:[%s165 + $0x164] sm:$0xf]
      %v278 = vld [vmem:[%s165 + $0x168] sm:$0xf]
      %v279 = vld [vmem:[%s165 + $0x16c] sm:$0xf]
      %v280 = vld [vmem:[%s165 + $0x170] sm:$0xf]
      %v281 = vld [vmem:[%s165 + $0x174] sm:$0xf]
      %v282 = vld [vmem:[%s165 + $0x178] sm:$0xf]
      %v283 = vld [vmem:[%s165 + $0x17c] sm:$0xf]
      %v284 = vld [vmem:[%s165 + $0x180] sm:$0xf]
      %v285 = vld [vmem:[%s165 + $0x184] sm:$0xf]
      %v286 = vld [vmem:[%s165 + $0x188] sm:$0xf]
      %v287 = vld [vmem:[%s165 + $0x18c] sm:$0xf]
      %v304 = vunpack.c.l.b16 %v172
      %v305 = vunpack.c.h.b16 %v172
      %v306 = vunpack.c.l.b16 %v173
      %v307 = vunpack.c.h.b16 %v173
      %v308 = vunpack.c.l.b16 %v174
      %v309 = vunpack.c.h.b16 %v174
      %v310 = vunpack.c.l.b16 %v175
      %v311 = vunpack.c.l.b16 %v176
      %v312 = vunpack.c.h.b16 %v176
      %v313 = vunpack.c.l.b16 %v177
      %v314 = vunpack.c.h.b16 %v177
      %v315 = vunpack.c.l.b16 %v178
      %v316 = vunpack.c.h.b16 %v178
      %v317 = vunpack.c.l.b16 %v179
      %v318 = vunpack.c.l.b16 %v180
      %v319 = vunpack.c.h.b16 %v180
      %v320 = vunpack.c.l.b16 %v181
      %v321 = vunpack.c.h.b16 %v181
      %v322 = vunpack.c.l.b16 %v182
      %v323 = vunpack.c.h.b16 %v182
      %v324 = vunpack.c.l.b16 %v183
      %v325 = vunpack.c.l.b16 %v184
      %v326 = vunpack.c.h.b16 %v184
      %v327 = vunpack.c.l.b16 %v185
      %v328 = vunpack.c.h.b16 %v185
      %v329 = vunpack.c.l.b16 %v186
      %v330 = vunpack.c.h.b16 %v186
      %v331 = vunpack.c.l.b16 %v187
      %v332 = vpack.c.b16 %v311, %v304
      %v333 = vpack.c.b16 %v312, %v305
      %v334 = vpack.c.b16 %v313, %v306
      %v335 = vpack.c.b16 %v314, %v307
      %v336 = vpack.c.b16 %v315, %v308
      %v337 = vpack.c.b16 %v316, %v309
      %v338 = vpack.c.b16 %v317, %v310
      %v339 = vpack.c.b16 %v325, %v318
      %v340 = vpack.c.b16 %v326, %v319
      %v341 = vpack.c.b16 %v327, %v320
      %v342 = vpack.c.b16 %v328, %v321
      %v343 = vpack.c.b16 %v329, %v322
      %v344 = vpack.c.b16 %v330, %v323
      %v345 = vpack.c.b16 %v331, %v324
      %v458 = vunpack.c.l.b16 %v188
      %v459 = vunpack.c.l.b16 %v189
      %v460 = vunpack.c.l.b16 %v190
      %v461 = vunpack.c.l.b16 %v191
      %v462 = vunpack.c.l.b16 %v192
      %v463 = vunpack.c.l.b16 %v193
      %v464 = vunpack.c.l.b16 %v194
      %v465 = vunpack.c.l.b16 %v195
      %v466 = vunpack.c.l.b16 %v196
      %v467 = vunpack.c.l.b16 %v197
      %v468 = vunpack.c.l.b16 %v198
      %v469 = vunpack.c.l.b16 %v199
      %v470 = vunpack.c.l.b16 %v200
      %v471 = vunpack.c.l.b16 %v201
      %v472 = vunpack.c.l.b16 %v202
      %v473 = vunpack.c.l.b16 %v203
      %v474 = vunpack.c.l.b16 %v204
      %v475 = vunpack.c.l.b16 %v205
      %v476 = vunpack.c.l.b16 %v206
      %v477 = vunpack.c.l.b16 %v207
      %v478 = vunpack.c.l.b16 %v208
      %v479 = vunpack.c.l.b16 %v209
      %v480 = vunpack.c.l.b16 %v210
      %v481 = vunpack.c.l.b16 %v211
      %v482 = vunpack.c.l.b16 %v212
      %v483 = vunpack.c.l.b16 %v213
      %v484 = vunpack.c.l.b16 %v214
      %v485 = vunpack.c.l.b16 %v215
      %v486 = vunpack.c.l.b16 %v216
      %v487 = vunpack.c.l.b16 %v217
      %v488 = vunpack.c.l.b16 %v218
      %v489 = vunpack.c.l.b16 %v219
      %v490 = vunpack.c.l.b16 %v220
      %v491 = vunpack.c.l.b16 %v221
      %v492 = vunpack.c.l.b16 %v222
      %v493 = vunpack.c.l.b16 %v223
      %v494 = vunpack.c.l.b16 %v224
      %v495 = vunpack.c.l.b16 %v225
      %v496 = vunpack.c.l.b16 %v226
      %v497 = vunpack.c.l.b16 %v227
      %v498 = vunpack.c.l.b16 %v228
      %v499 = vunpack.c.l.b16 %v229
      %v500 = vunpack.c.l.b16 %v230
      %v501 = vunpack.c.l.b16 %v231
      %v502 = vunpack.c.l.b16 %v232
      %v503 = vunpack.c.l.b16 %v233
      %v504 = vunpack.c.l.b16 %v234
      %v505 = vunpack.c.l.b16 %v235
      %v506 = vunpack.c.l.b16 %v236
      %v507 = vunpack.c.l.b16 %v237
      %v508 = vunpack.c.l.b16 %v238
      %v509 = vunpack.c.l.b16 %v239
      %v510 = vunpack.c.l.b16 %v240
      %v511 = vunpack.c.l.b16 %v241
      %v512 = vunpack.c.l.b16 %v242
      %v513 = vunpack.c.l.b16 %v243
      %v514 = vunpack.c.l.b16 %v244
      %v515 = vunpack.c.l.b16 %v245
      %v516 = vunpack.c.l.b16 %v246
      %v517 = vunpack.c.l.b16 %v247
      %v518 = vunpack.c.l.b16 %v248
      %v519 = vunpack.c.l.b16 %v249
      %v520 = vunpack.c.l.b16 %v250
      %v521 = vunpack.c.l.b16 %v251
      %v522 = vunpack.c.l.b16 %v252
      %v523 = vunpack.c.l.b16 %v253
      %v524 = vunpack.c.l.b16 %v254
      %v525 = vunpack.c.l.b16 %v255
      %v526 = vunpack.c.l.b16 %v256
      %v527 = vunpack.c.l.b16 %v257
      %v528 = vunpack.c.l.b16 %v258
      %v529 = vunpack.c.l.b16 %v259
      %v530 = vunpack.c.l.b16 %v260
      %v531 = vunpack.c.l.b16 %v261
      %v532 = vunpack.c.l.b16 %v262
      %v533 = vunpack.c.l.b16 %v263
      %v534 = vunpack.c.l.b16 %v264
      %v535 = vunpack.c.l.b16 %v265
      %v536 = vunpack.c.l.b16 %v266
      %v537 = vunpack.c.l.b16 %v267
      %v538 = vunpack.c.l.b16 %v268
      %v539 = vunpack.c.l.b16 %v269
      %v540 = vunpack.c.l.b16 %v270
      %v541 = vunpack.c.l.b16 %v271
      %v542 = vunpack.c.l.b16 %v272
      %v543 = vunpack.c.l.b16 %v273
      %v544 = vunpack.c.l.b16 %v274
      %v545 = vunpack.c.l.b16 %v275
      %v546 = vunpack.c.l.b16 %v276
      %v547 = vunpack.c.l.b16 %v277
      %v548 = vunpack.c.l.b16 %v278
      %v549 = vunpack.c.l.b16 %v279
      %v550 = vunpack.c.l.b16 %v280
      %v551 = vunpack.c.l.b16 %v281
      %v552 = vunpack.c.l.b16 %v282
      %v553 = vunpack.c.l.b16 %v283
      %v554 = vunpack.c.l.b16 %v284
      %v555 = vunpack.c.l.b16 %v285
      %v556 = vunpack.c.l.b16 %v286
      %v557 = vunpack.c.l.b16 %v287
      %v558 = vpack.c.b16 %v459, %v458
      %v559 = vpack.c.b16 %v461, %v460
      %v560 = vpack.c.b16 %v463, %v462
      %v561 = vpack.c.b16 %v465, %v464
      %v562 = vpack.c.b16 %v467, %v466
      %v563 = vpack.c.b16 %v469, %v468
      %v564 = vpack.c.b16 %v471, %v470
      %v565 = vpack.c.b16 %v473, %v472
      %v566 = vpack.c.b16 %v475, %v474
      %v567 = vpack.c.b16 %v477, %v476
      %v568 = vpack.c.b16 %v479, %v478
      %v569 = vpack.c.b16 %v481, %v480
      %v570 = vpack.c.b16 %v483, %v482
      %v571 = vpack.c.b16 %v485, %v484
      %v572 = vpack.c.b16 %v487, %v486
      %v573 = vpack.c.b16 %v489, %v488
      %v574 = vpack.c.b16 %v491, %v490
      %v575 = vpack.c.b16 %v493, %v492
      %v576 = vpack.c.b16 %v495, %v494
      %v577 = vpack.c.b16 %v497, %v496
      %v578 = vpack.c.b16 %v499, %v498
      %v579 = vpack.c.b16 %v501, %v500
      %v580 = vpack.c.b16 %v503, %v502
      %v581 = vpack.c.b16 %v505, %v504
      %v582 = vpack.c.b16 %v507, %v506
      %v583 = vpack.c.b16 %v509, %v508
      %v584 = vpack.c.b16 %v511, %v510
      %v585 = vpack.c.b16 %v513, %v512
      %v586 = vpack.c.b16 %v515, %v514
      %v587 = vpack.c.b16 %v517, %v516
      %v588 = vpack.c.b16 %v519, %v518
      %v589 = vpack.c.b16 %v521, %v520
      %v590 = vpack.c.b16 %v523, %v522
      %v591 = vpack.c.b16 %v525, %v524
      %v592 = vpack.c.b16 %v527, %v526
      %v593 = vpack.c.b16 %v529, %v528
      %v594 = vpack.c.b16 %v531, %v530
      %v595 = vpack.c.b16 %v533, %v532
      %v596 = vpack.c.b16 %v535, %v534
      %v597 = vpack.c.b16 %v537, %v536
      %v598 = vpack.c.b16 %v539, %v538
      %v599 = vpack.c.b16 %v541, %v540
      %v600 = vpack.c.b16 %v543, %v542
      %v601 = vpack.c.b16 %v545, %v544
      %v602 = vpack.c.b16 %v547, %v546
      %v603 = vpack.c.b16 %v549, %v548
      %v604 = vpack.c.b16 %v551, %v550
      %v605 = vpack.c.b16 %v553, %v552
      %v606 = vpack.c.b16 %v555, %v554
      %v607 = vpack.c.b16 %v557, %v556
      %vm658 = vcmask 261120
      %v660 = vsel %vm658, %v338, 0
      %v663 = vsel %vm658, %v345, 0
      %665 = vmatprep.subr.bf16.mxu0 0
      %666 = vmatpush1.bf16.msra.mxu0 %v565
      %667 = vmatprep.subr.bf16.mxu0 0
      %668 = vmatpush1.bf16.msra.mxu0 %v564
      %669 = vmatprep.subr.bf16.mxu0 0
      %670 = vmatpush1.bf16.msra.mxu0 %v563
      %671 = vmatprep.subr.bf16.mxu0 0
      %672 = vmatpush1.bf16.msra.mxu0 %v562
      %673 = vmatprep.subr.bf16.mxu0 0
      %674 = vmatpush1.bf16.msra.mxu0 %v561
      %675 = vmatprep.subr.bf16.mxu0 0
      %676 = vmatpush1.bf16.msra.mxu0 %v560
      %677 = vmatprep.subr.bf16.mxu0 0
      %678 = vmatpush1.bf16.msra.mxu0 %v559
      %679 = vmatprep.subr.bf16.mxu0 0
      %680 = vmatpush1.bf16.msra.mxu0 %v558
      %681 = vmatprep.subr.bf16.mxu0 0
      %682 = vmatpush2.bf16.msra.mxu0 %v573
      %683 = vmatprep.subr.bf16.mxu0 0
      %684 = vmatpush2.bf16.msra.mxu0 %v572
      %685 = vmatprep.subr.bf16.mxu0 0
      %686 = vmatpush2.bf16.msra.mxu0 %v571
      %687 = vmatprep.subr.bf16.mxu0 0
      %688 = vmatpush2.bf16.msra.mxu0 %v570
      %689 = vmatprep.subr.bf16.mxu0 0
      %690 = vmatpush2.bf16.msra.mxu0 %v569
      %691 = vmatprep.subr.bf16.mxu0 0
      %692 = vmatpush2.bf16.msra.mxu0 %v568
      %693 = vmatprep.subr.bf16.mxu0 0
      %694 = vmatpush2.bf16.msra.mxu0 %v567
      %695 = vmatprep.subr.bf16.mxu0 0
      %696 = vmatpush2.bf16.msra.mxu0 %v566
      %697 = vmatprep.mubr.bf16.mxu0 %v333
      %698 = vmatmul.mubr.bf16.gmra.mxu0 %v332
      %v699 = vpop.f32.mrf.mxu0
      %v700 = vadd.f32 0.0, %v699
      %v701 = vpop.f32.mrf.mxu0
      %v702 = vpop.f32.mrf.mxu0
      %v703 = vadd.f32 0.0, %v702
      %v704 = vpop.f32.mrf.mxu0
      %705 = vmatprep.mubr.bf16.mxu0 %v340
      %706 = vmatmul.mubr.bf16.gmra.mxu0 %v339
      %v707 = vpop.f32.mrf.mxu0
      %v708 = vadd.f32 0.0, %v707
      %v709 = vpop.f32.mrf.mxu0
      %v710 = vpop.f32.mrf.mxu0
      %v711 = vadd.f32 0.0, %v710
      %v712 = vpop.f32.mrf.mxu0
      %713 = vdwg.mxu0
      %714 = vmatprep.subr.bf16.mxu0 0
      %715 = vmatpush1.bf16.msra.mxu0 %v581
      %716 = vmatprep.subr.bf16.mxu0 0
      %717 = vmatpush1.bf16.msra.mxu0 %v580
      %718 = vmatprep.subr.bf16.mxu0 0
      %719 = vmatpush1.bf16.msra.mxu0 %v579
      %720 = vmatprep.subr.bf16.mxu0 0
      %721 = vmatpush1.bf16.msra.mxu0 %v578
      %722 = vmatprep.subr.bf16.mxu0 0
      %723 = vmatpush1.bf16.msra.mxu0 %v577
      %724 = vmatprep.subr.bf16.mxu0 0
      %725 = vmatpush1.bf16.msra.mxu0 %v576
      %726 = vmatprep.subr.bf16.mxu0 0
      %727 = vmatpush1.bf16.msra.mxu0 %v575
      %728 = vmatprep.subr.bf16.mxu0 0
      %729 = vmatpush1.bf16.msra.mxu0 %v574
      %730 = vmatprep.subr.bf16.mxu0 0
      %731 = vmatpush2.bf16.msra.mxu0 %v589
      %732 = vmatprep.subr.bf16.mxu0 0
      %733 = vmatpush2.bf16.msra.mxu0 %v588
      %734 = vmatprep.subr.bf16.mxu0 0
      %735 = vmatpush2.bf16.msra.mxu0 %v587
      %736 = vmatprep.subr.bf16.mxu0 0
      %737 = vmatpush2.bf16.msra.mxu0 %v586
      %738 = vmatprep.subr.bf16.mxu0 0
      %739 = vmatpush2.bf16.msra.mxu0 %v585
      %740 = vmatprep.subr.bf16.mxu0 0
      %741 = vmatpush2.bf16.msra.mxu0 %v584
      %742 = vmatprep.subr.bf16.mxu0 0
      %743 = vmatpush2.bf16.msra.mxu0 %v583
      %744 = vmatprep.subr.bf16.mxu0 0
      %745 = vmatpush2.bf16.msra.mxu0 %v582
      %746 = vmatprep.mubr.bf16.mxu0 %v335
      %747 = vmatmul.mubr.bf16.gmra.mxu0 %v334
      %v748 = vpop.f32.mrf.mxu0
      %v749 = vadd.f32 %v700, %v748
      %v750 = vpop.f32.mrf.mxu0
      %v751 = vpop.f32.mrf.mxu0
      %v752 = vadd.f32 %v703, %v751
      %v753 = vpop.f32.mrf.mxu0
      %754 = vmatprep.mubr.bf16.mxu0 %v342
      %755 = vmatmul.mubr.bf16.gmra.mxu0 %v341
      %v756 = vpop.f32.mrf.mxu0
      %v757 = vadd.f32 %v708, %v756
      %v758 = vpop.f32.mrf.mxu0
      %v759 = vpop.f32.mrf.mxu0
      %v760 = vadd.f32 %v711, %v759
      %v761 = vpop.f32.mrf.mxu0
      %762 = vdwg.mxu0
      %763 = vmatprep.subr.bf16.mxu0 0
      %764 = vmatpush1.bf16.msra.mxu0 %v597
      %765 = vmatprep.subr.bf16.mxu0 0
      %766 = vmatpush1.bf16.msra.mxu0 %v596
      %767 = vmatprep.subr.bf16.mxu0 0
      %768 = vmatpush1.bf16.msra.mxu0 %v595
      %769 = vmatprep.subr.bf16.mxu0 0
      %770 = vmatpush1.bf16.msra.mxu0 %v594
      %771 = vmatprep.subr.bf16.mxu0 0
      %772 = vmatpush1.bf16.msra.mxu0 %v593
      %773 = vmatprep.subr.bf16.mxu0 0
      %774 = vmatpush1.bf16.msra.mxu0 %v592
      %775 = vmatprep.subr.bf16.mxu0 0
      %776 = vmatpush1.bf16.msra.mxu0 %v591
      %777 = vmatprep.subr.bf16.mxu0 0
      %778 = vmatpush1.bf16.msra.mxu0 %v590
      %779 = vmatprep.subr.bf16.mxu0 0
      %780 = vmatpush2.bf16.msra.mxu0 %v605
      %781 = vmatprep.subr.bf16.mxu0 0
      %782 = vmatpush2.bf16.msra.mxu0 %v604
      %783 = vmatprep.subr.bf16.mxu0 0
      %784 = vmatpush2.bf16.msra.mxu0 %v603
      %785 = vmatprep.subr.bf16.mxu0 0
      %786 = vmatpush2.bf16.msra.mxu0 %v602
      %787 = vmatprep.subr.bf16.mxu0 0
      %788 = vmatpush2.bf16.msra.mxu0 %v601
      %789 = vmatprep.subr.bf16.mxu0 0
      %790 = vmatpush2.bf16.msra.mxu0 %v600
      %791 = vmatprep.subr.bf16.mxu0 0
      %792 = vmatpush2.bf16.msra.mxu0 %v599
      %793 = vmatprep.subr.bf16.mxu0 0
      %794 = vmatpush2.bf16.msra.mxu0 %v598
      %795 = vmatprep.mubr.bf16.mxu0 %v337
      %796 = vmatmul.mubr.bf16.gmra.mxu0 %v336
      %v797 = vpop.f32.mrf.mxu0
      %v798 = vadd.f32 %v749, %v797
      %v799 = vpop.f32.mrf.mxu0
      %v800 = vpop.f32.mrf.mxu0
      %v801 = vadd.f32 %v752, %v800
      %v802 = vpop.f32.mrf.mxu0
      %803 = vmatprep.mubr.bf16.mxu0 %v344
      %804 = vmatmul.mubr.bf16.gmra.mxu0 %v343
      %v805 = vpop.f32.mrf.mxu0
      %v806 = vadd.f32 %v757, %v805
      %v807 = vpop.f32.mrf.mxu0
      %v808 = vpop.f32.mrf.mxu0
      %v809 = vadd.f32 %v760, %v808
      %v810 = vpop.f32.mrf.mxu0
      %811 = vdwg.mxu0
      %812 = vmatprep.subr.bf16.mxu0 0
      %813 = vmatpush1.bf16.msra.mxu0 0
      %814 = vmatprep.subr.bf16.mxu0 0
      %815 = vmatpush1.bf16.msra.mxu0 0
      %816 = vmatprep.subr.bf16.mxu0 0
      %817 = vmatpush1.bf16.msra.mxu0 0
      %818 = vmatprep.subr.bf16.mxu0 0
      %819 = vmatpush1.bf16.msra.mxu0 0
      %820 = vmatprep.subr.bf16.mxu0 0
      %821 = vmatpush1.bf16.msra.mxu0 0
      %822 = vmatprep.subr.bf16.mxu0 0
      %823 = vmatpush1.bf16.msra.mxu0 0
      %824 = vmatprep.subr.bf16.mxu0 0
      %825 = vmatpush1.bf16.msra.mxu0 %v607
      %826 = vmatprep.subr.bf16.mxu0 0
      %827 = vmatpush1.bf16.msra.mxu0 %v606
      %828 = vmatprep.subr.bf16.mxu0 0
      %829 = vmatpush2.bf16.msra.mxu0 0
      %830 = vmatprep.subr.bf16.mxu0 0
      %831 = vmatpush2.bf16.msra.mxu0 0
      %832 = vmatprep.subr.bf16.mxu0 0
      %833 = vmatpush2.bf16.msra.mxu0 0
      %834 = vmatprep.subr.bf16.mxu0 0
      %835 = vmatpush2.bf16.msra.mxu0 0
      %836 = vmatprep.subr.bf16.mxu0 0
      %837 = vmatpush2.bf16.msra.mxu0 0
      %838 = vmatprep.subr.bf16.mxu0 0
      %839 = vmatpush2.bf16.msra.mxu0 0
      %840 = vmatprep.subr.bf16.mxu0 0
      %841 = vmatpush2.bf16.msra.mxu0 0
      %842 = vmatprep.subr.bf16.mxu0 0
      %843 = vmatpush2.bf16.msra.mxu0 0
      %844 = vmatprep.mubr.bf16.mxu0 0
      %845 = vmatmul.mubr.bf16.gmra.mxu0 %v660
      %v846 = vpop.f32.mrf.mxu0
      %v847 = vadd.f32 %v798, %v846
      %v848 = vpop.f32.mrf.mxu0
      %v849 = vpop.f32.mrf.mxu0
      %v850 = vadd.f32 %v801, %v849
      %v851 = vpop.f32.mrf.mxu0
      %852 = vmatprep.mubr.bf16.mxu0 0
      %853 = vmatmul.mubr.bf16.gmra.mxu0 %v663
      %v854 = vpop.f32.mrf.mxu0
      %v855 = vadd.f32 %v806, %v854
      %v856 = vpop.f32.mrf.mxu0
      %v857 = vpop.f32.mrf.mxu0
      %v858 = vadd.f32 %v809, %v857
      %v859 = vpop.f32.mrf.mxu0
      %860 = vdwg.mxu0
      %s861 = scalar_lea.vmem %s165, 400
      %v862 = vld [vmem:[%s861] sm:$0xf]
      %v863 = vld [vmem:[%s861 + $0x4] sm:$0xf]
      %v864 = vld [vmem:[%s861 + $0x8] sm:$0xf]
      %v865 = vld [vmem:[%s861 + $0xc] sm:$0xf]
      %v866 = vld [vmem:[%s861 + $0x10] sm:$0xf]
      %v867 = vld [vmem:[%s861 + $0x14] sm:$0xf]
      %v868 = vld [vmem:[%s861 + $0x18] sm:$0xf]
      %v869 = vld [vmem:[%s861 + $0x1c] sm:$0xf]
      %v870 = vld [vmem:[%s861 + $0x20] sm:$0xf]
      %v871 = vld [vmem:[%s861 + $0x24] sm:$0xf]
      %v872 = vld [vmem:[%s861 + $0x28] sm:$0xf]
      %v873 = vld [vmem:[%s861 + $0x2c] sm:$0xf]
      %v874 = vld [vmem:[%s861 + $0x30] sm:$0xf]
      %v875 = vld [vmem:[%s861 + $0x34] sm:$0xf]
      %v876 = vld [vmem:[%s861 + $0x38] sm:$0xf]
      %v877 = vld [vmem:[%s861 + $0x3c] sm:$0xf]
      %v878 = vld [vmem:[%s861 + $0x40] sm:$0xf]
      %v879 = vld [vmem:[%s861 + $0x44] sm:$0xf]
      %v880 = vld [vmem:[%s861 + $0x48] sm:$0xf]
      %v881 = vld [vmem:[%s861 + $0x4c] sm:$0xf]
      %v882 = vld [vmem:[%s861 + $0x50] sm:$0xf]
      %v883 = vld [vmem:[%s861 + $0x54] sm:$0xf]
      %v884 = vld [vmem:[%s861 + $0x58] sm:$0xf]
      %v885 = vld [vmem:[%s861 + $0x5c] sm:$0xf]
      %v886 = vld [vmem:[%s861 + $0x60] sm:$0xf]
      %v887 = vld [vmem:[%s861 + $0x64] sm:$0xf]
      %v888 = vld [vmem:[%s861 + $0x68] sm:$0xf]
      %v889 = vld [vmem:[%s861 + $0x6c] sm:$0xf]
      %v890 = vld [vmem:[%s861 + $0x70] sm:$0xf]
      %v891 = vld [vmem:[%s861 + $0x74] sm:$0xf]
      %v892 = vld [vmem:[%s861 + $0x78] sm:$0xf]
      %v893 = vld [vmem:[%s861 + $0x7c] sm:$0xf]
      %v894 = vld [vmem:[%s861 + $0x80] sm:$0xf]
      %v895 = vld [vmem:[%s861 + $0x84] sm:$0xf]
      %v896 = vld [vmem:[%s861 + $0x88] sm:$0xf]
      %v897 = vld [vmem:[%s861 + $0x8c] sm:$0xf]
      %v898 = vld [vmem:[%s861 + $0x90] sm:$0xf]
      %v899 = vld [vmem:[%s861 + $0x94] sm:$0xf]
      %v900 = vld [vmem:[%s861 + $0x98] sm:$0xf]
      %v901 = vld [vmem:[%s861 + $0x9c] sm:$0xf]
      %v902 = vld [vmem:[%s861 + $0xa0] sm:$0xf]
      %v903 = vld [vmem:[%s861 + $0xa4] sm:$0xf]
      %v904 = vld [vmem:[%s861 + $0xa8] sm:$0xf]
      %v905 = vld [vmem:[%s861 + $0xac] sm:$0xf]
      %v906 = vld [vmem:[%s861 + $0xb0] sm:$0xf]
      %v907 = vld [vmem:[%s861 + $0xb4] sm:$0xf]
      %v908 = vld [vmem:[%s861 + $0xb8] sm:$0xf]
      %v909 = vld [vmem:[%s861 + $0xbc] sm:$0xf]
      %v910 = vld [vmem:[%s861 + $0xc0] sm:$0xf]
      %v911 = vld [vmem:[%s861 + $0xc4] sm:$0xf]
      %v912 = vld [vmem:[%s861 + $0xc8] sm:$0xf]
      %v913 = vld [vmem:[%s861 + $0xcc] sm:$0xf]
      %v914 = vld [vmem:[%s861 + $0xd0] sm:$0xf]
      %v915 = vld [vmem:[%s861 + $0xd4] sm:$0xf]
      %v916 = vld [vmem:[%s861 + $0xd8] sm:$0xf]
      %v917 = vld [vmem:[%s861 + $0xdc] sm:$0xf]
      %v918 = vld [vmem:[%s861 + $0xe0] sm:$0xf]
      %v919 = vld [vmem:[%s861 + $0xe4] sm:$0xf]
      %v920 = vld [vmem:[%s861 + $0xe8] sm:$0xf]
      %v921 = vld [vmem:[%s861 + $0xec] sm:$0xf]
      %v922 = vld [vmem:[%s861 + $0xf0] sm:$0xf]
      %v923 = vld [vmem:[%s861 + $0xf4] sm:$0xf]
      %v924 = vld [vmem:[%s861 + $0xf8] sm:$0xf]
      %v925 = vld [vmem:[%s861 + $0xfc] sm:$0xf]
      %v926 = vld [vmem:[%s861 + $0x100] sm:$0xf]
      %v927 = vld [vmem:[%s861 + $0x104] sm:$0xf]
      %v928 = vld [vmem:[%s861 + $0x108] sm:$0xf]
      %v929 = vld [vmem:[%s861 + $0x10c] sm:$0xf]
      %v930 = vld [vmem:[%s861 + $0x110] sm:$0xf]
      %v931 = vld [vmem:[%s861 + $0x114] sm:$0xf]
      %v932 = vld [vmem:[%s861 + $0x118] sm:$0xf]
      %v933 = vld [vmem:[%s861 + $0x11c] sm:$0xf]
      %v934 = vld [vmem:[%s861 + $0x120] sm:$0xf]
      %v935 = vld [vmem:[%s861 + $0x124] sm:$0xf]
      %v936 = vld [vmem:[%s861 + $0x128] sm:$0xf]
      %v937 = vld [vmem:[%s861 + $0x12c] sm:$0xf]
      %v938 = vld [vmem:[%s861 + $0x130] sm:$0xf]
      %v939 = vld [vmem:[%s861 + $0x134] sm:$0xf]
      %v940 = vld [vmem:[%s861 + $0x138] sm:$0xf]
      %v941 = vld [vmem:[%s861 + $0x13c] sm:$0xf]
      %v942 = vld [vmem:[%s861 + $0x140] sm:$0xf]
      %v943 = vld [vmem:[%s861 + $0x144] sm:$0xf]
      %v944 = vld [vmem:[%s861 + $0x148] sm:$0xf]
      %v945 = vld [vmem:[%s861 + $0x14c] sm:$0xf]
      %v946 = vld [vmem:[%s861 + $0x150] sm:$0xf]
      %v947 = vld [vmem:[%s861 + $0x154] sm:$0xf]
      %v948 = vld [vmem:[%s861 + $0x158] sm:$0xf]
      %v949 = vld [vmem:[%s861 + $0x15c] sm:$0xf]
      %v950 = vld [vmem:[%s861 + $0x160] sm:$0xf]
      %v951 = vld [vmem:[%s861 + $0x164] sm:$0xf]
      %v952 = vld [vmem:[%s861 + $0x168] sm:$0xf]
      %v953 = vld [vmem:[%s861 + $0x16c] sm:$0xf]
      %v954 = vld [vmem:[%s861 + $0x170] sm:$0xf]
      %v955 = vld [vmem:[%s861 + $0x174] sm:$0xf]
      %v956 = vld [vmem:[%s861 + $0x178] sm:$0xf]
      %v957 = vld [vmem:[%s861 + $0x17c] sm:$0xf]
      %v958 = vld [vmem:[%s861 + $0x180] sm:$0xf]
      %v959 = vld [vmem:[%s861 + $0x184] sm:$0xf]
      %v960 = vld [vmem:[%s861 + $0x188] sm:$0xf]
      %v961 = vld [vmem:[%s861 + $0x18c] sm:$0xf]
      %v1062 = vunpack.c.l.b16 %v862
      %v1063 = vunpack.c.l.b16 %v863
      %v1064 = vunpack.c.l.b16 %v864
      %v1065 = vunpack.c.l.b16 %v865
      %v1066 = vunpack.c.l.b16 %v866
      %v1067 = vunpack.c.l.b16 %v867
      %v1068 = vunpack.c.l.b16 %v868
      %v1069 = vunpack.c.l.b16 %v869
      %v1070 = vunpack.c.l.b16 %v870
      %v1071 = vunpack.c.l.b16 %v871
      %v1072 = vunpack.c.l.b16 %v872
      %v1073 = vunpack.c.l.b16 %v873
      %v1074 = vunpack.c.l.b16 %v874
      %v1075 = vunpack.c.l.b16 %v875
      %v1076 = vunpack.c.l.b16 %v876
      %v1077 = vunpack.c.l.b16 %v877
      %v1078 = vunpack.c.l.b16 %v878
      %v1079 = vunpack.c.l.b16 %v879
      %v1080 = vunpack.c.l.b16 %v880
      %v1081 = vunpack.c.l.b16 %v881
      %v1082 = vunpack.c.l.b16 %v882
      %v1083 = vunpack.c.l.b16 %v883
      %v1084 = vunpack.c.l.b16 %v884
      %v1085 = vunpack.c.l.b16 %v885
      %v1086 = vunpack.c.l.b16 %v886
      %v1087 = vunpack.c.l.b16 %v887
      %v1088 = vunpack.c.l.b16 %v888
      %v1089 = vunpack.c.l.b16 %v889
      %v1090 = vunpack.c.l.b16 %v890
      %v1091 = vunpack.c.l.b16 %v891
      %v1092 = vunpack.c.l.b16 %v892
      %v1093 = vunpack.c.l.b16 %v893
      %v1094 = vunpack.c.l.b16 %v894
      %v1095 = vunpack.c.l.b16 %v895
      %v1096 = vunpack.c.l.b16 %v896
      %v1097 = vunpack.c.l.b16 %v897
      %v1098 = vunpack.c.l.b16 %v898
      %v1099 = vunpack.c.l.b16 %v899
      %v1100 = vunpack.c.l.b16 %v900
      %v1101 = vunpack.c.l.b16 %v901
      %v1102 = vunpack.c.l.b16 %v902
      %v1103 = vunpack.c.l.b16 %v903
      %v1104 = vunpack.c.l.b16 %v904
      %v1105 = vunpack.c.l.b16 %v905
      %v1106 = vunpack.c.l.b16 %v906
      %v1107 = vunpack.c.l.b16 %v907
      %v1108 = vunpack.c.l.b16 %v908
      %v1109 = vunpack.c.l.b16 %v909
      %v1110 = vunpack.c.l.b16 %v910
      %v1111 = vunpack.c.l.b16 %v911
      %v1112 = vunpack.c.l.b16 %v912
      %v1113 = vunpack.c.l.b16 %v913
      %v1114 = vunpack.c.l.b16 %v914
      %v1115 = vunpack.c.l.b16 %v915
      %v1116 = vunpack.c.l.b16 %v916
      %v1117 = vunpack.c.l.b16 %v917
      %v1118 = vunpack.c.l.b16 %v918
      %v1119 = vunpack.c.l.b16 %v919
      %v1120 = vunpack.c.l.b16 %v920
      %v1121 = vunpack.c.l.b16 %v921
      %v1122 = vunpack.c.l.b16 %v922
      %v1123 = vunpack.c.l.b16 %v923
      %v1124 = vunpack.c.l.b16 %v924
      %v1125 = vunpack.c.l.b16 %v925
      %v1126 = vunpack.c.l.b16 %v926
      %v1127 = vunpack.c.l.b16 %v927
      %v1128 = vunpack.c.l.b16 %v928
      %v1129 = vunpack.c.l.b16 %v929
      %v1130 = vunpack.c.l.b16 %v930
      %v1131 = vunpack.c.l.b16 %v931
      %v1132 = vunpack.c.l.b16 %v932
      %v1133 = vunpack.c.l.b16 %v933
      %v1134 = vunpack.c.l.b16 %v934
      %v1135 = vunpack.c.l.b16 %v935
      %v1136 = vunpack.c.l.b16 %v936
      %v1137 = vunpack.c.l.b16 %v937
      %v1138 = vunpack.c.l.b16 %v938
      %v1139 = vunpack.c.l.b16 %v939
      %v1140 = vunpack.c.l.b16 %v940
      %v1141 = vunpack.c.l.b16 %v941
      %v1142 = vunpack.c.l.b16 %v942
      %v1143 = vunpack.c.l.b16 %v943
      %v1144 = vunpack.c.l.b16 %v944
      %v1145 = vunpack.c.l.b16 %v945
      %v1146 = vunpack.c.l.b16 %v946
      %v1147 = vunpack.c.l.b16 %v947
      %v1148 = vunpack.c.l.b16 %v948
      %v1149 = vunpack.c.l.b16 %v949
      %v1150 = vunpack.c.l.b16 %v950
      %v1151 = vunpack.c.l.b16 %v951
      %v1152 = vunpack.c.l.b16 %v952
      %v1153 = vunpack.c.l.b16 %v953
      %v1154 = vunpack.c.l.b16 %v954
      %v1155 = vunpack.c.l.b16 %v955
      %v1156 = vunpack.c.l.b16 %v956
      %v1157 = vunpack.c.l.b16 %v957
      %v1158 = vunpack.c.l.b16 %v958
      %v1159 = vunpack.c.l.b16 %v959
      %v1160 = vunpack.c.l.b16 %v960
      %v1161 = vunpack.c.l.b16 %v961
      %v1162 = vpack.c.b16 %v1063, %v1062
      %v1163 = vpack.c.b16 %v1065, %v1064
      %v1164 = vpack.c.b16 %v1067, %v1066
      %v1165 = vpack.c.b16 %v1069, %v1068
      %v1166 = vpack.c.b16 %v1071, %v1070
      %v1167 = vpack.c.b16 %v1073, %v1072
      %v1168 = vpack.c.b16 %v1075, %v1074
      %v1169 = vpack.c.b16 %v1077, %v1076
      %v1170 = vpack.c.b16 %v1079, %v1078
      %v1171 = vpack.c.b16 %v1081, %v1080
      %v1172 = vpack.c.b16 %v1083, %v1082
      %v1173 = vpack.c.b16 %v1085, %v1084
      %v1174 = vpack.c.b16 %v1087, %v1086
      %v1175 = vpack.c.b16 %v1089, %v1088
      %v1176 = vpack.c.b16 %v1091, %v1090
      %v1177 = vpack.c.b16 %v1093, %v1092
      %v1178 = vpack.c.b16 %v1095, %v1094
      %v1179 = vpack.c.b16 %v1097, %v1096
      %v1180 = vpack.c.b16 %v1099, %v1098
      %v1181 = vpack.c.b16 %v1101, %v1100
      %v1182 = vpack.c.b16 %v1103, %v1102
      %v1183 = vpack.c.b16 %v1105, %v1104
      %v1184 = vpack.c.b16 %v1107, %v1106
      %v1185 = vpack.c.b16 %v1109, %v1108
      %v1186 = vpack.c.b16 %v1111, %v1110
      %v1187 = vpack.c.b16 %v1113, %v1112
      %v1188 = vpack.c.b16 %v1115, %v1114
      %v1189 = vpack.c.b16 %v1117, %v1116
      %v1190 = vpack.c.b16 %v1119, %v1118
      %v1191 = vpack.c.b16 %v1121, %v1120
      %v1192 = vpack.c.b16 %v1123, %v1122
      %v1193 = vpack.c.b16 %v1125, %v1124
      %v1194 = vpack.c.b16 %v1127, %v1126
      %v1195 = vpack.c.b16 %v1129, %v1128
      %v1196 = vpack.c.b16 %v1131, %v1130
      %v1197 = vpack.c.b16 %v1133, %v1132
      %v1198 = vpack.c.b16 %v1135, %v1134
      %v1199 = vpack.c.b16 %v1137, %v1136
      %v1200 = vpack.c.b16 %v1139, %v1138
      %v1201 = vpack.c.b16 %v1141, %v1140
      %v1202 = vpack.c.b16 %v1143, %v1142
      %v1203 = vpack.c.b16 %v1145, %v1144
      %v1204 = vpack.c.b16 %v1147, %v1146
      %v1205 = vpack.c.b16 %v1149, %v1148
      %v1206 = vpack.c.b16 %v1151, %v1150
      %v1207 = vpack.c.b16 %v1153, %v1152
      %v1208 = vpack.c.b16 %v1155, %v1154
      %v1209 = vpack.c.b16 %v1157, %v1156
      %v1210 = vpack.c.b16 %v1159, %v1158
      %v1211 = vpack.c.b16 %v1161, %v1160
      %1262 = vmatprep.subr.bf16.mxu0 0
      %1263 = vmatpush1.bf16.msra.mxu0 %v1169
      %1264 = vmatprep.subr.bf16.mxu0 0
      %1265 = vmatpush1.bf16.msra.mxu0 %v1168
      %1266 = vmatprep.subr.bf16.mxu0 0
      %1267 = vmatpush1.bf16.msra.mxu0 %v1167
      %1268 = vmatprep.subr.bf16.mxu0 0
      %1269 = vmatpush1.bf16.msra.mxu0 %v1166
      %1270 = vmatprep.subr.bf16.mxu0 0
      %1271 = vmatpush1.bf16.msra.mxu0 %v1165
      %1272 = vmatprep.subr.bf16.mxu0 0
      %1273 = vmatpush1.bf16.msra.mxu0 %v1164
      %1274 = vmatprep.subr.bf16.mxu0 0
      %1275 = vmatpush1.bf16.msra.mxu0 %v1163
      %1276 = vmatprep.subr.bf16.mxu0 0
      %1277 = vmatpush1.bf16.msra.mxu0 %v1162
      %1278 = vmatprep.subr.bf16.mxu0 0
      %1279 = vmatpush2.bf16.msra.mxu0 %v1177
      %1280 = vmatprep.subr.bf16.mxu0 0
      %1281 = vmatpush2.bf16.msra.mxu0 %v1176
      %1282 = vmatprep.subr.bf16.mxu0 0
      %1283 = vmatpush2.bf16.msra.mxu0 %v1175
      %1284 = vmatprep.subr.bf16.mxu0 0
      %1285 = vmatpush2.bf16.msra.mxu0 %v1174
      %1286 = vmatprep.subr.bf16.mxu0 0
      %1287 = vmatpush2.bf16.msra.mxu0 %v1173
      %1288 = vmatprep.subr.bf16.mxu0 0
      %1289 = vmatpush2.bf16.msra.mxu0 %v1172
      %1290 = vmatprep.subr.bf16.mxu0 0
      %1291 = vmatpush2.bf16.msra.mxu0 %v1171
      %1292 = vmatprep.subr.bf16.mxu0 0
      %1293 = vmatpush2.bf16.msra.mxu0 %v1170
      %1294 = vmatprep.mubr.bf16.mxu0 %v333
      %1295 = vmatmul.mubr.bf16.gmra.mxu0 %v332
      %v1296 = vpop.f32.mrf.mxu0
      %v1297 = vadd.f32 0.0, %v1296
      %v1298 = vpop.f32.mrf.mxu0
      %v1299 = vpop.f32.mrf.mxu0
      %v1300 = vadd.f32 0.0, %v1299
      %v1301 = vpop.f32.mrf.mxu0
      %1302 = vmatprep.mubr.bf16.mxu0 %v340
      %1303 = vmatmul.mubr.bf16.gmra.mxu0 %v339
      %v1304 = vpop.f32.mrf.mxu0
      %v1305 = vadd.f32 0.0, %v1304
      %v1306 = vpop.f32.mrf.mxu0
      %v1307 = vpop.f32.mrf.mxu0
      %v1308 = vadd.f32 0.0, %v1307
      %v1309 = vpop.f32.mrf.mxu0
      %1310 = vdwg.mxu0
      %1311 = vmatprep.subr.bf16.mxu0 0
      %1312 = vmatpush1.bf16.msra.mxu0 %v1185
      %1313 = vmatprep.subr.bf16.mxu0 0
      %1314 = vmatpush1.bf16.msra.mxu0 %v1184
      %1315 = vmatprep.subr.bf16.mxu0 0
      %1316 = vmatpush1.bf16.msra.mxu0 %v1183
      %1317 = vmatprep.subr.bf16.mxu0 0
      %1318 = vmatpush1.bf16.msra.mxu0 %v1182
      %1319 = vmatprep.subr.bf16.mxu0 0
      %1320 = vmatpush1.bf16.msra.mxu0 %v1181
      %1321 = vmatprep.subr.bf16.mxu0 0
      %1322 = vmatpush1.bf16.msra.mxu0 %v1180
      %1323 = vmatprep.subr.bf16.mxu0 0
      %1324 = vmatpush1.bf16.msra.mxu0 %v1179
      %1325 = vmatprep.subr.bf16.mxu0 0
      %1326 = vmatpush1.bf16.msra.mxu0 %v1178
      %1327 = vmatprep.subr.bf16.mxu0 0
      %1328 = vmatpush2.bf16.msra.mxu0 %v1193
      %1329 = vmatprep.subr.bf16.mxu0 0
      %1330 = vmatpush2.bf16.msra.mxu0 %v1192
      %1331 = vmatprep.subr.bf16.mxu0 0
      %1332 = vmatpush2.bf16.msra.mxu0 %v1191
      %1333 = vmatprep.subr.bf16.mxu0 0
      %1334 = vmatpush2.bf16.msra.mxu0 %v1190
      %1335 = vmatprep.subr.bf16.mxu0 0
      %1336 = vmatpush2.bf16.msra.mxu0 %v1189
      %1337 = vmatprep.subr.bf16.mxu0 0
      %1338 = vmatpush2.bf16.msra.mxu0 %v1188
      %1339 = vmatprep.subr.bf16.mxu0 0
      %1340 = vmatpush2.bf16.msra.mxu0 %v1187
      %1341 = vmatprep.subr.bf16.mxu0 0
      %1342 = vmatpush2.bf16.msra.mxu0 %v1186
      %1343 = vmatprep.mubr.bf16.mxu0 %v335
      %1344 = vmatmul.mubr.bf16.gmra.mxu0 %v334
      %v1345 = vpop.f32.mrf.mxu0
      %v1346 = vadd.f32 %v1297, %v1345
      %v1347 = vpop.f32.mrf.mxu0
      %v1348 = vpop.f32.mrf.mxu0
      %v1349 = vadd.f32 %v1300, %v1348
      %v1350 = vpop.f32.mrf.mxu0
      %1351 = vmatprep.mubr.bf16.mxu0 %v342
      %1352 = vmatmul.mubr.bf16.gmra.mxu0 %v341
      %v1353 = vpop.f32.mrf.mxu0
      %v1354 = vadd.f32 %v1305, %v1353
      %v1355 = vpop.f32.mrf.mxu0
      %v1356 = vpop.f32.mrf.mxu0
      %v1357 = vadd.f32 %v1308, %v1356
      %v1358 = vpop.f32.mrf.mxu0
      %1359 = vdwg.mxu0
      %1360 = vmatprep.subr.bf16.mxu0 0
      %1361 = vmatpush1.bf16.msra.mxu0 %v1201
      %1362 = vmatprep.subr.bf16.mxu0 0
      %1363 = vmatpush1.bf16.msra.mxu0 %v1200
      %1364 = vmatprep.subr.bf16.mxu0 0
      %1365 = vmatpush1.bf16.msra.mxu0 %v1199
      %1366 = vmatprep.subr.bf16.mxu0 0
      %1367 = vmatpush1.bf16.msra.mxu0 %v1198
      %1368 = vmatprep.subr.bf16.mxu0 0
      %1369 = vmatpush1.bf16.msra.mxu0 %v1197
      %1370 = vmatprep.subr.bf16.mxu0 0
      %1371 = vmatpush1.bf16.msra.mxu0 %v1196
      %1372 = vmatprep.subr.bf16.mxu0 0
      %1373 = vmatpush1.bf16.msra.mxu0 %v1195
      %1374 = vmatprep.subr.bf16.mxu0 0
      %1375 = vmatpush1.bf16.msra.mxu0 %v1194
      %1376 = vmatprep.subr.bf16.mxu0 0
      %1377 = vmatpush2.bf16.msra.mxu0 %v1209
      %1378 = vmatprep.subr.bf16.mxu0 0
      %1379 = vmatpush2.bf16.msra.mxu0 %v1208
      %1380 = vmatprep.subr.bf16.mxu0 0
      %1381 = vmatpush2.bf16.msra.mxu0 %v1207
      %1382 = vmatprep.subr.bf16.mxu0 0
      %1383 = vmatpush2.bf16.msra.mxu0 %v1206
      %1384 = vmatprep.subr.bf16.mxu0 0
      %1385 = vmatpush2.bf16.msra.mxu0 %v1205
      %1386 = vmatprep.subr.bf16.mxu0 0
      %1387 = vmatpush2.bf16.msra.mxu0 %v1204
      %1388 = vmatprep.subr.bf16.mxu0 0
      %1389 = vmatpush2.bf16.msra.mxu0 %v1203
      %1390 = vmatprep.subr.bf16.mxu0 0
      %1391 = vmatpush2.bf16.msra.mxu0 %v1202
      %1392 = vmatprep.mubr.bf16.mxu0 %v337
      %1393 = vmatmul.mubr.bf16.gmra.mxu0 %v336
      %v1394 = vpop.f32.mrf.mxu0
      %v1395 = vadd.f32 %v1346, %v1394
      %v1396 = vpop.f32.mrf.mxu0
      %v1397 = vpop.f32.mrf.mxu0
      %v1398 = vadd.f32 %v1349, %v1397
      %v1399 = vpop.f32.mrf.mxu0
      %1400 = vmatprep.mubr.bf16.mxu0 %v344
      %1401 = vmatmul.mubr.bf16.gmra.mxu0 %v343
      %v1402 = vpop.f32.mrf.mxu0
      %v1403 = vadd.f32 %v1354, %v1402
      %v1404 = vpop.f32.mrf.mxu0
      %v1405 = vpop.f32.mrf.mxu0
      %v1406 = vadd.f32 %v1357, %v1405
      %v1407 = vpop.f32.mrf.mxu0
      %1408 = vdwg.mxu0
      %1409 = vmatprep.subr.bf16.mxu0 0
      %1410 = vmatpush1.bf16.msra.mxu0 0
      %1411 = vmatprep.subr.bf16.mxu0 0
      %1412 = vmatpush1.bf16.msra.mxu0 0
      %1413 = vmatprep.subr.bf16.mxu0 0
      %1414 = vmatpush1.bf16.msra.mxu0 0
      %1415 = vmatprep.subr.bf16.mxu0 0
      %1416 = vmatpush1.bf16.msra.mxu0 0
      %1417 = vmatprep.subr.bf16.mxu0 0
      %1418 = vmatpush1.bf16.msra.mxu0 0
      %1419 = vmatprep.subr.bf16.mxu0 0
      %1420 = vmatpush1.bf16.msra.mxu0 0
      %1421 = vmatprep.subr.bf16.mxu0 0
      %1422 = vmatpush1.bf16.msra.mxu0 %v1211
      %1423 = vmatprep.subr.bf16.mxu0 0
      %1424 = vmatpush1.bf16.msra.mxu0 %v1210
      %1425 = vmatprep.subr.bf16.mxu0 0
      %1426 = vmatpush2.bf16.msra.mxu0 0
      %1427 = vmatprep.subr.bf16.mxu0 0
      %1428 = vmatpush2.bf16.msra.mxu0 0
      %1429 = vmatprep.subr.bf16.mxu0 0
      %1430 = vmatpush2.bf16.msra.mxu0 0
      %1431 = vmatprep.subr.bf16.mxu0 0
      %1432 = vmatpush2.bf16.msra.mxu0 0
      %1433 = vmatprep.subr.bf16.mxu0 0
      %1434 = vmatpush2.bf16.msra.mxu0 0
      %1435 = vmatprep.subr.bf16.mxu0 0
      %1436 = vmatpush2.bf16.msra.mxu0 0
      %1437 = vmatprep.subr.bf16.mxu0 0
      %1438 = vmatpush2.bf16.msra.mxu0 0
      %1439 = vmatprep.subr.bf16.mxu0 0
      %1440 = vmatpush2.bf16.msra.mxu0 0
      %1441 = vmatprep.mubr.bf16.mxu0 0
      %1442 = vmatmul.mubr.bf16.gmra.mxu0 %v660
      %v1443 = vpop.f32.mrf.mxu0
      %v1444 = vadd.f32 %v1395, %v1443
      %v1445 = vpop.f32.mrf.mxu0
      %v1446 = vpop.f32.mrf.mxu0
      %v1447 = vadd.f32 %v1398, %v1446
      %v1448 = vpop.f32.mrf.mxu0
      %1449 = vmatprep.mubr.bf16.mxu0 0
      %1450 = vmatmul.mubr.bf16.gmra.mxu0 %v663
      %v1451 = vpop.f32.mrf.mxu0
      %v1452 = vadd.f32 %v1403, %v1451
      %v1453 = vpop.f32.mrf.mxu0
      %v1454 = vpop.f32.mrf.mxu0
      %v1455 = vadd.f32 %v1406, %v1454
      %v1456 = vpop.f32.mrf.mxu0
      %1457 = vdwg.mxu0
      %s1458 = scalar_lea.vmem %s165, 800
      %v1459 = vld [vmem:[%s1458] sm:$0xf]
      %v1460 = vld [vmem:[%s1458 + $0x4] sm:$0xf]
      %v1461 = vld [vmem:[%s1458 + $0x8] sm:$0xf]
      %v1462 = vld [vmem:[%s1458 + $0xc] sm:$0xf]
      %v1463 = vld [vmem:[%s1458 + $0x10] sm:$0xf]
      %v1464 = vld [vmem:[%s1458 + $0x14] sm:$0xf]
      %v1465 = vld [vmem:[%s1458 + $0x18] sm:$0xf]
      %v1466 = vld [vmem:[%s1458 + $0x1c] sm:$0xf]
      %v1467 = vld [vmem:[%s1458 + $0x20] sm:$0xf]
      %v1468 = vld [vmem:[%s1458 + $0x24] sm:$0xf]
      %v1469 = vld [vmem:[%s1458 + $0x28] sm:$0xf]
      %v1470 = vld [vmem:[%s1458 + $0x2c] sm:$0xf]
      %v1471 = vld [vmem:[%s1458 + $0x30] sm:$0xf]
      %v1472 = vld [vmem:[%s1458 + $0x34] sm:$0xf]
      %v1473 = vld [vmem:[%s1458 + $0x38] sm:$0xf]
      %v1474 = vld [vmem:[%s1458 + $0x3c] sm:$0xf]
      %v1475 = vld [vmem:[%s1458 + $0x40] sm:$0xf]
      %v1476 = vld [vmem:[%s1458 + $0x44] sm:$0xf]
      %v1477 = vld [vmem:[%s1458 + $0x48] sm:$0xf]
      %v1478 = vld [vmem:[%s1458 + $0x4c] sm:$0xf]
      %v1479 = vld [vmem:[%s1458 + $0x50] sm:$0xf]
      %v1480 = vld [vmem:[%s1458 + $0x54] sm:$0xf]
      %v1481 = vld [vmem:[%s1458 + $0x58] sm:$0xf]
      %v1482 = vld [vmem:[%s1458 + $0x5c] sm:$0xf]
      %v1483 = vld [vmem:[%s1458 + $0x60] sm:$0xf]
      %v1484 = vld [vmem:[%s1458 + $0x64] sm:$0xf]
      %v1485 = vld [vmem:[%s1458 + $0x68] sm:$0xf]
      %v1486 = vld [vmem:[%s1458 + $0x6c] sm:$0xf]
      %v1487 = vld [vmem:[%s1458 + $0x70] sm:$0xf]
      %v1488 = vld [vmem:[%s1458 + $0x74] sm:$0xf]
      %v1489 = vld [vmem:[%s1458 + $0x78] sm:$0xf]
      %v1490 = vld [vmem:[%s1458 + $0x7c] sm:$0xf]
      %v1491 = vld [vmem:[%s1458 + $0x80] sm:$0xf]
      %v1492 = vld [vmem:[%s1458 + $0x84] sm:$0xf]
      %v1493 = vld [vmem:[%s1458 + $0x88] sm:$0xf]
      %v1494 = vld [vmem:[%s1458 + $0x8c] sm:$0xf]
      %v1495 = vld [vmem:[%s1458 + $0x90] sm:$0xf]
      %v1496 = vld [vmem:[%s1458 + $0x94] sm:$0xf]
      %v1497 = vld [vmem:[%s1458 + $0x98] sm:$0xf]
      %v1498 = vld [vmem:[%s1458 + $0x9c] sm:$0xf]
      %v1499 = vld [vmem:[%s1458 + $0xa0] sm:$0xf]
      %v1500 = vld [vmem:[%s1458 + $0xa4] sm:$0xf]
      %v1501 = vld [vmem:[%s1458 + $0xa8] sm:$0xf]
      %v1502 = vld [vmem:[%s1458 + $0xac] sm:$0xf]
      %v1503 = vld [vmem:[%s1458 + $0xb0] sm:$0xf]
      %v1504 = vld [vmem:[%s1458 + $0xb4] sm:$0xf]
      %v1505 = vld [vmem:[%s1458 + $0xb8] sm:$0xf]
      %v1506 = vld [vmem:[%s1458 + $0xbc] sm:$0xf]
      %v1507 = vld [vmem:[%s1458 + $0xc0] sm:$0xf]
      %v1508 = vld [vmem:[%s1458 + $0xc4] sm:$0xf]
      %v1509 = vld [vmem:[%s1458 + $0xc8] sm:$0xf]
      %v1510 = vld [vmem:[%s1458 + $0xcc] sm:$0xf]
      %v1511 = vld [vmem:[%s1458 + $0xd0] sm:$0xf]
      %v1512 = vld [vmem:[%s1458 + $0xd4] sm:$0xf]
      %v1513 = vld [vmem:[%s1458 + $0xd8] sm:$0xf]
      %v1514 = vld [vmem:[%s1458 + $0xdc] sm:$0xf]
      %v1515 = vld [vmem:[%s1458 + $0xe0] sm:$0xf]
      %v1516 = vld [vmem:[%s1458 + $0xe4] sm:$0xf]
      %v1517 = vld [vmem:[%s1458 + $0xe8] sm:$0xf]
      %v1518 = vld [vmem:[%s1458 + $0xec] sm:$0xf]
      %v1519 = vld [vmem:[%s1458 + $0xf0] sm:$0xf]
      %v1520 = vld [vmem:[%s1458 + $0xf4] sm:$0xf]
      %v1521 = vld [vmem:[%s1458 + $0xf8] sm:$0xf]
      %v1522 = vld [vmem:[%s1458 + $0xfc] sm:$0xf]
      %v1523 = vld [vmem:[%s1458 + $0x100] sm:$0xf]
      %v1524 = vld [vmem:[%s1458 + $0x104] sm:$0xf]
      %v1525 = vld [vmem:[%s1458 + $0x108] sm:$0xf]
      %v1526 = vld [vmem:[%s1458 + $0x10c] sm:$0xf]
      %v1527 = vld [vmem:[%s1458 + $0x110] sm:$0xf]
      %v1528 = vld [vmem:[%s1458 + $0x114] sm:$0xf]
      %v1529 = vld [vmem:[%s1458 + $0x118] sm:$0xf]
      %v1530 = vld [vmem:[%s1458 + $0x11c] sm:$0xf]
      %v1531 = vld [vmem:[%s1458 + $0x120] sm:$0xf]
      %v1532 = vld [vmem:[%s1458 + $0x124] sm:$0xf]
      %v1533 = vld [vmem:[%s1458 + $0x128] sm:$0xf]
      %v1534 = vld [vmem:[%s1458 + $0x12c] sm:$0xf]
      %v1535 = vld [vmem:[%s1458 + $0x130] sm:$0xf]
      %v1536 = vld [vmem:[%s1458 + $0x134] sm:$0xf]
      %v1537 = vld [vmem:[%s1458 + $0x138] sm:$0xf]
      %v1538 = vld [vmem:[%s1458 + $0x13c] sm:$0xf]
      %v1539 = vld [vmem:[%s1458 + $0x140] sm:$0xf]
      %v1540 = vld [vmem:[%s1458 + $0x144] sm:$0xf]
      %v1541 = vld [vmem:[%s1458 + $0x148] sm:$0xf]
      %v1542 = vld [vmem:[%s1458 + $0x14c] sm:$0xf]
      %v1543 = vld [vmem:[%s1458 + $0x150] sm:$0xf]
      %v1544 = vld [vmem:[%s1458 + $0x154] sm:$0xf]
      %v1545 = vld [vmem:[%s1458 + $0x158] sm:$0xf]
      %v1546 = vld [vmem:[%s1458 + $0x15c] sm:$0xf]
      %v1547 = vld [vmem:[%s1458 + $0x160] sm:$0xf]
      %v1548 = vld [vmem:[%s1458 + $0x164] sm:$0xf]
      %v1549 = vld [vmem:[%s1458 + $0x168] sm:$0xf]
      %v1550 = vld [vmem:[%s1458 + $0x16c] sm:$0xf]
      %v1551 = vld [vmem:[%s1458 + $0x170] sm:$0xf]
      %v1552 = vld [vmem:[%s1458 + $0x174] sm:$0xf]
      %v1553 = vld [vmem:[%s1458 + $0x178] sm:$0xf]
      %v1554 = vld [vmem:[%s1458 + $0x17c] sm:$0xf]
      %v1555 = vld [vmem:[%s1458 + $0x180] sm:$0xf]
      %v1556 = vld [vmem:[%s1458 + $0x184] sm:$0xf]
      %v1557 = vld [vmem:[%s1458 + $0x188] sm:$0xf]
      %v1558 = vld [vmem:[%s1458 + $0x18c] sm:$0xf]
      %v1659 = vunpack.c.l.b16 %v1459
      %v1660 = vunpack.c.l.b16 %v1460
      %v1661 = vunpack.c.l.b16 %v1461
      %v1662 = vunpack.c.l.b16 %v1462
      %v1663 = vunpack.c.l.b16 %v1463
      %v1664 = vunpack.c.l.b16 %v1464
      %v1665 = vunpack.c.l.b16 %v1465
      %v1666 = vunpack.c.l.b16 %v1466
      %v1667 = vunpack.c.l.b16 %v1467
      %v1668 = vunpack.c.l.b16 %v1468
      %v1669 = vunpack.c.l.b16 %v1469
      %v1670 = vunpack.c.l.b16 %v1470
      %v1671 = vunpack.c.l.b16 %v1471
      %v1672 = vunpack.c.l.b16 %v1472
      %v1673 = vunpack.c.l.b16 %v1473
      %v1674 = vunpack.c.l.b16 %v1474
      %v1675 = vunpack.c.l.b16 %v1475
      %v1676 = vunpack.c.l.b16 %v1476
      %v1677 = vunpack.c.l.b16 %v1477
      %v1678 = vunpack.c.l.b16 %v1478
      %v1679 = vunpack.c.l.b16 %v1479
      %v1680 = vunpack.c.l.b16 %v1480
      %v1681 = vunpack.c.l.b16 %v1481
      %v1682 = vunpack.c.l.b16 %v1482
      %v1683 = vunpack.c.l.b16 %v1483
      %v1684 = vunpack.c.l.b16 %v1484
      %v1685 = vunpack.c.l.b16 %v1485
      %v1686 = vunpack.c.l.b16 %v1486
      %v1687 = vunpack.c.l.b16 %v1487
      %v1688 = vunpack.c.l.b16 %v1488
      %v1689 = vunpack.c.l.b16 %v1489
      %v1690 = vunpack.c.l.b16 %v1490
      %v1691 = vunpack.c.l.b16 %v1491
      %v1692 = vunpack.c.l.b16 %v1492
      %v1693 = vunpack.c.l.b16 %v1493
      %v1694 = vunpack.c.l.b16 %v1494
      %v1695 = vunpack.c.l.b16 %v1495
      %v1696 = vunpack.c.l.b16 %v1496
      %v1697 = vunpack.c.l.b16 %v1497
      %v1698 = vunpack.c.l.b16 %v1498
      %v1699 = vunpack.c.l.b16 %v1499
      %v1700 = vunpack.c.l.b16 %v1500
      %v1701 = vunpack.c.l.b16 %v1501
      %v1702 = vunpack.c.l.b16 %v1502
      %v1703 = vunpack.c.l.b16 %v1503
      %v1704 = vunpack.c.l.b16 %v1504
      %v1705 = vunpack.c.l.b16 %v1505
      %v1706 = vunpack.c.l.b16 %v1506
      %v1707 = vunpack.c.l.b16 %v1507
      %v1708 = vunpack.c.l.b16 %v1508
      %v1709 = vunpack.c.l.b16 %v1509
      %v1710 = vunpack.c.l.b16 %v1510
      %v1711 = vunpack.c.l.b16 %v1511
      %v1712 = vunpack.c.l.b16 %v1512
      %v1713 = vunpack.c.l.b16 %v1513
      %v1714 = vunpack.c.l.b16 %v1514
      %v1715 = vunpack.c.l.b16 %v1515
      %v1716 = vunpack.c.l.b16 %v1516
      %v1717 = vunpack.c.l.b16 %v1517
      %v1718 = vunpack.c.l.b16 %v1518
      %v1719 = vunpack.c.l.b16 %v1519
      %v1720 = vunpack.c.l.b16 %v1520
      %v1721 = vunpack.c.l.b16 %v1521
      %v1722 = vunpack.c.l.b16 %v1522
      %v1723 = vunpack.c.l.b16 %v1523
      %v1724 = vunpack.c.l.b16 %v1524
      %v1725 = vunpack.c.l.b16 %v1525
      %v1726 = vunpack.c.l.b16 %v1526
      %v1727 = vunpack.c.l.b16 %v1527
      %v1728 = vunpack.c.l.b16 %v1528
      %v1729 = vunpack.c.l.b16 %v1529
      %v1730 = vunpack.c.l.b16 %v1530
      %v1731 = vunpack.c.l.b16 %v1531
      %v1732 = vunpack.c.l.b16 %v1532
      %v1733 = vunpack.c.l.b16 %v1533
      %v1734 = vunpack.c.l.b16 %v1534
      %v1735 = vunpack.c.l.b16 %v1535
      %v1736 = vunpack.c.l.b16 %v1536
      %v1737 = vunpack.c.l.b16 %v1537
      %v1738 = vunpack.c.l.b16 %v1538
      %v1739 = vunpack.c.l.b16 %v1539
      %v1740 = vunpack.c.l.b16 %v1540
      %v1741 = vunpack.c.l.b16 %v1541
      %v1742 = vunpack.c.l.b16 %v1542
      %v1743 = vunpack.c.l.b16 %v1543
      %v1744 = vunpack.c.l.b16 %v1544
      %v1745 = vunpack.c.l.b16 %v1545
      %v1746 = vunpack.c.l.b16 %v1546
      %v1747 = vunpack.c.l.b16 %v1547
      %v1748 = vunpack.c.l.b16 %v1548
      %v1749 = vunpack.c.l.b16 %v1549
      %v1750 = vunpack.c.l.b16 %v1550
      %v1751 = vunpack.c.l.b16 %v1551
      %v1752 = vunpack.c.l.b16 %v1552
      %v1753 = vunpack.c.l.b16 %v1553
      %v1754 = vunpack.c.l.b16 %v1554
      %v1755 = vunpack.c.l.b16 %v1555
      %v1756 = vunpack.c.l.b16 %v1556
      %v1757 = vunpack.c.l.b16 %v1557
      %v1758 = vunpack.c.l.b16 %v1558
      %v1759 = vpack.c.b16 %v1660, %v1659
      %v1760 = vpack.c.b16 %v1662, %v1661
      %v1761 = vpack.c.b16 %v1664, %v1663
      %v1762 = vpack.c.b16 %v1666, %v1665
      %v1763 = vpack.c.b16 %v1668, %v1667
      %v1764 = vpack.c.b16 %v1670, %v1669
      %v1765 = vpack.c.b16 %v1672, %v1671
      %v1766 = vpack.c.b16 %v1674, %v1673
      %v1767 = vpack.c.b16 %v1676, %v1675
      %v1768 = vpack.c.b16 %v1678, %v1677
      %v1769 = vpack.c.b16 %v1680, %v1679
      %v1770 = vpack.c.b16 %v1682, %v1681
      %v1771 = vpack.c.b16 %v1684, %v1683
      %v1772 = vpack.c.b16 %v1686, %v1685
      %v1773 = vpack.c.b16 %v1688, %v1687
      %v1774 = vpack.c.b16 %v1690, %v1689
      %v1775 = vpack.c.b16 %v1692, %v1691
      %v1776 = vpack.c.b16 %v1694, %v1693
      %v1777 = vpack.c.b16 %v1696, %v1695
      %v1778 = vpack.c.b16 %v1698, %v1697
      %v1779 = vpack.c.b16 %v1700, %v1699
      %v1780 = vpack.c.b16 %v1702, %v1701
      %v1781 = vpack.c.b16 %v1704, %v1703
      %v1782 = vpack.c.b16 %v1706, %v1705
      %v1783 = vpack.c.b16 %v1708, %v1707
      %v1784 = vpack.c.b16 %v1710, %v1709
      %v1785 = vpack.c.b16 %v1712, %v1711
      %v1786 = vpack.c.b16 %v1714, %v1713
      %v1787 = vpack.c.b16 %v1716, %v1715
      %v1788 = vpack.c.b16 %v1718, %v1717
      %v1789 = vpack.c.b16 %v1720, %v1719
      %v1790 = vpack.c.b16 %v1722, %v1721
      %v1791 = vpack.c.b16 %v1724, %v1723
      %v1792 = vpack.c.b16 %v1726, %v1725
      %v1793 = vpack.c.b16 %v1728, %v1727
      %v1794 = vpack.c.b16 %v1730, %v1729
      %v1795 = vpack.c.b16 %v1732, %v1731
      %v1796 = vpack.c.b16 %v1734, %v1733
      %v1797 = vpack.c.b16 %v1736, %v1735
      %v1798 = vpack.c.b16 %v1738, %v1737
      %v1799 = vpack.c.b16 %v1740, %v1739
      %v1800 = vpack.c.b16 %v1742, %v1741
      %v1801 = vpack.c.b16 %v1744, %v1743
      %v1802 = vpack.c.b16 %v1746, %v1745
      %v1803 = vpack.c.b16 %v1748, %v1747
      %v1804 = vpack.c.b16 %v1750, %v1749
      %v1805 = vpack.c.b16 %v1752, %v1751
      %v1806 = vpack.c.b16 %v1754, %v1753
      %v1807 = vpack.c.b16 %v1756, %v1755
      %v1808 = vpack.c.b16 %v1758, %v1757
      %1859 = vmatprep.subr.bf16.mxu0 0
      %1860 = vmatpush1.bf16.msra.mxu0 %v1766
      %1861 = vmatprep.subr.bf16.mxu0 0
      %1862 = vmatpush1.bf16.msra.mxu0 %v1765
      %1863 = vmatprep.subr.bf16.mxu0 0
      %1864 = vmatpush1.bf16.msra.mxu0 %v1764
      %1865 = vmatprep.subr.bf16.mxu0 0
      %1866 = vmatpush1.bf16.msra.mxu0 %v1763
      %1867 = vmatprep.subr.bf16.mxu0 0
      %1868 = vmatpush1.bf16.msra.mxu0 %v1762
      %1869 = vmatprep.subr.bf16.mxu0 0
      %1870 = vmatpush1.bf16.msra.mxu0 %v1761
      %1871 = vmatprep.subr.bf16.mxu0 0
      %1872 = vmatpush1.bf16.msra.mxu0 %v1760
      %1873 = vmatprep.subr.bf16.mxu0 0
      %1874 = vmatpush1.bf16.msra.mxu0 %v1759
      %1875 = vmatprep.subr.bf16.mxu0 0
      %1876 = vmatpush2.bf16.msra.mxu0 %v1774
      %1877 = vmatprep.subr.bf16.mxu0 0
      %1878 = vmatpush2.bf16.msra.mxu0 %v1773
      %1879 = vmatprep.subr.bf16.mxu0 0
      %1880 = vmatpush2.bf16.msra.mxu0 %v1772
      %1881 = vmatprep.subr.bf16.mxu0 0
      %1882 = vmatpush2.bf16.msra.mxu0 %v1771
      %1883 = vmatprep.subr.bf16.mxu0 0
      %1884 = vmatpush2.bf16.msra.mxu0 %v1770
      %1885 = vmatprep.subr.bf16.mxu0 0
      %1886 = vmatpush2.bf16.msra.mxu0 %v1769
      %1887 = vmatprep.subr.bf16.mxu0 0
      %1888 = vmatpush2.bf16.msra.mxu0 %v1768
      %1889 = vmatprep.subr.bf16.mxu0 0
      %1890 = vmatpush2.bf16.msra.mxu0 %v1767
      %1891 = vmatprep.mubr.bf16.mxu0 %v333
      %1892 = vmatmul.mubr.bf16.gmra.mxu0 %v332
      %v1893 = vpop.f32.mrf.mxu0
      %v1894 = vadd.f32 0.0, %v1893
      %v1895 = vpop.f32.mrf.mxu0
      %v1896 = vpop.f32.mrf.mxu0
      %v1897 = vadd.f32 0.0, %v1896
      %v1898 = vpop.f32.mrf.mxu0
      %1899 = vmatprep.mubr.bf16.mxu0 %v340
      %1900 = vmatmul.mubr.bf16.gmra.mxu0 %v339
      %v1901 = vpop.f32.mrf.mxu0
      %v1902 = vadd.f32 0.0, %v1901
      %v1903 = vpop.f32.mrf.mxu0
      %v1904 = vpop.f32.mrf.mxu0
      %v1905 = vadd.f32 0.0, %v1904
      %v1906 = vpop.f32.mrf.mxu0
      %1907 = vdwg.mxu0
      %1908 = vmatprep.subr.bf16.mxu0 0
      %1909 = vmatpush1.bf16.msra.mxu0 %v1782
      %1910 = vmatprep.subr.bf16.mxu0 0
      %1911 = vmatpush1.bf16.msra.mxu0 %v1781
      %1912 = vmatprep.subr.bf16.mxu0 0
      %1913 = vmatpush1.bf16.msra.mxu0 %v1780
      %1914 = vmatprep.subr.bf16.mxu0 0
      %1915 = vmatpush1.bf16.msra.mxu0 %v1779
      %1916 = vmatprep.subr.bf16.mxu0 0
      %1917 = vmatpush1.bf16.msra.mxu0 %v1778
      %1918 = vmatprep.subr.bf16.mxu0 0
      %1919 = vmatpush1.bf16.msra.mxu0 %v1777
      %1920 = vmatprep.subr.bf16.mxu0 0
      %1921 = vmatpush1.bf16.msra.mxu0 %v1776
      %1922 = vmatprep.subr.bf16.mxu0 0
      %1923 = vmatpush1.bf16.msra.mxu0 %v1775
      %1924 = vmatprep.subr.bf16.mxu0 0
      %1925 = vmatpush2.bf16.msra.mxu0 %v1790
      %1926 = vmatprep.subr.bf16.mxu0 0
      %1927 = vmatpush2.bf16.msra.mxu0 %v1789
      %1928 = vmatprep.subr.bf16.mxu0 0
      %1929 = vmatpush2.bf16.msra.mxu0 %v1788
      %1930 = vmatprep.subr.bf16.mxu0 0
      %1931 = vmatpush2.bf16.msra.mxu0 %v1787
      %1932 = vmatprep.subr.bf16.mxu0 0
      %1933 = vmatpush2.bf16.msra.mxu0 %v1786
      %1934 = vmatprep.subr.bf16.mxu0 0
      %1935 = vmatpush2.bf16.msra.mxu0 %v1785
      %1936 = vmatprep.subr.bf16.mxu0 0
      %1937 = vmatpush2.bf16.msra.mxu0 %v1784
      %1938 = vmatprep.subr.bf16.mxu0 0
      %1939 = vmatpush2.bf16.msra.mxu0 %v1783
      %1940 = vmatprep.mubr.bf16.mxu0 %v335
      %1941 = vmatmul.mubr.bf16.gmra.mxu0 %v334
      %v1942 = vpop.f32.mrf.mxu0
      %v1943 = vadd.f32 %v1894, %v1942
      %v1944 = vpop.f32.mrf.mxu0
      %v1945 = vpop.f32.mrf.mxu0
      %v1946 = vadd.f32 %v1897, %v1945
      %v1947 = vpop.f32.mrf.mxu0
      %1948 = vmatprep.mubr.bf16.mxu0 %v342
      %1949 = vmatmul.mubr.bf16.gmra.mxu0 %v341
      %v1950 = vpop.f32.mrf.mxu0
      %v1951 = vadd.f32 %v1902, %v1950
      %v1952 = vpop.f32.mrf.mxu0
      %v1953 = vpop.f32.mrf.mxu0
      %v1954 = vadd.f32 %v1905, %v1953
      %v1955 = vpop.f32.mrf.mxu0
      %1956 = vdwg.mxu0
      %1957 = vmatprep.subr.bf16.mxu0 0
      %1958 = vmatpush1.bf16.msra.mxu0 %v1798
      %1959 = vmatprep.subr.bf16.mxu0 0
      %1960 = vmatpush1.bf16.msra.mxu0 %v1797
      %1961 = vmatprep.subr.bf16.mxu0 0
      %1962 = vmatpush1.bf16.msra.mxu0 %v1796
      %1963 = vmatprep.subr.bf16.mxu0 0
      %1964 = vmatpush1.bf16.msra.mxu0 %v1795
      %1965 = vmatprep.subr.bf16.mxu0 0
      %1966 = vmatpush1.bf16.msra.mxu0 %v1794
      %1967 = vmatprep.subr.bf16.mxu0 0
      %1968 = vmatpush1.bf16.msra.mxu0 %v1793
      %1969 = vmatprep.subr.bf16.mxu0 0
      %1970 = vmatpush1.bf16.msra.mxu0 %v1792
      %1971 = vmatprep.subr.bf16.mxu0 0
      %1972 = vmatpush1.bf16.msra.mxu0 %v1791
      %1973 = vmatprep.subr.bf16.mxu0 0
      %1974 = vmatpush2.bf16.msra.mxu0 %v1806
      %1975 = vmatprep.subr.bf16.mxu0 0
      %1976 = vmatpush2.bf16.msra.mxu0 %v1805
      %1977 = vmatprep.subr.bf16.mxu0 0
      %1978 = vmatpush2.bf16.msra.mxu0 %v1804
      %1979 = vmatprep.subr.bf16.mxu0 0
      %1980 = vmatpush2.bf16.msra.mxu0 %v1803
      %1981 = vmatprep.subr.bf16.mxu0 0
      %1982 = vmatpush2.bf16.msra.mxu0 %v1802
      %1983 = vmatprep.subr.bf16.mxu0 0
      %1984 = vmatpush2.bf16.msra.mxu0 %v1801
      %1985 = vmatprep.subr.bf16.mxu0 0
      %1986 = vmatpush2.bf16.msra.mxu0 %v1800
      %1987 = vmatprep.subr.bf16.mxu0 0
      %1988 = vmatpush2.bf16.msra.mxu0 %v1799
      %1989 = vmatprep.mubr.bf16.mxu0 %v337
      %1990 = vmatmul.mubr.bf16.gmra.mxu0 %v336
      %v1991 = vpop.f32.mrf.mxu0
      %v1992 = vadd.f32 %v1943, %v1991
      %v1993 = vpop.f32.mrf.mxu0
      %v1994 = vpop.f32.mrf.mxu0
      %v1995 = vadd.f32 %v1946, %v1994
      %v1996 = vpop.f32.mrf.mxu0
      %1997 = vmatprep.mubr.bf16.mxu0 %v344
      %1998 = vmatmul.mubr.bf16.gmra.mxu0 %v343
      %v1999 = vpop.f32.mrf.mxu0
      %v2000 = vadd.f32 %v1951, %v1999
      %v2001 = vpop.f32.mrf.mxu0
      %v2002 = vpop.f32.mrf.mxu0
      %v2003 = vadd.f32 %v1954, %v2002
      %v2004 = vpop.f32.mrf.mxu0
      %2005 = vdwg.mxu0
      %2006 = vmatprep.subr.bf16.mxu0 0
      %2007 = vmatpush1.bf16.msra.mxu0 0
      %2008 = vmatprep.subr.bf16.mxu0 0
      %2009 = vmatpush1.bf16.msra.mxu0 0
      %2010 = vmatprep.subr.bf16.mxu0 0
      %2011 = vmatpush1.bf16.msra.mxu0 0
      %2012 = vmatprep.subr.bf16.mxu0 0
      %2013 = vmatpush1.bf16.msra.mxu0 0
      %2014 = vmatprep.subr.bf16.mxu0 0
      %2015 = vmatpush1.bf16.msra.mxu0 0
      %2016 = vmatprep.subr.bf16.mxu0 0
      %2017 = vmatpush1.bf16.msra.mxu0 0
      %2018 = vmatprep.subr.bf16.mxu0 0
      %2019 = vmatpush1.bf16.msra.mxu0 %v1808
      %2020 = vmatprep.subr.bf16.mxu0 0
      %2021 = vmatpush1.bf16.msra.mxu0 %v1807
      %2022 = vmatprep.subr.bf16.mxu0 0
      %2023 = vmatpush2.bf16.msra.mxu0 0
      %2024 = vmatprep.subr.bf16.mxu0 0
      %2025 = vmatpush2.bf16.msra.mxu0 0
      %2026 = vmatprep.subr.bf16.mxu0 0
      %2027 = vmatpush2.bf16.msra.mxu0 0
      %2028 = vmatprep.subr.bf16.mxu0 0
      %2029 = vmatpush2.bf16.msra.mxu0 0
      %2030 = vmatprep.subr.bf16.mxu0 0
      %2031 = vmatpush2.bf16.msra.mxu0 0
      %2032 = vmatprep.subr.bf16.mxu0 0
      %2033 = vmatpush2.bf16.msra.mxu0 0
      %2034 = vmatprep.subr.bf16.mxu0 0
      %2035 = vmatpush2.bf16.msra.mxu0 0
      %2036 = vmatprep.subr.bf16.mxu0 0
      %2037 = vmatpush2.bf16.msra.mxu0 0
      %2038 = vmatprep.mubr.bf16.mxu0 0
      %2039 = vmatmul.mubr.bf16.gmra.mxu0 %v660
      %v2040 = vpop.f32.mrf.mxu0
      %v2041 = vadd.f32 %v1992, %v2040
      %v2042 = vpop.f32.mrf.mxu0
      %v2043 = vpop.f32.mrf.mxu0
      %v2044 = vadd.f32 %v1995, %v2043
      %v2045 = vpop.f32.mrf.mxu0
      %2046 = vmatprep.mubr.bf16.mxu0 0
      %2047 = vmatmul.mubr.bf16.gmra.mxu0 %v663
      %v2048 = vpop.f32.mrf.mxu0
      %v2049 = vadd.f32 %v2000, %v2048
      %v2050 = vpop.f32.mrf.mxu0
      %v2051 = vpop.f32.mrf.mxu0
      %v2052 = vadd.f32 %v2003, %v2051
      %v2053 = vpop.f32.mrf.mxu0
      %2054 = vdwg.mxu0
      %s2055 = scalar_lea.vmem %s165, 1200
      %v2056 = vld [vmem:[%s2055] sm:$0xf]
      %v2057 = vld [vmem:[%s2055 + $0x4] sm:$0xf]
      %v2058 = vld [vmem:[%s2055 + $0x8] sm:$0xf]
      %v2059 = vld [vmem:[%s2055 + $0xc] sm:$0xf]
      %v2060 = vld [vmem:[%s2055 + $0x10] sm:$0xf]
      %v2061 = vld [vmem:[%s2055 + $0x14] sm:$0xf]
      %v2062 = vld [vmem:[%s2055 + $0x18] sm:$0xf]
      %v2063 = vld [vmem:[%s2055 + $0x1c] sm:$0xf]
      %v2064 = vld [vmem:[%s2055 + $0x20] sm:$0xf]
      %v2065 = vld [vmem:[%s2055 + $0x24] sm:$0xf]
      %v2066 = vld [vmem:[%s2055 + $0x28] sm:$0xf]
      %v2067 = vld [vmem:[%s2055 + $0x2c] sm:$0xf]
      %v2068 = vld [vmem:[%s2055 + $0x30] sm:$0xf]
      %v2069 = vld [vmem:[%s2055 + $0x34] sm:$0xf]
      %v2070 = vld [vmem:[%s2055 + $0x38] sm:$0xf]
      %v2071 = vld [vmem:[%s2055 + $0x3c] sm:$0xf]
      %v2072 = vld [vmem:[%s2055 + $0x40] sm:$0xf]
      %v2073 = vld [vmem:[%s2055 + $0x44] sm:$0xf]
      %v2074 = vld [vmem:[%s2055 + $0x48] sm:$0xf]
      %v2075 = vld [vmem:[%s2055 + $0x4c] sm:$0xf]
      %v2076 = vld [vmem:[%s2055 + $0x50] sm:$0xf]
      %v2077 = vld [vmem:[%s2055 + $0x54] sm:$0xf]
      %v2078 = vld [vmem:[%s2055 + $0x58] sm:$0xf]
      %v2079 = vld [vmem:[%s2055 + $0x5c] sm:$0xf]
      %v2080 = vld [vmem:[%s2055 + $0x60] sm:$0xf]
      %v2081 = vld [vmem:[%s2055 + $0x64] sm:$0xf]
      %v2082 = vld [vmem:[%s2055 + $0x68] sm:$0xf]
      %v2083 = vld [vmem:[%s2055 + $0x6c] sm:$0xf]
      %v2084 = vld [vmem:[%s2055 + $0x70] sm:$0xf]
      %v2085 = vld [vmem:[%s2055 + $0x74] sm:$0xf]
      %v2086 = vld [vmem:[%s2055 + $0x78] sm:$0xf]
      %v2087 = vld [vmem:[%s2055 + $0x7c] sm:$0xf]
      %v2088 = vld [vmem:[%s2055 + $0x80] sm:$0xf]
      %v2089 = vld [vmem:[%s2055 + $0x84] sm:$0xf]
      %v2090 = vld [vmem:[%s2055 + $0x88] sm:$0xf]
      %v2091 = vld [vmem:[%s2055 + $0x8c] sm:$0xf]
      %v2092 = vld [vmem:[%s2055 + $0x90] sm:$0xf]
      %v2093 = vld [vmem:[%s2055 + $0x94] sm:$0xf]
      %v2094 = vld [vmem:[%s2055 + $0x98] sm:$0xf]
      %v2095 = vld [vmem:[%s2055 + $0x9c] sm:$0xf]
      %v2096 = vld [vmem:[%s2055 + $0xa0] sm:$0xf]
      %v2097 = vld [vmem:[%s2055 + $0xa4] sm:$0xf]
      %v2098 = vld [vmem:[%s2055 + $0xa8] sm:$0xf]
      %v2099 = vld [vmem:[%s2055 + $0xac] sm:$0xf]
      %v2100 = vld [vmem:[%s2055 + $0xb0] sm:$0xf]
      %v2101 = vld [vmem:[%s2055 + $0xb4] sm:$0xf]
      %v2102 = vld [vmem:[%s2055 + $0xb8] sm:$0xf]
      %v2103 = vld [vmem:[%s2055 + $0xbc] sm:$0xf]
      %v2104 = vld [vmem:[%s2055 + $0xc0] sm:$0xf]
      %v2105 = vld [vmem:[%s2055 + $0xc4] sm:$0xf]
      %v2106 = vld [vmem:[%s2055 + $0xc8] sm:$0xf]
      %v2107 = vld [vmem:[%s2055 + $0xcc] sm:$0xf]
      %v2108 = vld [vmem:[%s2055 + $0xd0] sm:$0xf]
      %v2109 = vld [vmem:[%s2055 + $0xd4] sm:$0xf]
      %v2110 = vld [vmem:[%s2055 + $0xd8] sm:$0xf]
      %v2111 = vld [vmem:[%s2055 + $0xdc] sm:$0xf]
      %v2112 = vld [vmem:[%s2055 + $0xe0] sm:$0xf]
      %v2113 = vld [vmem:[%s2055 + $0xe4] sm:$0xf]
      %v2114 = vld [vmem:[%s2055 + $0xe8] sm:$0xf]
      %v2115 = vld [vmem:[%s2055 + $0xec] sm:$0xf]
      %v2116 = vld [vmem:[%s2055 + $0xf0] sm:$0xf]
      %v2117 = vld [vmem:[%s2055 + $0xf4] sm:$0xf]
      %v2118 = vld [vmem:[%s2055 + $0xf8] sm:$0xf]
      %v2119 = vld [vmem:[%s2055 + $0xfc] sm:$0xf]
      %v2120 = vld [vmem:[%s2055 + $0x100] sm:$0xf]
      %v2121 = vld [vmem:[%s2055 + $0x104] sm:$0xf]
      %v2122 = vld [vmem:[%s2055 + $0x108] sm:$0xf]
      %v2123 = vld [vmem:[%s2055 + $0x10c] sm:$0xf]
      %v2124 = vld [vmem:[%s2055 + $0x110] sm:$0xf]
      %v2125 = vld [vmem:[%s2055 + $0x114] sm:$0xf]
      %v2126 = vld [vmem:[%s2055 + $0x118] sm:$0xf]
      %v2127 = vld [vmem:[%s2055 + $0x11c] sm:$0xf]
      %v2128 = vld [vmem:[%s2055 + $0x120] sm:$0xf]
      %v2129 = vld [vmem:[%s2055 + $0x124] sm:$0xf]
      %v2130 = vld [vmem:[%s2055 + $0x128] sm:$0xf]
      %v2131 = vld [vmem:[%s2055 + $0x12c] sm:$0xf]
      %v2132 = vld [vmem:[%s2055 + $0x130] sm:$0xf]
      %v2133 = vld [vmem:[%s2055 + $0x134] sm:$0xf]
      %v2134 = vld [vmem:[%s2055 + $0x138] sm:$0xf]
      %v2135 = vld [vmem:[%s2055 + $0x13c] sm:$0xf]
      %v2136 = vld [vmem:[%s2055 + $0x140] sm:$0xf]
      %v2137 = vld [vmem:[%s2055 + $0x144] sm:$0xf]
      %v2138 = vld [vmem:[%s2055 + $0x148] sm:$0xf]
      %v2139 = vld [vmem:[%s2055 + $0x14c] sm:$0xf]
      %v2140 = vld [vmem:[%s2055 + $0x150] sm:$0xf]
      %v2141 = vld [vmem:[%s2055 + $0x154] sm:$0xf]
      %v2142 = vld [vmem:[%s2055 + $0x158] sm:$0xf]
      %v2143 = vld [vmem:[%s2055 + $0x15c] sm:$0xf]
      %v2144 = vld [vmem:[%s2055 + $0x160] sm:$0xf]
      %v2145 = vld [vmem:[%s2055 + $0x164] sm:$0xf]
      %v2146 = vld [vmem:[%s2055 + $0x168] sm:$0xf]
      %v2147 = vld [vmem:[%s2055 + $0x16c] sm:$0xf]
      %v2148 = vld [vmem:[%s2055 + $0x170] sm:$0xf]
      %v2149 = vld [vmem:[%s2055 + $0x174] sm:$0xf]
      %v2150 = vld [vmem:[%s2055 + $0x178] sm:$0xf]
      %v2151 = vld [vmem:[%s2055 + $0x17c] sm:$0xf]
      %v2152 = vld [vmem:[%s2055 + $0x180] sm:$0xf]
      %v2153 = vld [vmem:[%s2055 + $0x184] sm:$0xf]
      %v2154 = vld [vmem:[%s2055 + $0x188] sm:$0xf]
      %v2155 = vld [vmem:[%s2055 + $0x18c] sm:$0xf]
      %v2256 = vunpack.c.l.b16 %v2056
      %v2257 = vunpack.c.l.b16 %v2057
      %v2258 = vunpack.c.l.b16 %v2058
      %v2259 = vunpack.c.l.b16 %v2059
      %v2260 = vunpack.c.l.b16 %v2060
      %v2261 = vunpack.c.l.b16 %v2061
      %v2262 = vunpack.c.l.b16 %v2062
      %v2263 = vunpack.c.l.b16 %v2063
      %v2264 = vunpack.c.l.b16 %v2064
      %v2265 = vunpack.c.l.b16 %v2065
      %v2266 = vunpack.c.l.b16 %v2066
      %v2267 = vunpack.c.l.b16 %v2067
      %v2268 = vunpack.c.l.b16 %v2068
      %v2269 = vunpack.c.l.b16 %v2069
      %v2270 = vunpack.c.l.b16 %v2070
      %v2271 = vunpack.c.l.b16 %v2071
      %v2272 = vunpack.c.l.b16 %v2072
      %v2273 = vunpack.c.l.b16 %v2073
      %v2274 = vunpack.c.l.b16 %v2074
      %v2275 = vunpack.c.l.b16 %v2075
      %v2276 = vunpack.c.l.b16 %v2076
      %v2277 = vunpack.c.l.b16 %v2077
      %v2278 = vunpack.c.l.b16 %v2078
      %v2279 = vunpack.c.l.b16 %v2079
      %v2280 = vunpack.c.l.b16 %v2080
      %v2281 = vunpack.c.l.b16 %v2081
      %v2282 = vunpack.c.l.b16 %v2082
      %v2283 = vunpack.c.l.b16 %v2083
      %v2284 = vunpack.c.l.b16 %v2084
      %v2285 = vunpack.c.l.b16 %v2085
      %v2286 = vunpack.c.l.b16 %v2086
      %v2287 = vunpack.c.l.b16 %v2087
      %v2288 = vunpack.c.l.b16 %v2088
      %v2289 = vunpack.c.l.b16 %v2089
      %v2290 = vunpack.c.l.b16 %v2090
      %v2291 = vunpack.c.l.b16 %v2091
      %v2292 = vunpack.c.l.b16 %v2092
      %v2293 = vunpack.c.l.b16 %v2093
      %v2294 = vunpack.c.l.b16 %v2094
      %v2295 = vunpack.c.l.b16 %v2095
      %v2296 = vunpack.c.l.b16 %v2096
      %v2297 = vunpack.c.l.b16 %v2097
      %v2298 = vunpack.c.l.b16 %v2098
      %v2299 = vunpack.c.l.b16 %v2099
      %v2300 = vunpack.c.l.b16 %v2100
      %v2301 = vunpack.c.l.b16 %v2101
      %v2302 = vunpack.c.l.b16 %v2102
      %v2303 = vunpack.c.l.b16 %v2103
      %v2304 = vunpack.c.l.b16 %v2104
      %v2305 = vunpack.c.l.b16 %v2105
      %v2306 = vunpack.c.l.b16 %v2106
      %v2307 = vunpack.c.l.b16 %v2107
      %v2308 = vunpack.c.l.b16 %v2108
      %v2309 = vunpack.c.l.b16 %v2109
      %v2310 = vunpack.c.l.b16 %v2110
      %v2311 = vunpack.c.l.b16 %v2111
      %v2312 = vunpack.c.l.b16 %v2112
      %v2313 = vunpack.c.l.b16 %v2113
      %v2314 = vunpack.c.l.b16 %v2114
      %v2315 = vunpack.c.l.b16 %v2115
      %v2316 = vunpack.c.l.b16 %v2116
      %v2317 = vunpack.c.l.b16 %v2117
      %v2318 = vunpack.c.l.b16 %v2118
      %v2319 = vunpack.c.l.b16 %v2119
      %v2320 = vunpack.c.l.b16 %v2120
      %v2321 = vunpack.c.l.b16 %v2121
      %v2322 = vunpack.c.l.b16 %v2122
      %v2323 = vunpack.c.l.b16 %v2123
      %v2324 = vunpack.c.l.b16 %v2124
      %v2325 = vunpack.c.l.b16 %v2125
      %v2326 = vunpack.c.l.b16 %v2126
      %v2327 = vunpack.c.l.b16 %v2127
      %v2328 = vunpack.c.l.b16 %v2128
      %v2329 = vunpack.c.l.b16 %v2129
      %v2330 = vunpack.c.l.b16 %v2130
      %v2331 = vunpack.c.l.b16 %v2131
      %v2332 = vunpack.c.l.b16 %v2132
      %v2333 = vunpack.c.l.b16 %v2133
      %v2334 = vunpack.c.l.b16 %v2134
      %v2335 = vunpack.c.l.b16 %v2135
      %v2336 = vunpack.c.l.b16 %v2136
      %v2337 = vunpack.c.l.b16 %v2137
      %v2338 = vunpack.c.l.b16 %v2138
      %v2339 = vunpack.c.l.b16 %v2139
      %v2340 = vunpack.c.l.b16 %v2140
      %v2341 = vunpack.c.l.b16 %v2141
      %v2342 = vunpack.c.l.b16 %v2142
      %v2343 = vunpack.c.l.b16 %v2143
      %v2344 = vunpack.c.l.b16 %v2144
      %v2345 = vunpack.c.l.b16 %v2145
      %v2346 = vunpack.c.l.b16 %v2146
      %v2347 = vunpack.c.l.b16 %v2147
      %v2348 = vunpack.c.l.b16 %v2148
      %v2349 = vunpack.c.l.b16 %v2149
      %v2350 = vunpack.c.l.b16 %v2150
      %v2351 = vunpack.c.l.b16 %v2151
      %v2352 = vunpack.c.l.b16 %v2152
      %v2353 = vunpack.c.l.b16 %v2153
      %v2354 = vunpack.c.l.b16 %v2154
      %v2355 = vunpack.c.l.b16 %v2155
      %v2356 = vpack.c.b16 %v2257, %v2256
      %v2357 = vpack.c.b16 %v2259, %v2258
      %v2358 = vpack.c.b16 %v2261, %v2260
      %v2359 = vpack.c.b16 %v2263, %v2262
      %v2360 = vpack.c.b16 %v2265, %v2264
      %v2361 = vpack.c.b16 %v2267, %v2266
      %v2362 = vpack.c.b16 %v2269, %v2268
      %v2363 = vpack.c.b16 %v2271, %v2270
      %v2364 = vpack.c.b16 %v2273, %v2272
      %v2365 = vpack.c.b16 %v2275, %v2274
      %v2366 = vpack.c.b16 %v2277, %v2276
      %v2367 = vpack.c.b16 %v2279, %v2278
      %v2368 = vpack.c.b16 %v2281, %v2280
      %v2369 = vpack.c.b16 %v2283, %v2282
      %v2370 = vpack.c.b16 %v2285, %v2284
      %v2371 = vpack.c.b16 %v2287, %v2286
      %v2372 = vpack.c.b16 %v2289, %v2288
      %v2373 = vpack.c.b16 %v2291, %v2290
      %v2374 = vpack.c.b16 %v2293, %v2292
      %v2375 = vpack.c.b16 %v2295, %v2294
      %v2376 = vpack.c.b16 %v2297, %v2296
      %v2377 = vpack.c.b16 %v2299, %v2298
      %v2378 = vpack.c.b16 %v2301, %v2300
      %v2379 = vpack.c.b16 %v2303, %v2302
      %v2380 = vpack.c.b16 %v2305, %v2304
      %v2381 = vpack.c.b16 %v2307, %v2306
      %v2382 = vpack.c.b16 %v2309, %v2308
      %v2383 = vpack.c.b16 %v2311, %v2310
      %v2384 = vpack.c.b16 %v2313, %v2312
      %v2385 = vpack.c.b16 %v2315, %v2314
      %v2386 = vpack.c.b16 %v2317, %v2316
      %v2387 = vpack.c.b16 %v2319, %v2318
      %v2388 = vpack.c.b16 %v2321, %v2320
      %v2389 = vpack.c.b16 %v2323, %v2322
      %v2390 = vpack.c.b16 %v2325, %v2324
      %v2391 = vpack.c.b16 %v2327, %v2326
      %v2392 = vpack.c.b16 %v2329, %v2328
      %v2393 = vpack.c.b16 %v2331, %v2330
      %v2394 = vpack.c.b16 %v2333, %v2332
      %v2395 = vpack.c.b16 %v2335, %v2334
      %v2396 = vpack.c.b16 %v2337, %v2336
      %v2397 = vpack.c.b16 %v2339, %v2338
      %v2398 = vpack.c.b16 %v2341, %v2340
      %v2399 = vpack.c.b16 %v2343, %v2342
      %v2400 = vpack.c.b16 %v2345, %v2344
      %v2401 = vpack.c.b16 %v2347, %v2346
      %v2402 = vpack.c.b16 %v2349, %v2348
      %v2403 = vpack.c.b16 %v2351, %v2350
      %v2404 = vpack.c.b16 %v2353, %v2352
      %v2405 = vpack.c.b16 %v2355, %v2354
      %2456 = vmatprep.subr.bf16.mxu0 0
      %2457 = vmatpush1.bf16.msra.mxu0 %v2363
      %2458 = vmatprep.subr.bf16.mxu0 0
      %2459 = vmatpush1.bf16.msra.mxu0 %v2362
      %2460 = vmatprep.subr.bf16.mxu0 0
      %2461 = vmatpush1.bf16.msra.mxu0 %v2361
      %2462 = vmatprep.subr.bf16.mxu0 0
      %2463 = vmatpush1.bf16.msra.mxu0 %v2360
      %2464 = vmatprep.subr.bf16.mxu0 0
      %2465 = vmatpush1.bf16.msra.mxu0 %v2359
      %2466 = vmatprep.subr.bf16.mxu0 0
      %2467 = vmatpush1.bf16.msra.mxu0 %v2358
      %2468 = vmatprep.subr.bf16.mxu0 0
      %2469 = vmatpush1.bf16.msra.mxu0 %v2357
      %2470 = vmatprep.subr.bf16.mxu0 0
      %2471 = vmatpush1.bf16.msra.mxu0 %v2356
      %2472 = vmatprep.subr.bf16.mxu0 0
      %2473 = vmatpush2.bf16.msra.mxu0 %v2371
      %2474 = vmatprep.subr.bf16.mxu0 0
      %2475 = vmatpush2.bf16.msra.mxu0 %v2370
      %2476 = vmatprep.subr.bf16.mxu0 0
      %2477 = vmatpush2.bf16.msra.mxu0 %v2369
      %2478 = vmatprep.subr.bf16.mxu0 0
      %2479 = vmatpush2.bf16.msra.mxu0 %v2368
      %2480 = vmatprep.subr.bf16.mxu0 0
      %2481 = vmatpush2.bf16.msra.mxu0 %v2367
      %2482 = vmatprep.subr.bf16.mxu0 0
      %2483 = vmatpush2.bf16.msra.mxu0 %v2366
      %2484 = vmatprep.subr.bf16.mxu0 0
      %2485 = vmatpush2.bf16.msra.mxu0 %v2365
      %2486 = vmatprep.subr.bf16.mxu0 0
      %2487 = vmatpush2.bf16.msra.mxu0 %v2364
      %2488 = vmatprep.mubr.bf16.mxu0 %v333
      %2489 = vmatmul.mubr.bf16.gmra.mxu0 %v332
      %v2490 = vpop.f32.mrf.mxu0
      %v2491 = vadd.f32 0.0, %v2490
      %v2492 = vpop.f32.mrf.mxu0
      %v2493 = vpop.f32.mrf.mxu0
      %v2494 = vadd.f32 0.0, %v2493
      %v2495 = vpop.f32.mrf.mxu0
      %2496 = vmatprep.mubr.bf16.mxu0 %v340
      %2497 = vmatmul.mubr.bf16.gmra.mxu0 %v339
      %v2498 = vpop.f32.mrf.mxu0
      %v2499 = vadd.f32 0.0, %v2498
      %v2500 = vpop.f32.mrf.mxu0
      %v2501 = vpop.f32.mrf.mxu0
      %v2502 = vadd.f32 0.0, %v2501
      %v2503 = vpop.f32.mrf.mxu0
      %2504 = vdwg.mxu0
      %2505 = vmatprep.subr.bf16.mxu0 0
      %2506 = vmatpush1.bf16.msra.mxu0 %v2379
      %2507 = vmatprep.subr.bf16.mxu0 0
      %2508 = vmatpush1.bf16.msra.mxu0 %v2378
      %2509 = vmatprep.subr.bf16.mxu0 0
      %2510 = vmatpush1.bf16.msra.mxu0 %v2377
      %2511 = vmatprep.subr.bf16.mxu0 0
      %2512 = vmatpush1.bf16.msra.mxu0 %v2376
      %2513 = vmatprep.subr.bf16.mxu0 0
      %2514 = vmatpush1.bf16.msra.mxu0 %v2375
      %2515 = vmatprep.subr.bf16.mxu0 0
      %2516 = vmatpush1.bf16.msra.mxu0 %v2374
      %2517 = vmatprep.subr.bf16.mxu0 0
      %2518 = vmatpush1.bf16.msra.mxu0 %v2373
      %2519 = vmatprep.subr.bf16.mxu0 0
      %2520 = vmatpush1.bf16.msra.mxu0 %v2372
      %2521 = vmatprep.subr.bf16.mxu0 0
      %2522 = vmatpush2.bf16.msra.mxu0 %v2387
      %2523 = vmatprep.subr.bf16.mxu0 0
      %2524 = vmatpush2.bf16.msra.mxu0 %v2386
      %2525 = vmatprep.subr.bf16.mxu0 0
      %2526 = vmatpush2.bf16.msra.mxu0 %v2385
      %2527 = vmatprep.subr.bf16.mxu0 0
      %2528 = vmatpush2.bf16.msra.mxu0 %v2384
      %2529 = vmatprep.subr.bf16.mxu0 0
      %2530 = vmatpush2.bf16.msra.mxu0 %v2383
      %2531 = vmatprep.subr.bf16.mxu0 0
      %2532 = vmatpush2.bf16.msra.mxu0 %v2382
      %2533 = vmatprep.subr.bf16.mxu0 0
      %2534 = vmatpush2.bf16.msra.mxu0 %v2381
      %2535 = vmatprep.subr.bf16.mxu0 0
      %2536 = vmatpush2.bf16.msra.mxu0 %v2380
      %2537 = vmatprep.mubr.bf16.mxu0 %v335
      %2538 = vmatmul.mubr.bf16.gmra.mxu0 %v334
      %v2539 = vpop.f32.mrf.mxu0
      %v2540 = vadd.f32 %v2491, %v2539
      %v2541 = vpop.f32.mrf.mxu0
      %v2542 = vpop.f32.mrf.mxu0
      %v2543 = vadd.f32 %v2494, %v2542
      %v2544 = vpop.f32.mrf.mxu0
      %2545 = vmatprep.mubr.bf16.mxu0 %v342
      %2546 = vmatmul.mubr.bf16.gmra.mxu0 %v341
      %v2547 = vpop.f32.mrf.mxu0
      %v2548 = vadd.f32 %v2499, %v2547
      %v2549 = vpop.f32.mrf.mxu0
      %v2550 = vpop.f32.mrf.mxu0
      %v2551 = vadd.f32 %v2502, %v2550
      %v2552 = vpop.f32.mrf.mxu0
      %2553 = vdwg.mxu0
      %2554 = vmatprep.subr.bf16.mxu0 0
      %2555 = vmatpush1.bf16.msra.mxu0 %v2395
      %2556 = vmatprep.subr.bf16.mxu0 0
      %2557 = vmatpush1.bf16.msra.mxu0 %v2394
      %2558 = vmatprep.subr.bf16.mxu0 0
      %2559 = vmatpush1.bf16.msra.mxu0 %v2393
      %2560 = vmatprep.subr.bf16.mxu0 0
      %2561 = vmatpush1.bf16.msra.mxu0 %v2392
      %2562 = vmatprep.subr.bf16.mxu0 0
      %2563 = vmatpush1.bf16.msra.mxu0 %v2391
      %2564 = vmatprep.subr.bf16.mxu0 0
      %2565 = vmatpush1.bf16.msra.mxu0 %v2390
      %2566 = vmatprep.subr.bf16.mxu0 0
      %2567 = vmatpush1.bf16.msra.mxu0 %v2389
      %2568 = vmatprep.subr.bf16.mxu0 0
      %2569 = vmatpush1.bf16.msra.mxu0 %v2388
      %2570 = vmatprep.subr.bf16.mxu0 0
      %2571 = vmatpush2.bf16.msra.mxu0 %v2403
      %2572 = vmatprep.subr.bf16.mxu0 0
      %2573 = vmatpush2.bf16.msra.mxu0 %v2402
      %2574 = vmatprep.subr.bf16.mxu0 0
      %2575 = vmatpush2.bf16.msra.mxu0 %v2401
      %2576 = vmatprep.subr.bf16.mxu0 0
      %2577 = vmatpush2.bf16.msra.mxu0 %v2400
      %2578 = vmatprep.subr.bf16.mxu0 0
      %2579 = vmatpush2.bf16.msra.mxu0 %v2399
      %2580 = vmatprep.subr.bf16.mxu0 0
      %2581 = vmatpush2.bf16.msra.mxu0 %v2398
      %2582 = vmatprep.subr.bf16.mxu0 0
      %2583 = vmatpush2.bf16.msra.mxu0 %v2397
      %2584 = vmatprep.subr.bf16.mxu0 0
      %2585 = vmatpush2.bf16.msra.mxu0 %v2396
      %2586 = vmatprep.mubr.bf16.mxu0 %v337
      %2587 = vmatmul.mubr.bf16.gmra.mxu0 %v336
      %v2588 = vpop.f32.mrf.mxu0
      %v2589 = vadd.f32 %v2540, %v2588
      %v2590 = vpop.f32.mrf.mxu0
      %v2591 = vpop.f32.mrf.mxu0
      %v2592 = vadd.f32 %v2543, %v2591
      %v2593 = vpop.f32.mrf.mxu0
      %2594 = vmatprep.mubr.bf16.mxu0 %v344
      %2595 = vmatmul.mubr.bf16.gmra.mxu0 %v343
      %v2596 = vpop.f32.mrf.mxu0
      %v2597 = vadd.f32 %v2548, %v2596
      %v2598 = vpop.f32.mrf.mxu0
      %v2599 = vpop.f32.mrf.mxu0
      %v2600 = vadd.f32 %v2551, %v2599
      %v2601 = vpop.f32.mrf.mxu0
      %2602 = vdwg.mxu0
      %2603 = vmatprep.subr.bf16.mxu0 0
      %2604 = vmatpush1.bf16.msra.mxu0 0
      %2605 = vmatprep.subr.bf16.mxu0 0
      %2606 = vmatpush1.bf16.msra.mxu0 0
      %2607 = vmatprep.subr.bf16.mxu0 0
      %2608 = vmatpush1.bf16.msra.mxu0 0
      %2609 = vmatprep.subr.bf16.mxu0 0
      %2610 = vmatpush1.bf16.msra.mxu0 0
      %2611 = vmatprep.subr.bf16.mxu0 0
      %2612 = vmatpush1.bf16.msra.mxu0 0
      %2613 = vmatprep.subr.bf16.mxu0 0
      %2614 = vmatpush1.bf16.msra.mxu0 0
      %2615 = vmatprep.subr.bf16.mxu0 0
      %2616 = vmatpush1.bf16.msra.mxu0 %v2405
      %2617 = vmatprep.subr.bf16.mxu0 0
      %2618 = vmatpush1.bf16.msra.mxu0 %v2404
      %2619 = vmatprep.subr.bf16.mxu0 0
      %2620 = vmatpush2.bf16.msra.mxu0 0
      %2621 = vmatprep.subr.bf16.mxu0 0
      %2622 = vmatpush2.bf16.msra.mxu0 0
      %2623 = vmatprep.subr.bf16.mxu0 0
      %2624 = vmatpush2.bf16.msra.mxu0 0
      %2625 = vmatprep.subr.bf16.mxu0 0
      %2626 = vmatpush2.bf16.msra.mxu0 0
      %2627 = vmatprep.subr.bf16.mxu0 0
      %2628 = vmatpush2.bf16.msra.mxu0 0
      %2629 = vmatprep.subr.bf16.mxu0 0
      %2630 = vmatpush2.bf16.msra.mxu0 0
      %2631 = vmatprep.subr.bf16.mxu0 0
      %2632 = vmatpush2.bf16.msra.mxu0 0
      %2633 = vmatprep.subr.bf16.mxu0 0
      %2634 = vmatpush2.bf16.msra.mxu0 0
      %2635 = vmatprep.mubr.bf16.mxu0 0
      %2636 = vmatmul.mubr.bf16.gmra.mxu0 %v660
      %v2637 = vpop.f32.mrf.mxu0
      %v2638 = vadd.f32 %v2589, %v2637
      %v2639 = vpop.f32.mrf.mxu0
      %v2640 = vpop.f32.mrf.mxu0
      %v2641 = vadd.f32 %v2592, %v2640
      %v2642 = vpop.f32.mrf.mxu0
      %2643 = vmatprep.mubr.bf16.mxu0 0
      %2644 = vmatmul.mubr.bf16.gmra.mxu0 %v663
      %v2645 = vpop.f32.mrf.mxu0
      %v2646 = vadd.f32 %v2597, %v2645
      %v2647 = vpop.f32.mrf.mxu0
      %v2648 = vpop.f32.mrf.mxu0
      %v2649 = vadd.f32 %v2600, %v2648
      %v2650 = vpop.f32.mrf.mxu0
      %2651 = vdwg.mxu0
      %v2652 = vmax.f32 %v847, %v1444
      %v2653 = vmax.f32 %v850, %v1447
      %v2654 = vmax.f32 %v855, %v1452
      %v2655 = vmax.f32 %v858, %v1455
      %v2656 = vmax.f32 %v2041, %v2638
      %v2657 = vmax.f32 %v2044, %v2641
      %v2658 = vmax.f32 %v2049, %v2646
      %v2659 = vmax.f32 %v2052, %v2649
      %v2660 = vmax.f32 %v2652, %v2656
      %v2661 = vmax.f32 %v2653, %v2657
      %v2662 = vmax.f32 %v2654, %v2658
      %v2663 = vmax.f32 %v2655, %v2659
      %v2664 = vld [vmem:[%s2] sm:$0xff]
      %v2665 = vld [vmem:[%s2 + $0x8] sm:$0xff]
      %v2666 = vld [vmem:[%s2 + $0x10] sm:$0xff]
      %v2667 = vld [vmem:[%s2 + $0x18] sm:$0xff]
      %2669 = vset.pattern.permute.xlu0 0
      %2670 = vperm.xlu0 %2669, %v2664
      %v2671 = vpop.permute.xlu0 %2670
      %2674 = vset.pattern.permute.xlu0 0
      %2675 = vperm.xlu0 %2674, %v2665
      %v2676 = vpop.permute.xlu0 %2675
      %2679 = vset.pattern.permute.xlu0 0
      %2680 = vperm.xlu0 %2679, %v2666
      %v2681 = vpop.permute.xlu0 %2680
      %2684 = vset.pattern.permute.xlu0 0
      %2685 = vperm.xlu0 %2684, %v2667
      %v2686 = vpop.permute.xlu0 %2685
      %v2688 = vadd.f32 %v2660, %v2671
      %v2689 = vadd.f32 %v2661, %v2676
      %v2690 = vadd.f32 %v2662, %v2681
      %v2691 = vadd.f32 %v2663, %v2686
      %v2692 = vpack.c.bf16 %v2689, %v2688
      %v2693 = vpack.c.bf16 %v2691, %v2690
      %v2696 = vunpack.c.l.b16 %v2692
      %v2697 = vunpack.c.h.b16 %v2692
      %v2698 = vunpack.c.l.b16 %v2693
      %v2699 = vunpack.c.h.b16 %v2693
      %v2700 = vpack.c.b16 %v2696, %v2696
      %v2701 = vpack.c.b16 %v2697, %v2697
      %v2702 = vpack.c.b16 %v2698, %v2698
      %v2703 = vpack.c.b16 %v2699, %v2699
      %vm2708 = vcmask 519168
      %2709 = vst.msk [vmem:[%s170] sm:$0xf] %vm2708, %v2700
      %2710 = vst.msk [vmem:[%s170 + $0x4] sm:$0xf] %vm2708, %v2701
      %2711 = vst.msk [vmem:[%s170 + $0x8] sm:$0xf] %vm2708, %v2702
      %2712 = vst.msk [vmem:[%s170 + $0xc] sm:$0xf] %vm2708, %v2703
      %p2713 = scmp.lt.s32.totalorder %s14, 1
      %s2714 = scalar_select %p2713, %s14, 1
      %s2715 = smul.addr %s2714, 4
      %s2716 = smul.addr %s2715, 4
      %s2717 = scalar_lea.vmem %s3, %s2716
      // Predicated region
      $region33: #{forward.5} parent=31 // pred_check
        %p2718 = pneg %p100
      $region34: #{forward.5} parent=31 // pred_check_branch
        %2720 = sbr.rel (%p2718) target = $region36
      $region35: #{forward.5} parent=31 // pred_region
        _
      $region36: #{forward.5} parent=31 // pred_fallthru
        _
    $region32: #{forward.5} parent=5 // pred_fallthru
      _
    %p2721 = scmp.le.s32.totalorder 2, %s9
    // Predicated region
    $region37: #{forward.5} parent=5 // pred_check
      %p2722 = pneg %p2721
    $region38: #{forward.5} parent=5 // pred_check_branch
      %2724 = sbr.rel (%p2722) target = $region40
    $region39: #{forward.5} parent=5 // pred_region
      %s2725 = ssub.s32 %s9, 2
      // Predicated region
      $region41: #{forward.5} parent=39 // pred_check
        %p2726 = pneg %p106
      $region42: #{forward.5} parent=39 // pred_check_branch
        %2728 = sbr.rel (%p2726) target = $region44
      $region43: #{forward.5} parent=39 // pred_region
        %p2729 = scmp.lt.s32.totalorder %s15, 1
        %s2730 = scalar_select %p2729, %s15, 1
        %s2731 = smul.addr %s2730, 4
        %s2732 = smul.addr %s2731, 4
        %s2733 = scalar_lea.vmem %s3, %s2732
      $region44: #{forward.5} parent=39 // pred_fallthru
        _
    $region40: #{forward.5} parent=5 // pred_fallthru
      _
  $region6: #{forward.5} parent=0 // loop_footer
    %s13 = sadd.s32 1, %s9
  $region7: #{forward.5} parent=0 // loop_footer_branch
    %8 = sbr.rel target = $region3
  $region8: #{forward.5} parent=0 // loop_exit
    _

// kernel: forward.6
$region0: #{forward.6}
  #allocation0 [shape = 'u32[]', space=smem, size = 0x4, offset = 0x4, fixed_abs, tag = 'smem constant byte address 0x4 - core index']
  #allocation1 [shape = 'u32[144,128]{1,0:T(1,128)}', space=vmem, size = 0x12000, scoped, tag = 'internal scratch']
  %s0 = inlined_call_operand.vmem [shape: bf16[2,4,800,16], index: 0, kind: input, shape index: {}]
  %s1 = inlined_call_operand.vmem [shape: bf16[64,800], index: 1, kind: input, shape index: {}]
  %s2 = inlined_call_operand.vmem [shape: f32[64,1], index: 2, kind: input, shape index: {}]
  %s3 = inlined_call_operand.vmem [shape: bf16[2,64,16], index: 3, kind: output, shape index: {}]
  %s4 = sld [smem:[#allocation0]]
  $region45: #{forward.6} parent=0
    _
  %s6 = ssub.s32 1, %s4
  %s7 = scalar_select 0, %s6, %s4
  loop: start=0, step=1, limit=4
  $region2: #{forward.6} parent=0 // loop_pre_header
    _
  $region3: #{forward.6} parent=0 // loop_header
    %s9 = sphi 0, %s13
    %p10 = scmp.ge.s32.totalorder %s9, 4
    %s19 = sphi 0, %s21
    %s22 = sphi 0, %s19
    %s23 = sphi 0, %s22
    %s39 = sphi 0, %s23
    %s43 = sphi 0, %s43
    %s45 = sphi 0, %s43
    %s46 = sphi 0, %s45
    %s60 = sphi 0, %s46
    %s64 = sphi 0, %s64
    %s66 = sphi 0, %s64
    %s67 = sphi 0, %s66
    %s81 = sphi 0, %s67
    %s87 = sphi 0, %s89
    %s90 = sphi 0, %s87
    %s91 = sphi 0, %s90
    %s107 = sphi 0, %s91
  $region4: #{forward.6} parent=0 // loop_header_branch
    %12 = sbr.rel (%p10) target = $region8
  $region5: #{forward.6} parent=0 // loop_body
    %s14 = ssub.s32 %s9, 1
    %s15 = ssub.s32 %s9, 2
    %s16 = sadd.s32 %s9, 1
    %s17 = ssub.s32 %s9, %s16
    %p18 = scmp.eq.s32.totalorder %s17, 0
    %s20 = sadd.s32 %s19, 1
    %s21 = scalar_select %p18, %s19, %s20
    %p24 = pneg %p18
    %p25 = scmp.eq.s32.totalorder %s9, 1
    %p26 = por %p24, %p25
    %p27 = scmp.ne.s32.totalorder %s19, %s22
    %p28 = scmp.eq.s32.totalorder %s9, 0
    %p29 = por %p27, %p28
    %p30 = scmp.ne.s32.totalorder %s19, %s22
    %p31 = scmp.eq.s32.totalorder %s14, 1
    %p32 = por %p30, %p31
    %p33 = scmp.ne.s32.totalorder %s22, %s23
    %p34 = scmp.eq.s32.totalorder %s14, 0
    %p35 = por %p33, %p34
    %p36 = scmp.ne.s32.totalorder %s22, %s23
    %p37 = scmp.eq.s32.totalorder %s15, 1
    %p38 = por %p36, %p37
    %p40 = scmp.ne.s32.totalorder %s23, %s39
    %p41 = scmp.eq.s32.totalorder %s15, 0
    %p42 = por %p40, %p41
    %s44 = sadd.s32 %s43, 1
    %p47 = scmp.eq.s32.totalorder %s9, 1
    %p48 = scmp.ne.s32.totalorder %s43, %s45
    %p49 = scmp.eq.s32.totalorder %s9, 0
    %p50 = por %p48, %p49
    %p51 = scmp.ne.s32.totalorder %s43, %s45
    %p52 = scmp.eq.s32.totalorder %s14, 1
    %p53 = por %p51, %p52
    %p54 = scmp.ne.s32.totalorder %s45, %s46
    %p55 = scmp.eq.s32.totalorder %s14, 0
    %p56 = por %p54, %p55
    %p57 = scmp.ne.s32.totalorder %s45, %s46
    %p58 = scmp.eq.s32.totalorder %s15, 1
    %p59 = por %p57, %p58
    %p61 = scmp.ne.s32.totalorder %s46, %s60
    %p62 = scmp.eq.s32.totalorder %s15, 0
    %p63 = por %p61, %p62
    %s65 = sadd.s32 %s64, 1
    %p68 = scmp.eq.s32.totalorder %s9, 1
    %p69 = scmp.ne.s32.totalorder %s64, %s66
    %p70 = scmp.eq.s32.totalorder %s9, 0
    %p71 = por %p69, %p70
    %p72 = scmp.ne.s32.totalorder %s64, %s66
    %p73 = scmp.eq.s32.totalorder %s14, 1
    %p74 = por %p72, %p73
    %p75 = scmp.ne.s32.totalorder %s66, %s67
    %p76 = scmp.eq.s32.totalorder %s14, 0
    %p77 = por %p75, %p76
    %p78 = scmp.ne.s32.totalorder %s66, %s67
    %p79 = scmp.eq.s32.totalorder %s15, 1
    %p80 = por %p78, %p79
    %p82 = scmp.ne.s32.totalorder %s67, %s81
    %p83 = scmp.eq.s32.totalorder %s15, 0
    %p84 = por %p82, %p83
    %s85 = ssub.s32 %s9, %s16
    %p86 = scmp.eq.s32.totalorder %s85, 0
    %s88 = sadd.s32 %s87, 1
    %s89 = scalar_select %p86, %s87, %s88
    %p92 = pneg %p86
    %p93 = scmp.eq.s32.totalorder %s9, 1
    %p94 = por %p92, %p93
    %p95 = scmp.ne.s32.totalorder %s87, %s90
    %p96 = scmp.eq.s32.totalorder %s9, 0
    %p97 = por %p95, %p96
    %p98 = scmp.ne.s32.totalorder %s87, %s90
    %p99 = scmp.eq.s32.totalorder %s14, 1
    %p100 = por %p98, %p99
    %p101 = scmp.ne.s32.totalorder %s90, %s91
    %p102 = scmp.eq.s32.totalorder %s14, 0
    %p103 = por %p101, %p102
    %p104 = scmp.ne.s32.totalorder %s90, %s91
    %p105 = scmp.eq.s32.totalorder %s15, 1
    %p106 = por %p104, %p105
    %p108 = scmp.ne.s32.totalorder %s91, %s107
    %p109 = scmp.eq.s32.totalorder %s15, 0
    %p110 = por %p108, %p109
    %p111 = scmp.le.s32.totalorder 1, %s9
    %p112 = scmp.lt.s32.totalorder %s9, 3
    %p113 = pnand %p111, %p112
    %p114 = pneg %p113
    // Predicated region
    $region9: #{forward.6} parent=5 // pred_check
      _
    $region10: #{forward.6} parent=5 // pred_check_branch
      %116 = sbr.rel (%p113) target = $region12
    $region11: #{forward.6} parent=5 // pred_region
      %s117 = ssub.s32 %s9, 1
      // Predicated region
      $region13: #{forward.6} parent=11 // pred_check
        %p118 = pneg %p56
      $region14: #{forward.6} parent=11 // pred_check_branch
        %120 = sbr.rel (%p118) target = $region16
      $region15: #{forward.6} parent=11 // pred_region
        _
      $region16: #{forward.6} parent=11 // pred_fallthru
        _
      // Predicated region
      $region17: #{forward.6} parent=11 // pred_check
        %p121 = pneg %p77
      $region18: #{forward.6} parent=11 // pred_check_branch
        %123 = sbr.rel (%p121) target = $region20
      $region19: #{forward.6} parent=11 // pred_region
        _
      $region20: #{forward.6} parent=11 // pred_fallthru
        _
    $region12: #{forward.6} parent=5 // pred_fallthru
      _
    %p124 = scmp.lt.s32.totalorder %s9, 2
    // Predicated region
    $region21: #{forward.6} parent=5 // pred_check
      %p125 = pneg %p124
    $region22: #{forward.6} parent=5 // pred_check_branch
      %127 = sbr.rel (%p125) target = $region24
    $region23: #{forward.6} parent=5 // pred_region
      // Predicated region
      $region25: #{forward.6} parent=23 // pred_check
        %p128 = pneg %p29
      $region26: #{forward.6} parent=23 // pred_check_branch
        %130 = sbr.rel (%p128) target = $region28
      $region27: #{forward.6} parent=23 // pred_region
        %p131 = scmp.lt.s32.totalorder %s9, 1
        %s132 = scalar_select %p131, %s9, 1
        %s133 = smul.addr %s132, 400
        %s134 = smul.addr %s133, 4
        %s135 = scalar_lea.vmem %s0, %s134
      $region28: #{forward.6} parent=23 // pred_fallthru
        _
    $region24: #{forward.6} parent=5 // pred_fallthru
      _
    %p136 = scmp.le.s32.totalorder 1, %s9
    %p137 = scmp.lt.s32.totalorder %s9, 3
    %p138 = pnand %p136, %p137
    %p139 = pneg %p138
    // Predicated region
    $region29: #{forward.6} parent=5 // pred_check
      _
    $region30: #{forward.6} parent=5 // pred_check_branch
      %141 = sbr.rel (%p138) target = $region32
    $region31: #{forward.6} parent=5 // pred_region
      %s142 = ssub.s32 %s9, 1
      %p143 = scmp.lt.s32.totalorder %s14, 1
      %s144 = scalar_select %p143, %s14, 1
      %s145 = smul.addr %s144, 400
      %s146 = smul.addr %s145, 4
      %s147 = scalar_lea.vmem %s0, %s146
      %p148 = pneg %p35
      %p149 = pneg %p32
      %p150 = pneg %p56
      %p151 = pneg %p53
      %p152 = pneg %p77
      %p153 = pneg %p74
      %p154 = pneg %p103
      %p155 = pneg %p100
      %p156 = scmp.lt.s32.totalorder %s14, 1
      %s157 = scalar_select %p156, %s14, 1
      %s158 = smul.addr %s157, 8
      %s159 = smul.addr %s158, 4
      %s160 = scalar_lea.vmem %s3, %s159
      %p161 = scmp.lt.s32.totalorder %s14, 1
      %s162 = scalar_select %p161, %s14, 1
      %s163 = smul.addr %s162, 400
      %s164 = smul.addr %s163, 4
      %s165 = scalar_lea.vmem %s0, %s164
      %p166 = scmp.lt.s32.totalorder %s14, 1
      %s167 = scalar_select %p166, %s14, 1
      %s168 = smul.addr %s167, 8
      %s169 = smul.addr %s168, 4
      %s170 = scalar_lea.vmem %s3, %s169
      %v172 = vld [vmem:[%s1] sm:$0xff]
      %v173 = vld [vmem:[%s1 + $0x8] sm:$0xff]
      %v174 = vld [vmem:[%s1 + $0x10] sm:$0xff]
      %v175 = vld [vmem:[%s1 + $0x18] sm:$0xf]
      %v176 = vld [vmem:[%s1 + $0x1c] sm:$0xff]
      %v177 = vld [vmem:[%s1 + $0x24] sm:$0xff]
      %v178 = vld [vmem:[%s1 + $0x2c] sm:$0xff]
      %v179 = vld [vmem:[%s1 + $0x34] sm:$0xf]
      %v180 = vld [vmem:[%s1 + $0x38] sm:$0xff]
      %v181 = vld [vmem:[%s1 + $0x40] sm:$0xff]
      %v182 = vld [vmem:[%s1 + $0x48] sm:$0xff]
      %v183 = vld [vmem:[%s1 + $0x50] sm:$0xf]
      %v184 = vld [vmem:[%s1 + $0x54] sm:$0xff]
      %v185 = vld [vmem:[%s1 + $0x5c] sm:$0xff]
      %v186 = vld [vmem:[%s1 + $0x64] sm:$0xff]
      %v187 = vld [vmem:[%s1 + $0x6c] sm:$0xf]
      %v188 = vld [vmem:[%s1 + $0x70] sm:$0xff]
      %v189 = vld [vmem:[%s1 + $0x78] sm:$0xff]
      %v190 = vld [vmem:[%s1 + $0x80] sm:$0xff]
      %v191 = vld [vmem:[%s1 + $0x88] sm:$0xf]
      %v192 = vld [vmem:[%s1 + $0x8c] sm:$0xff]
      %v193 = vld [vmem:[%s1 + $0x94] sm:$0xff]
      %v194 = vld [vmem:[%s1 + $0x9c] sm:$0xff]
      %v195 = vld [vmem:[%s1 + $0xa4] sm:$0xf]
      %v196 = vld [vmem:[%s1 + $0xa8] sm:$0xff]
      %v197 = vld [vmem:[%s1 + $0xb0] sm:$0xff]
      %v198 = vld [vmem:[%s1 + $0xb8] sm:$0xff]
      %v199 = vld [vmem:[%s1 + $0xc0] sm:$0xf]
      %v200 = vld [vmem:[%s1 + $0xc4] sm:$0xff]
      %v201 = vld [vmem:[%s1 + $0xcc] sm:$0xff]
      %v202 = vld [vmem:[%s1 + $0xd4] sm:$0xff]
      %v203 = vld [vmem:[%s1 + $0xdc] sm:$0xf]
      %v204 = vld [vmem:[%s165] sm:$0xf]
      %v205 = vld [vmem:[%s165 + $0x4] sm:$0xf]
      %v206 = vld [vmem:[%s165 + $0x8] sm:$0xf]
      %v207 = vld [vmem:[%s165 + $0xc] sm:$0xf]
      %v208 = vld [vmem:[%s165 + $0x10] sm:$0xf]
      %v209 = vld [vmem:[%s165 + $0x14] sm:$0xf]
      %v210 = vld [vmem:[%s165 + $0x18] sm:$0xf]
      %v211 = vld [vmem:[%s165 + $0x1c] sm:$0xf]
      %v212 = vld [vmem:[%s165 + $0x20] sm:$0xf]
      %v213 = vld [vmem:[%s165 + $0x24] sm:$0xf]
      %v214 = vld [vmem:[%s165 + $0x28] sm:$0xf]
      %v215 = vld [vmem:[%s165 + $0x2c] sm:$0xf]
      %v216 = vld [vmem:[%s165 + $0x30] sm:$0xf]
      %v217 = vld [vmem:[%s165 + $0x34] sm:$0xf]
      %v218 = vld [vmem:[%s165 + $0x38] sm:$0xf]
      %v219 = vld [vmem:[%s165 + $0x3c] sm:$0xf]
      %v220 = vld [vmem:[%s165 + $0x40] sm:$0xf]
      %v221 = vld [vmem:[%s165 + $0x44] sm:$0xf]
      %v222 = vld [vmem:[%s165 + $0x48] sm:$0xf]
      %v223 = vld [vmem:[%s165 + $0x4c] sm:$0xf]
      %v224 = vld [vmem:[%s165 + $0x50] sm:$0xf]
      %v225 = vld [vmem:[%s165 + $0x54] sm:$0xf]
      %v226 = vld [vmem:[%s165 + $0x58] sm:$0xf]
      %v227 = vld [vmem:[%s165 + $0x5c] sm:$0xf]
      %v228 = vld [vmem:[%s165 + $0x60] sm:$0xf]
      %v229 = vld [vmem:[%s165 + $0x64] sm:$0xf]
      %v230 = vld [vmem:[%s165 + $0x68] sm:$0xf]
      %v231 = vld [vmem:[%s165 + $0x6c] sm:$0xf]
      %v232 = vld [vmem:[%s165 + $0x70] sm:$0xf]
      %v233 = vld [vmem:[%s165 + $0x74] sm:$0xf]
      %v234 = vld [vmem:[%s165 + $0x78] sm:$0xf]
      %v235 = vld [vmem:[%s165 + $0x7c] sm:$0xf]
      %v236 = vld [vmem:[%s165 + $0x80] sm:$0xf]
      %v237 = vld [vmem:[%s165 + $0x84] sm:$0xf]
      %v238 = vld [vmem:[%s165 + $0x88] sm:$0xf]
      %v239 = vld [vmem:[%s165 + $0x8c] sm:$0xf]
      %v240 = vld [vmem:[%s165 + $0x90] sm:$0xf]
      %v241 = vld [vmem:[%s165 + $0x94] sm:$0xf]
      %v242 = vld [vmem:[%s165 + $0x98] sm:$0xf]
      %v243 = vld [vmem:[%s165 + $0x9c] sm:$0xf]
      %v244 = vld [vmem:[%s165 + $0xa0] sm:$0xf]
      %v245 = vld [vmem:[%s165 + $0xa4] sm:$0xf]
      %v246 = vld [vmem:[%s165 + $0xa8] sm:$0xf]
      %v247 = vld [vmem:[%s165 + $0xac] sm:$0xf]
      %v248 = vld [vmem:[%s165 + $0xb0] sm:$0xf]
      %v249 = vld [vmem:[%s165 + $0xb4] sm:$0xf]
      %v250 = vld [vmem:[%s165 + $0xb8] sm:$0xf]
      %v251 = vld [vmem:[%s165 + $0xbc] sm:$0xf]
      %v252 = vld [vmem:[%s165 + $0xc0] sm:$0xf]
      %v253 = vld [vmem:[%s165 + $0xc4] sm:$0xf]
      %v254 = vld [vmem:[%s165 + $0xc8] sm:$0xf]
      %v255 = vld [vmem:[%s165 + $0xcc] sm:$0xf]
      %v256 = vld [vmem:[%s165 + $0xd0] sm:$0xf]
      %v257 = vld [vmem:[%s165 + $0xd4] sm:$0xf]
      %v258 = vld [vmem:[%s165 + $0xd8] sm:$0xf]
      %v259 = vld [vmem:[%s165 + $0xdc] sm:$0xf]
      %v260 = vld [vmem:[%s165 + $0xe0] sm:$0xf]
      %v261 = vld [vmem:[%s165 + $0xe4] sm:$0xf]
      %v262 = vld [vmem:[%s165 + $0xe8] sm:$0xf]
      %v263 = vld [vmem:[%s165 + $0xec] sm:$0xf]
      %v264 = vld [vmem:[%s165 + $0xf0] sm:$0xf]
      %v265 = vld [vmem:[%s165 + $0xf4] sm:$0xf]
      %v266 = vld [vmem:[%s165 + $0xf8] sm:$0xf]
      %v267 = vld [vmem:[%s165 + $0xfc] sm:$0xf]
      %v268 = vld [vmem:[%s165 + $0x100] sm:$0xf]
      %v269 = vld [vmem:[%s165 + $0x104] sm:$0xf]
      %v270 = vld [vmem:[%s165 + $0x108] sm:$0xf]
      %v271 = vld [vmem:[%s165 + $0x10c] sm:$0xf]
      %v272 = vld [vmem:[%s165 + $0x110] sm:$0xf]
      %v273 = vld [vmem:[%s165 + $0x114] sm:$0xf]
      %v274 = vld [vmem:[%s165 + $0x118] sm:$0xf]
      %v275 = vld [vmem:[%s165 + $0x11c] sm:$0xf]
      %v276 = vld [vmem:[%s165 + $0x120] sm:$0xf]
      %v277 = vld [vmem:[%s165 + $0x124] sm:$0xf]
      %v278 = vld [vmem:[%s165 + $0x128] sm:$0xf]
      %v279 = vld [vmem:[%s165 + $0x12c] sm:$0xf]
      %v280 = vld [vmem:[%s165 + $0x130] sm:$0xf]
      %v281 = vld [vmem:[%s165 + $0x134] sm:$0xf]
      %v282 = vld [vmem:[%s165 + $0x138] sm:$0xf]
      %v283 = vld [vmem:[%s165 + $0x13c] sm:$0xf]
      %v284 = vld [vmem:[%s165 + $0x140] sm:$0xf]
      %v285 = vld [vmem:[%s165 + $0x144] sm:$0xf]
      %v286 = vld [vmem:[%s165 + $0x148] sm:$0xf]
      %v287 = vld [vmem:[%s165 + $0x14c] sm:$0xf]
      %v288 = vld [vmem:[%s165 + $0x150] sm:$0xf]
      %v289 = vld [vmem:[%s165 + $0x154] sm:$0xf]
      %v290 = vld [vmem:[%s165 + $0x158] sm:$0xf]
      %v291 = vld [vmem:[%s165 + $0x15c] sm:$0xf]
      %v292 = vld [vmem:[%s165 + $0x160] sm:$0xf]
      %v293 = vld [vmem:[%s165 + $0x164] sm:$0xf]
      %v294 = vld [vmem:[%s165 + $0x168] sm:$0xf]
      %v295 = vld [vmem:[%s165 + $0x16c] sm:$0xf]
      %v296 = vld [vmem:[%s165 + $0x170] sm:$0xf]
      %v297 = vld [vmem:[%s165 + $0x174] sm:$0xf]
      %v298 = vld [vmem:[%s165 + $0x178] sm:$0xf]
      %v299 = vld [vmem:[%s165 + $0x17c] sm:$0xf]
      %v300 = vld [vmem:[%s165 + $0x180] sm:$0xf]
      %v301 = vld [vmem:[%s165 + $0x184] sm:$0xf]
      %v302 = vld [vmem:[%s165 + $0x188] sm:$0xf]
      %v303 = vld [vmem:[%s165 + $0x18c] sm:$0xf]
      %v336 = vunpack.c.l.b16 %v172
      %v337 = vunpack.c.h.b16 %v172
      %v338 = vunpack.c.l.b16 %v173
      %v339 = vunpack.c.h.b16 %v173
      %v340 = vunpack.c.l.b16 %v174
      %v341 = vunpack.c.h.b16 %v174
      %v342 = vunpack.c.l.b16 %v175
      %v343 = vunpack.c.l.b16 %v176
      %v344 = vunpack.c.h.b16 %v176
      %v345 = vunpack.c.l.b16 %v177
      %v346 = vunpack.c.h.b16 %v177
      %v347 = vunpack.c.l.b16 %v178
      %v348 = vunpack.c.h.b16 %v178
      %v349 = vunpack.c.l.b16 %v179
      %v350 = vunpack.c.l.b16 %v180
      %v351 = vunpack.c.h.b16 %v180
      %v352 = vunpack.c.l.b16 %v181
      %v353 = vunpack.c.h.b16 %v181
      %v354 = vunpack.c.l.b16 %v182
      %v355 = vunpack.c.h.b16 %v182
      %v356 = vunpack.c.l.b16 %v183
      %v357 = vunpack.c.l.b16 %v184
      %v358 = vunpack.c.h.b16 %v184
      %v359 = vunpack.c.l.b16 %v185
      %v360 = vunpack.c.h.b16 %v185
      %v361 = vunpack.c.l.b16 %v186
      %v362 = vunpack.c.h.b16 %v186
      %v363 = vunpack.c.l.b16 %v187
      %v364 = vunpack.c.l.b16 %v188
      %v365 = vunpack.c.h.b16 %v188
      %v366 = vunpack.c.l.b16 %v189
      %v367 = vunpack.c.h.b16 %v189
      %v368 = vunpack.c.l.b16 %v190
      %v369 = vunpack.c.h.b16 %v190
      %v370 = vunpack.c.l.b16 %v191
      %v371 = vunpack.c.l.b16 %v192
      %v372 = vunpack.c.h.b16 %v192
      %v373 = vunpack.c.l.b16 %v193
      %v374 = vunpack.c.h.b16 %v193
      %v375 = vunpack.c.l.b16 %v194
      %v376 = vunpack.c.h.b16 %v194
      %v377 = vunpack.c.l.b16 %v195
      %v378 = vunpack.c.l.b16 %v196
      %v379 = vunpack.c.h.b16 %v196
      %v380 = vunpack.c.l.b16 %v197
      %v381 = vunpack.c.h.b16 %v197
      %v382 = vunpack.c.l.b16 %v198
      %v383 = vunpack.c.h.b16 %v198
      %v384 = vunpack.c.l.b16 %v199
      %v385 = vunpack.c.l.b16 %v200
      %v386 = vunpack.c.h.b16 %v200
      %v387 = vunpack.c.l.b16 %v201
      %v388 = vunpack.c.h.b16 %v201
      %v389 = vunpack.c.l.b16 %v202
      %v390 = vunpack.c.h.b16 %v202
      %v391 = vunpack.c.l.b16 %v203
      %v392 = vpack.c.b16 %v343, %v336
      %v393 = vpack.c.b16 %v344, %v337
      %v394 = vpack.c.b16 %v345, %v338
      %v395 = vpack.c.b16 %v346, %v339
      %v396 = vpack.c.b16 %v347, %v340
      %v397 = vpack.c.b16 %v348, %v341
      %v398 = vpack.c.b16 %v349, %v342
      %v399 = vpack.c.b16 %v357, %v350
      %v400 = vpack.c.b16 %v358, %v351
      %v401 = vpack.c.b16 %v359, %v352
      %v402 = vpack.c.b16 %v360, %v353
      %v403 = vpack.c.b16 %v361, %v354
      %v404 = vpack.c.b16 %v362, %v355
      %v405 = vpack.c.b16 %v363, %v356
      %v406 = vpack.c.b16 %v371, %v364
      %v407 = vpack.c.b16 %v372, %v365
      %v408 = vpack.c.b16 %v373, %v366
      %v409 = vpack.c.b16 %v374, %v367
      %v410 = vpack.c.b16 %v375, %v368
      %v411 = vpack.c.b16 %v376, %v369
      %v412 = vpack.c.b16 %v377, %v370
      %v413 = vpack.c.b16 %v385, %v378
      %v414 = vpack.c.b16 %v386, %v379
      %v415 = vpack.c.b16 %v387, %v380
      %v416 = vpack.c.b16 %v388, %v381
      %v417 = vpack.c.b16 %v389, %v382
      %v418 = vpack.c.b16 %v390, %v383
      %v419 = vpack.c.b16 %v391, %v384
      %v544 = vunpack.c.l.b16 %v204
      %v545 = vunpack.c.l.b16 %v205
      %v546 = vunpack.c.l.b16 %v206
      %v547 = vunpack.c.l.b16 %v207
      %v548 = vunpack.c.l.b16 %v208
      %v549 = vunpack.c.l.b16 %v209
      %v550 = vunpack.c.l.b16 %v210
      %v551 = vunpack.c.l.b16 %v211
      %v552 = vunpack.c.l.b16 %v212
      %v553 = vunpack.c.l.b16 %v213
      %v554 = vunpack.c.l.b16 %v214
      %v555 = vunpack.c.l.b16 %v215
      %v556 = vunpack.c.l.b16 %v216
      %v557 = vunpack.c.l.b16 %v217
      %v558 = vunpack.c.l.b16 %v218
      %v559 = vunpack.c.l.b16 %v219
      %v560 = vunpack.c.l.b16 %v220
      %v561 = vunpack.c.l.b16 %v221
      %v562 = vunpack.c.l.b16 %v222
      %v563 = vunpack.c.l.b16 %v223
      %v564 = vunpack.c.l.b16 %v224
      %v565 = vunpack.c.l.b16 %v225
      %v566 = vunpack.c.l.b16 %v226
      %v567 = vunpack.c.l.b16 %v227
      %v568 = vunpack.c.l.b16 %v228
      %v569 = vunpack.c.l.b16 %v229
      %v570 = vunpack.c.l.b16 %v230
      %v571 = vunpack.c.l.b16 %v231
      %v572 = vunpack.c.l.b16 %v232
      %v573 = vunpack.c.l.b16 %v233
      %v574 = vunpack.c.l.b16 %v234
      %v575 = vunpack.c.l.b16 %v235
      %v576 = vunpack.c.l.b16 %v236
      %v577 = vunpack.c.l.b16 %v237
      %v578 = vunpack.c.l.b16 %v238
      %v579 = vunpack.c.l.b16 %v239
      %v580 = vunpack.c.l.b16 %v240
      %v581 = vunpack.c.l.b16 %v241
      %v582 = vunpack.c.l.b16 %v242
      %v583 = vunpack.c.l.b16 %v243
      %v584 = vunpack.c.l.b16 %v244
      %v585 = vunpack.c.l.b16 %v245
      %v586 = vunpack.c.l.b16 %v246
      %v587 = vunpack.c.l.b16 %v247
      %v588 = vunpack.c.l.b16 %v248
      %v589 = vunpack.c.l.b16 %v249
      %v590 = vunpack.c.l.b16 %v250
      %v591 = vunpack.c.l.b16 %v251
      %v592 = vunpack.c.l.b16 %v252
      %v593 = vunpack.c.l.b16 %v253
      %v594 = vunpack.c.l.b16 %v254
      %v595 = vunpack.c.l.b16 %v255
      %v596 = vunpack.c.l.b16 %v256
      %v597 = vunpack.c.l.b16 %v257
      %v598 = vunpack.c.l.b16 %v258
      %v599 = vunpack.c.l.b16 %v259
      %v600 = vunpack.c.l.b16 %v260
      %v601 = vunpack.c.l.b16 %v261
      %v602 = vunpack.c.l.b16 %v262
      %v603 = vunpack.c.l.b16 %v263
      %v604 = vunpack.c.l.b16 %v264
      %v605 = vunpack.c.l.b16 %v265
      %v606 = vunpack.c.l.b16 %v266
      %v607 = vunpack.c.l.b16 %v267
      %v608 = vunpack.c.l.b16 %v268
      %v609 = vunpack.c.l.b16 %v269
      %v610 = vunpack.c.l.b16 %v270
      %v611 = vunpack.c.l.b16 %v271
      %v612 = vunpack.c.l.b16 %v272
      %v613 = vunpack.c.l.b16 %v273
      %v614 = vunpack.c.l.b16 %v274
      %v615 = vunpack.c.l.b16 %v275
      %v616 = vunpack.c.l.b16 %v276
      %v617 = vunpack.c.l.b16 %v277
      %v618 = vunpack.c.l.b16 %v278
      %v619 = vunpack.c.l.b16 %v279
      %v620 = vunpack.c.l.b16 %v280
      %v621 = vunpack.c.l.b16 %v281
      %v622 = vunpack.c.l.b16 %v282
      %v623 = vunpack.c.l.b16 %v283
      %v624 = vunpack.c.l.b16 %v284
      %v625 = vunpack.c.l.b16 %v285
      %v626 = vunpack.c.l.b16 %v286
      %v627 = vunpack.c.l.b16 %v287
      %v628 = vunpack.c.l.b16 %v288
      %v629 = vunpack.c.l.b16 %v289
      %v630 = vunpack.c.l.b16 %v290
      %v631 = vunpack.c.l.b16 %v291
      %v632 = vunpack.c.l.b16 %v292
      %v633 = vunpack.c.l.b16 %v293
      %v634 = vunpack.c.l.b16 %v294
      %v635 = vunpack.c.l.b16 %v295
      %v636 = vunpack.c.l.b16 %v296
      %v637 = vunpack.c.l.b16 %v297
      %v638 = vunpack.c.l.b16 %v298
      %v639 = vunpack.c.l.b16 %v299
      %v640 = vunpack.c.l.b16 %v300
      %v641 = vunpack.c.l.b16 %v301
      %v642 = vunpack.c.l.b16 %v302
      %v643 = vunpack.c.l.b16 %v303
      %v644 = vpack.c.b16 %v545, %v544
      %v645 = vpack.c.b16 %v547, %v546
      %v646 = vpack.c.b16 %v549, %v548
      %v647 = vpack.c.b16 %v551, %v550
      %v648 = vpack.c.b16 %v553, %v552
      %v649 = vpack.c.b16 %v555, %v554
      %v650 = vpack.c.b16 %v557, %v556
      %v651 = vpack.c.b16 %v559, %v558
      %v652 = vpack.c.b16 %v561, %v560
      %v653 = vpack.c.b16 %v563, %v562
      %v654 = vpack.c.b16 %v565, %v564
      %v655 = vpack.c.b16 %v567, %v566
      %v656 = vpack.c.b16 %v569, %v568
      %v657 = vpack.c.b16 %v571, %v570
      %v658 = vpack.c.b16 %v573, %v572
      %v659 = vpack.c.b16 %v575, %v574
      %v660 = vpack.c.b16 %v577, %v576
      %v661 = vpack.c.b16 %v579, %v578
      %v662 = vpack.c.b16 %v581, %v580
      %v663 = vpack.c.b16 %v583, %v582
      %v664 = vpack.c.b16 %v585, %v584
      %v665 = vpack.c.b16 %v587, %v586
      %v666 = vpack.c.b16 %v589, %v588
      %v667 = vpack.c.b16 %v591, %v590
      %v668 = vpack.c.b16 %v593, %v592
      %v669 = vpack.c.b16 %v595, %v594
      %v670 = vpack.c.b16 %v597, %v596
      %v671 = vpack.c.b16 %v599, %v598
      %v672 = vpack.c.b16 %v601, %v600
      %v673 = vpack.c.b16 %v603, %v602
      %v674 = vpack.c.b16 %v605, %v604
      %v675 = vpack.c.b16 %v607, %v606
      %v676 = vpack.c.b16 %v609, %v608
      %v677 = vpack.c.b16 %v611, %v610
      %v678 = vpack.c.b16 %v613, %v612
      %v679 = vpack.c.b16 %v615, %v614
      %v680 = vpack.c.b16 %v617, %v616
      %v681 = vpack.c.b16 %v619, %v618
      %v682 = vpack.c.b16 %v621, %v620
      %v683 = vpack.c.b16 %v623, %v622
      %v684 = vpack.c.b16 %v625, %v624
      %v685 = vpack.c.b16 %v627, %v626
      %v686 = vpack.c.b16 %v629, %v628
      %v687 = vpack.c.b16 %v631, %v630
      %v688 = vpack.c.b16 %v633, %v632
      %v689 = vpack.c.b16 %v635, %v634
      %v690 = vpack.c.b16 %v637, %v636
      %v691 = vpack.c.b16 %v639, %v638
      %v692 = vpack.c.b16 %v641, %v640
      %v693 = vpack.c.b16 %v643, %v642
      %vm744 = vcmask 261120
      %v746 = vsel %vm744, %v398, 0
      %v749 = vsel %vm744, %v405, 0
      %v752 = vsel %vm744, %v412, 0
      %v755 = vsel %vm744, %v419, 0
      %757 = vmatprep.subr.bf16.mxu0 0
      %758 = vmatpush1.bf16.msra.mxu0 %v651
      %759 = vmatprep.subr.bf16.mxu0 0
      %760 = vmatpush1.bf16.msra.mxu0 %v650
      %761 = vmatprep.subr.bf16.mxu0 0
      %762 = vmatpush1.bf16.msra.mxu0 %v649
      %763 = vmatprep.subr.bf16.mxu0 0
      %764 = vmatpush1.bf16.msra.mxu0 %v648
      %765 = vmatprep.subr.bf16.mxu0 0
      %766 = vmatpush1.bf16.msra.mxu0 %v647
      %767 = vmatprep.subr.bf16.mxu0 0
      %768 = vmatpush1.bf16.msra.mxu0 %v646
      %769 = vmatprep.subr.bf16.mxu0 0
      %770 = vmatpush1.bf16.msra.mxu0 %v645
      %771 = vmatprep.subr.bf16.mxu0 0
      %772 = vmatpush1.bf16.msra.mxu0 %v644
      %773 = vmatprep.subr.bf16.mxu0 0
      %774 = vmatpush2.bf16.msra.mxu0 %v659
      %775 = vmatprep.subr.bf16.mxu0 0
      %776 = vmatpush2.bf16.msra.mxu0 %v658
      %777 = vmatprep.subr.bf16.mxu0 0
      %778 = vmatpush2.bf16.msra.mxu0 %v657
      %779 = vmatprep.subr.bf16.mxu0 0
      %780 = vmatpush2.bf16.msra.mxu0 %v656
      %781 = vmatprep.subr.bf16.mxu0 0
      %782 = vmatpush2.bf16.msra.mxu0 %v655
      %783 = vmatprep.subr.bf16.mxu0 0
      %784 = vmatpush2.bf16.msra.mxu0 %v654
      %785 = vmatprep.subr.bf16.mxu0 0
      %786 = vmatpush2.bf16.msra.mxu0 %v653
      %787 = vmatprep.subr.bf16.mxu0 0
      %788 = vmatpush2.bf16.msra.mxu0 %v652
      %789 = vmatprep.mubr.bf16.mxu0 %v393
      %790 = vmatmul.mubr.bf16.gmra.mxu0 %v392
      %v791 = vpop.f32.mrf.mxu0
      %v792 = vadd.f32 0.0, %v791
      %v793 = vpop.f32.mrf.mxu0
      %v794 = vpop.f32.mrf.mxu0
      %v795 = vadd.f32 0.0, %v794
      %v796 = vpop.f32.mrf.mxu0
      %797 = vmatprep.mubr.bf16.mxu0 %v400
      %798 = vmatmul.mubr.bf16.gmra.mxu0 %v399
      %v799 = vpop.f32.mrf.mxu0
      %v800 = vadd.f32 0.0, %v799
      %v801 = vpop.f32.mrf.mxu0
      %v802 = vpop.f32.mrf.mxu0
      %v803 = vadd.f32 0.0, %v802
      %v804 = vpop.f32.mrf.mxu0
      %805 = vmatprep.mubr.bf16.mxu0 %v407
      %806 = vmatmul.mubr.bf16.gmra.mxu0 %v406
      %v807 = vpop.f32.mrf.mxu0
      %v808 = vadd.f32 0.0, %v807
      %v809 = vpop.f32.mrf.mxu0
      %v810 = vpop.f32.mrf.mxu0
      %v811 = vadd.f32 0.0, %v810
      %v812 = vpop.f32.mrf.mxu0
      %813 = vmatprep.mubr.bf16.mxu0 %v414
      %814 = vmatmul.mubr.bf16.gmra.mxu0 %v413
      %v815 = vpop.f32.mrf.mxu0
      %v816 = vadd.f32 0.0, %v815
      %v817 = vpop.f32.mrf.mxu0
      %v818 = vpop.f32.mrf.mxu0
      %v819 = vadd.f32 0.0, %v818
      %v820 = vpop.f32.mrf.mxu0
      %821 = vdwg.mxu0
      %822 = vmatprep.subr.bf16.mxu0 0
      %823 = vmatpush1.bf16.msra.mxu0 %v667
      %824 = vmatprep.subr.bf16.mxu0 0
      %825 = vmatpush1.bf16.msra.mxu0 %v666
      %826 = vmatprep.subr.bf16.mxu0 0
      %827 = vmatpush1.bf16.msra.mxu0 %v665
      %828 = vmatprep.subr.bf16.mxu0 0
      %829 = vmatpush1.bf16.msra.mxu0 %v664
      %830 = vmatprep.subr.bf16.mxu0 0
      %831 = vmatpush1.bf16.msra.mxu0 %v663
      %832 = vmatprep.subr.bf16.mxu0 0
      %833 = vmatpush1.bf16.msra.mxu0 %v662
      %834 = vmatprep.subr.bf16.mxu0 0
      %835 = vmatpush1.bf16.msra.mxu0 %v661
      %836 = vmatprep.subr.bf16.mxu0 0
      %837 = vmatpush1.bf16.msra.mxu0 %v660
      %838 = vmatprep.subr.bf16.mxu0 0
      %839 = vmatpush2.bf16.msra.mxu0 %v675
      %840 = vmatprep.subr.bf16.mxu0 0
      %841 = vmatpush2.bf16.msra.mxu0 %v674
      %842 = vmatprep.subr.bf16.mxu0 0
      %843 = vmatpush2.bf16.msra.mxu0 %v673
      %844 = vmatprep.subr.bf16.mxu0 0
      %845 = vmatpush2.bf16.msra.mxu0 %v672
      %846 = vmatprep.subr.bf16.mxu0 0
      %847 = vmatpush2.bf16.msra.mxu0 %v671
      %848 = vmatprep.subr.bf16.mxu0 0
      %849 = vmatpush2.bf16.msra.mxu0 %v670
      %850 = vmatprep.subr.bf16.mxu0 0
      %851 = vmatpush2.bf16.msra.mxu0 %v669
      %852 = vmatprep.subr.bf16.mxu0 0
      %853 = vmatpush2.bf16.msra.mxu0 %v668
      %854 = vmatprep.mubr.bf16.mxu0 %v395
      %855 = vmatmul.mubr.bf16.gmra.mxu0 %v394
      %v856 = vpop.f32.mrf.mxu0
      %v857 = vadd.f32 %v792, %v856
      %v858 = vpop.f32.mrf.mxu0
      %v859 = vpop.f32.mrf.mxu0
      %v860 = vadd.f32 %v795, %v859
      %v861 = vpop.f32.mrf.mxu0
      %862 = vmatprep.mubr.bf16.mxu0 %v402
      %863 = vmatmul.mubr.bf16.gmra.mxu0 %v401
      %v864 = vpop.f32.mrf.mxu0
      %v865 = vadd.f32 %v800, %v864
      %v866 = vpop.f32.mrf.mxu0
      %v867 = vpop.f32.mrf.mxu0
      %v868 = vadd.f32 %v803, %v867
      %v869 = vpop.f32.mrf.mxu0
      %870 = vmatprep.mubr.bf16.mxu0 %v409
      %871 = vmatmul.mubr.bf16.gmra.mxu0 %v408
      %v872 = vpop.f32.mrf.mxu0
      %v873 = vadd.f32 %v808, %v872
      %v874 = vpop.f32.mrf.mxu0
      %v875 = vpop.f32.mrf.mxu0
      %v876 = vadd.f32 %v811, %v875
      %v877 = vpop.f32.mrf.mxu0
      %878 = vmatprep.mubr.bf16.mxu0 %v416
      %879 = vmatmul.mubr.bf16.gmra.mxu0 %v415
      %v880 = vpop.f32.mrf.mxu0
      %v881 = vadd.f32 %v816, %v880
      %v882 = vpop.f32.mrf.mxu0
      %v883 = vpop.f32.mrf.mxu0
      %v884 = vadd.f32 %v819, %v883
      %v885 = vpop.f32.mrf.mxu0
      %886 = vdwg.mxu0
      %887 = vmatprep.subr.bf16.mxu0 0
      %888 = vmatpush1.bf16.msra.mxu0 %v683
      %889 = vmatprep.subr.bf16.mxu0 0
      %890 = vmatpush1.bf16.msra.mxu0 %v682
      %891 = vmatprep.subr.bf16.mxu0 0
      %892 = vmatpush1.bf16.msra.mxu0 %v681
      %893 = vmatprep.subr.bf16.mxu0 0
      %894 = vmatpush1.bf16.msra.mxu0 %v680
      %895 = vmatprep.subr.bf16.mxu0 0
      %896 = vmatpush1.bf16.msra.mxu0 %v679
      %897 = vmatprep.subr.bf16.mxu0 0
      %898 = vmatpush1.bf16.msra.mxu0 %v678
      %899 = vmatprep.subr.bf16.mxu0 0
      %900 = vmatpush1.bf16.msra.mxu0 %v677
      %901 = vmatprep.subr.bf16.mxu0 0
      %902 = vmatpush1.bf16.msra.mxu0 %v676
      %903 = vmatprep.subr.bf16.mxu0 0
      %904 = vmatpush2.bf16.msra.mxu0 %v691
      %905 = vmatprep.subr.bf16.mxu0 0
      %906 = vmatpush2.bf16.msra.mxu0 %v690
      %907 = vmatprep.subr.bf16.mxu0 0
      %908 = vmatpush2.bf16.msra.mxu0 %v689
      %909 = vmatprep.subr.bf16.mxu0 0
      %910 = vmatpush2.bf16.msra.mxu0 %v688
      %911 = vmatprep.subr.bf16.mxu0 0
      %912 = vmatpush2.bf16.msra.mxu0 %v687
      %913 = vmatprep.subr.bf16.mxu0 0
      %914 = vmatpush2.bf16.msra.mxu0 %v686
      %915 = vmatprep.subr.bf16.mxu0 0
      %916 = vmatpush2.bf16.msra.mxu0 %v685
      %917 = vmatprep.subr.bf16.mxu0 0
      %918 = vmatpush2.bf16.msra.mxu0 %v684
      %919 = vmatprep.mubr.bf16.mxu0 %v397
      %920 = vmatmul.mubr.bf16.gmra.mxu0 %v396
      %v921 = vpop.f32.mrf.mxu0
      %v922 = vadd.f32 %v857, %v921
      %v923 = vpop.f32.mrf.mxu0
      %v924 = vpop.f32.mrf.mxu0
      %v925 = vadd.f32 %v860, %v924
      %v926 = vpop.f32.mrf.mxu0
      %927 = vmatprep.mubr.bf16.mxu0 %v404
      %928 = vmatmul.mubr.bf16.gmra.mxu0 %v403
      %v929 = vpop.f32.mrf.mxu0
      %v930 = vadd.f32 %v865, %v929
      %v931 = vpop.f32.mrf.mxu0
      %v932 = vpop.f32.mrf.mxu0
      %v933 = vadd.f32 %v868, %v932
      %v934 = vpop.f32.mrf.mxu0
      %935 = vmatprep.mubr.bf16.mxu0 %v411
      %936 = vmatmul.mubr.bf16.gmra.mxu0 %v410
      %v937 = vpop.f32.mrf.mxu0
      %v938 = vadd.f32 %v873, %v937
      %v939 = vpop.f32.mrf.mxu0
      %v940 = vpop.f32.mrf.mxu0
      %v941 = vadd.f32 %v876, %v940
      %v942 = vpop.f32.mrf.mxu0
      %943 = vmatprep.mubr.bf16.mxu0 %v418
      %944 = vmatmul.mubr.bf16.gmra.mxu0 %v417
      %v945 = vpop.f32.mrf.mxu0
      %v946 = vadd.f32 %v881, %v945
      %v947 = vpop.f32.mrf.mxu0
      %v948 = vpop.f32.mrf.mxu0
      %v949 = vadd.f32 %v884, %v948
      %v950 = vpop.f32.mrf.mxu0
      %951 = vdwg.mxu0
      %952 = vmatprep.subr.bf16.mxu0 0
      %953 = vmatpush1.bf16.msra.mxu0 0
      %954 = vmatprep.subr.bf16.mxu0 0
      %955 = vmatpush1.bf16.msra.mxu0 0
      %956 = vmatprep.subr.bf16.mxu0 0
      %957 = vmatpush1.bf16.msra.mxu0 0
      %958 = vmatprep.subr.bf16.mxu0 0
      %959 = vmatpush1.bf16.msra.mxu0 0
      %960 = vmatprep.subr.bf16.mxu0 0
      %961 = vmatpush1.bf16.msra.mxu0 0
      %962 = vmatprep.subr.bf16.mxu0 0
      %963 = vmatpush1.bf16.msra.mxu0 0
      %964 = vmatprep.subr.bf16.mxu0 0
      %965 = vmatpush1.bf16.msra.mxu0 %v693
      %966 = vmatprep.subr.bf16.mxu0 0
      %967 = vmatpush1.bf16.msra.mxu0 %v692
      %968 = vmatprep.subr.bf16.mxu0 0
      %969 = vmatpush2.bf16.msra.mxu0 0
      %970 = vmatprep.subr.bf16.mxu0 0
      %971 = vmatpush2.bf16.msra.mxu0 0
      %972 = vmatprep.subr.bf16.mxu0 0
      %973 = vmatpush2.bf16.msra.mxu0 0
      %974 = vmatprep.subr.bf16.mxu0 0
      %975 = vmatpush2.bf16.msra.mxu0 0
      %976 = vmatprep.subr.bf16.mxu0 0
      %977 = vmatpush2.bf16.msra.mxu0 0
      %978 = vmatprep.subr.bf16.mxu0 0
      %979 = vmatpush2.bf16.msra.mxu0 0
      %980 = vmatprep.subr.bf16.mxu0 0
      %981 = vmatpush2.bf16.msra.mxu0 0
      %982 = vmatprep.subr.bf16.mxu0 0
      %983 = vmatpush2.bf16.msra.mxu0 0
      %984 = vmatprep.mubr.bf16.mxu0 0
      %985 = vmatmul.mubr.bf16.gmra.mxu0 %v746
      %v986 = vpop.f32.mrf.mxu0
      %v987 = vadd.f32 %v922, %v986
      %v988 = vpop.f32.mrf.mxu0
      %v989 = vpop.f32.mrf.mxu0
      %v990 = vadd.f32 %v925, %v989
      %v991 = vpop.f32.mrf.mxu0
      %992 = vmatprep.mubr.bf16.mxu0 0
      %993 = vmatmul.mubr.bf16.gmra.mxu0 %v749
      %v994 = vpop.f32.mrf.mxu0
      %v995 = vadd.f32 %v930, %v994
      %v996 = vpop.f32.mrf.mxu0
      %v997 = vpop.f32.mrf.mxu0
      %v998 = vadd.f32 %v933, %v997
      %v999 = vpop.f32.mrf.mxu0
      %1000 = vmatprep.mubr.bf16.mxu0 0
      %1001 = vmatmul.mubr.bf16.gmra.mxu0 %v752
      %v1002 = vpop.f32.mrf.mxu0
      %v1003 = vadd.f32 %v938, %v1002
      %v1004 = vpop.f32.mrf.mxu0
      %v1005 = vpop.f32.mrf.mxu0
      %v1006 = vadd.f32 %v941, %v1005
      %v1007 = vpop.f32.mrf.mxu0
      %1008 = vmatprep.mubr.bf16.mxu0 0
      %1009 = vmatmul.mubr.bf16.gmra.mxu0 %v755
      %v1010 = vpop.f32.mrf.mxu0
      %v1011 = vadd.f32 %v946, %v1010
      %v1012 = vpop.f32.mrf.mxu0
      %v1013 = vpop.f32.mrf.mxu0
      %v1014 = vadd.f32 %v949, %v1013
      %v1015 = vpop.f32.mrf.mxu0
      %1016 = vdwg.mxu0
      %s1017 = scalar_lea.vmem %s165, 400
      %v1018 = vld [vmem:[%s1017] sm:$0xf]
      %v1019 = vld [vmem:[%s1017 + $0x4] sm:$0xf]
      %v1020 = vld [vmem:[%s1017 + $0x8] sm:$0xf]
      %v1021 = vld [vmem:[%s1017 + $0xc] sm:$0xf]
      %v1022 = vld [vmem:[%s1017 + $0x10] sm:$0xf]
      %v1023 = vld [vmem:[%s1017 + $0x14] sm:$0xf]
      %v1024 = vld [vmem:[%s1017 + $0x18] sm:$0xf]
      %v1025 = vld [vmem:[%s1017 + $0x1c] sm:$0xf]
      %v1026 = vld [vmem:[%s1017 + $0x20] sm:$0xf]
      %v1027 = vld [vmem:[%s1017 + $0x24] sm:$0xf]
      %v1028 = vld [vmem:[%s1017 + $0x28] sm:$0xf]
      %v1029 = vld [vmem:[%s1017 + $0x2c] sm:$0xf]
      %v1030 = vld [vmem:[%s1017 + $0x30] sm:$0xf]
      %v1031 = vld [vmem:[%s1017 + $0x34] sm:$0xf]
      %v1032 = vld [vmem:[%s1017 + $0x38] sm:$0xf]
      %v1033 = vld [vmem:[%s1017 + $0x3c] sm:$0xf]
      %v1034 = vld [vmem:[%s1017 + $0x40] sm:$0xf]
      %v1035 = vld [vmem:[%s1017 + $0x44] sm:$0xf]
      %v1036 = vld [vmem:[%s1017 + $0x48] sm:$0xf]
      %v1037 = vld [vmem:[%s1017 + $0x4c] sm:$0xf]
      %v1038 = vld [vmem:[%s1017 + $0x50] sm:$0xf]
      %v1039 = vld [vmem:[%s1017 + $0x54] sm:$0xf]
      %v1040 = vld [vmem:[%s1017 + $0x58] sm:$0xf]
      %v1041 = vld [vmem:[%s1017 + $0x5c] sm:$0xf]
      %v1042 = vld [vmem:[%s1017 + $0x60] sm:$0xf]
      %v1043 = vld [vmem:[%s1017 + $0x64] sm:$0xf]
      %v1044 = vld [vmem:[%s1017 + $0x68] sm:$0xf]
      %v1045 = vld [vmem:[%s1017 + $0x6c] sm:$0xf]
      %v1046 = vld [vmem:[%s1017 + $0x70] sm:$0xf]
      %v1047 = vld [vmem:[%s1017 + $0x74] sm:$0xf]
      %v1048 = vld [vmem:[%s1017 + $0x78] sm:$0xf]
      %v1049 = vld [vmem:[%s1017 + $0x7c] sm:$0xf]
      %v1050 = vld [vmem:[%s1017 + $0x80] sm:$0xf]
      %v1051 = vld [vmem:[%s1017 + $0x84] sm:$0xf]
      %v1052 = vld [vmem:[%s1017 + $0x88] sm:$0xf]
      %v1053 = vld [vmem:[%s1017 + $0x8c] sm:$0xf]
      %v1054 = vld [vmem:[%s1017 + $0x90] sm:$0xf]
      %v1055 = vld [vmem:[%s1017 + $0x94] sm:$0xf]
      %v1056 = vld [vmem:[%s1017 + $0x98] sm:$0xf]
      %v1057 = vld [vmem:[%s1017 + $0x9c] sm:$0xf]
      %v1058 = vld [vmem:[%s1017 + $0xa0] sm:$0xf]
      %v1059 = vld [vmem:[%s1017 + $0xa4] sm:$0xf]
      %v1060 = vld [vmem:[%s1017 + $0xa8] sm:$0xf]
      %v1061 = vld [vmem:[%s1017 + $0xac] sm:$0xf]
      %v1062 = vld [vmem:[%s1017 + $0xb0] sm:$0xf]
      %v1063 = vld [vmem:[%s1017 + $0xb4] sm:$0xf]
      %v1064 = vld [vmem:[%s1017 + $0xb8] sm:$0xf]
      %v1065 = vld [vmem:[%s1017 + $0xbc] sm:$0xf]
      %v1066 = vld [vmem:[%s1017 + $0xc0] sm:$0xf]
      %v1067 = vld [vmem:[%s1017 + $0xc4] sm:$0xf]
      %v1068 = vld [vmem:[%s1017 + $0xc8] sm:$0xf]
      %v1069 = vld [vmem:[%s1017 + $0xcc] sm:$0xf]
      %v1070 = vld [vmem:[%s1017 + $0xd0] sm:$0xf]
      %v1071 = vld [vmem:[%s1017 + $0xd4] sm:$0xf]
      %v1072 = vld [vmem:[%s1017 + $0xd8] sm:$0xf]
      %v1073 = vld [vmem:[%s1017 + $0xdc] sm:$0xf]
      %v1074 = vld [vmem:[%s1017 + $0xe0] sm:$0xf]
      %v1075 = vld [vmem:[%s1017 + $0xe4] sm:$0xf]
      %v1076 = vld [vmem:[%s1017 + $0xe8] sm:$0xf]
      %v1077 = vld [vmem:[%s1017 + $0xec] sm:$0xf]
      %v1078 = vld [vmem:[%s1017 + $0xf0] sm:$0xf]
      %v1079 = vld [vmem:[%s1017 + $0xf4] sm:$0xf]
      %v1080 = vld [vmem:[%s1017 + $0xf8] sm:$0xf]
      %v1081 = vld [vmem:[%s1017 + $0xfc] sm:$0xf]
      %v1082 = vld [vmem:[%s1017 + $0x100] sm:$0xf]
      %v1083 = vld [vmem:[%s1017 + $0x104] sm:$0xf]
      %v1084 = vld [vmem:[%s1017 + $0x108] sm:$0xf]
      %v1085 = vld [vmem:[%s1017 + $0x10c] sm:$0xf]
      %v1086 = vld [vmem:[%s1017 + $0x110] sm:$0xf]
      %v1087 = vld [vmem:[%s1017 + $0x114] sm:$0xf]
      %v1088 = vld [vmem:[%s1017 + $0x118] sm:$0xf]
      %v1089 = vld [vmem:[%s1017 + $0x11c] sm:$0xf]
      %v1090 = vld [vmem:[%s1017 + $0x120] sm:$0xf]
      %v1091 = vld [vmem:[%s1017 + $0x124] sm:$0xf]
      %v1092 = vld [vmem:[%s1017 + $0x128] sm:$0xf]
      %v1093 = vld [vmem:[%s1017 + $0x12c] sm:$0xf]
      %v1094 = vld [vmem:[%s1017 + $0x130] sm:$0xf]
      %v1095 = vld [vmem:[%s1017 + $0x134] sm:$0xf]
      %v1096 = vld [vmem:[%s1017 + $0x138] sm:$0xf]
      %v1097 = vld [vmem:[%s1017 + $0x13c] sm:$0xf]
      %v1098 = vld [vmem:[%s1017 + $0x140] sm:$0xf]
      %v1099 = vld [vmem:[%s1017 + $0x144] sm:$0xf]
      %v1100 = vld [vmem:[%s1017 + $0x148] sm:$0xf]
      %v1101 = vld [vmem:[%s1017 + $0x14c] sm:$0xf]
      %v1102 = vld [vmem:[%s1017 + $0x150] sm:$0xf]
      %v1103 = vld [vmem:[%s1017 + $0x154] sm:$0xf]
      %v1104 = vld [vmem:[%s1017 + $0x158] sm:$0xf]
      %v1105 = vld [vmem:[%s1017 + $0x15c] sm:$0xf]
      %v1106 = vld [vmem:[%s1017 + $0x160] sm:$0xf]
      %v1107 = vld [vmem:[%s1017 + $0x164] sm:$0xf]
      %v1108 = vld [vmem:[%s1017 + $0x168] sm:$0xf]
      %v1109 = vld [vmem:[%s1017 + $0x16c] sm:$0xf]
      %v1110 = vld [vmem:[%s1017 + $0x170] sm:$0xf]
      %v1111 = vld [vmem:[%s1017 + $0x174] sm:$0xf]
      %v1112 = vld [vmem:[%s1017 + $0x178] sm:$0xf]
      %v1113 = vld [vmem:[%s1017 + $0x17c] sm:$0xf]
      %v1114 = vld [vmem:[%s1017 + $0x180] sm:$0xf]
      %v1115 = vld [vmem:[%s1017 + $0x184] sm:$0xf]
      %v1116 = vld [vmem:[%s1017 + $0x188] sm:$0xf]
      %v1117 = vld [vmem:[%s1017 + $0x18c] sm:$0xf]
      %v1218 = vunpack.c.l.b16 %v1018
      %v1219 = vunpack.c.l.b16 %v1019
      %v1220 = vunpack.c.l.b16 %v1020
      %v1221 = vunpack.c.l.b16 %v1021
      %v1222 = vunpack.c.l.b16 %v1022
      %v1223 = vunpack.c.l.b16 %v1023
      %v1224 = vunpack.c.l.b16 %v1024
      %v1225 = vunpack.c.l.b16 %v1025
      %v1226 = vunpack.c.l.b16 %v1026
      %v1227 = vunpack.c.l.b16 %v1027
      %v1228 = vunpack.c.l.b16 %v1028
      %v1229 = vunpack.c.l.b16 %v1029
      %v1230 = vunpack.c.l.b16 %v1030
      %v1231 = vunpack.c.l.b16 %v1031
      %v1232 = vunpack.c.l.b16 %v1032
      %v1233 = vunpack.c.l.b16 %v1033
      %v1234 = vunpack.c.l.b16 %v1034
      %v1235 = vunpack.c.l.b16 %v1035
      %v1236 = vunpack.c.l.b16 %v1036
      %v1237 = vunpack.c.l.b16 %v1037
      %v1238 = vunpack.c.l.b16 %v1038
      %v1239 = vunpack.c.l.b16 %v1039
      %v1240 = vunpack.c.l.b16 %v1040
      %v1241 = vunpack.c.l.b16 %v1041
      %v1242 = vunpack.c.l.b16 %v1042
      %v1243 = vunpack.c.l.b16 %v1043
      %v1244 = vunpack.c.l.b16 %v1044
      %v1245 = vunpack.c.l.b16 %v1045
      %v1246 = vunpack.c.l.b16 %v1046
      %v1247 = vunpack.c.l.b16 %v1047
      %v1248 = vunpack.c.l.b16 %v1048
      %v1249 = vunpack.c.l.b16 %v1049
      %v1250 = vunpack.c.l.b16 %v1050
      %v1251 = vunpack.c.l.b16 %v1051
      %v1252 = vunpack.c.l.b16 %v1052
      %v1253 = vunpack.c.l.b16 %v1053
      %v1254 = vunpack.c.l.b16 %v1054
      %v1255 = vunpack.c.l.b16 %v1055
      %v1256 = vunpack.c.l.b16 %v1056
      %v1257 = vunpack.c.l.b16 %v1057
      %v1258 = vunpack.c.l.b16 %v1058
      %v1259 = vunpack.c.l.b16 %v1059
      %v1260 = vunpack.c.l.b16 %v1060
      %v1261 = vunpack.c.l.b16 %v1061
      %v1262 = vunpack.c.l.b16 %v1062
      %v1263 = vunpack.c.l.b16 %v1063
      %v1264 = vunpack.c.l.b16 %v1064
      %v1265 = vunpack.c.l.b16 %v1065
      %v1266 = vunpack.c.l.b16 %v1066
      %v1267 = vunpack.c.l.b16 %v1067
      %v1268 = vunpack.c.l.b16 %v1068
      %v1269 = vunpack.c.l.b16 %v1069
      %v1270 = vunpack.c.l.b16 %v1070
      %v1271 = vunpack.c.l.b16 %v1071
      %v1272 = vunpack.c.l.b16 %v1072
      %v1273 = vunpack.c.l.b16 %v1073
      %v1274 = vunpack.c.l.b16 %v1074
      %v1275 = vunpack.c.l.b16 %v1075
      %v1276 = vunpack.c.l.b16 %v1076
      %v1277 = vunpack.c.l.b16 %v1077
      %v1278 = vunpack.c.l.b16 %v1078
      %v1279 = vunpack.c.l.b16 %v1079
      %v1280 = vunpack.c.l.b16 %v1080
      %v1281 = vunpack.c.l.b16 %v1081
      %v1282 = vunpack.c.l.b16 %v1082
      %v1283 = vunpack.c.l.b16 %v1083
      %v1284 = vunpack.c.l.b16 %v1084
      %v1285 = vunpack.c.l.b16 %v1085
      %v1286 = vunpack.c.l.b16 %v1086
      %v1287 = vunpack.c.l.b16 %v1087
      %v1288 = vunpack.c.l.b16 %v1088
      %v1289 = vunpack.c.l.b16 %v1089
      %v1290 = vunpack.c.l.b16 %v1090
      %v1291 = vunpack.c.l.b16 %v1091
      %v1292 = vunpack.c.l.b16 %v1092
      %v1293 = vunpack.c.l.b16 %v1093
      %v1294 = vunpack.c.l.b16 %v1094
      %v1295 = vunpack.c.l.b16 %v1095
      %v1296 = vunpack.c.l.b16 %v1096
      %v1297 = vunpack.c.l.b16 %v1097
      %v1298 = vunpack.c.l.b16 %v1098
      %v1299 = vunpack.c.l.b16 %v1099
      %v1300 = vunpack.c.l.b16 %v1100
      %v1301 = vunpack.c.l.b16 %v1101
      %v1302 = vunpack.c.l.b16 %v1102
      %v1303 = vunpack.c.l.b16 %v1103
      %v1304 = vunpack.c.l.b16 %v1104
      %v1305 = vunpack.c.l.b16 %v1105
      %v1306 = vunpack.c.l.b16 %v1106
      %v1307 = vunpack.c.l.b16 %v1107
      %v1308 = vunpack.c.l.b16 %v1108
      %v1309 = vunpack.c.l.b16 %v1109
      %v1310 = vunpack.c.l.b16 %v1110
      %v1311 = vunpack.c.l.b16 %v1111
      %v1312 = vunpack.c.l.b16 %v1112
      %v1313 = vunpack.c.l.b16 %v1113
      %v1314 = vunpack.c.l.b16 %v1114
      %v1315 = vunpack.c.l.b16 %v1115
      %v1316 = vunpack.c.l.b16 %v1116
      %v1317 = vunpack.c.l.b16 %v1117
      %v1318 = vpack.c.b16 %v1219, %v1218
      %v1319 = vpack.c.b16 %v1221, %v1220
      %v1320 = vpack.c.b16 %v1223, %v1222
      %v1321 = vpack.c.b16 %v1225, %v1224
      %v1322 = vpack.c.b16 %v1227, %v1226
      %v1323 = vpack.c.b16 %v1229, %v1228
      %v1324 = vpack.c.b16 %v1231, %v1230
      %v1325 = vpack.c.b16 %v1233, %v1232
      %v1326 = vpack.c.b16 %v1235, %v1234
      %v1327 = vpack.c.b16 %v1237, %v1236
      %v1328 = vpack.c.b16 %v1239, %v1238
      %v1329 = vpack.c.b16 %v1241, %v1240
      %v1330 = vpack.c.b16 %v1243, %v1242
      %v1331 = vpack.c.b16 %v1245, %v1244
      %v1332 = vpack.c.b16 %v1247, %v1246
      %v1333 = vpack.c.b16 %v1249, %v1248
      %v1334 = vpack.c.b16 %v1251, %v1250
      %v1335 = vpack.c.b16 %v1253, %v1252
      %v1336 = vpack.c.b16 %v1255, %v1254
      %v1337 = vpack.c.b16 %v1257, %v1256
      %v1338 = vpack.c.b16 %v1259, %v1258
      %v1339 = vpack.c.b16 %v1261, %v1260
      %v1340 = vpack.c.b16 %v1263, %v1262
      %v1341 = vpack.c.b16 %v1265, %v1264
      %v1342 = vpack.c.b16 %v1267, %v1266
      %v1343 = vpack.c.b16 %v1269, %v1268
      %v1344 = vpack.c.b16 %v1271, %v1270
      %v1345 = vpack.c.b16 %v1273, %v1272
      %v1346 = vpack.c.b16 %v1275, %v1274
      %v1347 = vpack.c.b16 %v1277, %v1276
      %v1348 = vpack.c.b16 %v1279, %v1278
      %v1349 = vpack.c.b16 %v1281, %v1280
      %v1350 = vpack.c.b16 %v1283, %v1282
      %v1351 = vpack.c.b16 %v1285, %v1284
      %v1352 = vpack.c.b16 %v1287, %v1286
      %v1353 = vpack.c.b16 %v1289, %v1288
      %v1354 = vpack.c.b16 %v1291, %v1290
      %v1355 = vpack.c.b16 %v1293, %v1292
      %v1356 = vpack.c.b16 %v1295, %v1294
      %v1357 = vpack.c.b16 %v1297, %v1296
      %v1358 = vpack.c.b16 %v1299, %v1298
      %v1359 = vpack.c.b16 %v1301, %v1300
      %v1360 = vpack.c.b16 %v1303, %v1302
      %v1361 = vpack.c.b16 %v1305, %v1304
      %v1362 = vpack.c.b16 %v1307, %v1306
      %v1363 = vpack.c.b16 %v1309, %v1308
      %v1364 = vpack.c.b16 %v1311, %v1310
      %v1365 = vpack.c.b16 %v1313, %v1312
      %v1366 = vpack.c.b16 %v1315, %v1314
      %v1367 = vpack.c.b16 %v1317, %v1316
      %1418 = vmatprep.subr.bf16.mxu0 0
      %1419 = vmatpush1.bf16.msra.mxu0 %v1325
      %1420 = vmatprep.subr.bf16.mxu0 0
      %1421 = vmatpush1.bf16.msra.mxu0 %v1324
      %1422 = vmatprep.subr.bf16.mxu0 0
      %1423 = vmatpush1.bf16.msra.mxu0 %v1323
      %1424 = vmatprep.subr.bf16.mxu0 0
      %1425 = vmatpush1.bf16.msra.mxu0 %v1322
      %1426 = vmatprep.subr.bf16.mxu0 0
      %1427 = vmatpush1.bf16.msra.mxu0 %v1321
      %1428 = vmatprep.subr.bf16.mxu0 0
      %1429 = vmatpush1.bf16.msra.mxu0 %v1320
      %1430 = vmatprep.subr.bf16.mxu0 0
      %1431 = vmatpush1.bf16.msra.mxu0 %v1319
      %1432 = vmatprep.subr.bf16.mxu0 0
      %1433 = vmatpush1.bf16.msra.mxu0 %v1318
      %1434 = vmatprep.subr.bf16.mxu0 0
      %1435 = vmatpush2.bf16.msra.mxu0 %v1333
      %1436 = vmatprep.subr.bf16.mxu0 0
      %1437 = vmatpush2.bf16.msra.mxu0 %v1332
      %1438 = vmatprep.subr.bf16.mxu0 0
      %1439 = vmatpush2.bf16.msra.mxu0 %v1331
      %1440 = vmatprep.subr.bf16.mxu0 0
      %1441 = vmatpush2.bf16.msra.mxu0 %v1330
      %1442 = vmatprep.subr.bf16.mxu0 0
      %1443 = vmatpush2.bf16.msra.mxu0 %v1329
      %1444 = vmatprep.subr.bf16.mxu0 0
      %1445 = vmatpush2.bf16.msra.mxu0 %v1328
      %1446 = vmatprep.subr.bf16.mxu0 0
      %1447 = vmatpush2.bf16.msra.mxu0 %v1327
      %1448 = vmatprep.subr.bf16.mxu0 0
      %1449 = vmatpush2.bf16.msra.mxu0 %v1326
      %1450 = vmatprep.mubr.bf16.mxu0 %v393
      %1451 = vmatmul.mubr.bf16.gmra.mxu0 %v392
      %v1452 = vpop.f32.mrf.mxu0
      %v1453 = vadd.f32 0.0, %v1452
      %v1454 = vpop.f32.mrf.mxu0
      %v1455 = vpop.f32.mrf.mxu0
      %v1456 = vadd.f32 0.0, %v1455
      %v1457 = vpop.f32.mrf.mxu0
      %1458 = vmatprep.mubr.bf16.mxu0 %v400
      %1459 = vmatmul.mubr.bf16.gmra.mxu0 %v399
      %v1460 = vpop.f32.mrf.mxu0
      %v1461 = vadd.f32 0.0, %v1460
      %v1462 = vpop.f32.mrf.mxu0
      %v1463 = vpop.f32.mrf.mxu0
      %v1464 = vadd.f32 0.0, %v1463
      %v1465 = vpop.f32.mrf.mxu0
      %1466 = vmatprep.mubr.bf16.mxu0 %v407
      %1467 = vmatmul.mubr.bf16.gmra.mxu0 %v406
      %v1468 = vpop.f32.mrf.mxu0
      %v1469 = vadd.f32 0.0, %v1468
      %v1470 = vpop.f32.mrf.mxu0
      %v1471 = vpop.f32.mrf.mxu0
      %v1472 = vadd.f32 0.0, %v1471
      %v1473 = vpop.f32.mrf.mxu0
      %1474 = vmatprep.mubr.bf16.mxu0 %v414
      %1475 = vmatmul.mubr.bf16.gmra.mxu0 %v413
      %v1476 = vpop.f32.mrf.mxu0
      %v1477 = vadd.f32 0.0, %v1476
      %v1478 = vpop.f32.mrf.mxu0
      %v1479 = vpop.f32.mrf.mxu0
      %v1480 = vadd.f32 0.0, %v1479
      %v1481 = vpop.f32.mrf.mxu0
      %1482 = vdwg.mxu0
      %1483 = vmatprep.subr.bf16.mxu0 0
      %1484 = vmatpush1.bf16.msra.mxu0 %v1341
      %1485 = vmatprep.subr.bf16.mxu0 0
      %1486 = vmatpush1.bf16.msra.mxu0 %v1340
      %1487 = vmatprep.subr.bf16.mxu0 0
      %1488 = vmatpush1.bf16.msra.mxu0 %v1339
      %1489 = vmatprep.subr.bf16.mxu0 0
      %1490 = vmatpush1.bf16.msra.mxu0 %v1338
      %1491 = vmatprep.subr.bf16.mxu0 0
      %1492 = vmatpush1.bf16.msra.mxu0 %v1337
      %1493 = vmatprep.subr.bf16.mxu0 0
      %1494 = vmatpush1.bf16.msra.mxu0 %v1336
      %1495 = vmatprep.subr.bf16.mxu0 0
      %1496 = vmatpush1.bf16.msra.mxu0 %v1335
      %1497 = vmatprep.subr.bf16.mxu0 0
      %1498 = vmatpush1.bf16.msra.mxu0 %v1334
      %1499 = vmatprep.subr.bf16.mxu0 0
      %1500 = vmatpush2.bf16.msra.mxu0 %v1349
      %1501 = vmatprep.subr.bf16.mxu0 0
      %1502 = vmatpush2.bf16.msra.mxu0 %v1348
      %1503 = vmatprep.subr.bf16.mxu0 0
      %1504 = vmatpush2.bf16.msra.mxu0 %v1347
      %1505 = vmatprep.subr.bf16.mxu0 0
      %1506 = vmatpush2.bf16.msra.mxu0 %v1346
      %1507 = vmatprep.subr.bf16.mxu0 0
      %1508 = vmatpush2.bf16.msra.mxu0 %v1345
      %1509 = vmatprep.subr.bf16.mxu0 0
      %1510 = vmatpush2.bf16.msra.mxu0 %v1344
      %1511 = vmatprep.subr.bf16.mxu0 0
      %1512 = vmatpush2.bf16.msra.mxu0 %v1343
      %1513 = vmatprep.subr.bf16.mxu0 0
      %1514 = vmatpush2.bf16.msra.mxu0 %v1342
      %1515 = vmatprep.mubr.bf16.mxu0 %v395
      %1516 = vmatmul.mubr.bf16.gmra.mxu0 %v394
      %v1517 = vpop.f32.mrf.mxu0
      %v1518 = vadd.f32 %v1453, %v1517
      %v1519 = vpop.f32.mrf.mxu0
      %v1520 = vpop.f32.mrf.mxu0
      %v1521 = vadd.f32 %v1456, %v1520
      %v1522 = vpop.f32.mrf.mxu0
      %1523 = vmatprep.mubr.bf16.mxu0 %v402
      %1524 = vmatmul.mubr.bf16.gmra.mxu0 %v401
      %v1525 = vpop.f32.mrf.mxu0
      %v1526 = vadd.f32 %v1461, %v1525
      %v1527 = vpop.f32.mrf.mxu0
      %v1528 = vpop.f32.mrf.mxu0
      %v1529 = vadd.f32 %v1464, %v1528
      %v1530 = vpop.f32.mrf.mxu0
      %1531 = vmatprep.mubr.bf16.mxu0 %v409
      %1532 = vmatmul.mubr.bf16.gmra.mxu0 %v408
      %v1533 = vpop.f32.mrf.mxu0
      %v1534 = vadd.f32 %v1469, %v1533
      %v1535 = vpop.f32.mrf.mxu0
      %v1536 = vpop.f32.mrf.mxu0
      %v1537 = vadd.f32 %v1472, %v1536
      %v1538 = vpop.f32.mrf.mxu0
      %1539 = vmatprep.mubr.bf16.mxu0 %v416
      %1540 = vmatmul.mubr.bf16.gmra.mxu0 %v415
      %v1541 = vpop.f32.mrf.mxu0
      %v1542 = vadd.f32 %v1477, %v1541
      %v1543 = vpop.f32.mrf.mxu0
      %v1544 = vpop.f32.mrf.mxu0
      %v1545 = vadd.f32 %v1480, %v1544
      %v1546 = vpop.f32.mrf.mxu0
      %1547 = vdwg.mxu0
      %1548 = vmatprep.subr.bf16.mxu0 0
      %1549 = vmatpush1.bf16.msra.mxu0 %v1357
      %1550 = vmatprep.subr.bf16.mxu0 0
      %1551 = vmatpush1.bf16.msra.mxu0 %v1356
      %1552 = vmatprep.subr.bf16.mxu0 0
      %1553 = vmatpush1.bf16.msra.mxu0 %v1355
      %1554 = vmatprep.subr.bf16.mxu0 0
      %1555 = vmatpush1.bf16.msra.mxu0 %v1354
      %1556 = vmatprep.subr.bf16.mxu0 0
      %1557 = vmatpush1.bf16.msra.mxu0 %v1353
      %1558 = vmatprep.subr.bf16.mxu0 0
      %1559 = vmatpush1.bf16.msra.mxu0 %v1352
      %1560 = vmatprep.subr.bf16.mxu0 0
      %1561 = vmatpush1.bf16.msra.mxu0 %v1351
      %1562 = vmatprep.subr.bf16.mxu0 0
      %1563 = vmatpush1.bf16.msra.mxu0 %v1350
      %1564 = vmatprep.subr.bf16.mxu0 0
      %1565 = vmatpush2.bf16.msra.mxu0 %v1365
      %1566 = vmatprep.subr.bf16.mxu0 0
      %1567 = vmatpush2.bf16.msra.mxu0 %v1364
      %1568 = vmatprep.subr.bf16.mxu0 0
      %1569 = vmatpush2.bf16.msra.mxu0 %v1363
      %1570 = vmatprep.subr.bf16.mxu0 0
      %1571 = vmatpush2.bf16.msra.mxu0 %v1362
      %1572 = vmatprep.subr.bf16.mxu0 0
      %1573 = vmatpush2.bf16.msra.mxu0 %v1361
      %1574 = vmatprep.subr.bf16.mxu0 0
      %1575 = vmatpush2.bf16.msra.mxu0 %v1360
      %1576 = vmatprep.subr.bf16.mxu0 0
      %1577 = vmatpush2.bf16.msra.mxu0 %v1359
      %1578 = vmatprep.subr.bf16.mxu0 0
      %1579 = vmatpush2.bf16.msra.mxu0 %v1358
      %1580 = vmatprep.mubr.bf16.mxu0 %v397
      %1581 = vmatmul.mubr.bf16.gmra.mxu0 %v396
      %v1582 = vpop.f32.mrf.mxu0
      %v1583 = vadd.f32 %v1518, %v1582
      %v1584 = vpop.f32.mrf.mxu0
      %v1585 = vpop.f32.mrf.mxu0
      %v1586 = vadd.f32 %v1521, %v1585
      %v1587 = vpop.f32.mrf.mxu0
      %1588 = vmatprep.mubr.bf16.mxu0 %v404
      %1589 = vmatmul.mubr.bf16.gmra.mxu0 %v403
      %v1590 = vpop.f32.mrf.mxu0
      %v1591 = vadd.f32 %v1526, %v1590
      %v1592 = vpop.f32.mrf.mxu0
      %v1593 = vpop.f32.mrf.mxu0
      %v1594 = vadd.f32 %v1529, %v1593
      %v1595 = vpop.f32.mrf.mxu0
      %1596 = vmatprep.mubr.bf16.mxu0 %v411
      %1597 = vmatmul.mubr.bf16.gmra.mxu0 %v410
      %v1598 = vpop.f32.mrf.mxu0
      %v1599 = vadd.f32 %v1534, %v1598
      %v1600 = vpop.f32.mrf.mxu0
      %v1601 = vpop.f32.mrf.mxu0
      %v1602 = vadd.f32 %v1537, %v1601
      %v1603 = vpop.f32.mrf.mxu0
      %1604 = vmatprep.mubr.bf16.mxu0 %v418
      %1605 = vmatmul.mubr.bf16.gmra.mxu0 %v417
      %v1606 = vpop.f32.mrf.mxu0
      %v1607 = vadd.f32 %v1542, %v1606
      %v1608 = vpop.f32.mrf.mxu0
      %v1609 = vpop.f32.mrf.mxu0
      %v1610 = vadd.f32 %v1545, %v1609
      %v1611 = vpop.f32.mrf.mxu0
      %1612 = vdwg.mxu0
      %1613 = vmatprep.subr.bf16.mxu0 0
      %1614 = vmatpush1.bf16.msra.mxu0 0
      %1615 = vmatprep.subr.bf16.mxu0 0
      %1616 = vmatpush1.bf16.msra.mxu0 0
      %1617 = vmatprep.subr.bf16.mxu0 0
      %1618 = vmatpush1.bf16.msra.mxu0 0
      %1619 = vmatprep.subr.bf16.mxu0 0
      %1620 = vmatpush1.bf16.msra.mxu0 0
      %1621 = vmatprep.subr.bf16.mxu0 0
      %1622 = vmatpush1.bf16.msra.mxu0 0
      %1623 = vmatprep.subr.bf16.mxu0 0
      %1624 = vmatpush1.bf16.msra.mxu0 0
      %1625 = vmatprep.subr.bf16.mxu0 0
      %1626 = vmatpush1.bf16.msra.mxu0 %v1367
      %1627 = vmatprep.subr.bf16.mxu0 0
      %1628 = vmatpush1.bf16.msra.mxu0 %v1366
      %1629 = vmatprep.subr.bf16.mxu0 0
      %1630 = vmatpush2.bf16.msra.mxu0 0
      %1631 = vmatprep.subr.bf16.mxu0 0
      %1632 = vmatpush2.bf16.msra.mxu0 0
      %1633 = vmatprep.subr.bf16.mxu0 0
      %1634 = vmatpush2.bf16.msra.mxu0 0
      %1635 = vmatprep.subr.bf16.mxu0 0
      %1636 = vmatpush2.bf16.msra.mxu0 0
      %1637 = vmatprep.subr.bf16.mxu0 0
      %1638 = vmatpush2.bf16.msra.mxu0 0
      %1639 = vmatprep.subr.bf16.mxu0 0
      %1640 = vmatpush2.bf16.msra.mxu0 0
      %1641 = vmatprep.subr.bf16.mxu0 0
      %1642 = vmatpush2.bf16.msra.mxu0 0
      %1643 = vmatprep.subr.bf16.mxu0 0
      %1644 = vmatpush2.bf16.msra.mxu0 0
      %1645 = vmatprep.mubr.bf16.mxu0 0
      %1646 = vmatmul.mubr.bf16.gmra.mxu0 %v746
      %v1647 = vpop.f32.mrf.mxu0
      %v1648 = vadd.f32 %v1583, %v1647
      %v1649 = vpop.f32.mrf.mxu0
      %v1650 = vpop.f32.mrf.mxu0
      %v1651 = vadd.f32 %v1586, %v1650
      %v1652 = vpop.f32.mrf.mxu0
      %1653 = vmatprep.mubr.bf16.mxu0 0
      %1654 = vmatmul.mubr.bf16.gmra.mxu0 %v749
      %v1655 = vpop.f32.mrf.mxu0
      %v1656 = vadd.f32 %v1591, %v1655
      %v1657 = vpop.f32.mrf.mxu0
      %v1658 = vpop.f32.mrf.mxu0
      %v1659 = vadd.f32 %v1594, %v1658
      %v1660 = vpop.f32.mrf.mxu0
      %1661 = vmatprep.mubr.bf16.mxu0 0
      %1662 = vmatmul.mubr.bf16.gmra.mxu0 %v752
      %v1663 = vpop.f32.mrf.mxu0
      %v1664 = vadd.f32 %v1599, %v1663
      %v1665 = vpop.f32.mrf.mxu0
      %v1666 = vpop.f32.mrf.mxu0
      %v1667 = vadd.f32 %v1602, %v1666
      %v1668 = vpop.f32.mrf.mxu0
      %1669 = vmatprep.mubr.bf16.mxu0 0
      %1670 = vmatmul.mubr.bf16.gmra.mxu0 %v755
      %v1671 = vpop.f32.mrf.mxu0
      %v1672 = vadd.f32 %v1607, %v1671
      %v1673 = vpop.f32.mrf.mxu0
      %v1674 = vpop.f32.mrf.mxu0
      %v1675 = vadd.f32 %v1610, %v1674
      %v1676 = vpop.f32.mrf.mxu0
      %1677 = vdwg.mxu0
      %s1678 = scalar_lea.vmem %s165, 800
      %v1679 = vld [vmem:[%s1678] sm:$0xf]
      %v1680 = vld [vmem:[%s1678 + $0x4] sm:$0xf]
      %v1681 = vld [vmem:[%s1678 + $0x8] sm:$0xf]
      %v1682 = vld [vmem:[%s1678 + $0xc] sm:$0xf]
      %v1683 = vld [vmem:[%s1678 + $0x10] sm:$0xf]
      %v1684 = vld [vmem:[%s1678 + $0x14] sm:$0xf]
      %v1685 = vld [vmem:[%s1678 + $0x18] sm:$0xf]
      %v1686 = vld [vmem:[%s1678 + $0x1c] sm:$0xf]
      %v1687 = vld [vmem:[%s1678 + $0x20] sm:$0xf]
      %v1688 = vld [vmem:[%s1678 + $0x24] sm:$0xf]
      %v1689 = vld [vmem:[%s1678 + $0x28] sm:$0xf]
      %v1690 = vld [vmem:[%s1678 + $0x2c] sm:$0xf]
      %v1691 = vld [vmem:[%s1678 + $0x30] sm:$0xf]
      %v1692 = vld [vmem:[%s1678 + $0x34] sm:$0xf]
      %v1693 = vld [vmem:[%s1678 + $0x38] sm:$0xf]
      %v1694 = vld [vmem:[%s1678 + $0x3c] sm:$0xf]
      %v1695 = vld [vmem:[%s1678 + $0x40] sm:$0xf]
      %v1696 = vld [vmem:[%s1678 + $0x44] sm:$0xf]
      %v1697 = vld [vmem:[%s1678 + $0x48] sm:$0xf]
      %v1698 = vld [vmem:[%s1678 + $0x4c] sm:$0xf]
      %v1699 = vld [vmem:[%s1678 + $0x50] sm:$0xf]
      %v1700 = vld [vmem:[%s1678 + $0x54] sm:$0xf]
      %v1701 = vld [vmem:[%s1678 + $0x58] sm:$0xf]
      %v1702 = vld [vmem:[%s1678 + $0x5c] sm:$0xf]
      %v1703 = vld [vmem:[%s1678 + $0x60] sm:$0xf]
      %v1704 = vld [vmem:[%s1678 + $0x64] sm:$0xf]
      %v1705 = vld [vmem:[%s1678 + $0x68] sm:$0xf]
      %v1706 = vld [vmem:[%s1678 + $0x6c] sm:$0xf]
      %v1707 = vld [vmem:[%s1678 + $0x70] sm:$0xf]
      %v1708 = vld [vmem:[%s1678 + $0x74] sm:$0xf]
      %v1709 = vld [vmem:[%s1678 + $0x78] sm:$0xf]
      %v1710 = vld [vmem:[%s1678 + $0x7c] sm:$0xf]
      %v1711 = vld [vmem:[%s1678 + $0x80] sm:$0xf]
      %v1712 = vld [vmem:[%s1678 + $0x84] sm:$0xf]
      %v1713 = vld [vmem:[%s1678 + $0x88] sm:$0xf]
      %v1714 = vld [vmem:[%s1678 + $0x8c] sm:$0xf]
      %v1715 = vld [vmem:[%s1678 + $0x90] sm:$0xf]
      %v1716 = vld [vmem:[%s1678 + $0x94] sm:$0xf]
      %v1717 = vld [vmem:[%s1678 + $0x98] sm:$0xf]
      %v1718 = vld [vmem:[%s1678 + $0x9c] sm:$0xf]
      %v1719 = vld [vmem:[%s1678 + $0xa0] sm:$0xf]
      %v1720 = vld [vmem:[%s1678 + $0xa4] sm:$0xf]
      %v1721 = vld [vmem:[%s1678 + $0xa8] sm:$0xf]
      %v1722 = vld [vmem:[%s1678 + $0xac] sm:$0xf]
      %v1723 = vld [vmem:[%s1678 + $0xb0] sm:$0xf]
      %v1724 = vld [vmem:[%s1678 + $0xb4] sm:$0xf]
      %v1725 = vld [vmem:[%s1678 + $0xb8] sm:$0xf]
      %v1726 = vld [vmem:[%s1678 + $0xbc] sm:$0xf]
      %v1727 = vld [vmem:[%s1678 + $0xc0] sm:$0xf]
      %v1728 = vld [vmem:[%s1678 + $0xc4] sm:$0xf]
      %v1729 = vld [vmem:[%s1678 + $0xc8] sm:$0xf]
      %v1730 = vld [vmem:[%s1678 + $0xcc] sm:$0xf]
      %v1731 = vld [vmem:[%s1678 + $0xd0] sm:$0xf]
      %v1732 = vld [vmem:[%s1678 + $0xd4] sm:$0xf]
      %v1733 = vld [vmem:[%s1678 + $0xd8] sm:$0xf]
      %v1734 = vld [vmem:[%s1678 + $0xdc] sm:$0xf]
      %v1735 = vld [vmem:[%s1678 + $0xe0] sm:$0xf]
      %v1736 = vld [vmem:[%s1678 + $0xe4] sm:$0xf]
      %v1737 = vld [vmem:[%s1678 + $0xe8] sm:$0xf]
      %v1738 = vld [vmem:[%s1678 + $0xec] sm:$0xf]
      %v1739 = vld [vmem:[%s1678 + $0xf0] sm:$0xf]
      %v1740 = vld [vmem:[%s1678 + $0xf4] sm:$0xf]
      %v1741 = vld [vmem:[%s1678 + $0xf8] sm:$0xf]
      %v1742 = vld [vmem:[%s1678 + $0xfc] sm:$0xf]
      %v1743 = vld [vmem:[%s1678 + $0x100] sm:$0xf]
      %v1744 = vld [vmem:[%s1678 + $0x104] sm:$0xf]
      %v1745 = vld [vmem:[%s1678 + $0x108] sm:$0xf]
      %v1746 = vld [vmem:[%s1678 + $0x10c] sm:$0xf]
      %v1747 = vld [vmem:[%s1678 + $0x110] sm:$0xf]
      %v1748 = vld [vmem:[%s1678 + $0x114] sm:$0xf]
      %v1749 = vld [vmem:[%s1678 + $0x118] sm:$0xf]
      %v1750 = vld [vmem:[%s1678 + $0x11c] sm:$0xf]
      %v1751 = vld [vmem:[%s1678 + $0x120] sm:$0xf]
      %v1752 = vld [vmem:[%s1678 + $0x124] sm:$0xf]
      %v1753 = vld [vmem:[%s1678 + $0x128] sm:$0xf]
      %v1754 = vld [vmem:[%s1678 + $0x12c] sm:$0xf]
      %v1755 = vld [vmem:[%s1678 + $0x130] sm:$0xf]
      %v1756 = vld [vmem:[%s1678 + $0x134] sm:$0xf]
      %v1757 = vld [vmem:[%s1678 + $0x138] sm:$0xf]
      %v1758 = vld [vmem:[%s1678 + $0x13c] sm:$0xf]
      %v1759 = vld [vmem:[%s1678 + $0x140] sm:$0xf]
      %v1760 = vld [vmem:[%s1678 + $0x144] sm:$0xf]
      %v1761 = vld [vmem:[%s1678 + $0x148] sm:$0xf]
      %v1762 = vld [vmem:[%s1678 + $0x14c] sm:$0xf]
      %v1763 = vld [vmem:[%s1678 + $0x150] sm:$0xf]
      %v1764 = vld [vmem:[%s1678 + $0x154] sm:$0xf]
      %v1765 = vld [vmem:[%s1678 + $0x158] sm:$0xf]
      %v1766 = vld [vmem:[%s1678 + $0x15c] sm:$0xf]
      %v1767 = vld [vmem:[%s1678 + $0x160] sm:$0xf]
      %v1768 = vld [vmem:[%s1678 + $0x164] sm:$0xf]
      %v1769 = vld [vmem:[%s1678 + $0x168] sm:$0xf]
      %v1770 = vld [vmem:[%s1678 + $0x16c] sm:$0xf]
      %v1771 = vld [vmem:[%s1678 + $0x170] sm:$0xf]
      %v1772 = vld [vmem:[%s1678 + $0x174] sm:$0xf]
      %v1773 = vld [vmem:[%s1678 + $0x178] sm:$0xf]
      %v1774 = vld [vmem:[%s1678 + $0x17c] sm:$0xf]
      %v1775 = vld [vmem:[%s1678 + $0x180] sm:$0xf]
      %v1776 = vld [vmem:[%s1678 + $0x184] sm:$0xf]
      %v1777 = vld [vmem:[%s1678 + $0x188] sm:$0xf]
      %v1778 = vld [vmem:[%s1678 + $0x18c] sm:$0xf]
      %v1879 = vunpack.c.l.b16 %v1679
      %v1880 = vunpack.c.l.b16 %v1680
      %v1881 = vunpack.c.l.b16 %v1681
      %v1882 = vunpack.c.l.b16 %v1682
      %v1883 = vunpack.c.l.b16 %v1683
      %v1884 = vunpack.c.l.b16 %v1684
      %v1885 = vunpack.c.l.b16 %v1685
      %v1886 = vunpack.c.l.b16 %v1686
      %v1887 = vunpack.c.l.b16 %v1687
      %v1888 = vunpack.c.l.b16 %v1688
      %v1889 = vunpack.c.l.b16 %v1689
      %v1890 = vunpack.c.l.b16 %v1690
      %v1891 = vunpack.c.l.b16 %v1691
      %v1892 = vunpack.c.l.b16 %v1692
      %v1893 = vunpack.c.l.b16 %v1693
      %v1894 = vunpack.c.l.b16 %v1694
      %v1895 = vunpack.c.l.b16 %v1695
      %v1896 = vunpack.c.l.b16 %v1696
      %v1897 = vunpack.c.l.b16 %v1697
      %v1898 = vunpack.c.l.b16 %v1698
      %v1899 = vunpack.c.l.b16 %v1699
      %v1900 = vunpack.c.l.b16 %v1700
      %v1901 = vunpack.c.l.b16 %v1701
      %v1902 = vunpack.c.l.b16 %v1702
      %v1903 = vunpack.c.l.b16 %v1703
      %v1904 = vunpack.c.l.b16 %v1704
      %v1905 = vunpack.c.l.b16 %v1705
      %v1906 = vunpack.c.l.b16 %v1706
      %v1907 = vunpack.c.l.b16 %v1707
      %v1908 = vunpack.c.l.b16 %v1708
      %v1909 = vunpack.c.l.b16 %v1709
      %v1910 = vunpack.c.l.b16 %v1710
      %v1911 = vunpack.c.l.b16 %v1711
      %v1912 = vunpack.c.l.b16 %v1712
      %v1913 = vunpack.c.l.b16 %v1713
      %v1914 = vunpack.c.l.b16 %v1714
      %v1915 = vunpack.c.l.b16 %v1715
      %v1916 = vunpack.c.l.b16 %v1716
      %v1917 = vunpack.c.l.b16 %v1717
      %v1918 = vunpack.c.l.b16 %v1718
      %v1919 = vunpack.c.l.b16 %v1719
      %v1920 = vunpack.c.l.b16 %v1720
      %v1921 = vunpack.c.l.b16 %v1721
      %v1922 = vunpack.c.l.b16 %v1722
      %v1923 = vunpack.c.l.b16 %v1723
      %v1924 = vunpack.c.l.b16 %v1724
      %v1925 = vunpack.c.l.b16 %v1725
      %v1926 = vunpack.c.l.b16 %v1726
      %v1927 = vunpack.c.l.b16 %v1727
      %v1928 = vunpack.c.l.b16 %v1728
      %v1929 = vunpack.c.l.b16 %v1729
      %v1930 = vunpack.c.l.b16 %v1730
      %v1931 = vunpack.c.l.b16 %v1731
      %v1932 = vunpack.c.l.b16 %v1732
      %v1933 = vunpack.c.l.b16 %v1733
      %v1934 = vunpack.c.l.b16 %v1734
      %v1935 = vunpack.c.l.b16 %v1735
      %v1936 = vunpack.c.l.b16 %v1736
      %v1937 = vunpack.c.l.b16 %v1737
      %v1938 = vunpack.c.l.b16 %v1738
      %v1939 = vunpack.c.l.b16 %v1739
      %v1940 = vunpack.c.l.b16 %v1740
      %v1941 = vunpack.c.l.b16 %v1741
      %v1942 = vunpack.c.l.b16 %v1742
      %v1943 = vunpack.c.l.b16 %v1743
      %v1944 = vunpack.c.l.b16 %v1744
      %v1945 = vunpack.c.l.b16 %v1745
      %v1946 = vunpack.c.l.b16 %v1746
      %v1947 = vunpack.c.l.b16 %v1747
      %v1948 = vunpack.c.l.b16 %v1748
      %v1949 = vunpack.c.l.b16 %v1749
      %v1950 = vunpack.c.l.b16 %v1750
      %v1951 = vunpack.c.l.b16 %v1751
      %v1952 = vunpack.c.l.b16 %v1752
      %v1953 = vunpack.c.l.b16 %v1753
      %v1954 = vunpack.c.l.b16 %v1754
      %v1955 = vunpack.c.l.b16 %v1755
      %v1956 = vunpack.c.l.b16 %v1756
      %v1957 = vunpack.c.l.b16 %v1757
      %v1958 = vunpack.c.l.b16 %v1758
      %v1959 = vunpack.c.l.b16 %v1759
      %v1960 = vunpack.c.l.b16 %v1760
      %v1961 = vunpack.c.l.b16 %v1761
      %v1962 = vunpack.c.l.b16 %v1762
      %v1963 = vunpack.c.l.b16 %v1763
      %v1964 = vunpack.c.l.b16 %v1764
      %v1965 = vunpack.c.l.b16 %v1765
      %v1966 = vunpack.c.l.b16 %v1766
      %v1967 = vunpack.c.l.b16 %v1767
      %v1968 = vunpack.c.l.b16 %v1768
      %v1969 = vunpack.c.l.b16 %v1769
      %v1970 = vunpack.c.l.b16 %v1770
      %v1971 = vunpack.c.l.b16 %v1771
      %v1972 = vunpack.c.l.b16 %v1772
      %v1973 = vunpack.c.l.b16 %v1773
      %v1974 = vunpack.c.l.b16 %v1774
      %v1975 = vunpack.c.l.b16 %v1775
      %v1976 = vunpack.c.l.b16 %v1776
      %v1977 = vunpack.c.l.b16 %v1777
      %v1978 = vunpack.c.l.b16 %v1778
      %v1979 = vpack.c.b16 %v1880, %v1879
      %v1980 = vpack.c.b16 %v1882, %v1881
      %v1981 = vpack.c.b16 %v1884, %v1883
      %v1982 = vpack.c.b16 %v1886, %v1885
      %v1983 = vpack.c.b16 %v1888, %v1887
      %v1984 = vpack.c.b16 %v1890, %v1889
      %v1985 = vpack.c.b16 %v1892, %v1891
      %v1986 = vpack.c.b16 %v1894, %v1893
      %v1987 = vpack.c.b16 %v1896, %v1895
      %v1988 = vpack.c.b16 %v1898, %v1897
      %v1989 = vpack.c.b16 %v1900, %v1899
      %v1990 = vpack.c.b16 %v1902, %v1901
      %v1991 = vpack.c.b16 %v1904, %v1903
      %v1992 = vpack.c.b16 %v1906, %v1905
      %v1993 = vpack.c.b16 %v1908, %v1907
      %v1994 = vpack.c.b16 %v1910, %v1909
      %v1995 = vpack.c.b16 %v1912, %v1911
      %v1996 = vpack.c.b16 %v1914, %v1913
      %v1997 = vpack.c.b16 %v1916, %v1915
      %v1998 = vpack.c.b16 %v1918, %v1917
      %v1999 = vpack.c.b16 %v1920, %v1919
      %v2000 = vpack.c.b16 %v1922, %v1921
      %v2001 = vpack.c.b16 %v1924, %v1923
      %v2002 = vpack.c.b16 %v1926, %v1925
      %v2003 = vpack.c.b16 %v1928, %v1927
      %v2004 = vpack.c.b16 %v1930, %v1929
      %v2005 = vpack.c.b16 %v1932, %v1931
      %v2006 = vpack.c.b16 %v1934, %v1933
      %v2007 = vpack.c.b16 %v1936, %v1935
      %v2008 = vpack.c.b16 %v1938, %v1937
      %v2009 = vpack.c.b16 %v1940, %v1939
      %v2010 = vpack.c.b16 %v1942, %v1941
      %v2011 = vpack.c.b16 %v1944, %v1943
      %v2012 = vpack.c.b16 %v1946, %v1945
      %v2013 = vpack.c.b16 %v1948, %v1947
      %v2014 = vpack.c.b16 %v1950, %v1949
      %v2015 = vpack.c.b16 %v1952, %v1951
      %v2016 = vpack.c.b16 %v1954, %v1953
      %v2017 = vpack.c.b16 %v1956, %v1955
      %v2018 = vpack.c.b16 %v1958, %v1957
      %v2019 = vpack.c.b16 %v1960, %v1959
      %v2020 = vpack.c.b16 %v1962, %v1961
      %v2021 = vpack.c.b16 %v1964, %v1963
      %v2022 = vpack.c.b16 %v1966, %v1965
      %v2023 = vpack.c.b16 %v1968, %v1967
      %v2024 = vpack.c.b16 %v1970, %v1969
      %v2025 = vpack.c.b16 %v1972, %v1971
      %v2026 = vpack.c.b16 %v1974, %v1973
      %v2027 = vpack.c.b16 %v1976, %v1975
      %v2028 = vpack.c.b16 %v1978, %v1977
      %2079 = vmatprep.subr.bf16.mxu0 0
      %2080 = vmatpush1.bf16.msra.mxu0 %v1986
      %2081 = vmatprep.subr.bf16.mxu0 0
      %2082 = vmatpush1.bf16.msra.mxu0 %v1985
      %2083 = vmatprep.subr.bf16.mxu0 0
      %2084 = vmatpush1.bf16.msra.mxu0 %v1984
      %2085 = vmatprep.subr.bf16.mxu0 0
      %2086 = vmatpush1.bf16.msra.mxu0 %v1983
      %2087 = vmatprep.subr.bf16.mxu0 0
      %2088 = vmatpush1.bf16.msra.mxu0 %v1982
      %2089 = vmatprep.subr.bf16.mxu0 0
      %2090 = vmatpush1.bf16.msra.mxu0 %v1981
      %2091 = vmatprep.subr.bf16.mxu0 0
      %2092 = vmatpush1.bf16.msra.mxu0 %v1980
      %2093 = vmatprep.subr.bf16.mxu0 0
      %2094 = vmatpush1.bf16.msra.mxu0 %v1979
      %2095 = vmatprep.subr.bf16.mxu0 0
      %2096 = vmatpush2.bf16.msra.mxu0 %v1994
      %2097 = vmatprep.subr.bf16.mxu0 0
      %2098 = vmatpush2.bf16.msra.mxu0 %v1993
      %2099 = vmatprep.subr.bf16.mxu0 0
      %2100 = vmatpush2.bf16.msra.mxu0 %v1992
      %2101 = vmatprep.subr.bf16.mxu0 0
      %2102 = vmatpush2.bf16.msra.mxu0 %v1991
      %2103 = vmatprep.subr.bf16.mxu0 0
      %2104 = vmatpush2.bf16.msra.mxu0 %v1990
      %2105 = vmatprep.subr.bf16.mxu0 0
      %2106 = vmatpush2.bf16.msra.mxu0 %v1989
      %2107 = vmatprep.subr.bf16.mxu0 0
      %2108 = vmatpush2.bf16.msra.mxu0 %v1988
      %2109 = vmatprep.subr.bf16.mxu0 0
      %2110 = vmatpush2.bf16.msra.mxu0 %v1987
      %2111 = vmatprep.mubr.bf16.mxu0 %v393
      %2112 = vmatmul.mubr.bf16.gmra.mxu0 %v392
      %v2113 = vpop.f32.mrf.mxu0
      %v2114 = vadd.f32 0.0, %v2113
      %v2115 = vpop.f32.mrf.mxu0
      %v2116 = vpop.f32.mrf.mxu0
      %v2117 = vadd.f32 0.0, %v2116
      %v2118 = vpop.f32.mrf.mxu0
      %2119 = vmatprep.mubr.bf16.mxu0 %v400
      %2120 = vmatmul.mubr.bf16.gmra.mxu0 %v399
      %v2121 = vpop.f32.mrf.mxu0
      %v2122 = vadd.f32 0.0, %v2121
      %v2123 = vpop.f32.mrf.mxu0
      %v2124 = vpop.f32.mrf.mxu0
      %v2125 = vadd.f32 0.0, %v2124
      %v2126 = vpop.f32.mrf.mxu0
      %2127 = vmatprep.mubr.bf16.mxu0 %v407
      %2128 = vmatmul.mubr.bf16.gmra.mxu0 %v406
      %v2129 = vpop.f32.mrf.mxu0
      %v2130 = vadd.f32 0.0, %v2129
      %v2131 = vpop.f32.mrf.mxu0
      %v2132 = vpop.f32.mrf.mxu0
      %v2133 = vadd.f32 0.0, %v2132
      %v2134 = vpop.f32.mrf.mxu0
      %2135 = vmatprep.mubr.bf16.mxu0 %v414
      %2136 = vmatmul.mubr.bf16.gmra.mxu0 %v413
      %v2137 = vpop.f32.mrf.mxu0
      %v2138 = vadd.f32 0.0, %v2137
      %v2139 = vpop.f32.mrf.mxu0
      %v2140 = vpop.f32.mrf.mxu0
      %v2141 = vadd.f32 0.0, %v2140
      %v2142 = vpop.f32.mrf.mxu0
      %2143 = vdwg.mxu0
      %2144 = vmatprep.subr.bf16.mxu0 0
      %2145 = vmatpush1.bf16.msra.mxu0 %v2002
      %2146 = vmatprep.subr.bf16.mxu0 0
      %2147 = vmatpush1.bf16.msra.mxu0 %v2001
      %2148 = vmatprep.subr.bf16.mxu0 0
      %2149 = vmatpush1.bf16.msra.mxu0 %v2000
      %2150 = vmatprep.subr.bf16.mxu0 0
      %2151 = vmatpush1.bf16.msra.mxu0 %v1999
      %2152 = vmatprep.subr.bf16.mxu0 0
      %2153 = vmatpush1.bf16.msra.mxu0 %v1998
      %2154 = vmatprep.subr.bf16.mxu0 0
      %2155 = vmatpush1.bf16.msra.mxu0 %v1997
      %2156 = vmatprep.subr.bf16.mxu0 0
      %2157 = vmatpush1.bf16.msra.mxu0 %v1996
      %2158 = vmatprep.subr.bf16.mxu0 0
      %2159 = vmatpush1.bf16.msra.mxu0 %v1995
      %2160 = vmatprep.subr.bf16.mxu0 0
      %2161 = vmatpush2.bf16.msra.mxu0 %v2010
      %2162 = vmatprep.subr.bf16.mxu0 0
      %2163 = vmatpush2.bf16.msra.mxu0 %v2009
      %2164 = vmatprep.subr.bf16.mxu0 0
      %2165 = vmatpush2.bf16.msra.mxu0 %v2008
      %2166 = vmatprep.subr.bf16.mxu0 0
      %2167 = vmatpush2.bf16.msra.mxu0 %v2007
      %2168 = vmatprep.subr.bf16.mxu0 0
      %2169 = vmatpush2.bf16.msra.mxu0 %v2006
      %2170 = vmatprep.subr.bf16.mxu0 0
      %2171 = vmatpush2.bf16.msra.mxu0 %v2005
      %2172 = vmatprep.subr.bf16.mxu0 0
      %2173 = vmatpush2.bf16.msra.mxu0 %v2004
      %2174 = vmatprep.subr.bf16.mxu0 0
      %2175 = vmatpush2.bf16.msra.mxu0 %v2003
      %2176 = vmatprep.mubr.bf16.mxu0 %v395
      %2177 = vmatmul.mubr.bf16.gmra.mxu0 %v394
      %v2178 = vpop.f32.mrf.mxu0
      %v2179 = vadd.f32 %v2114, %v2178
      %v2180 = vpop.f32.mrf.mxu0
      %v2181 = vpop.f32.mrf.mxu0
      %v2182 = vadd.f32 %v2117, %v2181
      %v2183 = vpop.f32.mrf.mxu0
      %2184 = vmatprep.mubr.bf16.mxu0 %v402
      %2185 = vmatmul.mubr.bf16.gmra.mxu0 %v401
      %v2186 = vpop.f32.mrf.mxu0
      %v2187 = vadd.f32 %v2122, %v2186
      %v2188 = vpop.f32.mrf.mxu0
      %v2189 = vpop.f32.mrf.mxu0
      %v2190 = vadd.f32 %v2125, %v2189
      %v2191 = vpop.f32.mrf.mxu0
      %2192 = vmatprep.mubr.bf16.mxu0 %v409
      %2193 = vmatmul.mubr.bf16.gmra.mxu0 %v408
      %v2194 = vpop.f32.mrf.mxu0
      %v2195 = vadd.f32 %v2130, %v2194
      %v2196 = vpop.f32.mrf.mxu0
      %v2197 = vpop.f32.mrf.mxu0
      %v2198 = vadd.f32 %v2133, %v2197
      %v2199 = vpop.f32.mrf.mxu0
      %2200 = vmatprep.mubr.bf16.mxu0 %v416
      %2201 = vmatmul.mubr.bf16.gmra.mxu0 %v415
      %v2202 = vpop.f32.mrf.mxu0
      %v2203 = vadd.f32 %v2138, %v2202
      %v2204 = vpop.f32.mrf.mxu0
      %v2205 = vpop.f32.mrf.mxu0
      %v2206 = vadd.f32 %v2141, %v2205
      %v2207 = vpop.f32.mrf.mxu0
      %2208 = vdwg.mxu0
      %2209 = vmatprep.subr.bf16.mxu0 0
      %2210 = vmatpush1.bf16.msra.mxu0 %v2018
      %2211 = vmatprep.subr.bf16.mxu0 0
      %2212 = vmatpush1.bf16.msra.mxu0 %v2017
      %2213 = vmatprep.subr.bf16.mxu0 0
      %2214 = vmatpush1.bf16.msra.mxu0 %v2016
      %2215 = vmatprep.subr.bf16.mxu0 0
      %2216 = vmatpush1.bf16.msra.mxu0 %v2015
      %2217 = vmatprep.subr.bf16.mxu0 0
      %2218 = vmatpush1.bf16.msra.mxu0 %v2014
      %2219 = vmatprep.subr.bf16.mxu0 0
      %2220 = vmatpush1.bf16.msra.mxu0 %v2013
      %2221 = vmatprep.subr.bf16.mxu0 0
      %2222 = vmatpush1.bf16.msra.mxu0 %v2012
      %2223 = vmatprep.subr.bf16.mxu0 0
      %2224 = vmatpush1.bf16.msra.mxu0 %v2011
      %2225 = vmatprep.subr.bf16.mxu0 0
      %2226 = vmatpush2.bf16.msra.mxu0 %v2026
      %2227 = vmatprep.subr.bf16.mxu0 0
      %2228 = vmatpush2.bf16.msra.mxu0 %v2025
      %2229 = vmatprep.subr.bf16.mxu0 0
      %2230 = vmatpush2.bf16.msra.mxu0 %v2024
      %2231 = vmatprep.subr.bf16.mxu0 0
      %2232 = vmatpush2.bf16.msra.mxu0 %v2023
      %2233 = vmatprep.subr.bf16.mxu0 0
      %2234 = vmatpush2.bf16.msra.mxu0 %v2022
      %2235 = vmatprep.subr.bf16.mxu0 0
      %2236 = vmatpush2.bf16.msra.mxu0 %v2021
      %2237 = vmatprep.subr.bf16.mxu0 0
      %2238 = vmatpush2.bf16.msra.mxu0 %v2020
      %2239 = vmatprep.subr.bf16.mxu0 0
      %2240 = vmatpush2.bf16.msra.mxu0 %v2019
      %2241 = vmatprep.mubr.bf16.mxu0 %v397
      %2242 = vmatmul.mubr.bf16.gmra.mxu0 %v396
      %v2243 = vpop.f32.mrf.mxu0
      %v2244 = vadd.f32 %v2179, %v2243
      %v2245 = vpop.f32.mrf.mxu0
      %v2246 = vpop.f32.mrf.mxu0
      %v2247 = vadd.f32 %v2182, %v2246
      %v2248 = vpop.f32.mrf.mxu0
      %2249 = vmatprep.mubr.bf16.mxu0 %v404
      %2250 = vmatmul.mubr.bf16.gmra.mxu0 %v403
      %v2251 = vpop.f32.mrf.mxu0
      %v2252 = vadd.f32 %v2187, %v2251
      %v2253 = vpop.f32.mrf.mxu0
      %v2254 = vpop.f32.mrf.mxu0
      %v2255 = vadd.f32 %v2190, %v2254
      %v2256 = vpop.f32.mrf.mxu0
      %2257 = vmatprep.mubr.bf16.mxu0 %v411
      %2258 = vmatmul.mubr.bf16.gmra.mxu0 %v410
      %v2259 = vpop.f32.mrf.mxu0
      %v2260 = vadd.f32 %v2195, %v2259
      %v2261 = vpop.f32.mrf.mxu0
      %v2262 = vpop.f32.mrf.mxu0
      %v2263 = vadd.f32 %v2198, %v2262
      %v2264 = vpop.f32.mrf.mxu0
      %2265 = vmatprep.mubr.bf16.mxu0 %v418
      %2266 = vmatmul.mubr.bf16.gmra.mxu0 %v417
      %v2267 = vpop.f32.mrf.mxu0
      %v2268 = vadd.f32 %v2203, %v2267
      %v2269 = vpop.f32.mrf.mxu0
      %v2270 = vpop.f32.mrf.mxu0
      %v2271 = vadd.f32 %v2206, %v2270
      %v2272 = vpop.f32.mrf.mxu0
      %2273 = vdwg.mxu0
      %2274 = vmatprep.subr.bf16.mxu0 0
      %2275 = vmatpush1.bf16.msra.mxu0 0
      %2276 = vmatprep.subr.bf16.mxu0 0
      %2277 = vmatpush1.bf16.msra.mxu0 0
      %2278 = vmatprep.subr.bf16.mxu0 0
      %2279 = vmatpush1.bf16.msra.mxu0 0
      %2280 = vmatprep.subr.bf16.mxu0 0
      %2281 = vmatpush1.bf16.msra.mxu0 0
      %2282 = vmatprep.subr.bf16.mxu0 0
      %2283 = vmatpush1.bf16.msra.mxu0 0
      %2284 = vmatprep.subr.bf16.mxu0 0
      %2285 = vmatpush1.bf16.msra.mxu0 0
      %2286 = vmatprep.subr.bf16.mxu0 0
      %2287 = vmatpush1.bf16.msra.mxu0 %v2028
      %2288 = vmatprep.subr.bf16.mxu0 0
      %2289 = vmatpush1.bf16.msra.mxu0 %v2027
      %2290 = vmatprep.subr.bf16.mxu0 0
      %2291 = vmatpush2.bf16.msra.mxu0 0
      %2292 = vmatprep.subr.bf16.mxu0 0
      %2293 = vmatpush2.bf16.msra.mxu0 0
      %2294 = vmatprep.subr.bf16.mxu0 0
      %2295 = vmatpush2.bf16.msra.mxu0 0
      %2296 = vmatprep.subr.bf16.mxu0 0
      %2297 = vmatpush2.bf16.msra.mxu0 0
      %2298 = vmatprep.subr.bf16.mxu0 0
      %2299 = vmatpush2.bf16.msra.mxu0 0
      %2300 = vmatprep.subr.bf16.mxu0 0
      %2301 = vmatpush2.bf16.msra.mxu0 0
      %2302 = vmatprep.subr.bf16.mxu0 0
      %2303 = vmatpush2.bf16.msra.mxu0 0
      %2304 = vmatprep.subr.bf16.mxu0 0
      %2305 = vmatpush2.bf16.msra.mxu0 0
      %2306 = vmatprep.mubr.bf16.mxu0 0
      %2307 = vmatmul.mubr.bf16.gmra.mxu0 %v746
      %v2308 = vpop.f32.mrf.mxu0
      %v2309 = vadd.f32 %v2244, %v2308
      %v2310 = vpop.f32.mrf.mxu0
      %v2311 = vpop.f32.mrf.mxu0
      %v2312 = vadd.f32 %v2247, %v2311
      %v2313 = vpop.f32.mrf.mxu0
      %2314 = vmatprep.mubr.bf16.mxu0 0
      %2315 = vmatmul.mubr.bf16.gmra.mxu0 %v749
      %v2316 = vpop.f32.mrf.mxu0
      %v2317 = vadd.f32 %v2252, %v2316
      %v2318 = vpop.f32.mrf.mxu0
      %v2319 = vpop.f32.mrf.mxu0
      %v2320 = vadd.f32 %v2255, %v2319
      %v2321 = vpop.f32.mrf.mxu0
      %2322 = vmatprep.mubr.bf16.mxu0 0
      %2323 = vmatmul.mubr.bf16.gmra.mxu0 %v752
      %v2324 = vpop.f32.mrf.mxu0
      %v2325 = vadd.f32 %v2260, %v2324
      %v2326 = vpop.f32.mrf.mxu0
      %v2327 = vpop.f32.mrf.mxu0
      %v2328 = vadd.f32 %v2263, %v2327
      %v2329 = vpop.f32.mrf.mxu0
      %2330 = vmatprep.mubr.bf16.mxu0 0
      %2331 = vmatmul.mubr.bf16.gmra.mxu0 %v755
      %v2332 = vpop.f32.mrf.mxu0
      %v2333 = vadd.f32 %v2268, %v2332
      %v2334 = vpop.f32.mrf.mxu0
      %v2335 = vpop.f32.mrf.mxu0
      %v2336 = vadd.f32 %v2271, %v2335
      %v2337 = vpop.f32.mrf.mxu0
      %2338 = vdwg.mxu0
      %s2339 = scalar_lea.vmem %s165, 1200
      %v2340 = vld [vmem:[%s2339] sm:$0xf]
      %v2341 = vld [vmem:[%s2339 + $0x4] sm:$0xf]
      %v2342 = vld [vmem:[%s2339 + $0x8] sm:$0xf]
      %v2343 = vld [vmem:[%s2339 + $0xc] sm:$0xf]
      %v2344 = vld [vmem:[%s2339 + $0x10] sm:$0xf]
      %v2345 = vld [vmem:[%s2339 + $0x14] sm:$0xf]
      %v2346 = vld [vmem:[%s2339 + $0x18] sm:$0xf]
      %v2347 = vld [vmem:[%s2339 + $0x1c] sm:$0xf]
      %v2348 = vld [vmem:[%s2339 + $0x20] sm:$0xf]
      %v2349 = vld [vmem:[%s2339 + $0x24] sm:$0xf]
      %v2350 = vld [vmem:[%s2339 + $0x28] sm:$0xf]
      %v2351 = vld [vmem:[%s2339 + $0x2c] sm:$0xf]
      %v2352 = vld [vmem:[%s2339 + $0x30] sm:$0xf]
      %v2353 = vld [vmem:[%s2339 + $0x34] sm:$0xf]
      %v2354 = vld [vmem:[%s2339 + $0x38] sm:$0xf]
      %v2355 = vld [vmem:[%s2339 + $0x3c] sm:$0xf]
      %v2356 = vld [vmem:[%s2339 + $0x40] sm:$0xf]
      %v2357 = vld [vmem:[%s2339 + $0x44] sm:$0xf]
      %v2358 = vld [vmem:[%s2339 + $0x48] sm:$0xf]
      %v2359 = vld [vmem:[%s2339 + $0x4c] sm:$0xf]
      %v2360 = vld [vmem:[%s2339 + $0x50] sm:$0xf]
      %v2361 = vld [vmem:[%s2339 + $0x54] sm:$0xf]
      %v2362 = vld [vmem:[%s2339 + $0x58] sm:$0xf]
      %v2363 = vld [vmem:[%s2339 + $0x5c] sm:$0xf]
      %v2364 = vld [vmem:[%s2339 + $0x60] sm:$0xf]
      %v2365 = vld [vmem:[%s2339 + $0x64] sm:$0xf]
      %v2366 = vld [vmem:[%s2339 + $0x68] sm:$0xf]
      %v2367 = vld [vmem:[%s2339 + $0x6c] sm:$0xf]
      %v2368 = vld [vmem:[%s2339 + $0x70] sm:$0xf]
      %v2369 = vld [vmem:[%s2339 + $0x74] sm:$0xf]
      %v2370 = vld [vmem:[%s2339 + $0x78] sm:$0xf]
      %v2371 = vld [vmem:[%s2339 + $0x7c] sm:$0xf]
      %v2372 = vld [vmem:[%s2339 + $0x80] sm:$0xf]
      %v2373 = vld [vmem:[%s2339 + $0x84] sm:$0xf]
      %v2374 = vld [vmem:[%s2339 + $0x88] sm:$0xf]
      %v2375 = vld [vmem:[%s2339 + $0x8c] sm:$0xf]
      %v2376 = vld [vmem:[%s2339 + $0x90] sm:$0xf]
      %v2377 = vld [vmem:[%s2339 + $0x94] sm:$0xf]
      %v2378 = vld [vmem:[%s2339 + $0x98] sm:$0xf]
      %v2379 = vld [vmem:[%s2339 + $0x9c] sm:$0xf]
      %v2380 = vld [vmem:[%s2339 + $0xa0] sm:$0xf]
      %v2381 = vld [vmem:[%s2339 + $0xa4] sm:$0xf]
      %v2382 = vld [vmem:[%s2339 + $0xa8] sm:$0xf]
      %v2383 = vld [vmem:[%s2339 + $0xac] sm:$0xf]
      %v2384 = vld [vmem:[%s2339 + $0xb0] sm:$0xf]
      %v2385 = vld [vmem:[%s2339 + $0xb4] sm:$0xf]
      %v2386 = vld [vmem:[%s2339 + $0xb8] sm:$0xf]
      %v2387 = vld [vmem:[%s2339 + $0xbc] sm:$0xf]
      %v2388 = vld [vmem:[%s2339 + $0xc0] sm:$0xf]
      %v2389 = vld [vmem:[%s2339 + $0xc4] sm:$0xf]
      %v2390 = vld [vmem:[%s2339 + $0xc8] sm:$0xf]
      %v2391 = vld [vmem:[%s2339 + $0xcc] sm:$0xf]
      %v2392 = vld [vmem:[%s2339 + $0xd0] sm:$0xf]
      %v2393 = vld [vmem:[%s2339 + $0xd4] sm:$0xf]
      %v2394 = vld [vmem:[%s2339 + $0xd8] sm:$0xf]
      %v2395 = vld [vmem:[%s2339 + $0xdc] sm:$0xf]
      %v2396 = vld [vmem:[%s2339 + $0xe0] sm:$0xf]
      %v2397 = vld [vmem:[%s2339 + $0xe4] sm:$0xf]
      %v2398 = vld [vmem:[%s2339 + $0xe8] sm:$0xf]
      %v2399 = vld [vmem:[%s2339 + $0xec] sm:$0xf]
      %v2400 = vld [vmem:[%s2339 + $0xf0] sm:$0xf]
      %v2401 = vld [vmem:[%s2339 + $0xf4] sm:$0xf]
      %v2402 = vld [vmem:[%s2339 + $0xf8] sm:$0xf]
      %v2403 = vld [vmem:[%s2339 + $0xfc] sm:$0xf]
      %v2404 = vld [vmem:[%s2339 + $0x100] sm:$0xf]
      %v2405 = vld [vmem:[%s2339 + $0x104] sm:$0xf]
      %v2406 = vld [vmem:[%s2339 + $0x108] sm:$0xf]
      %v2407 = vld [vmem:[%s2339 + $0x10c] sm:$0xf]
      %v2408 = vld [vmem:[%s2339 + $0x110] sm:$0xf]
      %v2409 = vld [vmem:[%s2339 + $0x114] sm:$0xf]
      %v2410 = vld [vmem:[%s2339 + $0x118] sm:$0xf]
      %v2411 = vld [vmem:[%s2339 + $0x11c] sm:$0xf]
      %v2412 = vld [vmem:[%s2339 + $0x120] sm:$0xf]
      %v2413 = vld [vmem:[%s2339 + $0x124] sm:$0xf]
      %v2414 = vld [vmem:[%s2339 + $0x128] sm:$0xf]
      %v2415 = vld [vmem:[%s2339 + $0x12c] sm:$0xf]
      %v2416 = vld [vmem:[%s2339 + $0x130] sm:$0xf]
      %v2417 = vld [vmem:[%s2339 + $0x134] sm:$0xf]
      %v2418 = vld [vmem:[%s2339 + $0x138] sm:$0xf]
      %v2419 = vld [vmem:[%s2339 + $0x13c] sm:$0xf]
      %v2420 = vld [vmem:[%s2339 + $0x140] sm:$0xf]
      %v2421 = vld [vmem:[%s2339 + $0x144] sm:$0xf]
      %v2422 = vld [vmem:[%s2339 + $0x148] sm:$0xf]
      %v2423 = vld [vmem:[%s2339 + $0x14c] sm:$0xf]
      %v2424 = vld [vmem:[%s2339 + $0x150] sm:$0xf]
      %v2425 = vld [vmem:[%s2339 + $0x154] sm:$0xf]
      %v2426 = vld [vmem:[%s2339 + $0x158] sm:$0xf]
      %v2427 = vld [vmem:[%s2339 + $0x15c] sm:$0xf]
      %v2428 = vld [vmem:[%s2339 + $0x160] sm:$0xf]
      %v2429 = vld [vmem:[%s2339 + $0x164] sm:$0xf]
      %v2430 = vld [vmem:[%s2339 + $0x168] sm:$0xf]
      %v2431 = vld [vmem:[%s2339 + $0x16c] sm:$0xf]
      %v2432 = vld [vmem:[%s2339 + $0x170] sm:$0xf]
      %v2433 = vld [vmem:[%s2339 + $0x174] sm:$0xf]
      %v2434 = vld [vmem:[%s2339 + $0x178] sm:$0xf]
      %v2435 = vld [vmem:[%s2339 + $0x17c] sm:$0xf]
      %v2436 = vld [vmem:[%s2339 + $0x180] sm:$0xf]
      %v2437 = vld [vmem:[%s2339 + $0x184] sm:$0xf]
      %v2438 = vld [vmem:[%s2339 + $0x188] sm:$0xf]
      %v2439 = vld [vmem:[%s2339 + $0x18c] sm:$0xf]
      %v2540 = vunpack.c.l.b16 %v2340
      %v2541 = vunpack.c.l.b16 %v2341
      %v2542 = vunpack.c.l.b16 %v2342
      %v2543 = vunpack.c.l.b16 %v2343
      %v2544 = vunpack.c.l.b16 %v2344
      %v2545 = vunpack.c.l.b16 %v2345
      %v2546 = vunpack.c.l.b16 %v2346
      %v2547 = vunpack.c.l.b16 %v2347
      %v2548 = vunpack.c.l.b16 %v2348
      %v2549 = vunpack.c.l.b16 %v2349
      %v2550 = vunpack.c.l.b16 %v2350
      %v2551 = vunpack.c.l.b16 %v2351
      %v2552 = vunpack.c.l.b16 %v2352
      %v2553 = vunpack.c.l.b16 %v2353
      %v2554 = vunpack.c.l.b16 %v2354
      %v2555 = vunpack.c.l.b16 %v2355
      %v2556 = vunpack.c.l.b16 %v2356
      %v2557 = vunpack.c.l.b16 %v2357
      %v2558 = vunpack.c.l.b16 %v2358
      %v2559 = vunpack.c.l.b16 %v2359
      %v2560 = vunpack.c.l.b16 %v2360
      %v2561 = vunpack.c.l.b16 %v2361
      %v2562 = vunpack.c.l.b16 %v2362
      %v2563 = vunpack.c.l.b16 %v2363
      %v2564 = vunpack.c.l.b16 %v2364
      %v2565 = vunpack.c.l.b16 %v2365
      %v2566 = vunpack.c.l.b16 %v2366
      %v2567 = vunpack.c.l.b16 %v2367
      %v2568 = vunpack.c.l.b16 %v2368
      %v2569 = vunpack.c.l.b16 %v2369
      %v2570 = vunpack.c.l.b16 %v2370
      %v2571 = vunpack.c.l.b16 %v2371
      %v2572 = vunpack.c.l.b16 %v2372
      %v2573 = vunpack.c.l.b16 %v2373
      %v2574 = vunpack.c.l.b16 %v2374
      %v2575 = vunpack.c.l.b16 %v2375
      %v2576 = vunpack.c.l.b16 %v2376
      %v2577 = vunpack.c.l.b16 %v2377
      %v2578 = vunpack.c.l.b16 %v2378
      %v2579 = vunpack.c.l.b16 %v2379
      %v2580 = vunpack.c.l.b16 %v2380
      %v2581 = vunpack.c.l.b16 %v2381
      %v2582 = vunpack.c.l.b16 %v2382
      %v2583 = vunpack.c.l.b16 %v2383
      %v2584 = vunpack.c.l.b16 %v2384
      %v2585 = vunpack.c.l.b16 %v2385
      %v2586 = vunpack.c.l.b16 %v2386
      %v2587 = vunpack.c.l.b16 %v2387
      %v2588 = vunpack.c.l.b16 %v2388
      %v2589 = vunpack.c.l.b16 %v2389
      %v2590 = vunpack.c.l.b16 %v2390
      %v2591 = vunpack.c.l.b16 %v2391
      %v2592 = vunpack.c.l.b16 %v2392
      %v2593 = vunpack.c.l.b16 %v2393
      %v2594 = vunpack.c.l.b16 %v2394
      %v2595 = vunpack.c.l.b16 %v2395
      %v2596 = vunpack.c.l.b16 %v2396
      %v2597 = vunpack.c.l.b16 %v2397
      %v2598 = vunpack.c.l.b16 %v2398
      %v2599 = vunpack.c.l.b16 %v2399
      %v2600 = vunpack.c.l.b16 %v2400
      %v2601 = vunpack.c.l.b16 %v2401
      %v2602 = vunpack.c.l.b16 %v2402
      %v2603 = vunpack.c.l.b16 %v2403
      %v2604 = vunpack.c.l.b16 %v2404
      %v2605 = vunpack.c.l.b16 %v2405
      %v2606 = vunpack.c.l.b16 %v2406
      %v2607 = vunpack.c.l.b16 %v2407
      %v2608 = vunpack.c.l.b16 %v2408
      %v2609 = vunpack.c.l.b16 %v2409
      %v2610 = vunpack.c.l.b16 %v2410
      %v2611 = vunpack.c.l.b16 %v2411
      %v2612 = vunpack.c.l.b16 %v2412
      %v2613 = vunpack.c.l.b16 %v2413
      %v2614 = vunpack.c.l.b16 %v2414
      %v2615 = vunpack.c.l.b16 %v2415
      %v2616 = vunpack.c.l.b16 %v2416
      %v2617 = vunpack.c.l.b16 %v2417
      %v2618 = vunpack.c.l.b16 %v2418
      %v2619 = vunpack.c.l.b16 %v2419
      %v2620 = vunpack.c.l.b16 %v2420
      %v2621 = vunpack.c.l.b16 %v2421
      %v2622 = vunpack.c.l.b16 %v2422
      %v2623 = vunpack.c.l.b16 %v2423
      %v2624 = vunpack.c.l.b16 %v2424
      %v2625 = vunpack.c.l.b16 %v2425
      %v2626 = vunpack.c.l.b16 %v2426
      %v2627 = vunpack.c.l.b16 %v2427
      %v2628 = vunpack.c.l.b16 %v2428
      %v2629 = vunpack.c.l.b16 %v2429
      %v2630 = vunpack.c.l.b16 %v2430
      %v2631 = vunpack.c.l.b16 %v2431
      %v2632 = vunpack.c.l.b16 %v2432
      %v2633 = vunpack.c.l.b16 %v2433
      %v2634 = vunpack.c.l.b16 %v2434
      %v2635 = vunpack.c.l.b16 %v2435
      %v2636 = vunpack.c.l.b16 %v2436
      %v2637 = vunpack.c.l.b16 %v2437
      %v2638 = vunpack.c.l.b16 %v2438
      %v2639 = vunpack.c.l.b16 %v2439
      %v2640 = vpack.c.b16 %v2541, %v2540
      %v2641 = vpack.c.b16 %v2543, %v2542
      %v2642 = vpack.c.b16 %v2545, %v2544
      %v2643 = vpack.c.b16 %v2547, %v2546
      %v2644 = vpack.c.b16 %v2549, %v2548
      %v2645 = vpack.c.b16 %v2551, %v2550
      %v2646 = vpack.c.b16 %v2553, %v2552
      %v2647 = vpack.c.b16 %v2555, %v2554
      %v2648 = vpack.c.b16 %v2557, %v2556
      %v2649 = vpack.c.b16 %v2559, %v2558
      %v2650 = vpack.c.b16 %v2561, %v2560
      %v2651 = vpack.c.b16 %v2563, %v2562
      %v2652 = vpack.c.b16 %v2565, %v2564
      %v2653 = vpack.c.b16 %v2567, %v2566
      %v2654 = vpack.c.b16 %v2569, %v2568
      %v2655 = vpack.c.b16 %v2571, %v2570
      %v2656 = vpack.c.b16 %v2573, %v2572
      %v2657 = vpack.c.b16 %v2575, %v2574
      %v2658 = vpack.c.b16 %v2577, %v2576
      %v2659 = vpack.c.b16 %v2579, %v2578
      %v2660 = vpack.c.b16 %v2581, %v2580
      %v2661 = vpack.c.b16 %v2583, %v2582
      %v2662 = vpack.c.b16 %v2585, %v2584
      %v2663 = vpack.c.b16 %v2587, %v2586
      %v2664 = vpack.c.b16 %v2589, %v2588
      %v2665 = vpack.c.b16 %v2591, %v2590
      %v2666 = vpack.c.b16 %v2593, %v2592
      %v2667 = vpack.c.b16 %v2595, %v2594
      %v2668 = vpack.c.b16 %v2597, %v2596
      %v2669 = vpack.c.b16 %v2599, %v2598
      %v2670 = vpack.c.b16 %v2601, %v2600
      %v2671 = vpack.c.b16 %v2603, %v2602
      %v2672 = vpack.c.b16 %v2605, %v2604
      %v2673 = vpack.c.b16 %v2607, %v2606
      %v2674 = vpack.c.b16 %v2609, %v2608
      %v2675 = vpack.c.b16 %v2611, %v2610
      %v2676 = vpack.c.b16 %v2613, %v2612
      %v2677 = vpack.c.b16 %v2615, %v2614
      %v2678 = vpack.c.b16 %v2617, %v2616
      %v2679 = vpack.c.b16 %v2619, %v2618
      %v2680 = vpack.c.b16 %v2621, %v2620
      %v2681 = vpack.c.b16 %v2623, %v2622
      %v2682 = vpack.c.b16 %v2625, %v2624
      %v2683 = vpack.c.b16 %v2627, %v2626
      %v2684 = vpack.c.b16 %v2629, %v2628
      %v2685 = vpack.c.b16 %v2631, %v2630
      %v2686 = vpack.c.b16 %v2633, %v2632
      %v2687 = vpack.c.b16 %v2635, %v2634
      %v2688 = vpack.c.b16 %v2637, %v2636
      %v2689 = vpack.c.b16 %v2639, %v2638
      %2740 = vmatprep.subr.bf16.mxu0 0
      %2741 = vmatpush1.bf16.msra.mxu0 %v2647
      %2742 = vmatprep.subr.bf16.mxu0 0
      %2743 = vmatpush1.bf16.msra.mxu0 %v2646
      %2744 = vmatprep.subr.bf16.mxu0 0
      %2745 = vmatpush1.bf16.msra.mxu0 %v2645
      %2746 = vmatprep.subr.bf16.mxu0 0
      %2747 = vmatpush1.bf16.msra.mxu0 %v2644
      %2748 = vmatprep.subr.bf16.mxu0 0
      %2749 = vmatpush1.bf16.msra.mxu0 %v2643
      %2750 = vmatprep.subr.bf16.mxu0 0
      %2751 = vmatpush1.bf16.msra.mxu0 %v2642
      %2752 = vmatprep.subr.bf16.mxu0 0
      %2753 = vmatpush1.bf16.msra.mxu0 %v2641
      %2754 = vmatprep.subr.bf16.mxu0 0
      %2755 = vmatpush1.bf16.msra.mxu0 %v2640
      %2756 = vmatprep.subr.bf16.mxu0 0
      %2757 = vmatpush2.bf16.msra.mxu0 %v2655
      %2758 = vmatprep.subr.bf16.mxu0 0
      %2759 = vmatpush2.bf16.msra.mxu0 %v2654
      %2760 = vmatprep.subr.bf16.mxu0 0
      %2761 = vmatpush2.bf16.msra.mxu0 %v2653
      %2762 = vmatprep.subr.bf16.mxu0 0
      %2763 = vmatpush2.bf16.msra.mxu0 %v2652
      %2764 = vmatprep.subr.bf16.mxu0 0
      %2765 = vmatpush2.bf16.msra.mxu0 %v2651
      %2766 = vmatprep.subr.bf16.mxu0 0
      %2767 = vmatpush2.bf16.msra.mxu0 %v2650
      %2768 = vmatprep.subr.bf16.mxu0 0
      %2769 = vmatpush2.bf16.msra.mxu0 %v2649
      %2770 = vmatprep.subr.bf16.mxu0 0
      %2771 = vmatpush2.bf16.msra.mxu0 %v2648
      %2772 = vmatprep.mubr.bf16.mxu0 %v393
      %2773 = vmatmul.mubr.bf16.gmra.mxu0 %v392
      %v2774 = vpop.f32.mrf.mxu0
      %v2775 = vadd.f32 0.0, %v2774
      %v2776 = vpop.f32.mrf.mxu0
      %v2777 = vpop.f32.mrf.mxu0
      %v2778 = vadd.f32 0.0, %v2777
      %v2779 = vpop.f32.mrf.mxu0
      %2780 = vmatprep.mubr.bf16.mxu0 %v400
      %2781 = vmatmul.mubr.bf16.gmra.mxu0 %v399
      %v2782 = vpop.f32.mrf.mxu0
      %v2783 = vadd.f32 0.0, %v2782
      %v2784 = vpop.f32.mrf.mxu0
      %v2785 = vpop.f32.mrf.mxu0
      %v2786 = vadd.f32 0.0, %v2785
      %v2787 = vpop.f32.mrf.mxu0
      %2788 = vmatprep.mubr.bf16.mxu0 %v407
      %2789 = vmatmul.mubr.bf16.gmra.mxu0 %v406
      %v2790 = vpop.f32.mrf.mxu0
      %v2791 = vadd.f32 0.0, %v2790
      %v2792 = vpop.f32.mrf.mxu0
      %v2793 = vpop.f32.mrf.mxu0
      %v2794 = vadd.f32 0.0, %v2793
      %v2795 = vpop.f32.mrf.mxu0
      %2796 = vmatprep.mubr.bf16.mxu0 %v414
      %2797 = vmatmul.mubr.bf16.gmra.mxu0 %v413
      %v2798 = vpop.f32.mrf.mxu0
      %v2799 = vadd.f32 0.0, %v2798
      %v2800 = vpop.f32.mrf.mxu0
      %v2801 = vpop.f32.mrf.mxu0
      %v2802 = vadd.f32 0.0, %v2801
      %v2803 = vpop.f32.mrf.mxu0
      %2804 = vdwg.mxu0
      %2805 = vmatprep.subr.bf16.mxu0 0
      %2806 = vmatpush1.bf16.msra.mxu0 %v2663
      %2807 = vmatprep.subr.bf16.mxu0 0
      %2808 = vmatpush1.bf16.msra.mxu0 %v2662
      %2809 = vmatprep.subr.bf16.mxu0 0
      %2810 = vmatpush1.bf16.msra.mxu0 %v2661
      %2811 = vmatprep.subr.bf16.mxu0 0
      %2812 = vmatpush1.bf16.msra.mxu0 %v2660
      %2813 = vmatprep.subr.bf16.mxu0 0
      %2814 = vmatpush1.bf16.msra.mxu0 %v2659
      %2815 = vmatprep.subr.bf16.mxu0 0
      %2816 = vmatpush1.bf16.msra.mxu0 %v2658
      %2817 = vmatprep.subr.bf16.mxu0 0
      %2818 = vmatpush1.bf16.msra.mxu0 %v2657
      %2819 = vmatprep.subr.bf16.mxu0 0
      %2820 = vmatpush1.bf16.msra.mxu0 %v2656
      %2821 = vmatprep.subr.bf16.mxu0 0
      %2822 = vmatpush2.bf16.msra.mxu0 %v2671
      %2823 = vmatprep.subr.bf16.mxu0 0
      %2824 = vmatpush2.bf16.msra.mxu0 %v2670
      %2825 = vmatprep.subr.bf16.mxu0 0
      %2826 = vmatpush2.bf16.msra.mxu0 %v2669
      %2827 = vmatprep.subr.bf16.mxu0 0
      %2828 = vmatpush2.bf16.msra.mxu0 %v2668
      %2829 = vmatprep.subr.bf16.mxu0 0
      %2830 = vmatpush2.bf16.msra.mxu0 %v2667
      %2831 = vmatprep.subr.bf16.mxu0 0
      %2832 = vmatpush2.bf16.msra.mxu0 %v2666
      %2833 = vmatprep.subr.bf16.mxu0 0
      %2834 = vmatpush2.bf16.msra.mxu0 %v2665
      %2835 = vmatprep.subr.bf16.mxu0 0
      %2836 = vmatpush2.bf16.msra.mxu0 %v2664
      %2837 = vmatprep.mubr.bf16.mxu0 %v395
      %2838 = vmatmul.mubr.bf16.gmra.mxu0 %v394
      %v2839 = vpop.f32.mrf.mxu0
      %v2840 = vadd.f32 %v2775, %v2839
      %v2841 = vpop.f32.mrf.mxu0
      %v2842 = vpop.f32.mrf.mxu0
      %v2843 = vadd.f32 %v2778, %v2842
      %v2844 = vpop.f32.mrf.mxu0
      %2845 = vmatprep.mubr.bf16.mxu0 %v402
      %2846 = vmatmul.mubr.bf16.gmra.mxu0 %v401
      %v2847 = vpop.f32.mrf.mxu0
      %v2848 = vadd.f32 %v2783, %v2847
      %v2849 = vpop.f32.mrf.mxu0
      %v2850 = vpop.f32.mrf.mxu0
      %v2851 = vadd.f32 %v2786, %v2850
      %v2852 = vpop.f32.mrf.mxu0
      %2853 = vmatprep.mubr.bf16.mxu0 %v409
      %2854 = vmatmul.mubr.bf16.gmra.mxu0 %v408
      %v2855 = vpop.f32.mrf.mxu0
      %v2856 = vadd.f32 %v2791, %v2855
      %v2857 = vpop.f32.mrf.mxu0
      %v2858 = vpop.f32.mrf.mxu0
      %v2859 = vadd.f32 %v2794, %v2858
      %v2860 = vpop.f32.mrf.mxu0
      %2861 = vmatprep.mubr.bf16.mxu0 %v416
      %2862 = vmatmul.mubr.bf16.gmra.mxu0 %v415
      %v2863 = vpop.f32.mrf.mxu0
      %v2864 = vadd.f32 %v2799, %v2863
      %v2865 = vpop.f32.mrf.mxu0
      %v2866 = vpop.f32.mrf.mxu0
      %v2867 = vadd.f32 %v2802, %v2866
      %v2868 = vpop.f32.mrf.mxu0
      %2869 = vdwg.mxu0
      %2870 = vmatprep.subr.bf16.mxu0 0
      %2871 = vmatpush1.bf16.msra.mxu0 %v2679
      %2872 = vmatprep.subr.bf16.mxu0 0
      %2873 = vmatpush1.bf16.msra.mxu0 %v2678
      %2874 = vmatprep.subr.bf16.mxu0 0
      %2875 = vmatpush1.bf16.msra.mxu0 %v2677
      %2876 = vmatprep.subr.bf16.mxu0 0
      %2877 = vmatpush1.bf16.msra.mxu0 %v2676
      %2878 = vmatprep.subr.bf16.mxu0 0
      %2879 = vmatpush1.bf16.msra.mxu0 %v2675
      %2880 = vmatprep.subr.bf16.mxu0 0
      %2881 = vmatpush1.bf16.msra.mxu0 %v2674
      %2882 = vmatprep.subr.bf16.mxu0 0
      %2883 = vmatpush1.bf16.msra.mxu0 %v2673
      %2884 = vmatprep.subr.bf16.mxu0 0
      %2885 = vmatpush1.bf16.msra.mxu0 %v2672
      %2886 = vmatprep.subr.bf16.mxu0 0
      %2887 = vmatpush2.bf16.msra.mxu0 %v2687
      %2888 = vmatprep.subr.bf16.mxu0 0
      %2889 = vmatpush2.bf16.msra.mxu0 %v2686
      %2890 = vmatprep.subr.bf16.mxu0 0
      %2891 = vmatpush2.bf16.msra.mxu0 %v2685
      %2892 = vmatprep.subr.bf16.mxu0 0
      %2893 = vmatpush2.bf16.msra.mxu0 %v2684
      %2894 = vmatprep.subr.bf16.mxu0 0
      %2895 = vmatpush2.bf16.msra.mxu0 %v2683
      %2896 = vmatprep.subr.bf16.mxu0 0
      %2897 = vmatpush2.bf16.msra.mxu0 %v2682
      %2898 = vmatprep.subr.bf16.mxu0 0
      %2899 = vmatpush2.bf16.msra.mxu0 %v2681
      %2900 = vmatprep.subr.bf16.mxu0 0
      %2901 = vmatpush2.bf16.msra.mxu0 %v2680
      %2902 = vmatprep.mubr.bf16.mxu0 %v397
      %2903 = vmatmul.mubr.bf16.gmra.mxu0 %v396
      %v2904 = vpop.f32.mrf.mxu0
      %v2905 = vadd.f32 %v2840, %v2904
      %v2906 = vpop.f32.mrf.mxu0
      %v2907 = vpop.f32.mrf.mxu0
      %v2908 = vadd.f32 %v2843, %v2907
      %v2909 = vpop.f32.mrf.mxu0
      %2910 = vmatprep.mubr.bf16.mxu0 %v404
      %2911 = vmatmul.mubr.bf16.gmra.mxu0 %v403
      %v2912 = vpop.f32.mrf.mxu0
      %v2913 = vadd.f32 %v2848, %v2912
      %v2914 = vpop.f32.mrf.mxu0
      %v2915 = vpop.f32.mrf.mxu0
      %v2916 = vadd.f32 %v2851, %v2915
      %v2917 = vpop.f32.mrf.mxu0
      %2918 = vmatprep.mubr.bf16.mxu0 %v411
      %2919 = vmatmul.mubr.bf16.gmra.mxu0 %v410
      %v2920 = vpop.f32.mrf.mxu0
      %v2921 = vadd.f32 %v2856, %v2920
      %v2922 = vpop.f32.mrf.mxu0
      %v2923 = vpop.f32.mrf.mxu0
      %v2924 = vadd.f32 %v2859, %v2923
      %v2925 = vpop.f32.mrf.mxu0
      %2926 = vmatprep.mubr.bf16.mxu0 %v418
      %2927 = vmatmul.mubr.bf16.gmra.mxu0 %v417
      %v2928 = vpop.f32.mrf.mxu0
      %v2929 = vadd.f32 %v2864, %v2928
      %v2930 = vpop.f32.mrf.mxu0
      %v2931 = vpop.f32.mrf.mxu0
      %v2932 = vadd.f32 %v2867, %v2931
      %v2933 = vpop.f32.mrf.mxu0
      %2934 = vdwg.mxu0
      %2935 = vmatprep.subr.bf16.mxu0 0
      %2936 = vmatpush1.bf16.msra.mxu0 0
      %2937 = vmatprep.subr.bf16.mxu0 0
      %2938 = vmatpush1.bf16.msra.mxu0 0
      %2939 = vmatprep.subr.bf16.mxu0 0
      %2940 = vmatpush1.bf16.msra.mxu0 0
      %2941 = vmatprep.subr.bf16.mxu0 0
      %2942 = vmatpush1.bf16.msra.mxu0 0
      %2943 = vmatprep.subr.bf16.mxu0 0
      %2944 = vmatpush1.bf16.msra.mxu0 0
      %2945 = vmatprep.subr.bf16.mxu0 0
      %2946 = vmatpush1.bf16.msra.mxu0 0
      %2947 = vmatprep.subr.bf16.mxu0 0
      %2948 = vmatpush1.bf16.msra.mxu0 %v2689
      %2949 = vmatprep.subr.bf16.mxu0 0
      %2950 = vmatpush1.bf16.msra.mxu0 %v2688
      %2951 = vmatprep.subr.bf16.mxu0 0
      %2952 = vmatpush2.bf16.msra.mxu0 0
      %2953 = vmatprep.subr.bf16.mxu0 0
      %2954 = vmatpush2.bf16.msra.mxu0 0
      %2955 = vmatprep.subr.bf16.mxu0 0
      %2956 = vmatpush2.bf16.msra.mxu0 0
      %2957 = vmatprep.subr.bf16.mxu0 0
      %2958 = vmatpush2.bf16.msra.mxu0 0
      %2959 = vmatprep.subr.bf16.mxu0 0
      %2960 = vmatpush2.bf16.msra.mxu0 0
      %2961 = vmatprep.subr.bf16.mxu0 0
      %2962 = vmatpush2.bf16.msra.mxu0 0
      %2963 = vmatprep.subr.bf16.mxu0 0
      %2964 = vmatpush2.bf16.msra.mxu0 0
      %2965 = vmatprep.subr.bf16.mxu0 0
      %2966 = vmatpush2.bf16.msra.mxu0 0
      %2967 = vmatprep.mubr.bf16.mxu0 0
      %2968 = vmatmul.mubr.bf16.gmra.mxu0 %v746
      %v2969 = vpop.f32.mrf.mxu0
      %v2970 = vadd.f32 %v2905, %v2969
      %v2971 = vpop.f32.mrf.mxu0
      %v2972 = vpop.f32.mrf.mxu0
      %v2973 = vadd.f32 %v2908, %v2972
      %v2974 = vpop.f32.mrf.mxu0
      %2975 = vmatprep.mubr.bf16.mxu0 0
      %2976 = vmatmul.mubr.bf16.gmra.mxu0 %v749
      %v2977 = vpop.f32.mrf.mxu0
      %v2978 = vadd.f32 %v2913, %v2977
      %v2979 = vpop.f32.mrf.mxu0
      %v2980 = vpop.f32.mrf.mxu0
      %v2981 = vadd.f32 %v2916, %v2980
      %v2982 = vpop.f32.mrf.mxu0
      %2983 = vmatprep.mubr.bf16.mxu0 0
      %2984 = vmatmul.mubr.bf16.gmra.mxu0 %v752
      %v2985 = vpop.f32.mrf.mxu0
      %v2986 = vadd.f32 %v2921, %v2985
      %v2987 = vpop.f32.mrf.mxu0
      %v2988 = vpop.f32.mrf.mxu0
      %v2989 = vadd.f32 %v2924, %v2988
      %v2990 = vpop.f32.mrf.mxu0
      %2991 = vmatprep.mubr.bf16.mxu0 0
      %2992 = vmatmul.mubr.bf16.gmra.mxu0 %v755
      %v2993 = vpop.f32.mrf.mxu0
      %v2994 = vadd.f32 %v2929, %v2993
      %v2995 = vpop.f32.mrf.mxu0
      %v2996 = vpop.f32.mrf.mxu0
      %v2997 = vadd.f32 %v2932, %v2996
      %v2998 = vpop.f32.mrf.mxu0
      %2999 = vdwg.mxu0
      %v3000 = vmax.f32 %v987, %v1648
      %v3001 = vmax.f32 %v990, %v1651
      %v3002 = vmax.f32 %v995, %v1656
      %v3003 = vmax.f32 %v998, %v1659
      %v3004 = vmax.f32 %v1003, %v1664
      %v3005 = vmax.f32 %v1006, %v1667
      %v3006 = vmax.f32 %v1011, %v1672
      %v3007 = vmax.f32 %v1014, %v1675
      %v3008 = vmax.f32 %v2309, %v2970
      %v3009 = vmax.f32 %v2312, %v2973
      %v3010 = vmax.f32 %v2317, %v2978
      %v3011 = vmax.f32 %v2320, %v2981
      %v3012 = vmax.f32 %v2325, %v2986
      %v3013 = vmax.f32 %v2328, %v2989
      %v3014 = vmax.f32 %v2333, %v2994
      %v3015 = vmax.f32 %v2336, %v2997
      %v3016 = vmax.f32 %v3000, %v3008
      %v3017 = vmax.f32 %v3001, %v3009
      %v3018 = vmax.f32 %v3002, %v3010
      %v3019 = vmax.f32 %v3003, %v3011
      %v3020 = vmax.f32 %v3004, %v3012
      %v3021 = vmax.f32 %v3005, %v3013
      %v3022 = vmax.f32 %v3006, %v3014
      %v3023 = vmax.f32 %v3007, %v3015
      %v3024 = vld [vmem:[%s2] sm:$0xff]
      %v3025 = vld [vmem:[%s2 + $0x8] sm:$0xff]
      %v3026 = vld [vmem:[%s2 + $0x10] sm:$0xff]
      %v3027 = vld [vmem:[%s2 + $0x18] sm:$0xff]
      %v3028 = vld [vmem:[%s2 + $0x20] sm:$0xff]
      %v3029 = vld [vmem:[%s2 + $0x28] sm:$0xff]
      %v3030 = vld [vmem:[%s2 + $0x30] sm:$0xff]
      %v3031 = vld [vmem:[%s2 + $0x38] sm:$0xff]
      %3033 = vset.pattern.permute.xlu0 0
      %3034 = vperm.xlu0 %3033, %v3024
      %v3035 = vpop.permute.xlu0 %3034
      %3038 = vset.pattern.permute.xlu0 0
      %3039 = vperm.xlu0 %3038, %v3025
      %v3040 = vpop.permute.xlu0 %3039
      %3043 = vset.pattern.permute.xlu0 0
      %3044 = vperm.xlu0 %3043, %v3026
      %v3045 = vpop.permute.xlu0 %3044
      %3048 = vset.pattern.permute.xlu0 0
      %3049 = vperm.xlu0 %3048, %v3027
      %v3050 = vpop.permute.xlu0 %3049
      %3053 = vset.pattern.permute.xlu0 0
      %3054 = vperm.xlu0 %3053, %v3028
      %v3055 = vpop.permute.xlu0 %3054
      %3058 = vset.pattern.permute.xlu0 0
      %3059 = vperm.xlu0 %3058, %v3029
      %v3060 = vpop.permute.xlu0 %3059
      %3063 = vset.pattern.permute.xlu0 0
      %3064 = vperm.xlu0 %3063, %v3030
      %v3065 = vpop.permute.xlu0 %3064
      %3068 = vset.pattern.permute.xlu0 0
      %3069 = vperm.xlu0 %3068, %v3031
      %v3070 = vpop.permute.xlu0 %3069
      %v3072 = vadd.f32 %v3016, %v3035
      %v3073 = vadd.f32 %v3017, %v3040
      %v3074 = vadd.f32 %v3018, %v3045
      %v3075 = vadd.f32 %v3019, %v3050
      %v3076 = vadd.f32 %v3020, %v3055
      %v3077 = vadd.f32 %v3021, %v3060
      %v3078 = vadd.f32 %v3022, %v3065
      %v3079 = vadd.f32 %v3023, %v3070
      %v3080 = vpack.c.bf16 %v3073, %v3072
      %v3081 = vpack.c.bf16 %v3075, %v3074
      %v3082 = vpack.c.bf16 %v3077, %v3076
      %v3083 = vpack.c.bf16 %v3079, %v3078
      %v3088 = vunpack.c.l.b16 %v3080
      %v3089 = vunpack.c.h.b16 %v3080
      %v3090 = vunpack.c.l.b16 %v3081
      %v3091 = vunpack.c.h.b16 %v3081
      %v3092 = vunpack.c.l.b16 %v3082
      %v3093 = vunpack.c.h.b16 %v3082
      %v3094 = vunpack.c.l.b16 %v3083
      %v3095 = vunpack.c.h.b16 %v3083
      %v3096 = vpack.c.b16 %v3088, %v3088
      %v3097 = vpack.c.b16 %v3089, %v3089
      %v3098 = vpack.c.b16 %v3090, %v3090
      %v3099 = vpack.c.b16 %v3091, %v3091
      %v3100 = vpack.c.b16 %v3092, %v3092
      %v3101 = vpack.c.b16 %v3093, %v3093
      %v3102 = vpack.c.b16 %v3094, %v3094
      %v3103 = vpack.c.b16 %v3095, %v3095
      %vm3112 = vcmask 125952
      %3113 = vst.msk [vmem:[%s170] sm:$0xf] %vm3112, %v3096
      %3114 = vst.msk [vmem:[%s170 + $0x4] sm:$0xf] %vm3112, %v3097
      %3115 = vst.msk [vmem:[%s170 + $0x8] sm:$0xf] %vm3112, %v3098
      %3116 = vst.msk [vmem:[%s170 + $0xc] sm:$0xf] %vm3112, %v3099
      %3117 = vst.msk [vmem:[%s170 + $0x10] sm:$0xf] %vm3112, %v3100
      %3118 = vst.msk [vmem:[%s170 + $0x14] sm:$0xf] %vm3112, %v3101
      %3119 = vst.msk [vmem:[%s170 + $0x18] sm:$0xf] %vm3112, %v3102
      %3120 = vst.msk [vmem:[%s170 + $0x1c] sm:$0xf] %vm3112, %v3103
      %p3121 = scmp.lt.s32.totalorder %s14, 1
      %s3122 = scalar_select %p3121, %s14, 1
      %s3123 = smul.addr %s3122, 8
      %s3124 = smul.addr %s3123, 4
      %s3125 = scalar_lea.vmem %s3, %s3124
      // Predicated region
      $region33: #{forward.6} parent=31 // pred_check
        %p3126 = pneg %p100
      $region34: #{forward.6} parent=31 // pred_check_branch
        %3128 = sbr.rel (%p3126) target = $region36
      $region35: #{forward.6} parent=31 // pred_region
        _
      $region36: #{forward.6} parent=31 // pred_fallthru
        _
    $region32: #{forward.6} parent=5 // pred_fallthru
      _
    %p3129 = scmp.le.s32.totalorder 2, %s9
    // Predicated region
    $region37: #{forward.6} parent=5 // pred_check
      %p3130 = pneg %p3129
    $region38: #{forward.6} parent=5 // pred_check_branch
      %3132 = sbr.rel (%p3130) target = $region40
    $region39: #{forward.6} parent=5 // pred_region
      %s3133 = ssub.s32 %s9, 2
      // Predicated region
      $region41: #{forward.6} parent=39 // pred_check
        %p3134 = pneg %p106
      $region42: #{forward.6} parent=39 // pred_check_branch
        %3136 = sbr.rel (%p3134) target = $region44
      $region43: #{forward.6} parent=39 // pred_region
        %p3137 = scmp.lt.s32.totalorder %s15, 1
        %s3138 = scalar_select %p3137, %s15, 1
        %s3139 = smul.addr %s3138, 8
        %s3140 = smul.addr %s3139, 4
        %s3141 = scalar_lea.vmem %s3, %s3140
      $region44: #{forward.6} parent=39 // pred_fallthru
        _
    $region40: #{forward.6} parent=5 // pred_fallthru
      _
  $region6: #{forward.6} parent=0 // loop_footer
    %s13 = sadd.s32 1, %s9
  $region7: #{forward.6} parent=0 // loop_footer_branch
    %8 = sbr.rel target = $region3
  $region8: #{forward.6} parent=0 // loop_exit
    _

// kernel: forward.7
$region0: #{forward.7}
  #allocation0 [shape = 'u32[]', space=smem, size = 0x4, offset = 0x4, fixed_abs, tag = 'smem constant byte address 0x4 - core index']
  #allocation1 [shape = 'u32[144,128]{1,0:T(1,128)}', space=vmem, size = 0x12000, scoped, tag = 'internal scratch']
  %s0 = inlined_call_operand.vmem [shape: bf16[2,1024], index: 0, kind: input, shape index: {}]
  %s1 = inlined_call_operand.vmem [shape: bf16[1024,64], index: 1, kind: input, shape index: {}]
  %s2 = inlined_call_operand.vmem [shape: f32[1,64], index: 2, kind: input, shape index: {}]
  %s3 = inlined_call_operand.vmem [shape: bf16[64,10], index: 3, kind: input, shape index: {}]
  %s4 = inlined_call_operand.vmem [shape: f32[1,10], index: 4, kind: input, shape index: {}]
  %s5 = inlined_call_operand.hbm [shape: f32[2,10], index: 5, kind: output, shape index: {}]
  %s6 = sld [smem:[#allocation0]]
  $region30: #{forward.7} parent=0
    _
  %s8 = ssub.s32 1, %s6
  %s9 = scalar_select 0, %s8, %s6
  $region1: #{forward.7} parent=0
    #allocation2 [shape = 'u8[1024]{0}', space=vmem, size = 0x400, scoped, tag = 'output window, operand 0, single buffered']
    #allocation3 [shape = 's32[1]{0}', space=sflag, size = 0x4, scoped, tag = 'scoped memory for forward.7']
    %10 = vsyncpa [#allocation3], 0
    // Predicated region
    $region2: #{forward.7} parent=1 // pred_check
      _
    $region3: #{forward.7} parent=1 // pred_check_branch
      %12 = sbr.rel (0) target = $region5
    $region4: #{forward.7} parent=1 // pred_region
      _
    $region5: #{forward.7} parent=1 // pred_fallthru
      _
    // Predicated region
    $region6: #{forward.7} parent=1 // pred_check
      _
    $region7: #{forward.7} parent=1 // pred_check_branch
      %14 = sbr.rel (0) target = $region9
    $region8: #{forward.7} parent=1 // pred_region
      _
    $region9: #{forward.7} parent=1 // pred_fallthru
      _
    // Predicated region
    $region10: #{forward.7} parent=1 // pred_check
      _
    $region11: #{forward.7} parent=1 // pred_check_branch
      %16 = sbr.rel (0) target = $region13
    $region12: #{forward.7} parent=1 // pred_region
      _
    $region13: #{forward.7} parent=1 // pred_fallthru
      _
    // Predicated region
    $region14: #{forward.7} parent=1 // pred_check
      _
    $region15: #{forward.7} parent=1 // pred_check_branch
      %18 = sbr.rel (0) target = $region17
    $region16: #{forward.7} parent=1 // pred_region
      _
    $region17: #{forward.7} parent=1 // pred_fallthru
      _
    // Predicated region
    $region18: #{forward.7} parent=1 // pred_check
      _
    $region19: #{forward.7} parent=1 // pred_check_branch
      %20 = sbr.rel (0) target = $region21
    $region20: #{forward.7} parent=1 // pred_region
      _
    $region21: #{forward.7} parent=1 // pred_fallthru
      _
    %v22 = vld [vmem:[%s0] sm:$0xff]
    %v23 = vld [vmem:[%s1] sm:$0xf]
    %v24 = vld [vmem:[%s1 + $0x4] sm:$0xf]
    %v25 = vld [vmem:[%s1 + $0x8] sm:$0xf]
    %v26 = vld [vmem:[%s1 + $0xc] sm:$0xf]
    %v27 = vld [vmem:[%s1 + $0x10] sm:$0xf]
    %v28 = vld [vmem:[%s1 + $0x14] sm:$0xf]
    %v29 = vld [vmem:[%s1 + $0x18] sm:$0xf]
    %v30 = vld [vmem:[%s1 + $0x1c] sm:$0xf]
    %v31 = vld [vmem:[%s1 + $0x20] sm:$0xf]
    %v32 = vld [vmem:[%s1 + $0x24] sm:$0xf]
    %v33 = vld [vmem:[%s1 + $0x28] sm:$0xf]
    %v34 = vld [vmem:[%s1 + $0x2c] sm:$0xf]
    %v35 = vld [vmem:[%s1 + $0x30] sm:$0xf]
    %v36 = vld [vmem:[%s1 + $0x34] sm:$0xf]
    %v37 = vld [vmem:[%s1 + $0x38] sm:$0xf]
    %v38 = vld [vmem:[%s1 + $0x3c] sm:$0xf]
    %v39 = vld [vmem:[%s1 + $0x40] sm:$0xf]
    %v40 = vld [vmem:[%s1 + $0x44] sm:$0xf]
    %v41 = vld [vmem:[%s1 + $0x48] sm:$0xf]
    %v42 = vld [vmem:[%s1 + $0x4c] sm:$0xf]
    %v43 = vld [vmem:[%s1 + $0x50] sm:$0xf]
    %v44 = vld [vmem:[%s1 + $0x54] sm:$0xf]
    %v45 = vld [vmem:[%s1 + $0x58] sm:$0xf]
    %v46 = vld [vmem:[%s1 + $0x5c] sm:$0xf]
    %v47 = vld [vmem:[%s1 + $0x60] sm:$0xf]
    %v48 = vld [vmem:[%s1 + $0x64] sm:$0xf]
    %v49 = vld [vmem:[%s1 + $0x68] sm:$0xf]
    %v50 = vld [vmem:[%s1 + $0x6c] sm:$0xf]
    %v51 = vld [vmem:[%s1 + $0x70] sm:$0xf]
    %v52 = vld [vmem:[%s1 + $0x74] sm:$0xf]
    %v53 = vld [vmem:[%s1 + $0x78] sm:$0xf]
    %v54 = vld [vmem:[%s1 + $0x7c] sm:$0xf]
    %v55 = vld [vmem:[%s1 + $0x80] sm:$0xf]
    %v56 = vld [vmem:[%s1 + $0x84] sm:$0xf]
    %v57 = vld [vmem:[%s1 + $0x88] sm:$0xf]
    %v58 = vld [vmem:[%s1 + $0x8c] sm:$0xf]
    %v59 = vld [vmem:[%s1 + $0x90] sm:$0xf]
    %v60 = vld [vmem:[%s1 + $0x94] sm:$0xf]
    %v61 = vld [vmem:[%s1 + $0x98] sm:$0xf]
    %v62 = vld [vmem:[%s1 + $0x9c] sm:$0xf]
    %v63 = vld [vmem:[%s1 + $0xa0] sm:$0xf]
    %v64 = vld [vmem:[%s1 + $0xa4] sm:$0xf]
    %v65 = vld [vmem:[%s1 + $0xa8] sm:$0xf]
    %v66 = vld [vmem:[%s1 + $0xac] sm:$0xf]
    %v67 = vld [vmem:[%s1 + $0xb0] sm:$0xf]
    %v68 = vld [vmem:[%s1 + $0xb4] sm:$0xf]
    %v69 = vld [vmem:[%s1 + $0xb8] sm:$0xf]
    %v70 = vld [vmem:[%s1 + $0xbc] sm:$0xf]
    %v71 = vld [vmem:[%s1 + $0xc0] sm:$0xf]
    %v72 = vld [vmem:[%s1 + $0xc4] sm:$0xf]
    %v73 = vld [vmem:[%s1 + $0xc8] sm:$0xf]
    %v74 = vld [vmem:[%s1 + $0xcc] sm:$0xf]
    %v75 = vld [vmem:[%s1 + $0xd0] sm:$0xf]
    %v76 = vld [vmem:[%s1 + $0xd4] sm:$0xf]
    %v77 = vld [vmem:[%s1 + $0xd8] sm:$0xf]
    %v78 = vld [vmem:[%s1 + $0xdc] sm:$0xf]
    %v79 = vld [vmem:[%s1 + $0xe0] sm:$0xf]
    %v80 = vld [vmem:[%s1 + $0xe4] sm:$0xf]
    %v81 = vld [vmem:[%s1 + $0xe8] sm:$0xf]
    %v82 = vld [vmem:[%s1 + $0xec] sm:$0xf]
    %v83 = vld [vmem:[%s1 + $0xf0] sm:$0xf]
    %v84 = vld [vmem:[%s1 + $0xf4] sm:$0xf]
    %v85 = vld [vmem:[%s1 + $0xf8] sm:$0xf]
    %v86 = vld [vmem:[%s1 + $0xfc] sm:$0xf]
    %v87 = vld [vmem:[%s1 + $0x100] sm:$0xf]
    %v88 = vld [vmem:[%s1 + $0x104] sm:$0xf]
    %v89 = vld [vmem:[%s1 + $0x108] sm:$0xf]
    %v90 = vld [vmem:[%s1 + $0x10c] sm:$0xf]
    %v91 = vld [vmem:[%s1 + $0x110] sm:$0xf]
    %v92 = vld [vmem:[%s1 + $0x114] sm:$0xf]
    %v93 = vld [vmem:[%s1 + $0x118] sm:$0xf]
    %v94 = vld [vmem:[%s1 + $0x11c] sm:$0xf]
    %v95 = vld [vmem:[%s1 + $0x120] sm:$0xf]
    %v96 = vld [vmem:[%s1 + $0x124] sm:$0xf]
    %v97 = vld [vmem:[%s1 + $0x128] sm:$0xf]
    %v98 = vld [vmem:[%s1 + $0x12c] sm:$0xf]
    %v99 = vld [vmem:[%s1 + $0x130] sm:$0xf]
    %v100 = vld [vmem:[%s1 + $0x134] sm:$0xf]
    %v101 = vld [vmem:[%s1 + $0x138] sm:$0xf]
    %v102 = vld [vmem:[%s1 + $0x13c] sm:$0xf]
    %v103 = vld [vmem:[%s1 + $0x140] sm:$0xf]
    %v104 = vld [vmem:[%s1 + $0x144] sm:$0xf]
    %v105 = vld [vmem:[%s1 + $0x148] sm:$0xf]
    %v106 = vld [vmem:[%s1 + $0x14c] sm:$0xf]
    %v107 = vld [vmem:[%s1 + $0x150] sm:$0xf]
    %v108 = vld [vmem:[%s1 + $0x154] sm:$0xf]
    %v109 = vld [vmem:[%s1 + $0x158] sm:$0xf]
    %v110 = vld [vmem:[%s1 + $0x15c] sm:$0xf]
    %v111 = vld [vmem:[%s1 + $0x160] sm:$0xf]
    %v112 = vld [vmem:[%s1 + $0x164] sm:$0xf]
    %v113 = vld [vmem:[%s1 + $0x168] sm:$0xf]
    %v114 = vld [vmem:[%s1 + $0x16c] sm:$0xf]
    %v115 = vld [vmem:[%s1 + $0x170] sm:$0xf]
    %v116 = vld [vmem:[%s1 + $0x174] sm:$0xf]
    %v117 = vld [vmem:[%s1 + $0x178] sm:$0xf]
    %v118 = vld [vmem:[%s1 + $0x17c] sm:$0xf]
    %v119 = vld [vmem:[%s1 + $0x180] sm:$0xf]
    %v120 = vld [vmem:[%s1 + $0x184] sm:$0xf]
    %v121 = vld [vmem:[%s1 + $0x188] sm:$0xf]
    %v122 = vld [vmem:[%s1 + $0x18c] sm:$0xf]
    %v123 = vld [vmem:[%s1 + $0x190] sm:$0xf]
    %v124 = vld [vmem:[%s1 + $0x194] sm:$0xf]
    %v125 = vld [vmem:[%s1 + $0x198] sm:$0xf]
    %v126 = vld [vmem:[%s1 + $0x19c] sm:$0xf]
    %v127 = vld [vmem:[%s1 + $0x1a0] sm:$0xf]
    %v128 = vld [vmem:[%s1 + $0x1a4] sm:$0xf]
    %v129 = vld [vmem:[%s1 + $0x1a8] sm:$0xf]
    %v130 = vld [vmem:[%s1 + $0x1ac] sm:$0xf]
    %v131 = vld [vmem:[%s1 + $0x1b0] sm:$0xf]
    %v132 = vld [vmem:[%s1 + $0x1b4] sm:$0xf]
    %v133 = vld [vmem:[%s1 + $0x1b8] sm:$0xf]
    %v134 = vld [vmem:[%s1 + $0x1bc] sm:$0xf]
    %v135 = vld [vmem:[%s1 + $0x1c0] sm:$0xf]
    %v136 = vld [vmem:[%s1 + $0x1c4] sm:$0xf]
    %v137 = vld [vmem:[%s1 + $0x1c8] sm:$0xf]
    %v138 = vld [vmem:[%s1 + $0x1cc] sm:$0xf]
    %v139 = vld [vmem:[%s1 + $0x1d0] sm:$0xf]
    %v140 = vld [vmem:[%s1 + $0x1d4] sm:$0xf]
    %v141 = vld [vmem:[%s1 + $0x1d8] sm:$0xf]
    %v142 = vld [vmem:[%s1 + $0x1dc] sm:$0xf]
    %v143 = vld [vmem:[%s1 + $0x1e0] sm:$0xf]
    %v144 = vld [vmem:[%s1 + $0x1e4] sm:$0xf]
    %v145 = vld [vmem:[%s1 + $0x1e8] sm:$0xf]
    %v146 = vld [vmem:[%s1 + $0x1ec] sm:$0xf]
    %v147 = vld [vmem:[%s1 + $0x1f0] sm:$0xf]
    %v148 = vld [vmem:[%s1 + $0x1f4] sm:$0xf]
    %v149 = vld [vmem:[%s1 + $0x1f8] sm:$0xf]
    %v150 = vld [vmem:[%s1 + $0x1fc] sm:$0xf]
    %v151 = vld [vmem:[%s2] sm:$0x1]
    %v153 = vlaneseq
    %v154 = vshrl.u32 %v153, 7
    %v155 = vsub.s32 0, %v154
    %v156 = vrot.slane %v151, %v155
    %v159 = vcombine.high %v22, %v22
    %v161 = vunpack.c.l.s4 1966171168
    %v162 = vunpack.c.0.s8 %v161
    %v163 = vlaneseq
    %v164 = vshrl.u32 %v163, 7
    %v165 = vsub.s32 %v162, %v164
    %v166 = vrot.slane %v22, %v165
    %v168 = vunpack.c.l.s4 1966171168
    %v169 = vunpack.c.0.s8 %v168
    %v170 = vlaneseq
    %v171 = vshrl.u32 %v170, 7
    %v172 = vsub.s32 %v169, %v171
    %v173 = vrot.slane %v159, %v172
    %v174 = vcombine.high %v166, %v166
    %v175 = vcombine.high %v173, %v173
    %v177 = vunpack.c.l.s4 1966171168
    %v178 = vunpack.c.0.s8 %v177
    %v179 = vlaneseq
    %v180 = vshrl.u32 %v179, 7
    %v181 = vsub.s32 %v178, %v180
    %v182 = vrot.slane %v166, %v181
    %v184 = vunpack.c.l.s4 1966171168
    %v185 = vunpack.c.0.s8 %v184
    %v186 = vlaneseq
    %v187 = vshrl.u32 %v186, 7
    %v188 = vsub.s32 %v185, %v187
    %v189 = vrot.slane %v173, %v188
    %v191 = vunpack.c.l.s4 1966171168
    %v192 = vunpack.c.0.s8 %v191
    %v193 = vlaneseq
    %v194 = vshrl.u32 %v193, 7
    %v195 = vsub.s32 %v192, %v194
    %v196 = vrot.slane %v174, %v195
    %v198 = vunpack.c.l.s4 1966171168
    %v199 = vunpack.c.0.s8 %v198
    %v200 = vlaneseq
    %v201 = vshrl.u32 %v200, 7
    %v202 = vsub.s32 %v199, %v201
    %v203 = vrot.slane %v175, %v202
    %v204 = vcombine.high %v182, %v182
    %v205 = vcombine.high %v189, %v189
    %v206 = vcombine.high %v196, %v196
    %v207 = vcombine.high %v203, %v203
    %v344 = vunpack.c.l.b16 %v23
    %v345 = vunpack.c.l.b16 %v24
    %v346 = vunpack.c.l.b16 %v25
    %v347 = vunpack.c.l.b16 %v26
    %v348 = vunpack.c.l.b16 %v27
    %v349 = vunpack.c.l.b16 %v28
    %v350 = vunpack.c.l.b16 %v29
    %v351 = vunpack.c.l.b16 %v30
    %v352 = vunpack.c.l.b16 %v31
    %v353 = vunpack.c.l.b16 %v32
    %v354 = vunpack.c.l.b16 %v33
    %v355 = vunpack.c.l.b16 %v34
    %v356 = vunpack.c.l.b16 %v35
    %v357 = vunpack.c.l.b16 %v36
    %v358 = vunpack.c.l.b16 %v37
    %v359 = vunpack.c.l.b16 %v38
    %v360 = vunpack.c.l.b16 %v39
    %v361 = vunpack.c.l.b16 %v40
    %v362 = vunpack.c.l.b16 %v41
    %v363 = vunpack.c.l.b16 %v42
    %v364 = vunpack.c.l.b16 %v43
    %v365 = vunpack.c.l.b16 %v44
    %v366 = vunpack.c.l.b16 %v45
    %v367 = vunpack.c.l.b16 %v46
    %v368 = vunpack.c.l.b16 %v47
    %v369 = vunpack.c.l.b16 %v48
    %v370 = vunpack.c.l.b16 %v49
    %v371 = vunpack.c.l.b16 %v50
    %v372 = vunpack.c.l.b16 %v51
    %v373 = vunpack.c.l.b16 %v52
    %v374 = vunpack.c.l.b16 %v53
    %v375 = vunpack.c.l.b16 %v54
    %v376 = vunpack.c.l.b16 %v55
    %v377 = vunpack.c.l.b16 %v56
    %v378 = vunpack.c.l.b16 %v57
    %v379 = vunpack.c.l.b16 %v58
    %v380 = vunpack.c.l.b16 %v59
    %v381 = vunpack.c.l.b16 %v60
    %v382 = vunpack.c.l.b16 %v61
    %v383 = vunpack.c.l.b16 %v62
    %v384 = vunpack.c.l.b16 %v63
    %v385 = vunpack.c.l.b16 %v64
    %v386 = vunpack.c.l.b16 %v65
    %v387 = vunpack.c.l.b16 %v66
    %v388 = vunpack.c.l.b16 %v67
    %v389 = vunpack.c.l.b16 %v68
    %v390 = vunpack.c.l.b16 %v69
    %v391 = vunpack.c.l.b16 %v70
    %v392 = vunpack.c.l.b16 %v71
    %v393 = vunpack.c.l.b16 %v72
    %v394 = vunpack.c.l.b16 %v73
    %v395 = vunpack.c.l.b16 %v74
    %v396 = vunpack.c.l.b16 %v75
    %v397 = vunpack.c.l.b16 %v76
    %v398 = vunpack.c.l.b16 %v77
    %v399 = vunpack.c.l.b16 %v78
    %v400 = vunpack.c.l.b16 %v79
    %v401 = vunpack.c.l.b16 %v80
    %v402 = vunpack.c.l.b16 %v81
    %v403 = vunpack.c.l.b16 %v82
    %v404 = vunpack.c.l.b16 %v83
    %v405 = vunpack.c.l.b16 %v84
    %v406 = vunpack.c.l.b16 %v85
    %v407 = vunpack.c.l.b16 %v86
    %v408 = vunpack.c.l.b16 %v87
    %v409 = vunpack.c.l.b16 %v88
    %v410 = vunpack.c.l.b16 %v89
    %v411 = vunpack.c.l.b16 %v90
    %v412 = vunpack.c.l.b16 %v91
    %v413 = vunpack.c.l.b16 %v92
    %v414 = vunpack.c.l.b16 %v93
    %v415 = vunpack.c.l.b16 %v94
    %v416 = vunpack.c.l.b16 %v95
    %v417 = vunpack.c.l.b16 %v96
    %v418 = vunpack.c.l.b16 %v97
    %v419 = vunpack.c.l.b16 %v98
    %v420 = vunpack.c.l.b16 %v99
    %v421 = vunpack.c.l.b16 %v100
    %v422 = vunpack.c.l.b16 %v101
    %v423 = vunpack.c.l.b16 %v102
    %v424 = vunpack.c.l.b16 %v103
    %v425 = vunpack.c.l.b16 %v104
    %v426 = vunpack.c.l.b16 %v105
    %v427 = vunpack.c.l.b16 %v106
    %v428 = vunpack.c.l.b16 %v107
    %v429 = vunpack.c.l.b16 %v108
    %v430 = vunpack.c.l.b16 %v109
    %v431 = vunpack.c.l.b16 %v110
    %v432 = vunpack.c.l.b16 %v111
    %v433 = vunpack.c.l.b16 %v112
    %v434 = vunpack.c.l.b16 %v113
    %v435 = vunpack.c.l.b16 %v114
    %v436 = vunpack.c.l.b16 %v115
    %v437 = vunpack.c.l.b16 %v116
    %v438 = vunpack.c.l.b16 %v117
    %v439 = vunpack.c.l.b16 %v118
    %v440 = vunpack.c.l.b16 %v119
    %v441 = vunpack.c.l.b16 %v120
    %v442 = vunpack.c.l.b16 %v121
    %v443 = vunpack.c.l.b16 %v122
    %v444 = vunpack.c.l.b16 %v123
    %v445 = vunpack.c.l.b16 %v124
    %v446 = vunpack.c.l.b16 %v125
    %v447 = vunpack.c.l.b16 %v126
    %v448 = vunpack.c.l.b16 %v127
    %v449 = vunpack.c.l.b16 %v128
    %v450 = vunpack.c.l.b16 %v129
    %v451 = vunpack.c.l.b16 %v130
    %v452 = vunpack.c.l.b16 %v131
    %v453 = vunpack.c.l.b16 %v132
    %v454 = vunpack.c.l.b16 %v133
    %v455 = vunpack.c.l.b16 %v134
    %v456 = vunpack.c.l.b16 %v135
    %v457 = vunpack.c.l.b16 %v136
    %v458 = vunpack.c.l.b16 %v137
    %v459 = vunpack.c.l.b16 %v138
    %v460 = vunpack.c.l.b16 %v139
    %v461 = vunpack.c.l.b16 %v140
    %v462 = vunpack.c.l.b16 %v141
    %v463 = vunpack.c.l.b16 %v142
    %v464 = vunpack.c.l.b16 %v143
    %v465 = vunpack.c.l.b16 %v144
    %v466 = vunpack.c.l.b16 %v145
    %v467 = vunpack.c.l.b16 %v146
    %v468 = vunpack.c.l.b16 %v147
    %v469 = vunpack.c.l.b16 %v148
    %v470 = vunpack.c.l.b16 %v149
    %v471 = vunpack.c.l.b16 %v150
    %v472 = vpack.c.b16 %v345, %v344
    %v473 = vpack.c.b16 %v347, %v346
    %v474 = vpack.c.b16 %v349, %v348
    %v475 = vpack.c.b16 %v351, %v350
    %v476 = vpack.c.b16 %v353, %v352
    %v477 = vpack.c.b16 %v355, %v354
    %v478 = vpack.c.b16 %v357, %v356
    %v479 = vpack.c.b16 %v359, %v358
    %v480 = vpack.c.b16 %v361, %v360
    %v481 = vpack.c.b16 %v363, %v362
    %v482 = vpack.c.b16 %v365, %v364
    %v483 = vpack.c.b16 %v367, %v366
    %v484 = vpack.c.b16 %v369, %v368
    %v485 = vpack.c.b16 %v371, %v370
    %v486 = vpack.c.b16 %v373, %v372
    %v487 = vpack.c.b16 %v375, %v374
    %v488 = vpack.c.b16 %v377, %v376
    %v489 = vpack.c.b16 %v379, %v378
    %v490 = vpack.c.b16 %v381, %v380
    %v491 = vpack.c.b16 %v383, %v382
    %v492 = vpack.c.b16 %v385, %v384
    %v493 = vpack.c.b16 %v387, %v386
    %v494 = vpack.c.b16 %v389, %v388
    %v495 = vpack.c.b16 %v391, %v390
    %v496 = vpack.c.b16 %v393, %v392
    %v497 = vpack.c.b16 %v395, %v394
    %v498 = vpack.c.b16 %v397, %v396
    %v499 = vpack.c.b16 %v399, %v398
    %v500 = vpack.c.b16 %v401, %v400
    %v501 = vpack.c.b16 %v403, %v402
    %v502 = vpack.c.b16 %v405, %v404
    %v503 = vpack.c.b16 %v407, %v406
    %v504 = vpack.c.b16 %v409, %v408
    %v505 = vpack.c.b16 %v411, %v410
    %v506 = vpack.c.b16 %v413, %v412
    %v507 = vpack.c.b16 %v415, %v414
    %v508 = vpack.c.b16 %v417, %v416
    %v509 = vpack.c.b16 %v419, %v418
    %v510 = vpack.c.b16 %v421, %v420
    %v511 = vpack.c.b16 %v423, %v422
    %v512 = vpack.c.b16 %v425, %v424
    %v513 = vpack.c.b16 %v427, %v426
    %v514 = vpack.c.b16 %v429, %v428
    %v515 = vpack.c.b16 %v431, %v430
    %v516 = vpack.c.b16 %v433, %v432
    %v517 = vpack.c.b16 %v435, %v434
    %v518 = vpack.c.b16 %v437, %v436
    %v519 = vpack.c.b16 %v439, %v438
    %v520 = vpack.c.b16 %v441, %v440
    %v521 = vpack.c.b16 %v443, %v442
    %v522 = vpack.c.b16 %v445, %v444
    %v523 = vpack.c.b16 %v447, %v446
    %v524 = vpack.c.b16 %v449, %v448
    %v525 = vpack.c.b16 %v451, %v450
    %v526 = vpack.c.b16 %v453, %v452
    %v527 = vpack.c.b16 %v455, %v454
    %v528 = vpack.c.b16 %v457, %v456
    %v529 = vpack.c.b16 %v459, %v458
    %v530 = vpack.c.b16 %v461, %v460
    %v531 = vpack.c.b16 %v463, %v462
    %v532 = vpack.c.b16 %v465, %v464
    %v533 = vpack.c.b16 %v467, %v466
    %v534 = vpack.c.b16 %v469, %v468
    %v535 = vpack.c.b16 %v471, %v470
    %600 = vmatprep.subr.bf16.mxu0 0
    %601 = vmatpush1.bf16.msra.mxu0 %v479
    %602 = vmatprep.subr.bf16.mxu0 0
    %603 = vmatpush1.bf16.msra.mxu0 %v478
    %604 = vmatprep.subr.bf16.mxu0 0
    %605 = vmatpush1.bf16.msra.mxu0 %v477
    %606 = vmatprep.subr.bf16.mxu0 0
    %607 = vmatpush1.bf16.msra.mxu0 %v476
    %608 = vmatprep.subr.bf16.mxu0 0
    %609 = vmatpush1.bf16.msra.mxu0 %v475
    %610 = vmatprep.subr.bf16.mxu0 0
    %611 = vmatpush1.bf16.msra.mxu0 %v474
    %612 = vmatprep.subr.bf16.mxu0 0
    %613 = vmatpush1.bf16.msra.mxu0 %v473
    %614 = vmatprep.subr.bf16.mxu0 0
    %615 = vmatpush1.bf16.msra.mxu0 %v472
    %616 = vmatprep.subr.bf16.mxu0 0
    %617 = vmatpush2.bf16.msra.mxu0 %v487
    %618 = vmatprep.subr.bf16.mxu0 0
    %619 = vmatpush2.bf16.msra.mxu0 %v486
    %620 = vmatprep.subr.bf16.mxu0 0
    %621 = vmatpush2.bf16.msra.mxu0 %v485
    %622 = vmatprep.subr.bf16.mxu0 0
    %623 = vmatpush2.bf16.msra.mxu0 %v484
    %624 = vmatprep.subr.bf16.mxu0 0
    %625 = vmatpush2.bf16.msra.mxu0 %v483
    %626 = vmatprep.subr.bf16.mxu0 0
    %627 = vmatpush2.bf16.msra.mxu0 %v482
    %628 = vmatprep.subr.bf16.mxu0 0
    %629 = vmatpush2.bf16.msra.mxu0 %v481
    %630 = vmatprep.subr.bf16.mxu0 0
    %631 = vmatpush2.bf16.msra.mxu0 %v480
    %632 = vmatprep.mubr.bf16.mxu0 %v196
    %633 = vmatmul.mubr.bf16.gmra.mxu0 %v182
    %v634 = vpop.f32.mrf.mxu0
    %v635 = vadd.f32 %v156, %v634
    %v636 = vpop.f32.mrf.mxu0
    %v637 = vpop.f32.mrf.mxu0
    %v638 = vpop.f32.mrf.mxu0
    %639 = vdwg.mxu0
    %640 = vmatprep.subr.bf16.mxu0 0
    %641 = vmatpush1.bf16.msra.mxu0 %v495
    %642 = vmatprep.subr.bf16.mxu0 0
    %643 = vmatpush1.bf16.msra.mxu0 %v494
    %644 = vmatprep.subr.bf16.mxu0 0
    %645 = vmatpush1.bf16.msra.mxu0 %v493
    %646 = vmatprep.subr.bf16.mxu0 0
    %647 = vmatpush1.bf16.msra.mxu0 %v492
    %648 = vmatprep.subr.bf16.mxu0 0
    %649 = vmatpush1.bf16.msra.mxu0 %v491
    %650 = vmatprep.subr.bf16.mxu0 0
    %651 = vmatpush1.bf16.msra.mxu0 %v490
    %652 = vmatprep.subr.bf16.mxu0 0
    %653 = vmatpush1.bf16.msra.mxu0 %v489
    %654 = vmatprep.subr.bf16.mxu0 0
    %655 = vmatpush1.bf16.msra.mxu0 %v488
    %656 = vmatprep.subr.bf16.mxu0 0
    %657 = vmatpush2.bf16.msra.mxu0 %v503
    %658 = vmatprep.subr.bf16.mxu0 0
    %659 = vmatpush2.bf16.msra.mxu0 %v502
    %660 = vmatprep.subr.bf16.mxu0 0
    %661 = vmatpush2.bf16.msra.mxu0 %v501
    %662 = vmatprep.subr.bf16.mxu0 0
    %663 = vmatpush2.bf16.msra.mxu0 %v500
    %664 = vmatprep.subr.bf16.mxu0 0
    %665 = vmatpush2.bf16.msra.mxu0 %v499
    %666 = vmatprep.subr.bf16.mxu0 0
    %667 = vmatpush2.bf16.msra.mxu0 %v498
    %668 = vmatprep.subr.bf16.mxu0 0
    %669 = vmatpush2.bf16.msra.mxu0 %v497
    %670 = vmatprep.subr.bf16.mxu0 0
    %671 = vmatpush2.bf16.msra.mxu0 %v496
    %672 = vmatprep.mubr.bf16.mxu0 %v206
    %673 = vmatmul.mubr.bf16.gmra.mxu0 %v204
    %v674 = vpop.f32.mrf.mxu0
    %v675 = vadd.f32 %v635, %v674
    %v676 = vpop.f32.mrf.mxu0
    %v677 = vpop.f32.mrf.mxu0
    %v678 = vpop.f32.mrf.mxu0
    %679 = vdwg.mxu0
    %680 = vmatprep.subr.bf16.mxu0 0
    %681 = vmatpush1.bf16.msra.mxu0 %v511
    %682 = vmatprep.subr.bf16.mxu0 0
    %683 = vmatpush1.bf16.msra.mxu0 %v510
    %684 = vmatprep.subr.bf16.mxu0 0
    %685 = vmatpush1.bf16.msra.mxu0 %v509
    %686 = vmatprep.subr.bf16.mxu0 0
    %687 = vmatpush1.bf16.msra.mxu0 %v508
    %688 = vmatprep.subr.bf16.mxu0 0
    %689 = vmatpush1.bf16.msra.mxu0 %v507
    %690 = vmatprep.subr.bf16.mxu0 0
    %691 = vmatpush1.bf16.msra.mxu0 %v506
    %692 = vmatprep.subr.bf16.mxu0 0
    %693 = vmatpush1.bf16.msra.mxu0 %v505
    %694 = vmatprep.subr.bf16.mxu0 0
    %695 = vmatpush1.bf16.msra.mxu0 %v504
    %696 = vmatprep.subr.bf16.mxu0 0
    %697 = vmatpush2.bf16.msra.mxu0 %v519
    %698 = vmatprep.subr.bf16.mxu0 0
    %699 = vmatpush2.bf16.msra.mxu0 %v518
    %700 = vmatprep.subr.bf16.mxu0 0
    %701 = vmatpush2.bf16.msra.mxu0 %v517
    %702 = vmatprep.subr.bf16.mxu0 0
    %703 = vmatpush2.bf16.msra.mxu0 %v516
    %704 = vmatprep.subr.bf16.mxu0 0
    %705 = vmatpush2.bf16.msra.mxu0 %v515
    %706 = vmatprep.subr.bf16.mxu0 0
    %707 = vmatpush2.bf16.msra.mxu0 %v514
    %708 = vmatprep.subr.bf16.mxu0 0
    %709 = vmatpush2.bf16.msra.mxu0 %v513
    %710 = vmatprep.subr.bf16.mxu0 0
    %711 = vmatpush2.bf16.msra.mxu0 %v512
    %712 = vmatprep.mubr.bf16.mxu0 %v203
    %713 = vmatmul.mubr.bf16.gmra.mxu0 %v189
    %v714 = vpop.f32.mrf.mxu0
    %v715 = vadd.f32 %v675, %v714
    %v716 = vpop.f32.mrf.mxu0
    %v717 = vpop.f32.mrf.mxu0
    %v718 = vpop.f32.mrf.mxu0
    %719 = vdwg.mxu0
    %720 = vmatprep.subr.bf16.mxu0 0
    %721 = vmatpush1.bf16.msra.mxu0 %v527
    %722 = vmatprep.subr.bf16.mxu0 0
    %723 = vmatpush1.bf16.msra.mxu0 %v526
    %724 = vmatprep.subr.bf16.mxu0 0
    %725 = vmatpush1.bf16.msra.mxu0 %v525
    %726 = vmatprep.subr.bf16.mxu0 0
    %727 = vmatpush1.bf16.msra.mxu0 %v524
    %728 = vmatprep.subr.bf16.mxu0 0
    %729 = vmatpush1.bf16.msra.mxu0 %v523
    %730 = vmatprep.subr.bf16.mxu0 0
    %731 = vmatpush1.bf16.msra.mxu0 %v522
    %732 = vmatprep.subr.bf16.mxu0 0
    %733 = vmatpush1.bf16.msra.mxu0 %v521
    %734 = vmatprep.subr.bf16.mxu0 0
    %735 = vmatpush1.bf16.msra.mxu0 %v520
    %736 = vmatprep.subr.bf16.mxu0 0
    %737 = vmatpush2.bf16.msra.mxu0 %v535
    %738 = vmatprep.subr.bf16.mxu0 0
    %739 = vmatpush2.bf16.msra.mxu0 %v534
    %740 = vmatprep.subr.bf16.mxu0 0
    %741 = vmatpush2.bf16.msra.mxu0 %v533
    %742 = vmatprep.subr.bf16.mxu0 0
    %743 = vmatpush2.bf16.msra.mxu0 %v532
    %744 = vmatprep.subr.bf16.mxu0 0
    %745 = vmatpush2.bf16.msra.mxu0 %v531
    %746 = vmatprep.subr.bf16.mxu0 0
    %747 = vmatpush2.bf16.msra.mxu0 %v530
    %748 = vmatprep.subr.bf16.mxu0 0
    %749 = vmatpush2.bf16.msra.mxu0 %v529
    %750 = vmatprep.subr.bf16.mxu0 0
    %751 = vmatpush2.bf16.msra.mxu0 %v528
    %752 = vmatprep.mubr.bf16.mxu0 %v207
    %753 = vmatmul.mubr.bf16.gmra.mxu0 %v205
    %v754 = vpop.f32.mrf.mxu0
    %v755 = vadd.f32 %v715, %v754
    %v756 = vpop.f32.mrf.mxu0
    %v757 = vpop.f32.mrf.mxu0
    %v758 = vpop.f32.mrf.mxu0
    %759 = vdwg.mxu0
    %v760 = vpack.c.bf16 %v755, %v755
    %v761 = vld [vmem:[%s3] sm:$0xf]
    %v762 = vld [vmem:[%s3 + $0x4] sm:$0xf]
    %v763 = vld [vmem:[%s3 + $0x8] sm:$0xf]
    %v764 = vld [vmem:[%s3 + $0xc] sm:$0xf]
    %v765 = vld [vmem:[%s3 + $0x10] sm:$0xf]
    %v766 = vld [vmem:[%s3 + $0x14] sm:$0xf]
    %v767 = vld [vmem:[%s3 + $0x18] sm:$0xf]
    %v768 = vld [vmem:[%s3 + $0x1c] sm:$0xf]
    %v769 = vld [vmem:[%s4] sm:$0x1]
    %v771 = vlaneseq
    %v772 = vshrl.u32 %v771, 7
    %v773 = vsub.s32 0, %v772
    %v774 = vrot.slane %v769, %v773
    %v784 = vunpack.c.l.b16 %v761
    %v785 = vunpack.c.l.b16 %v762
    %v786 = vunpack.c.l.b16 %v763
    %v787 = vunpack.c.l.b16 %v764
    %v788 = vunpack.c.l.b16 %v765
    %v789 = vunpack.c.l.b16 %v766
    %v790 = vunpack.c.l.b16 %v767
    %v791 = vunpack.c.l.b16 %v768
    %v792 = vpack.c.b16 %v785, %v784
    %v793 = vpack.c.b16 %v787, %v786
    %v794 = vpack.c.b16 %v789, %v788
    %v795 = vpack.c.b16 %v791, %v790
    %vm800 = vcmask 523264
    %v802 = vsel %vm800, %v760, 0
    %804 = vmatprep.subr.bf16.mxu0 0
    %805 = vmatpush1.bf16.msra.mxu0 0
    %806 = vmatprep.subr.bf16.mxu0 0
    %807 = vmatpush1.bf16.msra.mxu0 0
    %808 = vmatprep.subr.bf16.mxu0 0
    %809 = vmatpush1.bf16.msra.mxu0 0
    %810 = vmatprep.subr.bf16.mxu0 0
    %811 = vmatpush1.bf16.msra.mxu0 0
    %812 = vmatprep.subr.bf16.mxu0 0
    %813 = vmatpush1.bf16.msra.mxu0 %v795
    %814 = vmatprep.subr.bf16.mxu0 0
    %815 = vmatpush1.bf16.msra.mxu0 %v794
    %816 = vmatprep.subr.bf16.mxu0 0
    %817 = vmatpush1.bf16.msra.mxu0 %v793
    %818 = vmatprep.subr.bf16.mxu0 0
    %819 = vmatpush1.bf16.msra.mxu0 %v792
    %820 = vmatprep.subr.bf16.mxu0 0
    %821 = vmatpush2.bf16.msra.mxu0 0
    %822 = vmatprep.subr.bf16.mxu0 0
    %823 = vmatpush2.bf16.msra.mxu0 0
    %824 = vmatprep.subr.bf16.mxu0 0
    %825 = vmatpush2.bf16.msra.mxu0 0
    %826 = vmatprep.subr.bf16.mxu0 0
    %827 = vmatpush2.bf16.msra.mxu0 0
    %828 = vmatprep.subr.bf16.mxu0 0
    %829 = vmatpush2.bf16.msra.mxu0 0
    %830 = vmatprep.subr.bf16.mxu0 0
    %831 = vmatpush2.bf16.msra.mxu0 0
    %832 = vmatprep.subr.bf16.mxu0 0
    %833 = vmatpush2.bf16.msra.mxu0 0
    %834 = vmatprep.subr.bf16.mxu0 0
    %835 = vmatpush2.bf16.msra.mxu0 0
    %836 = vmatprep.mubr.bf16.mxu0 0
    %837 = vmatmul.mubr.bf16.gmra.mxu0 %v802
    %v838 = vpop.f32.mrf.mxu0
    %v839 = vadd.f32 %v774, %v838
    %v840 = vpop.f32.mrf.mxu0
    %v841 = vpop.f32.mrf.mxu0
    %v842 = vpop.f32.mrf.mxu0
    %843 = vdwg.mxu0
    %vm844 = vcmask 74752
    %845 = vst.msk [vmem:[#allocation2] sm:$0x3] %vm844, %v839
    // Predicated region
    $region22: #{forward.7} parent=1 // pred_check
      _
    $region23: #{forward.7} parent=1 // pred_check_branch
      %847 = sbr.rel (0) target = $region25
    $region24: #{forward.7} parent=1 // pred_region
      %s849 = ssub.s32 32, 32
      %850 = vsyncadd [#allocation3], %s849
      %s852 = sshll.u32 [#allocation2], 4
      %s853 = int_to_ptr.vmem [resolvable:$true] %s852
      %855 = dma.vmem_to_hbm [thread:$0]  %s853, 32, %s5, [#allocation3]
    $region25: #{forward.7} parent=1 // pred_fallthru
      _
    // Predicated region
    $region26: #{forward.7} parent=1 // pred_check
      _
    $region27: #{forward.7} parent=1 // pred_check_branch
      %857 = sbr.rel (0) target = $region29
    $region28: #{forward.7} parent=1 // pred_region
      %858 = dma.done [#allocation3], 32
    $region29: #{forward.7} parent=1 // pred_fallthru
      _
    %859 = vsyncpa [#allocation3], 1

</llo_original>
